<compile_context>
chip_gen: v5e
topology: v5e:2x2
jax: 0.10.0
libtpu: 0.0.40
codegen_flags: <defaults>
</compile_context>

<pallas_src>
import functools

import jax
import jax.numpy as jnp
from jax.experimental import pallas as pl
from jax.experimental.pallas import tpu as pltpu


# ----------------------------------------------------------------------------
# Pallas kernel: one bidirectional LSTM layer (both directions fused).
# Single invocation (no grid); the whole sequence is VMEM-resident.
#   gx_ref  : (T, B, 8H)  precomputed x-gates, layout [fwd 4H | bwd 4H]
#   whh_ref : (2P, 8H)    block-diag [Whh_f^T ; Whh_b^T]   (bf16)
#   whr_ref : (2H, 2P)    block-diag [Whr_f^T ; Whr_b^T]   (bf16)
#   out_ref : (T, B, 2P)  [h_fwd | h_bwd] per timestep      (f32)
# ----------------------------------------------------------------------------
def _bilstm_layer_kernel(gx_ref, whh_ref, whr_ref, out_ref):
    T, B, eight_h = gx_ref.shape
    four_h = eight_h // 2
    hidden = four_h // 4
    two_p = out_ref.shape[2]
    proj = two_p // 2
    mxu_dtype = whh_ref.dtype

    # State carried across the unrolled time loop (lives in vregs / VMEM).
    h = jnp.zeros((B, two_p), jnp.float32)        # [h_fwd | h_bwd]
    c = jnp.zeros((B, 2 * hidden), jnp.float32)   # [c_fwd | c_bwd]

    fwd_out = [None] * T
    bwd_out = [None] * T

    def cell(gates, c_prev):
        # Gate order i, f, g, o (PyTorch).  All elementwise math in f32.
        i = jax.nn.sigmoid(gates[:, 0 * hidden:1 * hidden])
        f = jax.nn.sigmoid(gates[:, 1 * hidden:2 * hidden])
        g = jnp.tanh(gates[:, 2 * hidden:3 * hidden])
        o = jax.nn.sigmoid(gates[:, 3 * hidden:4 * hidden])
        c_new = f * c_prev + i * g
        return c_new, o * jnp.tanh(c_new)

    # Fully unrolled (T is small and static).
    # TODO(synk): for long sequences, switch to lax.fori_loop with h/c/out in
    # VMEM scratch and T-chunked gx via pltpu.emit_pipeline.
    for s in range(T):
        # One fused recurrent matmul for both directions (block-diag weights).
        gh = jnp.dot(h.astype(mxu_dtype), whh_ref[...],
                     preferred_element_type=jnp.float32)          # (B, 8H)

        # fwd consumes x[s]; bwd consumes x[T-1-s].
        row_f = gx_ref[s]                                         # (B, 8H)
        row_b = gx_ref[T - 1 - s]                                 # (B, 8H)
        gates_f = row_f[:, :four_h] + gh[:, :four_h]
        gates_b = row_b[:, four_h:] + gh[:, four_h:]

        c_f, hf_full = cell(gates_f, c[:, :hidden])
        c_b, hb_full = cell(gates_b, c[:, hidden:])
        c = jnp.concatenate([c_f, c_b], axis=-1)                  # (B, 2H)
        h_full = jnp.concatenate([hf_full, hb_full], axis=-1)     # (B, 2H)

        # Fused projection for both directions (block-diag W_hr^T).
        h = jnp.dot(h_full.astype(mxu_dtype), whr_ref[...],
                    preferred_element_type=jnp.float32)           # (B, 2P)

        fwd_out[s] = h[:, :proj]           # output for time s
        bwd_out[T - 1 - s] = h[:, proj:]   # output for time T-1-s

    # Lane-dense (B, 2P=128) full-row stores; HBM writeback is one slab.
    for t in range(T):
        out_ref[t] = jnp.concatenate([fwd_out[t], bwd_out[t]], axis=-1)


def bilstm_layer(gx, whh_blk, whr_blk, *, proj):
    """Run one fused bidirectional LSTM layer over the full sequence."""
    T, B, _ = gx.shape
    return pl.pallas_call(
        _bilstm_layer_kernel,
        out_shape=jax.ShapeDtypeStruct((T, B, 2 * proj), jnp.float32),
        in_specs=[pl.BlockSpec(memory_space=pltpu.MemorySpace.VMEM)] * 3,
        out_specs=pl.BlockSpec(memory_space=pltpu.MemorySpace.VMEM),
    )(gx, whh_blk, whr_blk)


# ----------------------------------------------------------------------------
# Weight preparation glue (done once per layer per forward call).
# ----------------------------------------------------------------------------
def _block_diag(a, b):
    m, n = a.shape
    p, q = b.shape
    top = jnp.concatenate([a, jnp.zeros((m, q), a.dtype)], axis=1)
    bot = jnp.concatenate([jnp.zeros((p, n), b.dtype), b], axis=1)
    return jnp.concatenate([top, bot], axis=0)


def _prep_layer_weights(fwd_p, bwd_p, *, matmul_dtype=jnp.bfloat16):
    # x-projection weights stay f32 (that GEMM runs outside the kernel).
    wih_cat = jnp.concatenate([fwd_p["w_ih"].T, bwd_p["w_ih"].T], axis=1)   # (D_in, 8H)
    bias_cat = jnp.concatenate([fwd_p["b_ih"] + fwd_p["b_hh"],
                                bwd_p["b_ih"] + bwd_p["b_hh"]])             # (8H,)
    # Recurrent / projection weights: block-diagonal fwd/bwd stack, bf16 MXU.
    whh_blk = _block_diag(fwd_p["w_hh"].T, bwd_p["w_hh"].T).astype(matmul_dtype)  # (2P, 8H)
    whr_blk = _block_diag(fwd_p["w_hr"].T, bwd_p["w_hr"].T).astype(matmul_dtype)  # (2H, 2P)
    return wih_cat, bias_cat, whh_blk, whr_blk


# ----------------------------------------------------------------------------
# Parameter construction (deterministic, matches nn.LSTM shapes)
# ----------------------------------------------------------------------------
def init_params(key, vocab_size, embed_size, hidden, num_layers):
    # NOTE: hidden // 2 for num_layers == 1 is an arbitrary choice (the
    # reference module always uses num_layers > 1).
    proj = hidden // num_layers if num_layers > 1 else hidden // 2
    k = 1.0 / jnp.sqrt(hidden)

    key, ek = jax.random.split(key)
    params = {"embedding": jax.random.normal(ek, (vocab_size, embed_size),
                                             jnp.float32)}

    layers = []
    for layer in range(num_layers):
        d_in = embed_size if layer == 0 else 2 * proj
        dirs = []
        for _ in range(2):  # forward, backward
            key, k1, k2, k3, k4, k5 = jax.random.split(key, 6)
            dirs.append(dict(
                w_ih=jax.random.uniform(k1, (4 * hidden, d_in), jnp.float32,
                                        -k, k),
                w_hh=jax.random.uniform(k2, (4 * hidden, proj), jnp.float32,
                                        -k, k),
                b_ih=jax.random.uniform(k3, (4 * hidden,), jnp.float32, -k, k),
                b_hh=jax.random.uniform(k4, (4 * hidden,), jnp.float32, -k, k),
                w_hr=jax.random.uniform(k5, (proj, hidden), jnp.float32,
                                        -k, k),
            ))
        layers.append(dirs)
    params["layers"] = layers
    return params, proj


# ----------------------------------------------------------------------------
# Full forward pass
# ----------------------------------------------------------------------------
def bilstm_encoder_forward(params, tokens, num_layers,
                           matmul_dtype=jnp.bfloat16):
    # TODO(synk): `to_onehot(i)` in the reference is an out-of-module token ->
    # index mapping; here the input is already int32 token indices.
    x = jnp.take(params["embedding"], tokens, axis=0)   # (T, B, E)  glue gather
    T, B, _ = x.shape

    for layer in range(num_layers):
        fwd_p, bwd_p = params["layers"][layer]
        wih_cat, bias_cat, whh_blk, whr_blk = _prep_layer_weights(
            fwd_p, bwd_p, matmul_dtype=matmul_dtype)

        # Hoisted time-parallel input projection (no sequential dependency):
        # one (T*B, D_in) x (D_in, 8H) GEMM + folded biases, outside the
        # serial recurrence kernel.
        d_in = x.shape[-1]
        eight_h = wih_cat.shape[1]
        gx = (x.reshape(T * B, d_in) @ wih_cat + bias_cat).reshape(
            T, B, eight_h)

        proj = whr_blk.shape[1] // 2
        x = bilstm_layer(gx, whh_blk, whr_blk, proj=proj)   # (T, B, 2P)
    return x


if __name__ == "__main__":
    VOCAB = 50
    EMBED = 64
    HIDDEN = 128
    NUM_LAYERS = 2
    SEQ = 8
    BATCH = 2

    key = jax.random.PRNGKey(0)
    key, pkey, tkey = jax.random.split(key, 3)

    params, proj = init_params(pkey, VOCAB, EMBED, HIDDEN, NUM_LAYERS)
    tokens = jax.random.randint(tkey, (SEQ, BATCH), 0, VOCAB, dtype=jnp.int32)

    fwd = jax.jit(functools.partial(bilstm_encoder_forward,
                                    num_layers=NUM_LAYERS))
    out = jax.block_until_ready(fwd(params, tokens))

    assert out.shape == (SEQ, BATCH, 2 * proj), out.shape
    assert out.dtype == jnp.float32
    assert bool(jnp.all(jnp.isfinite(out)))
    print("KERNEL_OK")
</pallas_src>

<mosaic_0001>
module attributes {stable_mosaic.version = 11 : i64} {
  func.func @_bilstm_layer_kernel(%arg0: memref<8x2x1024xf32, #tpu.memory_space<vmem>>, %arg1: memref<128x1024xbf16, #tpu.memory_space<vmem>>, %arg2: memref<256x128xbf16, #tpu.memory_space<vmem>>, %arg3: memref<8x2x128xf32, #tpu.memory_space<vmem>>) attributes {dimension_semantics = [], scalar_prefetch = 0 : i64, scratch_operands = 0 : i64, tpu.core_type = #tpu.core_type<tc>} {
    %cst = arith.constant 0.000000e+00 : f32
    %0 = vector.broadcast %cst : f32 to vector<2x128xf32>
    %cst_0 = arith.constant 0.000000e+00 : f32
    %1 = vector.broadcast %cst_0 : f32 to vector<2x256xf32>
    %2 = arith.truncf %0 : vector<2x128xf32> to vector<2x128xbf16>
    %c0 = arith.constant 0 : index
    %c0_1 = arith.constant 0 : index
    %3 = vector.load %arg1[%c0, %c0_1] : memref<128x1024xbf16, #tpu.memory_space<vmem>>, vector<128x1024xbf16>
    %cst_2 = arith.constant dense<0.000000e+00> : vector<2x1024xf32>
    %4 = tpu.matmul %2, %3, %cst_2 {dimension_numbers = #tpu.dot_dimension_numbers<[1], [0], [0], [1], [0, 0, 1, 1], [], []>} : vector<2x128xbf16>, vector<128x1024xbf16>, vector<2x1024xf32> -> vector<2x1024xf32>
    %c0_3 = arith.constant 0 : index
    %c0_4 = arith.constant 0 : index
    %c0_5 = arith.constant 0 : index
    %5 = vector.load %arg0[%c0_3, %c0_4, %c0_5] : memref<8x2x1024xf32, #tpu.memory_space<vmem>>, vector<1x2x1024xf32>
    %6 = vector.shape_cast %5 : vector<1x2x1024xf32> to vector<2x1024xf32>
    %c7 = arith.constant 7 : index
    %c0_6 = arith.constant 0 : index
    %c0_7 = arith.constant 0 : index
    %7 = vector.load %arg0[%c7, %c0_6, %c0_7] : memref<8x2x1024xf32, #tpu.memory_space<vmem>>, vector<1x2x1024xf32>
    %8 = vector.shape_cast %7 : vector<1x2x1024xf32> to vector<2x1024xf32>
    %9 = vector.extract_strided_slice %6 {offsets = [0, 0], sizes = [2, 512], strides = [1, 1]} : vector<2x1024xf32> to vector<2x512xf32>
    %10 = vector.extract_strided_slice %4 {offsets = [0, 0], sizes = [2, 512], strides = [1, 1]} : vector<2x1024xf32> to vector<2x512xf32>
    %11 = arith.addf %9, %10 : vector<2x512xf32>
    %12 = vector.extract_strided_slice %8 {offsets = [0, 512], sizes = [2, 512], strides = [1, 1]} : vector<2x1024xf32> to vector<2x512xf32>
    %13 = vector.extract_strided_slice %4 {offsets = [0, 512], sizes = [2, 512], strides = [1, 1]} : vector<2x1024xf32> to vector<2x512xf32>
    %14 = arith.addf %12, %13 : vector<2x512xf32>
    %15 = vector.extract_strided_slice %1 {offsets = [0, 0], sizes = [2, 128], strides = [1, 1]} : vector<2x256xf32> to vector<2x128xf32>
    %16 = vector.extract_strided_slice %11 {offsets = [0, 0], sizes = [2, 128], strides = [1, 1]} : vector<2x512xf32> to vector<2x128xf32>
    %17 = arith.negf %16 : vector<2x128xf32>
    %18 = math.exp %17 : vector<2x128xf32>
    %cst_8 = arith.constant 1.000000e+00 : f32
    %19 = vector.broadcast %cst_8 : f32 to vector<2x128xf32>
    %20 = arith.addf %19, %18 : vector<2x128xf32>
    %21 = arith.divf %19, %20 : vector<2x128xf32>
    %22 = vector.extract_strided_slice %11 {offsets = [0, 128], sizes = [2, 128], strides = [1, 1]} : vector<2x512xf32> to vector<2x128xf32>
    %23 = arith.negf %22 : vector<2x128xf32>
    %24 = math.exp %23 : vector<2x128xf32>
    %cst_9 = arith.constant 1.000000e+00 : f32
    %25 = vector.broadcast %cst_9 : f32 to vector<2x128xf32>
    %26 = arith.addf %25, %24 : vector<2x128xf32>
    %27 = arith.divf %25, %26 : vector<2x128xf32>
    %28 = vector.extract_strided_slice %11 {offsets = [0, 256], sizes = [2, 128], strides = [1, 1]} : vector<2x512xf32> to vector<2x128xf32>
    %29 = math.tanh %28 : vector<2x128xf32>
    %30 = vector.extract_strided_slice %11 {offsets = [0, 384], sizes = [2, 128], strides = [1, 1]} : vector<2x512xf32> to vector<2x128xf32>
    %31 = arith.negf %30 : vector<2x128xf32>
    %32 = math.exp %31 : vector<2x128xf32>
    %cst_10 = arith.constant 1.000000e+00 : f32
    %33 = vector.broadcast %cst_10 : f32 to vector<2x128xf32>
    %34 = arith.addf %33, %32 : vector<2x128xf32>
    %35 = arith.divf %33, %34 : vector<2x128xf32>
    %36 = arith.mulf %27, %15 : vector<2x128xf32>
    %37 = arith.mulf %21, %29 : vector<2x128xf32>
    %38 = arith.addf %36, %37 : vector<2x128xf32>
    %39 = math.tanh %38 : vector<2x128xf32>
    %40 = arith.mulf %35, %39 : vector<2x128xf32>
    %41 = vector.extract_strided_slice %1 {offsets = [0, 128], sizes = [2, 128], strides = [1, 1]} : vector<2x256xf32> to vector<2x128xf32>
    %42 = vector.extract_strided_slice %14 {offsets = [0, 0], sizes = [2, 128], strides = [1, 1]} : vector<2x512xf32> to vector<2x128xf32>
    %43 = arith.negf %42 : vector<2x128xf32>
    %44 = math.exp %43 : vector<2x128xf32>
    %cst_11 = arith.constant 1.000000e+00 : f32
    %45 = vector.broadcast %cst_11 : f32 to vector<2x128xf32>
    %46 = arith.addf %45, %44 : vector<2x128xf32>
    %47 = arith.divf %45, %46 : vector<2x128xf32>
    %48 = vector.extract_strided_slice %14 {offsets = [0, 128], sizes = [2, 128], strides = [1, 1]} : vector<2x512xf32> to vector<2x128xf32>
    %49 = arith.negf %48 : vector<2x128xf32>
    %50 = math.exp %49 : vector<2x128xf32>
    %cst_12 = arith.constant 1.000000e+00 : f32
    %51 = vector.broadcast %cst_12 : f32 to vector<2x128xf32>
    %52 = arith.addf %51, %50 : vector<2x128xf32>
    %53 = arith.divf %51, %52 : vector<2x128xf32>
    %54 = vector.extract_strided_slice %14 {offsets = [0, 256], sizes = [2, 128], strides = [1, 1]} : vector<2x512xf32> to vector<2x128xf32>
    %55 = math.tanh %54 : vector<2x128xf32>
    %56 = vector.extract_strided_slice %14 {offsets = [0, 384], sizes = [2, 128], strides = [1, 1]} : vector<2x512xf32> to vector<2x128xf32>
    %57 = arith.negf %56 : vector<2x128xf32>
    %58 = math.exp %57 : vector<2x128xf32>
    %cst_13 = arith.constant 1.000000e+00 : f32
    %59 = vector.broadcast %cst_13 : f32 to vector<2x128xf32>
    %60 = arith.addf %59, %58 : vector<2x128xf32>
    %61 = arith.divf %59, %60 : vector<2x128xf32>
    %62 = arith.mulf %53, %41 : vector<2x128xf32>
    %63 = arith.mulf %47, %55 : vector<2x128xf32>
    %64 = arith.addf %62, %63 : vector<2x128xf32>
    %65 = math.tanh %64 : vector<2x128xf32>
    %66 = arith.mulf %61, %65 : vector<2x128xf32>
    %67 = tpu.concatenate %38, %64 in 1 : vector<2x128xf32>, vector<2x128xf32> -> vector<2x256xf32>
    %68 = tpu.concatenate %40, %66 in 1 : vector<2x128xf32>, vector<2x128xf32> -> vector<2x256xf32>
    %69 = arith.truncf %68 : vector<2x256xf32> to vector<2x256xbf16>
    %c0_14 = arith.constant 0 : index
    %c0_15 = arith.constant 0 : index
    %70 = vector.load %arg2[%c0_14, %c0_15] : memref<256x128xbf16, #tpu.memory_space<vmem>>, vector<256x128xbf16>
    %cst_16 = arith.constant dense<0.000000e+00> : vector<2x128xf32>
    %71 = tpu.matmul %69, %70, %cst_16 {dimension_numbers = #tpu.dot_dimension_numbers<[1], [0], [0], [1], [0, 0, 1, 1], [], []>} : vector<2x256xbf16>, vector<256x128xbf16>, vector<2x128xf32> -> vector<2x128xf32>
    %72 = vector.extract_strided_slice %71 {offsets = [0, 0], sizes = [2, 64], strides = [1, 1]} : vector<2x128xf32> to vector<2x64xf32>
    %73 = vector.extract_strided_slice %71 {offsets = [0, 64], sizes = [2, 64], strides = [1, 1]} : vector<2x128xf32> to vector<2x64xf32>
    %74 = arith.truncf %71 : vector<2x128xf32> to vector<2x128xbf16>
    %c0_17 = arith.constant 0 : index
    %c0_18 = arith.constant 0 : index
    %75 = vector.load %arg1[%c0_17, %c0_18] : memref<128x1024xbf16, #tpu.memory_space<vmem>>, vector<128x1024xbf16>
    %cst_19 = arith.constant dense<0.000000e+00> : vector<2x1024xf32>
    %76 = tpu.matmul %74, %75, %cst_19 {dimension_numbers = #tpu.dot_dimension_numbers<[1], [0], [0], [1], [0, 0, 1, 1], [], []>} : vector<2x128xbf16>, vector<128x1024xbf16>, vector<2x1024xf32> -> vector<2x1024xf32>
    %c1 = arith.constant 1 : index
    %c0_20 = arith.constant 0 : index
    %c0_21 = arith.constant 0 : index
    %77 = vector.load %arg0[%c1, %c0_20, %c0_21] : memref<8x2x1024xf32, #tpu.memory_space<vmem>>, vector<1x2x1024xf32>
    %78 = vector.shape_cast %77 : vector<1x2x1024xf32> to vector<2x1024xf32>
    %c6 = arith.constant 6 : index
    %c0_22 = arith.constant 0 : index
    %c0_23 = arith.constant 0 : index
    %79 = vector.load %arg0[%c6, %c0_22, %c0_23] : memref<8x2x1024xf32, #tpu.memory_space<vmem>>, vector<1x2x1024xf32>
    %80 = vector.shape_cast %79 : vector<1x2x1024xf32> to vector<2x1024xf32>
    %81 = vector.extract_strided_slice %78 {offsets = [0, 0], sizes = [2, 512], strides = [1, 1]} : vector<2x1024xf32> to vector<2x512xf32>
    %82 = vector.extract_strided_slice %76 {offsets = [0, 0], sizes = [2, 512], strides = [1, 1]} : vector<2x1024xf32> to vector<2x512xf32>
    %83 = arith.addf %81, %82 : vector<2x512xf32>
    %84 = vector.extract_strided_slice %80 {offsets = [0, 512], sizes = [2, 512], strides = [1, 1]} : vector<2x1024xf32> to vector<2x512xf32>
    %85 = vector.extract_strided_slice %76 {offsets = [0, 512], sizes = [2, 512], strides = [1, 1]} : vector<2x1024xf32> to vector<2x512xf32>
    %86 = arith.addf %84, %85 : vector<2x512xf32>
    %87 = vector.extract_strided_slice %67 {offsets = [0, 0], sizes = [2, 128], strides = [1, 1]} : vector<2x256xf32> to vector<2x128xf32>
    %88 = vector.extract_strided_slice %83 {offsets = [0, 0], sizes = [2, 128], strides = [1, 1]} : vector<2x512xf32> to vector<2x128xf32>
    %89 = arith.negf %88 : vector<2x128xf32>
    %90 = math.exp %89 : vector<2x128xf32>
    %cst_24 = arith.constant 1.000000e+00 : f32
    %91 = vector.broadcast %cst_24 : f32 to vector<2x128xf32>
    %92 = arith.addf %91, %90 : vector<2x128xf32>
    %93 = arith.divf %91, %92 : vector<2x128xf32>
    %94 = vector.extract_strided_slice %83 {offsets = [0, 128], sizes = [2, 128], strides = [1, 1]} : vector<2x512xf32> to vector<2x128xf32>
    %95 = arith.negf %94 : vector<2x128xf32>
    %96 = math.exp %95 : vector<2x128xf32>
    %cst_25 = arith.constant 1.000000e+00 : f32
    %97 = vector.broadcast %cst_25 : f32 to vector<2x128xf32>
    %98 = arith.addf %97, %96 : vector<2x128xf32>
    %99 = arith.divf %97, %98 : vector<2x128xf32>
    %100 = vector.extract_strided_slice %83 {offsets = [0, 256], sizes = [2, 128], strides = [1, 1]} : vector<2x512xf32> to vector<2x128xf32>
    %101 = math.tanh %100 : vector<2x128xf32>
    %102 = vector.extract_strided_slice %83 {offsets = [0, 384], sizes = [2, 128], strides = [1, 1]} : vector<2x512xf32> to vector<2x128xf32>
    %103 = arith.negf %102 : vector<2x128xf32>
    %104 = math.exp %103 : vector<2x128xf32>
    %cst_26 = arith.constant 1.000000e+00 : f32
    %105 = vector.broadcast %cst_26 : f32 to vector<2x128xf32>
    %106 = arith.addf %105, %104 : vector<2x128xf32>
    %107 = arith.divf %105, %106 : vector<2x128xf32>
    %108 = arith.mulf %99, %87 : vector<2x128xf32>
    %109 = arith.mulf %93, %101 : vector<2x128xf32>
    %110 = arith.addf %108, %109 : vector<2x128xf32>
    %111 = math.tanh %110 : vector<2x128xf32>
    %112 = arith.mulf %107, %111 : vector<2x128xf32>
    %113 = vector.extract_strided_slice %67 {offsets = [0, 128], sizes = [2, 128], strides = [1, 1]} : vector<2x256xf32> to vector<2x128xf32>
    %114 = vector.extract_strided_slice %86 {offsets = [0, 0], sizes = [2, 128], strides = [1, 1]} : vector<2x512xf32> to vector<2x128xf32>
    %115 = arith.negf %114 : vector<2x128xf32>
    %116 = math.exp %115 : vector<2x128xf32>
    %cst_27 = arith.constant 1.000000e+00 : f32
    %117 = vector.broadcast %cst_27 : f32 to vector<2x128xf32>
    %118 = arith.addf %117, %116 : vector<2x128xf32>
    %119 = arith.divf %117, %118 : vector<2x128xf32>
    %120 = vector.extract_strided_slice %86 {offsets = [0, 128], sizes = [2, 128], strides = [1, 1]} : vector<2x512xf32> to vector<2x128xf32>
    %121 = arith.negf %120 : vector<2x128xf32>
    %122 = math.exp %121 : vector<2x128xf32>
    %cst_28 = arith.constant 1.000000e+00 : f32
    %123 = vector.broadcast %cst_28 : f32 to vector<2x128xf32>
    %124 = arith.addf %123, %122 : vector<2x128xf32>
    %125 = arith.divf %123, %124 : vector<2x128xf32>
    %126 = vector.extract_strided_slice %86 {offsets = [0, 256], sizes = [2, 128], strides = [1, 1]} : vector<2x512xf32> to vector<2x128xf32>
    %127 = math.tanh %126 : vector<2x128xf32>
    %128 = vector.extract_strided_slice %86 {offsets = [0, 384], sizes = [2, 128], strides = [1, 1]} : vector<2x512xf32> to vector<2x128xf32>
    %129 = arith.negf %128 : vector<2x128xf32>
    %130 = math.exp %129 : vector<2x128xf32>
    %cst_29 = arith.constant 1.000000e+00 : f32
    %131 = vector.broadcast %cst_29 : f32 to vector<2x128xf32>
    %132 = arith.addf %131, %130 : vector<2x128xf32>
    %133 = arith.divf %131, %132 : vector<2x128xf32>
    %134 = arith.mulf %125, %113 : vector<2x128xf32>
    %135 = arith.mulf %119, %127 : vector<2x128xf32>
    %136 = arith.addf %134, %135 : vector<2x128xf32>
    %137 = math.tanh %136 : vector<2x128xf32>
    %138 = arith.mulf %133, %137 : vector<2x128xf32>
    %139 = tpu.concatenate %110, %136 in 1 : vector<2x128xf32>, vector<2x128xf32> -> vector<2x256xf32>
    %140 = tpu.concatenate %112, %138 in 1 : vector<2x128xf32>, vector<2x128xf32> -> vector<2x256xf32>
    %141 = arith.truncf %140 : vector<2x256xf32> to vector<2x256xbf16>
    %c0_30 = arith.constant 0 : index
    %c0_31 = arith.constant 0 : index
    %142 = vector.load %arg2[%c0_30, %c0_31] : memref<256x128xbf16, #tpu.memory_space<vmem>>, vector<256x128xbf16>
    %cst_32 = arith.constant dense<0.000000e+00> : vector<2x128xf32>
    %143 = tpu.matmul %141, %142, %cst_32 {dimension_numbers = #tpu.dot_dimension_numbers<[1], [0], [0], [1], [0, 0, 1, 1], [], []>} : vector<2x256xbf16>, vector<256x128xbf16>, vector<2x128xf32> -> vector<2x128xf32>
    %144 = vector.extract_strided_slice %143 {offsets = [0, 0], sizes = [2, 64], strides = [1, 1]} : vector<2x128xf32> to vector<2x64xf32>
    %145 = vector.extract_strided_slice %143 {offsets = [0, 64], sizes = [2, 64], strides = [1, 1]} : vector<2x128xf32> to vector<2x64xf32>
    %146 = arith.truncf %143 : vector<2x128xf32> to vector<2x128xbf16>
    %c0_33 = arith.constant 0 : index
    %c0_34 = arith.constant 0 : index
    %147 = vector.load %arg1[%c0_33, %c0_34] : memref<128x1024xbf16, #tpu.memory_space<vmem>>, vector<128x1024xbf16>
    %cst_35 = arith.constant dense<0.000000e+00> : vector<2x1024xf32>
    %148 = tpu.matmul %146, %147, %cst_35 {dimension_numbers = #tpu.dot_dimension_numbers<[1], [0], [0], [1], [0, 0, 1, 1], [], []>} : vector<2x128xbf16>, vector<128x1024xbf16>, vector<2x1024xf32> -> vector<2x1024xf32>
    %c2 = arith.constant 2 : index
    %c0_36 = arith.constant 0 : index
    %c0_37 = arith.constant 0 : index
    %149 = vector.load %arg0[%c2, %c0_36, %c0_37] : memref<8x2x1024xf32, #tpu.memory_space<vmem>>, vector<1x2x1024xf32>
    %150 = vector.shape_cast %149 : vector<1x2x1024xf32> to vector<2x1024xf32>
    %c5 = arith.constant 5 : index
    %c0_38 = arith.constant 0 : index
    %c0_39 = arith.constant 0 : index
    %151 = vector.load %arg0[%c5, %c0_38, %c0_39] : memref<8x2x1024xf32, #tpu.memory_space<vmem>>, vector<1x2x1024xf32>
    %152 = vector.shape_cast %151 : vector<1x2x1024xf32> to vector<2x1024xf32>
    %153 = vector.extract_strided_slice %150 {offsets = [0, 0], sizes = [2, 512], strides = [1, 1]} : vector<2x1024xf32> to vector<2x512xf32>
    %154 = vector.extract_strided_slice %148 {offsets = [0, 0], sizes = [2, 512], strides = [1, 1]} : vector<2x1024xf32> to vector<2x512xf32>
    %155 = arith.addf %153, %154 : vector<2x512xf32>
    %156 = vector.extract_strided_slice %152 {offsets = [0, 512], sizes = [2, 512], strides = [1, 1]} : vector<2x1024xf32> to vector<2x512xf32>
    %157 = vector.extract_strided_slice %148 {offsets = [0, 512], sizes = [2, 512], strides = [1, 1]} : vector<2x1024xf32> to vector<2x512xf32>
    %158 = arith.addf %156, %157 : vector<2x512xf32>
    %159 = vector.extract_strided_slice %139 {offsets = [0, 0], sizes = [2, 128], strides = [1, 1]} : vector<2x256xf32> to vector<2x128xf32>
    %160 = vector.extract_strided_slice %155 {offsets = [0, 0], sizes = [2, 128], strides = [1, 1]} : vector<2x512xf32> to vector<2x128xf32>
    %161 = arith.negf %160 : vector<2x128xf32>
    %162 = math.exp %161 : vector<2x128xf32>
    %cst_40 = arith.constant 1.000000e+00 : f32
    %163 = vector.broadcast %cst_40 : f32 to vector<2x128xf32>
    %164 = arith.addf %163, %162 : vector<2x128xf32>
    %165 = arith.divf %163, %164 : vector<2x128xf32>
    %166 = vector.extract_strided_slice %155 {offsets = [0, 128], sizes = [2, 128], strides = [1, 1]} : vector<2x512xf32> to vector<2x128xf32>
    %167 = arith.negf %166 : vector<2x128xf32>
    %168 = math.exp %167 : vector<2x128xf32>
    %cst_41 = arith.constant 1.000000e+00 : f32
    %169 = vector.broadcast %cst_41 : f32 to vector<2x128xf32>
    %170 = arith.addf %169, %168 : vector<2x128xf32>
    %171 = arith.divf %169, %170 : vector<2x128xf32>
    %172 = vector.extract_strided_slice %155 {offsets = [0, 256], sizes = [2, 128], strides = [1, 1]} : vector<2x512xf32> to vector<2x128xf32>
    %173 = math.tanh %172 : vector<2x128xf32>
    %174 = vector.extract_strided_slice %155 {offsets = [0, 384], sizes = [2, 128], strides = [1, 1]} : vector<2x512xf32> to vector<2x128xf32>
    %175 = arith.negf %174 : vector<2x128xf32>
    %176 = math.exp %175 : vector<2x128xf32>
    %cst_42 = arith.constant 1.000000e+00 : f32
    %177 = vector.broadcast %cst_42 : f32 to vector<2x128xf32>
    %178 = arith.addf %177, %176 : vector<2x128xf32>
    %179 = arith.divf %177, %178 : vector<2x128xf32>
    %180 = arith.mulf %171, %159 : vector<2x128xf32>
    %181 = arith.mulf %165, %173 : vector<2x128xf32>
    %182 = arith.addf %180, %181 : vector<2x128xf32>
    %183 = math.tanh %182 : vector<2x128xf32>
    %184 = arith.mulf %179, %183 : vector<2x128xf32>
    %185 = vector.extract_strided_slice %139 {offsets = [0, 128], sizes = [2, 128], strides = [1, 1]} : vector<2x256xf32> to vector<2x128xf32>
    %186 = vector.extract_strided_slice %158 {offsets = [0, 0], sizes = [2, 128], strides = [1, 1]} : vector<2x512xf32> to vector<2x128xf32>
    %187 = arith.negf %186 : vector<2x128xf32>
    %188 = math.exp %187 : vector<2x128xf32>
    %cst_43 = arith.constant 1.000000e+00 : f32
    %189 = vector.broadcast %cst_43 : f32 to vector<2x128xf32>
    %190 = arith.addf %189, %188 : vector<2x128xf32>
    %191 = arith.divf %189, %190 : vector<2x128xf32>
    %192 = vector.extract_strided_slice %158 {offsets = [0, 128], sizes = [2, 128], strides = [1, 1]} : vector<2x512xf32> to vector<2x128xf32>
    %193 = arith.negf %192 : vector<2x128xf32>
    %194 = math.exp %193 : vector<2x128xf32>
    %cst_44 = arith.constant 1.000000e+00 : f32
    %195 = vector.broadcast %cst_44 : f32 to vector<2x128xf32>
    %196 = arith.addf %195, %194 : vector<2x128xf32>
    %197 = arith.divf %195, %196 : vector<2x128xf32>
    %198 = vector.extract_strided_slice %158 {offsets = [0, 256], sizes = [2, 128], strides = [1, 1]} : vector<2x512xf32> to vector<2x128xf32>
    %199 = math.tanh %198 : vector<2x128xf32>
    %200 = vector.extract_strided_slice %158 {offsets = [0, 384], sizes = [2, 128], strides = [1, 1]} : vector<2x512xf32> to vector<2x128xf32>
    %201 = arith.negf %200 : vector<2x128xf32>
    %202 = math.exp %201 : vector<2x128xf32>
    %cst_45 = arith.constant 1.000000e+00 : f32
    %203 = vector.broadcast %cst_45 : f32 to vector<2x128xf32>
    %204 = arith.addf %203, %202 : vector<2x128xf32>
    %205 = arith.divf %203, %204 : vector<2x128xf32>
    %206 = arith.mulf %197, %185 : vector<2x128xf32>
    %207 = arith.mulf %191, %199 : vector<2x128xf32>
    %208 = arith.addf %206, %207 : vector<2x128xf32>
    %209 = math.tanh %208 : vector<2x128xf32>
    %210 = arith.mulf %205, %209 : vector<2x128xf32>
    %211 = tpu.concatenate %182, %208 in 1 : vector<2x128xf32>, vector<2x128xf32> -> vector<2x256xf32>
    %212 = tpu.concatenate %184, %210 in 1 : vector<2x128xf32>, vector<2x128xf32> -> vector<2x256xf32>
    %213 = arith.truncf %212 : vector<2x256xf32> to vector<2x256xbf16>
    %c0_46 = arith.constant 0 : index
    %c0_47 = arith.constant 0 : index
    %214 = vector.load %arg2[%c0_46, %c0_47] : memref<256x128xbf16, #tpu.memory_space<vmem>>, vector<256x128xbf16>
    %cst_48 = arith.constant dense<0.000000e+00> : vector<2x128xf32>
    %215 = tpu.matmul %213, %214, %cst_48 {dimension_numbers = #tpu.dot_dimension_numbers<[1], [0], [0], [1], [0, 0, 1, 1], [], []>} : vector<2x256xbf16>, vector<256x128xbf16>, vector<2x128xf32> -> vector<2x128xf32>
    %216 = vector.extract_strided_slice %215 {offsets = [0, 0], sizes = [2, 64], strides = [1, 1]} : vector<2x128xf32> to vector<2x64xf32>
    %217 = vector.extract_strided_slice %215 {offsets = [0, 64], sizes = [2, 64], strides = [1, 1]} : vector<2x128xf32> to vector<2x64xf32>
    %218 = arith.truncf %215 : vector<2x128xf32> to vector<2x128xbf16>
    %c0_49 = arith.constant 0 : index
    %c0_50 = arith.constant 0 : index
    %219 = vector.load %arg1[%c0_49, %c0_50] : memref<128x1024xbf16, #tpu.memory_space<vmem>>, vector<128x1024xbf16>
    %cst_51 = arith.constant dense<0.000000e+00> : vector<2x1024xf32>
    %220 = tpu.matmul %218, %219, %cst_51 {dimension_numbers = #tpu.dot_dimension_numbers<[1], [0], [0], [1], [0, 0, 1, 1], [], []>} : vector<2x128xbf16>, vector<128x1024xbf16>, vector<2x1024xf32> -> vector<2x1024xf32>
    %c3 = arith.constant 3 : index
    %c0_52 = arith.constant 0 : index
    %c0_53 = arith.constant 0 : index
    %221 = vector.load %arg0[%c3, %c0_52, %c0_53] : memref<8x2x1024xf32, #tpu.memory_space<vmem>>, vector<1x2x1024xf32>
    %222 = vector.shape_cast %221 : vector<1x2x1024xf32> to vector<2x1024xf32>
    %c4 = arith.constant 4 : index
    %c0_54 = arith.constant 0 : index
    %c0_55 = arith.constant 0 : index
    %223 = vector.load %arg0[%c4, %c0_54, %c0_55] : memref<8x2x1024xf32, #tpu.memory_space<vmem>>, vector<1x2x1024xf32>
    %224 = vector.shape_cast %223 : vector<1x2x1024xf32> to vector<2x1024xf32>
    %225 = vector.extract_strided_slice %222 {offsets = [0, 0], sizes = [2, 512], strides = [1, 1]} : vector<2x1024xf32> to vector<2x512xf32>
    %226 = vector.extract_strided_slice %220 {offsets = [0, 0], sizes = [2, 512], strides = [1, 1]} : vector<2x1024xf32> to vector<2x512xf32>
    %227 = arith.addf %225, %226 : vector<2x512xf32>
    %228 = vector.extract_strided_slice %224 {offsets = [0, 512], sizes = [2, 512], strides = [1, 1]} : vector<2x1024xf32> to vector<2x512xf32>
    %229 = vector.extract_strided_slice %220 {offsets = [0, 512], sizes = [2, 512], strides = [1, 1]} : vector<2x1024xf32> to vector<2x512xf32>
    %230 = arith.addf %228, %229 : vector<2x512xf32>
    %231 = vector.extract_strided_slice %211 {offsets = [0, 0], sizes = [2, 128], strides = [1, 1]} : vector<2x256xf32> to vector<2x128xf32>
    %232 = vector.extract_strided_slice %227 {offsets = [0, 0], sizes = [2, 128], strides = [1, 1]} : vector<2x512xf32> to vector<2x128xf32>
    %233 = arith.negf %232 : vector<2x128xf32>
    %234 = math.exp %233 : vector<2x128xf32>
    %cst_56 = arith.constant 1.000000e+00 : f32
    %235 = vector.broadcast %cst_56 : f32 to vector<2x128xf32>
    %236 = arith.addf %235, %234 : vector<2x128xf32>
    %237 = arith.divf %235, %236 : vector<2x128xf32>
    %238 = vector.extract_strided_slice %227 {offsets = [0, 128], sizes = [2, 128], strides = [1, 1]} : vector<2x512xf32> to vector<2x128xf32>
    %239 = arith.negf %238 : vector<2x128xf32>
    %240 = math.exp %239 : vector<2x128xf32>
    %cst_57 = arith.constant 1.000000e+00 : f32
    %241 = vector.broadcast %cst_57 : f32 to vector<2x128xf32>
    %242 = arith.addf %241, %240 : vector<2x128xf32>
    %243 = arith.divf %241, %242 : vector<2x128xf32>
    %244 = vector.extract_strided_slice %227 {offsets = [0, 256], sizes = [2, 128], strides = [1, 1]} : vector<2x512xf32> to vector<2x128xf32>
    %245 = math.tanh %244 : vector<2x128xf32>
    %246 = vector.extract_strided_slice %227 {offsets = [0, 384], sizes = [2, 128], strides = [1, 1]} : vector<2x512xf32> to vector<2x128xf32>
    %247 = arith.negf %246 : vector<2x128xf32>
    %248 = math.exp %247 : vector<2x128xf32>
    %cst_58 = arith.constant 1.000000e+00 : f32
    %249 = vector.broadcast %cst_58 : f32 to vector<2x128xf32>
    %250 = arith.addf %249, %248 : vector<2x128xf32>
    %251 = arith.divf %249, %250 : vector<2x128xf32>
    %252 = arith.mulf %243, %231 : vector<2x128xf32>
    %253 = arith.mulf %237, %245 : vector<2x128xf32>
    %254 = arith.addf %252, %253 : vector<2x128xf32>
    %255 = math.tanh %254 : vector<2x128xf32>
    %256 = arith.mulf %251, %255 : vector<2x128xf32>
    %257 = vector.extract_strided_slice %211 {offsets = [0, 128], sizes = [2, 128], strides = [1, 1]} : vector<2x256xf32> to vector<2x128xf32>
    %258 = vector.extract_strided_slice %230 {offsets = [0, 0], sizes = [2, 128], strides = [1, 1]} : vector<2x512xf32> to vector<2x128xf32>
    %259 = arith.negf %258 : vector<2x128xf32>
    %260 = math.exp %259 : vector<2x128xf32>
    %cst_59 = arith.constant 1.000000e+00 : f32
    %261 = vector.broadcast %cst_59 : f32 to vector<2x128xf32>
    %262 = arith.addf %261, %260 : vector<2x128xf32>
    %263 = arith.divf %261, %262 : vector<2x128xf32>
    %264 = vector.extract_strided_slice %230 {offsets = [0, 128], sizes = [2, 128], strides = [1, 1]} : vector<2x512xf32> to vector<2x128xf32>
    %265 = arith.negf %264 : vector<2x128xf32>
    %266 = math.exp %265 : vector<2x128xf32>
    %cst_60 = arith.constant 1.000000e+00 : f32
    %267 = vector.broadcast %cst_60 : f32 to vector<2x128xf32>
    %268 = arith.addf %267, %266 : vector<2x128xf32>
    %269 = arith.divf %267, %268 : vector<2x128xf32>
    %270 = vector.extract_strided_slice %230 {offsets = [0, 256], sizes = [2, 128], strides = [1, 1]} : vector<2x512xf32> to vector<2x128xf32>
    %271 = math.tanh %270 : vector<2x128xf32>
    %272 = vector.extract_strided_slice %230 {offsets = [0, 384], sizes = [2, 128], strides = [1, 1]} : vector<2x512xf32> to vector<2x128xf32>
    %273 = arith.negf %272 : vector<2x128xf32>
    %274 = math.exp %273 : vector<2x128xf32>
    %cst_61 = arith.constant 1.000000e+00 : f32
    %275 = vector.broadcast %cst_61 : f32 to vector<2x128xf32>
    %276 = arith.addf %275, %274 : vector<2x128xf32>
    %277 = arith.divf %275, %276 : vector<2x128xf32>
    %278 = arith.mulf %269, %257 : vector<2x128xf32>
    %279 = arith.mulf %263, %271 : vector<2x128xf32>
    %280 = arith.addf %278, %279 : vector<2x128xf32>
    %281 = math.tanh %280 : vector<2x128xf32>
    %282 = arith.mulf %277, %281 : vector<2x128xf32>
    %283 = tpu.concatenate %254, %280 in 1 : vector<2x128xf32>, vector<2x128xf32> -> vector<2x256xf32>
    %284 = tpu.concatenate %256, %282 in 1 : vector<2x128xf32>, vector<2x128xf32> -> vector<2x256xf32>
    %285 = arith.truncf %284 : vector<2x256xf32> to vector<2x256xbf16>
    %c0_62 = arith.constant 0 : index
    %c0_63 = arith.constant 0 : index
    %286 = vector.load %arg2[%c0_62, %c0_63] : memref<256x128xbf16, #tpu.memory_space<vmem>>, vector<256x128xbf16>
    %cst_64 = arith.constant dense<0.000000e+00> : vector<2x128xf32>
    %287 = tpu.matmul %285, %286, %cst_64 {dimension_numbers = #tpu.dot_dimension_numbers<[1], [0], [0], [1], [0, 0, 1, 1], [], []>} : vector<2x256xbf16>, vector<256x128xbf16>, vector<2x128xf32> -> vector<2x128xf32>
    %288 = vector.extract_strided_slice %287 {offsets = [0, 0], sizes = [2, 64], strides = [1, 1]} : vector<2x128xf32> to vector<2x64xf32>
    %289 = vector.extract_strided_slice %287 {offsets = [0, 64], sizes = [2, 64], strides = [1, 1]} : vector<2x128xf32> to vector<2x64xf32>
    %290 = arith.truncf %287 : vector<2x128xf32> to vector<2x128xbf16>
    %c0_65 = arith.constant 0 : index
    %c0_66 = arith.constant 0 : index
    %291 = vector.load %arg1[%c0_65, %c0_66] : memref<128x1024xbf16, #tpu.memory_space<vmem>>, vector<128x1024xbf16>
    %cst_67 = arith.constant dense<0.000000e+00> : vector<2x1024xf32>
    %292 = tpu.matmul %290, %291, %cst_67 {dimension_numbers = #tpu.dot_dimension_numbers<[1], [0], [0], [1], [0, 0, 1, 1], [], []>} : vector<2x128xbf16>, vector<128x1024xbf16>, vector<2x1024xf32> -> vector<2x1024xf32>
    %c4_68 = arith.constant 4 : index
    %c0_69 = arith.constant 0 : index
    %c0_70 = arith.constant 0 : index
    %293 = vector.load %arg0[%c4_68, %c0_69, %c0_70] : memref<8x2x1024xf32, #tpu.memory_space<vmem>>, vector<1x2x1024xf32>
    %294 = vector.shape_cast %293 : vector<1x2x1024xf32> to vector<2x1024xf32>
    %c3_71 = arith.constant 3 : index
    %c0_72 = arith.constant 0 : index
    %c0_73 = arith.constant 0 : index
    %295 = vector.load %arg0[%c3_71, %c0_72, %c0_73] : memref<8x2x1024xf32, #tpu.memory_space<vmem>>, vector<1x2x1024xf32>
    %296 = vector.shape_cast %295 : vector<1x2x1024xf32> to vector<2x1024xf32>
    %297 = vector.extract_strided_slice %294 {offsets = [0, 0], sizes = [2, 512], strides = [1, 1]} : vector<2x1024xf32> to vector<2x512xf32>
    %298 = vector.extract_strided_slice %292 {offsets = [0, 0], sizes = [2, 512], strides = [1, 1]} : vector<2x1024xf32> to vector<2x512xf32>
    %299 = arith.addf %297, %298 : vector<2x512xf32>
    %300 = vector.extract_strided_slice %296 {offsets = [0, 512], sizes = [2, 512], strides = [1, 1]} : vector<2x1024xf32> to vector<2x512xf32>
    %301 = vector.extract_strided_slice %292 {offsets = [0, 512], sizes = [2, 512], strides = [1, 1]} : vector<2x1024xf32> to vector<2x512xf32>
    %302 = arith.addf %300, %301 : vector<2x512xf32>
    %303 = vector.extract_strided_slice %283 {offsets = [0, 0], sizes = [2, 128], strides = [1, 1]} : vector<2x256xf32> to vector<2x128xf32>
    %304 = vector.extract_strided_slice %299 {offsets = [0, 0], sizes = [2, 128], strides = [1, 1]} : vector<2x512xf32> to vector<2x128xf32>
    %305 = arith.negf %304 : vector<2x128xf32>
    %306 = math.exp %305 : vector<2x128xf32>
    %cst_74 = arith.constant 1.000000e+00 : f32
    %307 = vector.broadcast %cst_74 : f32 to vector<2x128xf32>
    %308 = arith.addf %307, %306 : vector<2x128xf32>
    %309 = arith.divf %307, %308 : vector<2x128xf32>
    %310 = vector.extract_strided_slice %299 {offsets = [0, 128], sizes = [2, 128], strides = [1, 1]} : vector<2x512xf32> to vector<2x128xf32>
    %311 = arith.negf %310 : vector<2x128xf32>
    %312 = math.exp %311 : vector<2x128xf32>
    %cst_75 = arith.constant 1.000000e+00 : f32
    %313 = vector.broadcast %cst_75 : f32 to vector<2x128xf32>
    %314 = arith.addf %313, %312 : vector<2x128xf32>
    %315 = arith.divf %313, %314 : vector<2x128xf32>
    %316 = vector.extract_strided_slice %299 {offsets = [0, 256], sizes = [2, 128], strides = [1, 1]} : vector<2x512xf32> to vector<2x128xf32>
    %317 = math.tanh %316 : vector<2x128xf32>
    %318 = vector.extract_strided_slice %299 {offsets = [0, 384], sizes = [2, 128], strides = [1, 1]} : vector<2x512xf32> to vector<2x128xf32>
    %319 = arith.negf %318 : vector<2x128xf32>
    %320 = math.exp %319 : vector<2x128xf32>
    %cst_76 = arith.constant 1.000000e+00 : f32
    %321 = vector.broadcast %cst_76 : f32 to vector<2x128xf32>
    %322 = arith.addf %321, %320 : vector<2x128xf32>
    %323 = arith.divf %321, %322 : vector<2x128xf32>
    %324 = arith.mulf %315, %303 : vector<2x128xf32>
    %325 = arith.mulf %309, %317 : vector<2x128xf32>
    %326 = arith.addf %324, %325 : vector<2x128xf32>
    %327 = math.tanh %326 : vector<2x128xf32>
    %328 = arith.mulf %323, %327 : vector<2x128xf32>
    %329 = vector.extract_strided_slice %283 {offsets = [0, 128], sizes = [2, 128], strides = [1, 1]} : vector<2x256xf32> to vector<2x128xf32>
    %330 = vector.extract_strided_slice %302 {offsets = [0, 0], sizes = [2, 128], strides = [1, 1]} : vector<2x512xf32> to vector<2x128xf32>
    %331 = arith.negf %330 : vector<2x128xf32>
    %332 = math.exp %331 : vector<2x128xf32>
    %cst_77 = arith.constant 1.000000e+00 : f32
    %333 = vector.broadcast %cst_77 : f32 to vector<2x128xf32>
    %334 = arith.addf %333, %332 : vector<2x128xf32>
    %335 = arith.divf %333, %334 : vector<2x128xf32>
    %336 = vector.extract_strided_slice %302 {offsets = [0, 128], sizes = [2, 128], strides = [1, 1]} : vector<2x512xf32> to vector<2x128xf32>
    %337 = arith.negf %336 : vector<2x128xf32>
    %338 = math.exp %337 : vector<2x128xf32>
    %cst_78 = arith.constant 1.000000e+00 : f32
    %339 = vector.broadcast %cst_78 : f32 to vector<2x128xf32>
    %340 = arith.addf %339, %338 : vector<2x128xf32>
    %341 = arith.divf %339, %340 : vector<2x128xf32>
    %342 = vector.extract_strided_slice %302 {offsets = [0, 256], sizes = [2, 128], strides = [1, 1]} : vector<2x512xf32> to vector<2x128xf32>
    %343 = math.tanh %342 : vector<2x128xf32>
    %344 = vector.extract_strided_slice %302 {offsets = [0, 384], sizes = [2, 128], strides = [1, 1]} : vector<2x512xf32> to vector<2x128xf32>
    %345 = arith.negf %344 : vector<2x128xf32>
    %346 = math.exp %345 : vector<2x128xf32>
    %cst_79 = arith.constant 1.000000e+00 : f32
    %347 = vector.broadcast %cst_79 : f32 to vector<2x128xf32>
    %348 = arith.addf %347, %346 : vector<2x128xf32>
    %349 = arith.divf %347, %348 : vector<2x128xf32>
    %350 = arith.mulf %341, %329 : vector<2x128xf32>
    %351 = arith.mulf %335, %343 : vector<2x128xf32>
    %352 = arith.addf %350, %351 : vector<2x128xf32>
    %353 = math.tanh %352 : vector<2x128xf32>
    %354 = arith.mulf %349, %353 : vector<2x128xf32>
    %355 = tpu.concatenate %326, %352 in 1 : vector<2x128xf32>, vector<2x128xf32> -> vector<2x256xf32>
    %356 = tpu.concatenate %328, %354 in 1 : vector<2x128xf32>, vector<2x128xf32> -> vector<2x256xf32>
    %357 = arith.truncf %356 : vector<2x256xf32> to vector<2x256xbf16>
    %c0_80 = arith.constant 0 : index
    %c0_81 = arith.constant 0 : index
    %358 = vector.load %arg2[%c0_80, %c0_81] : memref<256x128xbf16, #tpu.memory_space<vmem>>, vector<256x128xbf16>
    %cst_82 = arith.constant dense<0.000000e+00> : vector<2x128xf32>
    %359 = tpu.matmul %357, %358, %cst_82 {dimension_numbers = #tpu.dot_dimension_numbers<[1], [0], [0], [1], [0, 0, 1, 1], [], []>} : vector<2x256xbf16>, vector<256x128xbf16>, vector<2x128xf32> -> vector<2x128xf32>
    %360 = vector.extract_strided_slice %359 {offsets = [0, 0], sizes = [2, 64], strides = [1, 1]} : vector<2x128xf32> to vector<2x64xf32>
    %361 = vector.extract_strided_slice %359 {offsets = [0, 64], sizes = [2, 64], strides = [1, 1]} : vector<2x128xf32> to vector<2x64xf32>
    %362 = arith.truncf %359 : vector<2x128xf32> to vector<2x128xbf16>
    %c0_83 = arith.constant 0 : index
    %c0_84 = arith.constant 0 : index
    %363 = vector.load %arg1[%c0_83, %c0_84] : memref<128x1024xbf16, #tpu.memory_space<vmem>>, vector<128x1024xbf16>
    %cst_85 = arith.constant dense<0.000000e+00> : vector<2x1024xf32>
    %364 = tpu.matmul %362, %363, %cst_85 {dimension_numbers = #tpu.dot_dimension_numbers<[1], [0], [0], [1], [0, 0, 1, 1], [], []>} : vector<2x128xbf16>, vector<128x1024xbf16>, vector<2x1024xf32> -> vector<2x1024xf32>
    %c5_86 = arith.constant 5 : index
    %c0_87 = arith.constant 0 : index
    %c0_88 = arith.constant 0 : index
    %365 = vector.load %arg0[%c5_86, %c0_87, %c0_88] : memref<8x2x1024xf32, #tpu.memory_space<vmem>>, vector<1x2x1024xf32>
    %366 = vector.shape_cast %365 : vector<1x2x1024xf32> to vector<2x1024xf32>
    %c2_89 = arith.constant 2 : index
    %c0_90 = arith.constant 0 : index
    %c0_91 = arith.constant 0 : index
    %367 = vector.load %arg0[%c2_89, %c0_90, %c0_91] : memref<8x2x1024xf32, #tpu.memory_space<vmem>>, vector<1x2x1024xf32>
    %368 = vector.shape_cast %367 : vector<1x2x1024xf32> to vector<2x1024xf32>
    %369 = vector.extract_strided_slice %366 {offsets = [0, 0], sizes = [2, 512], strides = [1, 1]} : vector<2x1024xf32> to vector<2x512xf32>
    %370 = vector.extract_strided_slice %364 {offsets = [0, 0], sizes = [2, 512], strides = [1, 1]} : vector<2x1024xf32> to vector<2x512xf32>
    %371 = arith.addf %369, %370 : vector<2x512xf32>
    %372 = vector.extract_strided_slice %368 {offsets = [0, 512], sizes = [2, 512], strides = [1, 1]} : vector<2x1024xf32> to vector<2x512xf32>
    %373 = vector.extract_strided_slice %364 {offsets = [0, 512], sizes = [2, 512], strides = [1, 1]} : vector<2x1024xf32> to vector<2x512xf32>
    %374 = arith.addf %372, %373 : vector<2x512xf32>
    %375 = vector.extract_strided_slice %355 {offsets = [0, 0], sizes = [2, 128], strides = [1, 1]} : vector<2x256xf32> to vector<2x128xf32>
    %376 = vector.extract_strided_slice %371 {offsets = [0, 0], sizes = [2, 128], strides = [1, 1]} : vector<2x512xf32> to vector<2x128xf32>
    %377 = arith.negf %376 : vector<2x128xf32>
    %378 = math.exp %377 : vector<2x128xf32>
    %cst_92 = arith.constant 1.000000e+00 : f32
    %379 = vector.broadcast %cst_92 : f32 to vector<2x128xf32>
    %380 = arith.addf %379, %378 : vector<2x128xf32>
    %381 = arith.divf %379, %380 : vector<2x128xf32>
    %382 = vector.extract_strided_slice %371 {offsets = [0, 128], sizes = [2, 128], strides = [1, 1]} : vector<2x512xf32> to vector<2x128xf32>
    %383 = arith.negf %382 : vector<2x128xf32>
    %384 = math.exp %383 : vector<2x128xf32>
    %cst_93 = arith.constant 1.000000e+00 : f32
    %385 = vector.broadcast %cst_93 : f32 to vector<2x128xf32>
    %386 = arith.addf %385, %384 : vector<2x128xf32>
    %387 = arith.divf %385, %386 : vector<2x128xf32>
    %388 = vector.extract_strided_slice %371 {offsets = [0, 256], sizes = [2, 128], strides = [1, 1]} : vector<2x512xf32> to vector<2x128xf32>
    %389 = math.tanh %388 : vector<2x128xf32>
    %390 = vector.extract_strided_slice %371 {offsets = [0, 384], sizes = [2, 128], strides = [1, 1]} : vector<2x512xf32> to vector<2x128xf32>
    %391 = arith.negf %390 : vector<2x128xf32>
    %392 = math.exp %391 : vector<2x128xf32>
    %cst_94 = arith.constant 1.000000e+00 : f32
    %393 = vector.broadcast %cst_94 : f32 to vector<2x128xf32>
    %394 = arith.addf %393, %392 : vector<2x128xf32>
    %395 = arith.divf %393, %394 : vector<2x128xf32>
    %396 = arith.mulf %387, %375 : vector<2x128xf32>
    %397 = arith.mulf %381, %389 : vector<2x128xf32>
    %398 = arith.addf %396, %397 : vector<2x128xf32>
    %399 = math.tanh %398 : vector<2x128xf32>
    %400 = arith.mulf %395, %399 : vector<2x128xf32>
    %401 = vector.extract_strided_slice %355 {offsets = [0, 128], sizes = [2, 128], strides = [1, 1]} : vector<2x256xf32> to vector<2x128xf32>
    %402 = vector.extract_strided_slice %374 {offsets = [0, 0], sizes = [2, 128], strides = [1, 1]} : vector<2x512xf32> to vector<2x128xf32>
    %403 = arith.negf %402 : vector<2x128xf32>
    %404 = math.exp %403 : vector<2x128xf32>
    %cst_95 = arith.constant 1.000000e+00 : f32
    %405 = vector.broadcast %cst_95 : f32 to vector<2x128xf32>
    %406 = arith.addf %405, %404 : vector<2x128xf32>
    %407 = arith.divf %405, %406 : vector<2x128xf32>
    %408 = vector.extract_strided_slice %374 {offsets = [0, 128], sizes = [2, 128], strides = [1, 1]} : vector<2x512xf32> to vector<2x128xf32>
    %409 = arith.negf %408 : vector<2x128xf32>
    %410 = math.exp %409 : vector<2x128xf32>
    %cst_96 = arith.constant 1.000000e+00 : f32
    %411 = vector.broadcast %cst_96 : f32 to vector<2x128xf32>
    %412 = arith.addf %411, %410 : vector<2x128xf32>
    %413 = arith.divf %411, %412 : vector<2x128xf32>
    %414 = vector.extract_strided_slice %374 {offsets = [0, 256], sizes = [2, 128], strides = [1, 1]} : vector<2x512xf32> to vector<2x128xf32>
    %415 = math.tanh %414 : vector<2x128xf32>
    %416 = vector.extract_strided_slice %374 {offsets = [0, 384], sizes = [2, 128], strides = [1, 1]} : vector<2x512xf32> to vector<2x128xf32>
    %417 = arith.negf %416 : vector<2x128xf32>
    %418 = math.exp %417 : vector<2x128xf32>
    %cst_97 = arith.constant 1.000000e+00 : f32
    %419 = vector.broadcast %cst_97 : f32 to vector<2x128xf32>
    %420 = arith.addf %419, %418 : vector<2x128xf32>
    %421 = arith.divf %419, %420 : vector<2x128xf32>
    %422 = arith.mulf %413, %401 : vector<2x128xf32>
    %423 = arith.mulf %407, %415 : vector<2x128xf32>
    %424 = arith.addf %422, %423 : vector<2x128xf32>
    %425 = math.tanh %424 : vector<2x128xf32>
    %426 = arith.mulf %421, %425 : vector<2x128xf32>
    %427 = tpu.concatenate %398, %424 in 1 : vector<2x128xf32>, vector<2x128xf32> -> vector<2x256xf32>
    %428 = tpu.concatenate %400, %426 in 1 : vector<2x128xf32>, vector<2x128xf32> -> vector<2x256xf32>
    %429 = arith.truncf %428 : vector<2x256xf32> to vector<2x256xbf16>
    %c0_98 = arith.constant 0 : index
    %c0_99 = arith.constant 0 : index
    %430 = vector.load %arg2[%c0_98, %c0_99] : memref<256x128xbf16, #tpu.memory_space<vmem>>, vector<256x128xbf16>
    %cst_100 = arith.constant dense<0.000000e+00> : vector<2x128xf32>
    %431 = tpu.matmul %429, %430, %cst_100 {dimension_numbers = #tpu.dot_dimension_numbers<[1], [0], [0], [1], [0, 0, 1, 1], [], []>} : vector<2x256xbf16>, vector<256x128xbf16>, vector<2x128xf32> -> vector<2x128xf32>
    %432 = vector.extract_strided_slice %431 {offsets = [0, 0], sizes = [2, 64], strides = [1, 1]} : vector<2x128xf32> to vector<2x64xf32>
    %433 = vector.extract_strided_slice %431 {offsets = [0, 64], sizes = [2, 64], strides = [1, 1]} : vector<2x128xf32> to vector<2x64xf32>
    %434 = arith.truncf %431 : vector<2x128xf32> to vector<2x128xbf16>
    %c0_101 = arith.constant 0 : index
    %c0_102 = arith.constant 0 : index
    %435 = vector.load %arg1[%c0_101, %c0_102] : memref<128x1024xbf16, #tpu.memory_space<vmem>>, vector<128x1024xbf16>
    %cst_103 = arith.constant dense<0.000000e+00> : vector<2x1024xf32>
    %436 = tpu.matmul %434, %435, %cst_103 {dimension_numbers = #tpu.dot_dimension_numbers<[1], [0], [0], [1], [0, 0, 1, 1], [], []>} : vector<2x128xbf16>, vector<128x1024xbf16>, vector<2x1024xf32> -> vector<2x1024xf32>
    %c6_104 = arith.constant 6 : index
    %c0_105 = arith.constant 0 : index
    %c0_106 = arith.constant 0 : index
    %437 = vector.load %arg0[%c6_104, %c0_105, %c0_106] : memref<8x2x1024xf32, #tpu.memory_space<vmem>>, vector<1x2x1024xf32>
    %438 = vector.shape_cast %437 : vector<1x2x1024xf32> to vector<2x1024xf32>
    %c1_107 = arith.constant 1 : index
    %c0_108 = arith.constant 0 : index
    %c0_109 = arith.constant 0 : index
    %439 = vector.load %arg0[%c1_107, %c0_108, %c0_109] : memref<8x2x1024xf32, #tpu.memory_space<vmem>>, vector<1x2x1024xf32>
    %440 = vector.shape_cast %439 : vector<1x2x1024xf32> to vector<2x1024xf32>
    %441 = vector.extract_strided_slice %438 {offsets = [0, 0], sizes = [2, 512], strides = [1, 1]} : vector<2x1024xf32> to vector<2x512xf32>
    %442 = vector.extract_strided_slice %436 {offsets = [0, 0], sizes = [2, 512], strides = [1, 1]} : vector<2x1024xf32> to vector<2x512xf32>
    %443 = arith.addf %441, %442 : vector<2x512xf32>
    %444 = vector.extract_strided_slice %440 {offsets = [0, 512], sizes = [2, 512], strides = [1, 1]} : vector<2x1024xf32> to vector<2x512xf32>
    %445 = vector.extract_strided_slice %436 {offsets = [0, 512], sizes = [2, 512], strides = [1, 1]} : vector<2x1024xf32> to vector<2x512xf32>
    %446 = arith.addf %444, %445 : vector<2x512xf32>
    %447 = vector.extract_strided_slice %427 {offsets = [0, 0], sizes = [2, 128], strides = [1, 1]} : vector<2x256xf32> to vector<2x128xf32>
    %448 = vector.extract_strided_slice %443 {offsets = [0, 0], sizes = [2, 128], strides = [1, 1]} : vector<2x512xf32> to vector<2x128xf32>
    %449 = arith.negf %448 : vector<2x128xf32>
    %450 = math.exp %449 : vector<2x128xf32>
    %cst_110 = arith.constant 1.000000e+00 : f32
    %451 = vector.broadcast %cst_110 : f32 to vector<2x128xf32>
    %452 = arith.addf %451, %450 : vector<2x128xf32>
    %453 = arith.divf %451, %452 : vector<2x128xf32>
    %454 = vector.extract_strided_slice %443 {offsets = [0, 128], sizes = [2, 128], strides = [1, 1]} : vector<2x512xf32> to vector<2x128xf32>
    %455 = arith.negf %454 : vector<2x128xf32>
    %456 = math.exp %455 : vector<2x128xf32>
    %cst_111 = arith.constant 1.000000e+00 : f32
    %457 = vector.broadcast %cst_111 : f32 to vector<2x128xf32>
    %458 = arith.addf %457, %456 : vector<2x128xf32>
    %459 = arith.divf %457, %458 : vector<2x128xf32>
    %460 = vector.extract_strided_slice %443 {offsets = [0, 256], sizes = [2, 128], strides = [1, 1]} : vector<2x512xf32> to vector<2x128xf32>
    %461 = math.tanh %460 : vector<2x128xf32>
    %462 = vector.extract_strided_slice %443 {offsets = [0, 384], sizes = [2, 128], strides = [1, 1]} : vector<2x512xf32> to vector<2x128xf32>
    %463 = arith.negf %462 : vector<2x128xf32>
    %464 = math.exp %463 : vector<2x128xf32>
    %cst_112 = arith.constant 1.000000e+00 : f32
    %465 = vector.broadcast %cst_112 : f32 to vector<2x128xf32>
    %466 = arith.addf %465, %464 : vector<2x128xf32>
    %467 = arith.divf %465, %466 : vector<2x128xf32>
    %468 = arith.mulf %459, %447 : vector<2x128xf32>
    %469 = arith.mulf %453, %461 : vector<2x128xf32>
    %470 = arith.addf %468, %469 : vector<2x128xf32>
    %471 = math.tanh %470 : vector<2x128xf32>
    %472 = arith.mulf %467, %471 : vector<2x128xf32>
    %473 = vector.extract_strided_slice %427 {offsets = [0, 128], sizes = [2, 128], strides = [1, 1]} : vector<2x256xf32> to vector<2x128xf32>
    %474 = vector.extract_strided_slice %446 {offsets = [0, 0], sizes = [2, 128], strides = [1, 1]} : vector<2x512xf32> to vector<2x128xf32>
    %475 = arith.negf %474 : vector<2x128xf32>
    %476 = math.exp %475 : vector<2x128xf32>
    %cst_113 = arith.constant 1.000000e+00 : f32
    %477 = vector.broadcast %cst_113 : f32 to vector<2x128xf32>
    %478 = arith.addf %477, %476 : vector<2x128xf32>
    %479 = arith.divf %477, %478 : vector<2x128xf32>
    %480 = vector.extract_strided_slice %446 {offsets = [0, 128], sizes = [2, 128], strides = [1, 1]} : vector<2x512xf32> to vector<2x128xf32>
    %481 = arith.negf %480 : vector<2x128xf32>
    %482 = math.exp %481 : vector<2x128xf32>
    %cst_114 = arith.constant 1.000000e+00 : f32
    %483 = vector.broadcast %cst_114 : f32 to vector<2x128xf32>
    %484 = arith.addf %483, %482 : vector<2x128xf32>
    %485 = arith.divf %483, %484 : vector<2x128xf32>
    %486 = vector.extract_strided_slice %446 {offsets = [0, 256], sizes = [2, 128], strides = [1, 1]} : vector<2x512xf32> to vector<2x128xf32>
    %487 = math.tanh %486 : vector<2x128xf32>
    %488 = vector.extract_strided_slice %446 {offsets = [0, 384], sizes = [2, 128], strides = [1, 1]} : vector<2x512xf32> to vector<2x128xf32>
    %489 = arith.negf %488 : vector<2x128xf32>
    %490 = math.exp %489 : vector<2x128xf32>
    %cst_115 = arith.constant 1.000000e+00 : f32
    %491 = vector.broadcast %cst_115 : f32 to vector<2x128xf32>
    %492 = arith.addf %491, %490 : vector<2x128xf32>
    %493 = arith.divf %491, %492 : vector<2x128xf32>
    %494 = arith.mulf %485, %473 : vector<2x128xf32>
    %495 = arith.mulf %479, %487 : vector<2x128xf32>
    %496 = arith.addf %494, %495 : vector<2x128xf32>
    %497 = math.tanh %496 : vector<2x128xf32>
    %498 = arith.mulf %493, %497 : vector<2x128xf32>
    %499 = tpu.concatenate %470, %496 in 1 : vector<2x128xf32>, vector<2x128xf32> -> vector<2x256xf32>
    %500 = tpu.concatenate %472, %498 in 1 : vector<2x128xf32>, vector<2x128xf32> -> vector<2x256xf32>
    %501 = arith.truncf %500 : vector<2x256xf32> to vector<2x256xbf16>
    %c0_116 = arith.constant 0 : index
    %c0_117 = arith.constant 0 : index
    %502 = vector.load %arg2[%c0_116, %c0_117] : memref<256x128xbf16, #tpu.memory_space<vmem>>, vector<256x128xbf16>
    %cst_118 = arith.constant dense<0.000000e+00> : vector<2x128xf32>
    %503 = tpu.matmul %501, %502, %cst_118 {dimension_numbers = #tpu.dot_dimension_numbers<[1], [0], [0], [1], [0, 0, 1, 1], [], []>} : vector<2x256xbf16>, vector<256x128xbf16>, vector<2x128xf32> -> vector<2x128xf32>
    %504 = vector.extract_strided_slice %503 {offsets = [0, 0], sizes = [2, 64], strides = [1, 1]} : vector<2x128xf32> to vector<2x64xf32>
    %505 = vector.extract_strided_slice %503 {offsets = [0, 64], sizes = [2, 64], strides = [1, 1]} : vector<2x128xf32> to vector<2x64xf32>
    %506 = arith.truncf %503 : vector<2x128xf32> to vector<2x128xbf16>
    %c0_119 = arith.constant 0 : index
    %c0_120 = arith.constant 0 : index
    %507 = vector.load %arg1[%c0_119, %c0_120] : memref<128x1024xbf16, #tpu.memory_space<vmem>>, vector<128x1024xbf16>
    %cst_121 = arith.constant dense<0.000000e+00> : vector<2x1024xf32>
    %508 = tpu.matmul %506, %507, %cst_121 {dimension_numbers = #tpu.dot_dimension_numbers<[1], [0], [0], [1], [0, 0, 1, 1], [], []>} : vector<2x128xbf16>, vector<128x1024xbf16>, vector<2x1024xf32> -> vector<2x1024xf32>
    %c7_122 = arith.constant 7 : index
    %c0_123 = arith.constant 0 : index
    %c0_124 = arith.constant 0 : index
    %509 = vector.load %arg0[%c7_122, %c0_123, %c0_124] : memref<8x2x1024xf32, #tpu.memory_space<vmem>>, vector<1x2x1024xf32>
    %510 = vector.shape_cast %509 : vector<1x2x1024xf32> to vector<2x1024xf32>
    %c0_125 = arith.constant 0 : index
    %c0_126 = arith.constant 0 : index
    %c0_127 = arith.constant 0 : index
    %511 = vector.load %arg0[%c0_125, %c0_126, %c0_127] : memref<8x2x1024xf32, #tpu.memory_space<vmem>>, vector<1x2x1024xf32>
    %512 = vector.shape_cast %511 : vector<1x2x1024xf32> to vector<2x1024xf32>
    %513 = vector.extract_strided_slice %510 {offsets = [0, 0], sizes = [2, 512], strides = [1, 1]} : vector<2x1024xf32> to vector<2x512xf32>
    %514 = vector.extract_strided_slice %508 {offsets = [0, 0], sizes = [2, 512], strides = [1, 1]} : vector<2x1024xf32> to vector<2x512xf32>
    %515 = arith.addf %513, %514 : vector<2x512xf32>
    %516 = vector.extract_strided_slice %512 {offsets = [0, 512], sizes = [2, 512], strides = [1, 1]} : vector<2x1024xf32> to vector<2x512xf32>
    %517 = vector.extract_strided_slice %508 {offsets = [0, 512], sizes = [2, 512], strides = [1, 1]} : vector<2x1024xf32> to vector<2x512xf32>
    %518 = arith.addf %516, %517 : vector<2x512xf32>
    %519 = vector.extract_strided_slice %499 {offsets = [0, 0], sizes = [2, 128], strides = [1, 1]} : vector<2x256xf32> to vector<2x128xf32>
    %520 = vector.extract_strided_slice %515 {offsets = [0, 0], sizes = [2, 128], strides = [1, 1]} : vector<2x512xf32> to vector<2x128xf32>
    %521 = arith.negf %520 : vector<2x128xf32>
    %522 = math.exp %521 : vector<2x128xf32>
    %cst_128 = arith.constant 1.000000e+00 : f32
    %523 = vector.broadcast %cst_128 : f32 to vector<2x128xf32>
    %524 = arith.addf %523, %522 : vector<2x128xf32>
    %525 = arith.divf %523, %524 : vector<2x128xf32>
    %526 = vector.extract_strided_slice %515 {offsets = [0, 128], sizes = [2, 128], strides = [1, 1]} : vector<2x512xf32> to vector<2x128xf32>
    %527 = arith.negf %526 : vector<2x128xf32>
    %528 = math.exp %527 : vector<2x128xf32>
    %cst_129 = arith.constant 1.000000e+00 : f32
    %529 = vector.broadcast %cst_129 : f32 to vector<2x128xf32>
    %530 = arith.addf %529, %528 : vector<2x128xf32>
    %531 = arith.divf %529, %530 : vector<2x128xf32>
    %532 = vector.extract_strided_slice %515 {offsets = [0, 256], sizes = [2, 128], strides = [1, 1]} : vector<2x512xf32> to vector<2x128xf32>
    %533 = math.tanh %532 : vector<2x128xf32>
    %534 = vector.extract_strided_slice %515 {offsets = [0, 384], sizes = [2, 128], strides = [1, 1]} : vector<2x512xf32> to vector<2x128xf32>
    %535 = arith.negf %534 : vector<2x128xf32>
    %536 = math.exp %535 : vector<2x128xf32>
    %cst_130 = arith.constant 1.000000e+00 : f32
    %537 = vector.broadcast %cst_130 : f32 to vector<2x128xf32>
    %538 = arith.addf %537, %536 : vector<2x128xf32>
    %539 = arith.divf %537, %538 : vector<2x128xf32>
    %540 = arith.mulf %531, %519 : vector<2x128xf32>
    %541 = arith.mulf %525, %533 : vector<2x128xf32>
    %542 = arith.addf %540, %541 : vector<2x128xf32>
    %543 = math.tanh %542 : vector<2x128xf32>
    %544 = arith.mulf %539, %543 : vector<2x128xf32>
    %545 = vector.extract_strided_slice %499 {offsets = [0, 128], sizes = [2, 128], strides = [1, 1]} : vector<2x256xf32> to vector<2x128xf32>
    %546 = vector.extract_strided_slice %518 {offsets = [0, 0], sizes = [2, 128], strides = [1, 1]} : vector<2x512xf32> to vector<2x128xf32>
    %547 = arith.negf %546 : vector<2x128xf32>
    %548 = math.exp %547 : vector<2x128xf32>
    %cst_131 = arith.constant 1.000000e+00 : f32
    %549 = vector.broadcast %cst_131 : f32 to vector<2x128xf32>
    %550 = arith.addf %549, %548 : vector<2x128xf32>
    %551 = arith.divf %549, %550 : vector<2x128xf32>
    %552 = vector.extract_strided_slice %518 {offsets = [0, 128], sizes = [2, 128], strides = [1, 1]} : vector<2x512xf32> to vector<2x128xf32>
    %553 = arith.negf %552 : vector<2x128xf32>
    %554 = math.exp %553 : vector<2x128xf32>
    %cst_132 = arith.constant 1.000000e+00 : f32
    %555 = vector.broadcast %cst_132 : f32 to vector<2x128xf32>
    %556 = arith.addf %555, %554 : vector<2x128xf32>
    %557 = arith.divf %555, %556 : vector<2x128xf32>
    %558 = vector.extract_strided_slice %518 {offsets = [0, 256], sizes = [2, 128], strides = [1, 1]} : vector<2x512xf32> to vector<2x128xf32>
    %559 = math.tanh %558 : vector<2x128xf32>
    %560 = vector.extract_strided_slice %518 {offsets = [0, 384], sizes = [2, 128], strides = [1, 1]} : vector<2x512xf32> to vector<2x128xf32>
    %561 = arith.negf %560 : vector<2x128xf32>
    %562 = math.exp %561 : vector<2x128xf32>
    %cst_133 = arith.constant 1.000000e+00 : f32
    %563 = vector.broadcast %cst_133 : f32 to vector<2x128xf32>
    %564 = arith.addf %563, %562 : vector<2x128xf32>
    %565 = arith.divf %563, %564 : vector<2x128xf32>
    %566 = arith.mulf %557, %545 : vector<2x128xf32>
    %567 = arith.mulf %551, %559 : vector<2x128xf32>
    %568 = arith.addf %566, %567 : vector<2x128xf32>
    %569 = math.tanh %568 : vector<2x128xf32>
    %570 = arith.mulf %565, %569 : vector<2x128xf32>
    %571 = tpu.concatenate %544, %570 in 1 : vector<2x128xf32>, vector<2x128xf32> -> vector<2x256xf32>
    %572 = arith.truncf %571 : vector<2x256xf32> to vector<2x256xbf16>
    %c0_134 = arith.constant 0 : index
    %c0_135 = arith.constant 0 : index
    %573 = vector.load %arg2[%c0_134, %c0_135] : memref<256x128xbf16, #tpu.memory_space<vmem>>, vector<256x128xbf16>
    %cst_136 = arith.constant dense<0.000000e+00> : vector<2x128xf32>
    %574 = tpu.matmul %572, %573, %cst_136 {dimension_numbers = #tpu.dot_dimension_numbers<[1], [0], [0], [1], [0, 0, 1, 1], [], []>} : vector<2x256xbf16>, vector<256x128xbf16>, vector<2x128xf32> -> vector<2x128xf32>
    %575 = vector.extract_strided_slice %574 {offsets = [0, 0], sizes = [2, 64], strides = [1, 1]} : vector<2x128xf32> to vector<2x64xf32>
    %576 = vector.extract_strided_slice %574 {offsets = [0, 64], sizes = [2, 64], strides = [1, 1]} : vector<2x128xf32> to vector<2x64xf32>
    %577 = tpu.concatenate %72, %576 in 1 : vector<2x64xf32>, vector<2x64xf32> -> vector<2x128xf32>
    %c0_137 = arith.constant 0 : index
    %c0_138 = arith.constant 0 : index
    %c0_139 = arith.constant 0 : index
    %578 = vector.load %arg3[%c0_137, %c0_138, %c0_139] : memref<8x2x128xf32, #tpu.memory_space<vmem>>, vector<1x2x128xf32>
    %579 = vector.shape_cast %578 : vector<1x2x128xf32> to vector<2x128xf32>
    %580 = vector.shape_cast %577 : vector<2x128xf32> to vector<1x2x128xf32>
    tpu.vector_store %arg3[%c0_137, %c0_138, %c0_139], %580 {strides = array<i32>} : memref<8x2x128xf32, #tpu.memory_space<vmem>>, vector<1x2x128xf32>,
    %581 = tpu.concatenate %144, %505 in 1 : vector<2x64xf32>, vector<2x64xf32> -> vector<2x128xf32>
    %c1_140 = arith.constant 1 : index
    %c0_141 = arith.constant 0 : index
    %c0_142 = arith.constant 0 : index
    %582 = vector.load %arg3[%c1_140, %c0_141, %c0_142] : memref<8x2x128xf32, #tpu.memory_space<vmem>>, vector<1x2x128xf32>
    %583 = vector.shape_cast %582 : vector<1x2x128xf32> to vector<2x128xf32>
    %584 = vector.shape_cast %581 : vector<2x128xf32> to vector<1x2x128xf32>
    tpu.vector_store %arg3[%c1_140, %c0_141, %c0_142], %584 {strides = array<i32>} : memref<8x2x128xf32, #tpu.memory_space<vmem>>, vector<1x2x128xf32>,
    %585 = tpu.concatenate %216, %433 in 1 : vector<2x64xf32>, vector<2x64xf32> -> vector<2x128xf32>
    %c2_143 = arith.constant 2 : index
    %c0_144 = arith.constant 0 : index
    %c0_145 = arith.constant 0 : index
    %586 = vector.load %arg3[%c2_143, %c0_144, %c0_145] : memref<8x2x128xf32, #tpu.memory_space<vmem>>, vector<1x2x128xf32>
    %587 = vector.shape_cast %586 : vector<1x2x128xf32> to vector<2x128xf32>
    %588 = vector.shape_cast %585 : vector<2x128xf32> to vector<1x2x128xf32>
    tpu.vector_store %arg3[%c2_143, %c0_144, %c0_145], %588 {strides = array<i32>} : memref<8x2x128xf32, #tpu.memory_space<vmem>>, vector<1x2x128xf32>,
    %589 = tpu.concatenate %288, %361 in 1 : vector<2x64xf32>, vector<2x64xf32> -> vector<2x128xf32>
    %c3_146 = arith.constant 3 : index
    %c0_147 = arith.constant 0 : index
    %c0_148 = arith.constant 0 : index
    %590 = vector.load %arg3[%c3_146, %c0_147, %c0_148] : memref<8x2x128xf32, #tpu.memory_space<vmem>>, vector<1x2x128xf32>
    %591 = vector.shape_cast %590 : vector<1x2x128xf32> to vector<2x128xf32>
    %592 = vector.shape_cast %589 : vector<2x128xf32> to vector<1x2x128xf32>
    tpu.vector_store %arg3[%c3_146, %c0_147, %c0_148], %592 {strides = array<i32>} : memref<8x2x128xf32, #tpu.memory_space<vmem>>, vector<1x2x128xf32>,
    %593 = tpu.concatenate %360, %289 in 1 : vector<2x64xf32>, vector<2x64xf32> -> vector<2x128xf32>
    %c4_149 = arith.constant 4 : index
    %c0_150 = arith.constant 0 : index
    %c0_151 = arith.constant 0 : index
    %594 = vector.load %arg3[%c4_149, %c0_150, %c0_151] : memref<8x2x128xf32, #tpu.memory_space<vmem>>, vector<1x2x128xf32>
    %595 = vector.shape_cast %594 : vector<1x2x128xf32> to vector<2x128xf32>
    %596 = vector.shape_cast %593 : vector<2x128xf32> to vector<1x2x128xf32>
    tpu.vector_store %arg3[%c4_149, %c0_150, %c0_151], %596 {strides = array<i32>} : memref<8x2x128xf32, #tpu.memory_space<vmem>>, vector<1x2x128xf32>,
    %597 = tpu.concatenate %432, %217 in 1 : vector<2x64xf32>, vector<2x64xf32> -> vector<2x128xf32>
    %c5_152 = arith.constant 5 : index
    %c0_153 = arith.constant 0 : index
    %c0_154 = arith.constant 0 : index
    %598 = vector.load %arg3[%c5_152, %c0_153, %c0_154] : memref<8x2x128xf32, #tpu.memory_space<vmem>>, vector<1x2x128xf32>
    %599 = vector.shape_cast %598 : vector<1x2x128xf32> to vector<2x128xf32>
    %600 = vector.shape_cast %597 : vector<2x128xf32> to vector<1x2x128xf32>
    tpu.vector_store %arg3[%c5_152, %c0_153, %c0_154], %600 {strides = array<i32>} : memref<8x2x128xf32, #tpu.memory_space<vmem>>, vector<1x2x128xf32>,
    %601 = tpu.concatenate %504, %145 in 1 : vector<2x64xf32>, vector<2x64xf32> -> vector<2x128xf32>
    %c6_155 = arith.constant 6 : index
    %c0_156 = arith.constant 0 : index
    %c0_157 = arith.constant 0 : index
    %602 = vector.load %arg3[%c6_155, %c0_156, %c0_157] : memref<8x2x128xf32, #tpu.memory_space<vmem>>, vector<1x2x128xf32>
    %603 = vector.shape_cast %602 : vector<1x2x128xf32> to vector<2x128xf32>
    %604 = vector.shape_cast %601 : vector<2x128xf32> to vector<1x2x128xf32>
    tpu.vector_store %arg3[%c6_155, %c0_156, %c0_157], %604 {strides = array<i32>} : memref<8x2x128xf32, #tpu.memory_space<vmem>>, vector<1x2x128xf32>,
    %605 = tpu.concatenate %575, %73 in 1 : vector<2x64xf32>, vector<2x64xf32> -> vector<2x128xf32>
    %c7_158 = arith.constant 7 : index
    %c0_159 = arith.constant 0 : index
    %c0_160 = arith.constant 0 : index
    %606 = vector.load %arg3[%c7_158, %c0_159, %c0_160] : memref<8x2x128xf32, #tpu.memory_space<vmem>>, vector<1x2x128xf32>
    %607 = vector.shape_cast %606 : vector<1x2x128xf32> to vector<2x128xf32>
    %608 = vector.shape_cast %605 : vector<2x128xf32> to vector<1x2x128xf32>
    tpu.vector_store %arg3[%c7_158, %c0_159, %c0_160], %608 {strides = array<i32>} : memref<8x2x128xf32, #tpu.memory_space<vmem>>, vector<1x2x128xf32>,
    return
  }
}

module attributes {stable_mosaic.version = 11 : i64} {
  func.func @_bilstm_layer_kernel(%arg0: memref<8x2x1024xf32, #tpu.memory_space<vmem>>, %arg1: memref<128x1024xbf16, #tpu.memory_space<vmem>>, %arg2: memref<256x128xbf16, #tpu.memory_space<vmem>>, %arg3: memref<8x2x128xf32, #tpu.memory_space<vmem>>) attributes {dimension_semantics = [], scalar_prefetch = 0 : i64, scratch_operands = 0 : i64, tpu.core_type = #tpu.core_type<tc>} {
    %cst = arith.constant 0.000000e+00 : f32
    %0 = vector.broadcast %cst : f32 to vector<2x128xf32>
    %cst_0 = arith.constant 0.000000e+00 : f32
    %1 = vector.broadcast %cst_0 : f32 to vector<2x256xf32>
    %2 = arith.truncf %0 : vector<2x128xf32> to vector<2x128xbf16>
    %c0 = arith.constant 0 : index
    %c0_1 = arith.constant 0 : index
    %3 = vector.load %arg1[%c0, %c0_1] : memref<128x1024xbf16, #tpu.memory_space<vmem>>, vector<128x1024xbf16>
    %cst_2 = arith.constant dense<0.000000e+00> : vector<2x1024xf32>
    %4 = tpu.matmul %2, %3, %cst_2 {dimension_numbers = #tpu.dot_dimension_numbers<[1], [0], [0], [1], [0, 0, 1, 1], [], []>} : vector<2x128xbf16>, vector<128x1024xbf16>, vector<2x1024xf32> -> vector<2x1024xf32>
    %c0_3 = arith.constant 0 : index
    %c0_4 = arith.constant 0 : index
    %c0_5 = arith.constant 0 : index
    %5 = vector.load %arg0[%c0_3, %c0_4, %c0_5] : memref<8x2x1024xf32, #tpu.memory_space<vmem>>, vector<1x2x1024xf32>
    %6 = vector.shape_cast %5 : vector<1x2x1024xf32> to vector<2x1024xf32>
    %c7 = arith.constant 7 : index
    %c0_6 = arith.constant 0 : index
    %c0_7 = arith.constant 0 : index
    %7 = vector.load %arg0[%c7, %c0_6, %c0_7] : memref<8x2x1024xf32, #tpu.memory_space<vmem>>, vector<1x2x1024xf32>
    %8 = vector.shape_cast %7 : vector<1x2x1024xf32> to vector<2x1024xf32>
    %9 = vector.extract_strided_slice %6 {offsets = [0, 0], sizes = [2, 512], strides = [1, 1]} : vector<2x1024xf32> to vector<2x512xf32>
    %10 = vector.extract_strided_slice %4 {offsets = [0, 0], sizes = [2, 512], strides = [1, 1]} : vector<2x1024xf32> to vector<2x512xf32>
    %11 = arith.addf %9, %10 : vector<2x512xf32>
    %12 = vector.extract_strided_slice %8 {offsets = [0, 512], sizes = [2, 512], strides = [1, 1]} : vector<2x1024xf32> to vector<2x512xf32>
    %13 = vector.extract_strided_slice %4 {offsets = [0, 512], sizes = [2, 512], strides = [1, 1]} : vector<2x1024xf32> to vector<2x512xf32>
    %14 = arith.addf %12, %13 : vector<2x512xf32>
    %15 = vector.extract_strided_slice %1 {offsets = [0, 0], sizes = [2, 128], strides = [1, 1]} : vector<2x256xf32> to vector<2x128xf32>
    %16 = vector.extract_strided_slice %11 {offsets = [0, 0], sizes = [2, 128], strides = [1, 1]} : vector<2x512xf32> to vector<2x128xf32>
    %17 = arith.negf %16 : vector<2x128xf32>
    %18 = math.exp %17 : vector<2x128xf32>
    %cst_8 = arith.constant 1.000000e+00 : f32
    %19 = vector.broadcast %cst_8 : f32 to vector<2x128xf32>
    %20 = arith.addf %19, %18 : vector<2x128xf32>
    %21 = arith.divf %19, %20 : vector<2x128xf32>
    %22 = vector.extract_strided_slice %11 {offsets = [0, 128], sizes = [2, 128], strides = [1, 1]} : vector<2x512xf32> to vector<2x128xf32>
    %23 = arith.negf %22 : vector<2x128xf32>
    %24 = math.exp %23 : vector<2x128xf32>
    %cst_9 = arith.constant 1.000000e+00 : f32
    %25 = vector.broadcast %cst_9 : f32 to vector<2x128xf32>
    %26 = arith.addf %25, %24 : vector<2x128xf32>
    %27 = arith.divf %25, %26 : vector<2x128xf32>
    %28 = vector.extract_strided_slice %11 {offsets = [0, 256], sizes = [2, 128], strides = [1, 1]} : vector<2x512xf32> to vector<2x128xf32>
    %29 = math.tanh %28 : vector<2x128xf32>
    %30 = vector.extract_strided_slice %11 {offsets = [0, 384], sizes = [2, 128], strides = [1, 1]} : vector<2x512xf32> to vector<2x128xf32>
    %31 = arith.negf %30 : vector<2x128xf32>
    %32 = math.exp %31 : vector<2x128xf32>
    %cst_10 = arith.constant 1.000000e+00 : f32
    %33 = vector.broadcast %cst_10 : f32 to vector<2x128xf32>
    %34 = arith.addf %33, %32 : vector<2x128xf32>
    %35 = arith.divf %33, %34 : vector<2x128xf32>
    %36 = arith.mulf %27, %15 : vector<2x128xf32>
    %37 = arith.mulf %21, %29 : vector<2x128xf32>
    %38 = arith.addf %36, %37 : vector<2x128xf32>
    %39 = math.tanh %38 : vector<2x128xf32>
    %40 = arith.mulf %35, %39 : vector<2x128xf32>
    %41 = vector.extract_strided_slice %1 {offsets = [0, 128], sizes = [2, 128], strides = [1, 1]} : vector<2x256xf32> to vector<2x128xf32>
    %42 = vector.extract_strided_slice %14 {offsets = [0, 0], sizes = [2, 128], strides = [1, 1]} : vector<2x512xf32> to vector<2x128xf32>
    %43 = arith.negf %42 : vector<2x128xf32>
    %44 = math.exp %43 : vector<2x128xf32>
    %cst_11 = arith.constant 1.000000e+00 : f32
    %45 = vector.broadcast %cst_11 : f32 to vector<2x128xf32>
    %46 = arith.addf %45, %44 : vector<2x128xf32>
    %47 = arith.divf %45, %46 : vector<2x128xf32>
    %48 = vector.extract_strided_slice %14 {offsets = [0, 128], sizes = [2, 128], strides = [1, 1]} : vector<2x512xf32> to vector<2x128xf32>
    %49 = arith.negf %48 : vector<2x128xf32>
    %50 = math.exp %49 : vector<2x128xf32>
    %cst_12 = arith.constant 1.000000e+00 : f32
    %51 = vector.broadcast %cst_12 : f32 to vector<2x128xf32>
    %52 = arith.addf %51, %50 : vector<2x128xf32>
    %53 = arith.divf %51, %52 : vector<2x128xf32>
    %54 = vector.extract_strided_slice %14 {offsets = [0, 256], sizes = [2, 128], strides = [1, 1]} : vector<2x512xf32> to vector<2x128xf32>
    %55 = math.tanh %54 : vector<2x128xf32>
    %56 = vector.extract_strided_slice %14 {offsets = [0, 384], sizes = [2, 128], strides = [1, 1]} : vector<2x512xf32> to vector<2x128xf32>
    %57 = arith.negf %56 : vector<2x128xf32>
    %58 = math.exp %57 : vector<2x128xf32>
    %cst_13 = arith.constant 1.000000e+00 : f32
    %59 = vector.broadcast %cst_13 : f32 to vector<2x128xf32>
    %60 = arith.addf %59, %58 : vector<2x128xf32>
    %61 = arith.divf %59, %60 : vector<2x128xf32>
    %62 = arith.mulf %53, %41 : vector<2x128xf32>
    %63 = arith.mulf %47, %55 : vector<2x128xf32>
    %64 = arith.addf %62, %63 : vector<2x128xf32>
    %65 = math.tanh %64 : vector<2x128xf32>
    %66 = arith.mulf %61, %65 : vector<2x128xf32>
    %67 = tpu.concatenate %38, %64 in 1 : vector<2x128xf32>, vector<2x128xf32> -> vector<2x256xf32>
    %68 = tpu.concatenate %40, %66 in 1 : vector<2x128xf32>, vector<2x128xf32> -> vector<2x256xf32>
    %69 = arith.truncf %68 : vector<2x256xf32> to vector<2x256xbf16>
    %c0_14 = arith.constant 0 : index
    %c0_15 = arith.constant 0 : index
    %70 = vector.load %arg2[%c0_14, %c0_15] : memref<256x128xbf16, #tpu.memory_space<vmem>>, vector<256x128xbf16>
    %cst_16 = arith.constant dense<0.000000e+00> : vector<2x128xf32>
    %71 = tpu.matmul %69, %70, %cst_16 {dimension_numbers = #tpu.dot_dimension_numbers<[1], [0], [0], [1], [0, 0, 1, 1], [], []>} : vector<2x256xbf16>, vector<256x128xbf16>, vector<2x128xf32> -> vector<2x128xf32>
    %72 = vector.extract_strided_slice %71 {offsets = [0, 0], sizes = [2, 64], strides = [1, 1]} : vector<2x128xf32> to vector<2x64xf32>
    %73 = vector.extract_strided_slice %71 {offsets = [0, 64], sizes = [2, 64], strides = [1, 1]} : vector<2x128xf32> to vector<2x64xf32>
    %74 = arith.truncf %71 : vector<2x128xf32> to vector<2x128xbf16>
    %c0_17 = arith.constant 0 : index
    %c0_18 = arith.constant 0 : index
    %75 = vector.load %arg1[%c0_17, %c0_18] : memref<128x1024xbf16, #tpu.memory_space<vmem>>, vector<128x1024xbf16>
    %cst_19 = arith.constant dense<0.000000e+00> : vector<2x1024xf32>
    %76 = tpu.matmul %74, %75, %cst_19 {dimension_numbers = #tpu.dot_dimension_numbers<[1], [0], [0], [1], [0, 0, 1, 1], [], []>} : vector<2x128xbf16>, vector<128x1024xbf16>, vector<2x1024xf32> -> vector<2x1024xf32>
    %c1 = arith.constant 1 : index
    %c0_20 = arith.constant 0 : index
    %c0_21 = arith.constant 0 : index
    %77 = vector.load %arg0[%c1, %c0_20, %c0_21] : memref<8x2x1024xf32, #tpu.memory_space<vmem>>, vector<1x2x1024xf32>
    %78 = vector.shape_cast %77 : vector<1x2x1024xf32> to vector<2x1024xf32>
    %c6 = arith.constant 6 : index
    %c0_22 = arith.constant 0 : index
    %c0_23 = arith.constant 0 : index
    %79 = vector.load %arg0[%c6, %c0_22, %c0_23] : memref<8x2x1024xf32, #tpu.memory_space<vmem>>, vector<1x2x1024xf32>
    %80 = vector.shape_cast %79 : vector<1x2x1024xf32> to vector<2x1024xf32>
    %81 = vector.extract_strided_slice %78 {offsets = [0, 0], sizes = [2, 512], strides = [1, 1]} : vector<2x1024xf32> to vector<2x512xf32>
    %82 = vector.extract_strided_slice %76 {offsets = [0, 0], sizes = [2, 512], strides = [1, 1]} : vector<2x1024xf32> to vector<2x512xf32>
    %83 = arith.addf %81, %82 : vector<2x512xf32>
    %84 = vector.extract_strided_slice %80 {offsets = [0, 512], sizes = [2, 512], strides = [1, 1]} : vector<2x1024xf32> to vector<2x512xf32>
    %85 = vector.extract_strided_slice %76 {offsets = [0, 512], sizes = [2, 512], strides = [1, 1]} : vector<2x1024xf32> to vector<2x512xf32>
    %86 = arith.addf %84, %85 : vector<2x512xf32>
    %87 = vector.extract_strided_slice %67 {offsets = [0, 0], sizes = [2, 128], strides = [1, 1]} : vector<2x256xf32> to vector<2x128xf32>
    %88 = vector.extract_strided_slice %83 {offsets = [0, 0], sizes = [2, 128], strides = [1, 1]} : vector<2x512xf32> to vector<2x128xf32>
    %89 = arith.negf %88 : vector<2x128xf32>
    %90 = math.exp %89 : vector<2x128xf32>
    %cst_24 = arith.constant 1.000000e+00 : f32
    %91 = vector.broadcast %cst_24 : f32 to vector<2x128xf32>
    %92 = arith.addf %91, %90 : vector<2x128xf32>
    %93 = arith.divf %91, %92 : vector<2x128xf32>
    %94 = vector.extract_strided_slice %83 {offsets = [0, 128], sizes = [2, 128], strides = [1, 1]} : vector<2x512xf32> to vector<2x128xf32>
    %95 = arith.negf %94 : vector<2x128xf32>
    %96 = math.exp %95 : vector<2x128xf32>
    %cst_25 = arith.constant 1.000000e+00 : f32
    %97 = vector.broadcast %cst_25 : f32 to vector<2x128xf32>
    %98 = arith.addf %97, %96 : vector<2x128xf32>
    %99 = arith.divf %97, %98 : vector<2x128xf32>
    %100 = vector.extract_strided_slice %83 {offsets = [0, 256], sizes = [2, 128], strides = [1, 1]} : vector<2x512xf32> to vector<2x128xf32>
    %101 = math.tanh %100 : vector<2x128xf32>
    %102 = vector.extract_strided_slice %83 {offsets = [0, 384], sizes = [2, 128], strides = [1, 1]} : vector<2x512xf32> to vector<2x128xf32>
    %103 = arith.negf %102 : vector<2x128xf32>
    %104 = math.exp %103 : vector<2x128xf32>
    %cst_26 = arith.constant 1.000000e+00 : f32
    %105 = vector.broadcast %cst_26 : f32 to vector<2x128xf32>
    %106 = arith.addf %105, %104 : vector<2x128xf32>
    %107 = arith.divf %105, %106 : vector<2x128xf32>
    %108 = arith.mulf %99, %87 : vector<2x128xf32>
    %109 = arith.mulf %93, %101 : vector<2x128xf32>
    %110 = arith.addf %108, %109 : vector<2x128xf32>
    %111 = math.tanh %110 : vector<2x128xf32>
    %112 = arith.mulf %107, %111 : vector<2x128xf32>
    %113 = vector.extract_strided_slice %67 {offsets = [0, 128], sizes = [2, 128], strides = [1, 1]} : vector<2x256xf32> to vector<2x128xf32>
    %114 = vector.extract_strided_slice %86 {offsets = [0, 0], sizes = [2, 128], strides = [1, 1]} : vector<2x512xf32> to vector<2x128xf32>
    %115 = arith.negf %114 : vector<2x128xf32>
    %116 = math.exp %115 : vector<2x128xf32>
    %cst_27 = arith.constant 1.000000e+00 : f32
    %117 = vector.broadcast %cst_27 : f32 to vector<2x128xf32>
    %118 = arith.addf %117, %116 : vector<2x128xf32>
    %119 = arith.divf %117, %118 : vector<2x128xf32>
    %120 = vector.extract_strided_slice %86 {offsets = [0, 128], sizes = [2, 128], strides = [1, 1]} : vector<2x512xf32> to vector<2x128xf32>
    %121 = arith.negf %120 : vector<2x128xf32>
    %122 = math.exp %121 : vector<2x128xf32>
    %cst_28 = arith.constant 1.000000e+00 : f32
    %123 = vector.broadcast %cst_28 : f32 to vector<2x128xf32>
    %124 = arith.addf %123, %122 : vector<2x128xf32>
    %125 = arith.divf %123, %124 : vector<2x128xf32>
    %126 = vector.extract_strided_slice %86 {offsets = [0, 256], sizes = [2, 128], strides = [1, 1]} : vector<2x512xf32> to vector<2x128xf32>
    %127 = math.tanh %126 : vector<2x128xf32>
    %128 = vector.extract_strided_slice %86 {offsets = [0, 384], sizes = [2, 128], strides = [1, 1]} : vector<2x512xf32> to vector<2x128xf32>
    %129 = arith.negf %128 : vector<2x128xf32>
    %130 = math.exp %129 : vector<2x128xf32>
    %cst_29 = arith.constant 1.000000e+00 : f32
    %131 = vector.broadcast %cst_29 : f32 to vector<2x128xf32>
    %132 = arith.addf %131, %130 : vector<2x128xf32>
    %133 = arith.divf %131, %132 : vector<2x128xf32>
    %134 = arith.mulf %125, %113 : vector<2x128xf32>
    %135 = arith.mulf %119, %127 : vector<2x128xf32>
    %136 = arith.addf %134, %135 : vector<2x128xf32>
    %137 = math.tanh %136 : vector<2x128xf32>
    %138 = arith.mulf %133, %137 : vector<2x128xf32>
    %139 = tpu.concatenate %110, %136 in 1 : vector<2x128xf32>, vector<2x128xf32> -> vector<2x256xf32>
    %140 = tpu.concatenate %112, %138 in 1 : vector<2x128xf32>, vector<2x128xf32> -> vector<2x256xf32>
    %141 = arith.truncf %140 : vector<2x256xf32> to vector<2x256xbf16>
    %c0_30 = arith.constant 0 : index
    %c0_31 = arith.constant 0 : index
    %142 = vector.load %arg2[%c0_30, %c0_31] : memref<256x128xbf16, #tpu.memory_space<vmem>>, vector<256x128xbf16>
    %cst_32 = arith.constant dense<0.000000e+00> : vector<2x128xf32>
    %143 = tpu.matmul %141, %142, %cst_32 {dimension_numbers = #tpu.dot_dimension_numbers<[1], [0], [0], [1], [0, 0, 1, 1], [], []>} : vector<2x256xbf16>, vector<256x128xbf16>, vector<2x128xf32> -> vector<2x128xf32>
    %144 = vector.extract_strided_slice %143 {offsets = [0, 0], sizes = [2, 64], strides = [1, 1]} : vector<2x128xf32> to vector<2x64xf32>
    %145 = vector.extract_strided_slice %143 {offsets = [0, 64], sizes = [2, 64], strides = [1, 1]} : vector<2x128xf32> to vector<2x64xf32>
    %146 = arith.truncf %143 : vector<2x128xf32> to vector<2x128xbf16>
    %c0_33 = arith.constant 0 : index
    %c0_34 = arith.constant 0 : index
    %147 = vector.load %arg1[%c0_33, %c0_34] : memref<128x1024xbf16, #tpu.memory_space<vmem>>, vector<128x1024xbf16>
    %cst_35 = arith.constant dense<0.000000e+00> : vector<2x1024xf32>
    %148 = tpu.matmul %146, %147, %cst_35 {dimension_numbers = #tpu.dot_dimension_numbers<[1], [0], [0], [1], [0, 0, 1, 1], [], []>} : vector<2x128xbf16>, vector<128x1024xbf16>, vector<2x1024xf32> -> vector<2x1024xf32>
    %c2 = arith.constant 2 : index
    %c0_36 = arith.constant 0 : index
    %c0_37 = arith.constant 0 : index
    %149 = vector.load %arg0[%c2, %c0_36, %c0_37] : memref<8x2x1024xf32, #tpu.memory_space<vmem>>, vector<1x2x1024xf32>
    %150 = vector.shape_cast %149 : vector<1x2x1024xf32> to vector<2x1024xf32>
    %c5 = arith.constant 5 : index
    %c0_38 = arith.constant 0 : index
    %c0_39 = arith.constant 0 : index
    %151 = vector.load %arg0[%c5, %c0_38, %c0_39] : memref<8x2x1024xf32, #tpu.memory_space<vmem>>, vector<1x2x1024xf32>
    %152 = vector.shape_cast %151 : vector<1x2x1024xf32> to vector<2x1024xf32>
    %153 = vector.extract_strided_slice %150 {offsets = [0, 0], sizes = [2, 512], strides = [1, 1]} : vector<2x1024xf32> to vector<2x512xf32>
    %154 = vector.extract_strided_slice %148 {offsets = [0, 0], sizes = [2, 512], strides = [1, 1]} : vector<2x1024xf32> to vector<2x512xf32>
    %155 = arith.addf %153, %154 : vector<2x512xf32>
    %156 = vector.extract_strided_slice %152 {offsets = [0, 512], sizes = [2, 512], strides = [1, 1]} : vector<2x1024xf32> to vector<2x512xf32>
    %157 = vector.extract_strided_slice %148 {offsets = [0, 512], sizes = [2, 512], strides = [1, 1]} : vector<2x1024xf32> to vector<2x512xf32>
    %158 = arith.addf %156, %157 : vector<2x512xf32>
    %159 = vector.extract_strided_slice %139 {offsets = [0, 0], sizes = [2, 128], strides = [1, 1]} : vector<2x256xf32> to vector<2x128xf32>
    %160 = vector.extract_strided_slice %155 {offsets = [0, 0], sizes = [2, 128], strides = [1, 1]} : vector<2x512xf32> to vector<2x128xf32>
    %161 = arith.negf %160 : vector<2x128xf32>
    %162 = math.exp %161 : vector<2x128xf32>
    %cst_40 = arith.constant 1.000000e+00 : f32
    %163 = vector.broadcast %cst_40 : f32 to vector<2x128xf32>
    %164 = arith.addf %163, %162 : vector<2x128xf32>
    %165 = arith.divf %163, %164 : vector<2x128xf32>
    %166 = vector.extract_strided_slice %155 {offsets = [0, 128], sizes = [2, 128], strides = [1, 1]} : vector<2x512xf32> to vector<2x128xf32>
    %167 = arith.negf %166 : vector<2x128xf32>
    %168 = math.exp %167 : vector<2x128xf32>
    %cst_41 = arith.constant 1.000000e+00 : f32
    %169 = vector.broadcast %cst_41 : f32 to vector<2x128xf32>
    %170 = arith.addf %169, %168 : vector<2x128xf32>
    %171 = arith.divf %169, %170 : vector<2x128xf32>
    %172 = vector.extract_strided_slice %155 {offsets = [0, 256], sizes = [2, 128], strides = [1, 1]} : vector<2x512xf32> to vector<2x128xf32>
    %173 = math.tanh %172 : vector<2x128xf32>
    %174 = vector.extract_strided_slice %155 {offsets = [0, 384], sizes = [2, 128], strides = [1, 1]} : vector<2x512xf32> to vector<2x128xf32>
    %175 = arith.negf %174 : vector<2x128xf32>
    %176 = math.exp %175 : vector<2x128xf32>
    %cst_42 = arith.constant 1.000000e+00 : f32
    %177 = vector.broadcast %cst_42 : f32 to vector<2x128xf32>
    %178 = arith.addf %177, %176 : vector<2x128xf32>
    %179 = arith.divf %177, %178 : vector<2x128xf32>
    %180 = arith.mulf %171, %159 : vector<2x128xf32>
    %181 = arith.mulf %165, %173 : vector<2x128xf32>
    %182 = arith.addf %180, %181 : vector<2x128xf32>
    %183 = math.tanh %182 : vector<2x128xf32>
    %184 = arith.mulf %179, %183 : vector<2x128xf32>
    %185 = vector.extract_strided_slice %139 {offsets = [0, 128], sizes = [2, 128], strides = [1, 1]} : vector<2x256xf32> to vector<2x128xf32>
    %186 = vector.extract_strided_slice %158 {offsets = [0, 0], sizes = [2, 128], strides = [1, 1]} : vector<2x512xf32> to vector<2x128xf32>
    %187 = arith.negf %186 : vector<2x128xf32>
    %188 = math.exp %187 : vector<2x128xf32>
    %cst_43 = arith.constant 1.000000e+00 : f32
    %189 = vector.broadcast %cst_43 : f32 to vector<2x128xf32>
    %190 = arith.addf %189, %188 : vector<2x128xf32>
    %191 = arith.divf %189, %190 : vector<2x128xf32>
    %192 = vector.extract_strided_slice %158 {offsets = [0, 128], sizes = [2, 128], strides = [1, 1]} : vector<2x512xf32> to vector<2x128xf32>
    %193 = arith.negf %192 : vector<2x128xf32>
    %194 = math.exp %193 : vector<2x128xf32>
    %cst_44 = arith.constant 1.000000e+00 : f32
    %195 = vector.broadcast %cst_44 : f32 to vector<2x128xf32>
    %196 = arith.addf %195, %194 : vector<2x128xf32>
    %197 = arith.divf %195, %196 : vector<2x128xf32>
    %198 = vector.extract_strided_slice %158 {offsets = [0, 256], sizes = [2, 128], strides = [1, 1]} : vector<2x512xf32> to vector<2x128xf32>
    %199 = math.tanh %198 : vector<2x128xf32>
    %200 = vector.extract_strided_slice %158 {offsets = [0, 384], sizes = [2, 128], strides = [1, 1]} : vector<2x512xf32> to vector<2x128xf32>
    %201 = arith.negf %200 : vector<2x128xf32>
    %202 = math.exp %201 : vector<2x128xf32>
    %cst_45 = arith.constant 1.000000e+00 : f32
    %203 = vector.broadcast %cst_45 : f32 to vector<2x128xf32>
    %204 = arith.addf %203, %202 : vector<2x128xf32>
    %205 = arith.divf %203, %204 : vector<2x128xf32>
    %206 = arith.mulf %197, %185 : vector<2x128xf32>
    %207 = arith.mulf %191, %199 : vector<2x128xf32>
    %208 = arith.addf %206, %207 : vector<2x128xf32>
    %209 = math.tanh %208 : vector<2x128xf32>
    %210 = arith.mulf %205, %209 : vector<2x128xf32>
    %211 = tpu.concatenate %182, %208 in 1 : vector<2x128xf32>, vector<2x128xf32> -> vector<2x256xf32>
    %212 = tpu.concatenate %184, %210 in 1 : vector<2x128xf32>, vector<2x128xf32> -> vector<2x256xf32>
    %213 = arith.truncf %212 : vector<2x256xf32> to vector<2x256xbf16>
    %c0_46 = arith.constant 0 : index
    %c0_47 = arith.constant 0 : index
    %214 = vector.load %arg2[%c0_46, %c0_47] : memref<256x128xbf16, #tpu.memory_space<vmem>>, vector<256x128xbf16>
    %cst_48 = arith.constant dense<0.000000e+00> : vector<2x128xf32>
    %215 = tpu.matmul %213, %214, %cst_48 {dimension_numbers = #tpu.dot_dimension_numbers<[1], [0], [0], [1], [0, 0, 1, 1], [], []>} : vector<2x256xbf16>, vector<256x128xbf16>, vector<2x128xf32> -> vector<2x128xf32>
    %216 = vector.extract_strided_slice %215 {offsets = [0, 0], sizes = [2, 64], strides = [1, 1]} : vector<2x128xf32> to vector<2x64xf32>
    %217 = vector.extract_strided_slice %215 {offsets = [0, 64], sizes = [2, 64], strides = [1, 1]} : vector<2x128xf32> to vector<2x64xf32>
    %218 = arith.truncf %215 : vector<2x128xf32> to vector<2x128xbf16>
    %c0_49 = arith.constant 0 : index
    %c0_50 = arith.constant 0 : index
    %219 = vector.load %arg1[%c0_49, %c0_50] : memref<128x1024xbf16, #tpu.memory_space<vmem>>, vector<128x1024xbf16>
    %cst_51 = arith.constant dense<0.000000e+00> : vector<2x1024xf32>
    %220 = tpu.matmul %218, %219, %cst_51 {dimension_numbers = #tpu.dot_dimension_numbers<[1], [0], [0], [1], [0, 0, 1, 1], [], []>} : vector<2x128xbf16>, vector<128x1024xbf16>, vector<2x1024xf32> -> vector<2x1024xf32>
    %c3 = arith.constant 3 : index
    %c0_52 = arith.constant 0 : index
    %c0_53 = arith.constant 0 : index
    %221 = vector.load %arg0[%c3, %c0_52, %c0_53] : memref<8x2x1024xf32, #tpu.memory_space<vmem>>, vector<1x2x1024xf32>
    %222 = vector.shape_cast %221 : vector<1x2x1024xf32> to vector<2x1024xf32>
    %c4 = arith.constant 4 : index
    %c0_54 = arith.constant 0 : index
    %c0_55 = arith.constant 0 : index
    %223 = vector.load %arg0[%c4, %c0_54, %c0_55] : memref<8x2x1024xf32, #tpu.memory_space<vmem>>, vector<1x2x1024xf32>
    %224 = vector.shape_cast %223 : vector<1x2x1024xf32> to vector<2x1024xf32>
    %225 = vector.extract_strided_slice %222 {offsets = [0, 0], sizes = [2, 512], strides = [1, 1]} : vector<2x1024xf32> to vector<2x512xf32>
    %226 = vector.extract_strided_slice %220 {offsets = [0, 0], sizes = [2, 512], strides = [1, 1]} : vector<2x1024xf32> to vector<2x512xf32>
    %227 = arith.addf %225, %226 : vector<2x512xf32>
    %228 = vector.extract_strided_slice %224 {offsets = [0, 512], sizes = [2, 512], strides = [1, 1]} : vector<2x1024xf32> to vector<2x512xf32>
    %229 = vector.extract_strided_slice %220 {offsets = [0, 512], sizes = [2, 512], strides = [1, 1]} : vector<2x1024xf32> to vector<2x512xf32>
    %230 = arith.addf %228, %229 : vector<2x512xf32>
    %231 = vector.extract_strided_slice %211 {offsets = [0, 0], sizes = [2, 128], strides = [1, 1]} : vector<2x256xf32> to vector<2x128xf32>
    %232 = vector.extract_strided_slice %227 {offsets = [0, 0], sizes = [2, 128], strides = [1, 1]} : vector<2x512xf32> to vector<2x128xf32>
    %233 = arith.negf %232 : vector<2x128xf32>
    %234 = math.exp %233 : vector<2x128xf32>
    %cst_56 = arith.constant 1.000000e+00 : f32
    %235 = vector.broadcast %cst_56 : f32 to vector<2x128xf32>
    %236 = arith.addf %235, %234 : vector<2x128xf32>
    %237 = arith.divf %235, %236 : vector<2x128xf32>
    %238 = vector.extract_strided_slice %227 {offsets = [0, 128], sizes = [2, 128], strides = [1, 1]} : vector<2x512xf32> to vector<2x128xf32>
    %239 = arith.negf %238 : vector<2x128xf32>
    %240 = math.exp %239 : vector<2x128xf32>
    %cst_57 = arith.constant 1.000000e+00 : f32
    %241 = vector.broadcast %cst_57 : f32 to vector<2x128xf32>
    %242 = arith.addf %241, %240 : vector<2x128xf32>
    %243 = arith.divf %241, %242 : vector<2x128xf32>
    %244 = vector.extract_strided_slice %227 {offsets = [0, 256], sizes = [2, 128], strides = [1, 1]} : vector<2x512xf32> to vector<2x128xf32>
    %245 = math.tanh %244 : vector<2x128xf32>
    %246 = vector.extract_strided_slice %227 {offsets = [0, 384], sizes = [2, 128], strides = [1, 1]} : vector<2x512xf32> to vector<2x128xf32>
    %247 = arith.negf %246 : vector<2x128xf32>
    %248 = math.exp %247 : vector<2x128xf32>
    %cst_58 = arith.constant 1.000000e+00 : f32
    %249 = vector.broadcast %cst_58 : f32 to vector<2x128xf32>
    %250 = arith.addf %249, %248 : vector<2x128xf32>
    %251 = arith.divf %249, %250 : vector<2x128xf32>
    %252 = arith.mulf %243, %231 : vector<2x128xf32>
    %253 = arith.mulf %237, %245 : vector<2x128xf32>
    %254 = arith.addf %252, %253 : vector<2x128xf32>
    %255 = math.tanh %254 : vector<2x128xf32>
    %256 = arith.mulf %251, %255 : vector<2x128xf32>
    %257 = vector.extract_strided_slice %211 {offsets = [0, 128], sizes = [2, 128], strides = [1, 1]} : vector<2x256xf32> to vector<2x128xf32>
    %258 = vector.extract_strided_slice %230 {offsets = [0, 0], sizes = [2, 128], strides = [1, 1]} : vector<2x512xf32> to vector<2x128xf32>
    %259 = arith.negf %258 : vector<2x128xf32>
    %260 = math.exp %259 : vector<2x128xf32>
    %cst_59 = arith.constant 1.000000e+00 : f32
    %261 = vector.broadcast %cst_59 : f32 to vector<2x128xf32>
    %262 = arith.addf %261, %260 : vector<2x128xf32>
    %263 = arith.divf %261, %262 : vector<2x128xf32>
    %264 = vector.extract_strided_slice %230 {offsets = [0, 128], sizes = [2, 128], strides = [1, 1]} : vector<2x512xf32> to vector<2x128xf32>
    %265 = arith.negf %264 : vector<2x128xf32>
    %266 = math.exp %265 : vector<2x128xf32>
    %cst_60 = arith.constant 1.000000e+00 : f32
    %267 = vector.broadcast %cst_60 : f32 to vector<2x128xf32>
    %268 = arith.addf %267, %266 : vector<2x128xf32>
    %269 = arith.divf %267, %268 : vector<2x128xf32>
    %270 = vector.extract_strided_slice %230 {offsets = [0, 256], sizes = [2, 128], strides = [1, 1]} : vector<2x512xf32> to vector<2x128xf32>
    %271 = math.tanh %270 : vector<2x128xf32>
    %272 = vector.extract_strided_slice %230 {offsets = [0, 384], sizes = [2, 128], strides = [1, 1]} : vector<2x512xf32> to vector<2x128xf32>
    %273 = arith.negf %272 : vector<2x128xf32>
    %274 = math.exp %273 : vector<2x128xf32>
    %cst_61 = arith.constant 1.000000e+00 : f32
    %275 = vector.broadcast %cst_61 : f32 to vector<2x128xf32>
    %276 = arith.addf %275, %274 : vector<2x128xf32>
    %277 = arith.divf %275, %276 : vector<2x128xf32>
    %278 = arith.mulf %269, %257 : vector<2x128xf32>
    %279 = arith.mulf %263, %271 : vector<2x128xf32>
    %280 = arith.addf %278, %279 : vector<2x128xf32>
    %281 = math.tanh %280 : vector<2x128xf32>
    %282 = arith.mulf %277, %281 : vector<2x128xf32>
    %283 = tpu.concatenate %254, %280 in 1 : vector<2x128xf32>, vector<2x128xf32> -> vector<2x256xf32>
    %284 = tpu.concatenate %256, %282 in 1 : vector<2x128xf32>, vector<2x128xf32> -> vector<2x256xf32>
    %285 = arith.truncf %284 : vector<2x256xf32> to vector<2x256xbf16>
    %c0_62 = arith.constant 0 : index
    %c0_63 = arith.constant 0 : index
    %286 = vector.load %arg2[%c0_62, %c0_63] : memref<256x128xbf16, #tpu.memory_space<vmem>>, vector<256x128xbf16>
    %cst_64 = arith.constant dense<0.000000e+00> : vector<2x128xf32>
    %287 = tpu.matmul %285, %286, %cst_64 {dimension_numbers = #tpu.dot_dimension_numbers<[1], [0], [0], [1], [0, 0, 1, 1], [], []>} : vector<2x256xbf16>, vector<256x128xbf16>, vector<2x128xf32> -> vector<2x128xf32>
    %288 = vector.extract_strided_slice %287 {offsets = [0, 0], sizes = [2, 64], strides = [1, 1]} : vector<2x128xf32> to vector<2x64xf32>
    %289 = vector.extract_strided_slice %287 {offsets = [0, 64], sizes = [2, 64], strides = [1, 1]} : vector<2x128xf32> to vector<2x64xf32>
    %290 = arith.truncf %287 : vector<2x128xf32> to vector<2x128xbf16>
    %c0_65 = arith.constant 0 : index
    %c0_66 = arith.constant 0 : index
    %291 = vector.load %arg1[%c0_65, %c0_66] : memref<128x1024xbf16, #tpu.memory_space<vmem>>, vector<128x1024xbf16>
    %cst_67 = arith.constant dense<0.000000e+00> : vector<2x1024xf32>
    %292 = tpu.matmul %290, %291, %cst_67 {dimension_numbers = #tpu.dot_dimension_numbers<[1], [0], [0], [1], [0, 0, 1, 1], [], []>} : vector<2x128xbf16>, vector<128x1024xbf16>, vector<2x1024xf32> -> vector<2x1024xf32>
    %c4_68 = arith.constant 4 : index
    %c0_69 = arith.constant 0 : index
    %c0_70 = arith.constant 0 : index
    %293 = vector.load %arg0[%c4_68, %c0_69, %c0_70] : memref<8x2x1024xf32, #tpu.memory_space<vmem>>, vector<1x2x1024xf32>
    %294 = vector.shape_cast %293 : vector<1x2x1024xf32> to vector<2x1024xf32>
    %c3_71 = arith.constant 3 : index
    %c0_72 = arith.constant 0 : index
    %c0_73 = arith.constant 0 : index
    %295 = vector.load %arg0[%c3_71, %c0_72, %c0_73] : memref<8x2x1024xf32, #tpu.memory_space<vmem>>, vector<1x2x1024xf32>
    %296 = vector.shape_cast %295 : vector<1x2x1024xf32> to vector<2x1024xf32>
    %297 = vector.extract_strided_slice %294 {offsets = [0, 0], sizes = [2, 512], strides = [1, 1]} : vector<2x1024xf32> to vector<2x512xf32>
    %298 = vector.extract_strided_slice %292 {offsets = [0, 0], sizes = [2, 512], strides = [1, 1]} : vector<2x1024xf32> to vector<2x512xf32>
    %299 = arith.addf %297, %298 : vector<2x512xf32>
    %300 = vector.extract_strided_slice %296 {offsets = [0, 512], sizes = [2, 512], strides = [1, 1]} : vector<2x1024xf32> to vector<2x512xf32>
    %301 = vector.extract_strided_slice %292 {offsets = [0, 512], sizes = [2, 512], strides = [1, 1]} : vector<2x1024xf32> to vector<2x512xf32>
    %302 = arith.addf %300, %301 : vector<2x512xf32>
    %303 = vector.extract_strided_slice %283 {offsets = [0, 0], sizes = [2, 128], strides = [1, 1]} : vector<2x256xf32> to vector<2x128xf32>
    %304 = vector.extract_strided_slice %299 {offsets = [0, 0], sizes = [2, 128], strides = [1, 1]} : vector<2x512xf32> to vector<2x128xf32>
    %305 = arith.negf %304 : vector<2x128xf32>
    %306 = math.exp %305 : vector<2x128xf32>
    %cst_74 = arith.constant 1.000000e+00 : f32
    %307 = vector.broadcast %cst_74 : f32 to vector<2x128xf32>
    %308 = arith.addf %307, %306 : vector<2x128xf32>
    %309 = arith.divf %307, %308 : vector<2x128xf32>
    %310 = vector.extract_strided_slice %299 {offsets = [0, 128], sizes = [2, 128], strides = [1, 1]} : vector<2x512xf32> to vector<2x128xf32>
    %311 = arith.negf %310 : vector<2x128xf32>
    %312 = math.exp %311 : vector<2x128xf32>
    %cst_75 = arith.constant 1.000000e+00 : f32
    %313 = vector.broadcast %cst_75 : f32 to vector<2x128xf32>
    %314 = arith.addf %313, %312 : vector<2x128xf32>
    %315 = arith.divf %313, %314 : vector<2x128xf32>
    %316 = vector.extract_strided_slice %299 {offsets = [0, 256], sizes = [2, 128], strides = [1, 1]} : vector<2x512xf32> to vector<2x128xf32>
    %317 = math.tanh %316 : vector<2x128xf32>
    %318 = vector.extract_strided_slice %299 {offsets = [0, 384], sizes = [2, 128], strides = [1, 1]} : vector<2x512xf32> to vector<2x128xf32>
    %319 = arith.negf %318 : vector<2x128xf32>
    %320 = math.exp %319 : vector<2x128xf32>
    %cst_76 = arith.constant 1.000000e+00 : f32
    %321 = vector.broadcast %cst_76 : f32 to vector<2x128xf32>
    %322 = arith.addf %321, %320 : vector<2x128xf32>
    %323 = arith.divf %321, %322 : vector<2x128xf32>
    %324 = arith.mulf %315, %303 : vector<2x128xf32>
    %325 = arith.mulf %309, %317 : vector<2x128xf32>
    %326 = arith.addf %324, %325 : vector<2x128xf32>
    %327 = math.tanh %326 : vector<2x128xf32>
    %328 = arith.mulf %323, %327 : vector<2x128xf32>
    %329 = vector.extract_strided_slice %283 {offsets = [0, 128], sizes = [2, 128], strides = [1, 1]} : vector<2x256xf32> to vector<2x128xf32>
    %330 = vector.extract_strided_slice %302 {offsets = [0, 0], sizes = [2, 128], strides = [1, 1]} : vector<2x512xf32> to vector<2x128xf32>
    %331 = arith.negf %330 : vector<2x128xf32>
    %332 = math.exp %331 : vector<2x128xf32>
    %cst_77 = arith.constant 1.000000e+00 : f32
    %333 = vector.broadcast %cst_77 : f32 to vector<2x128xf32>
    %334 = arith.addf %333, %332 : vector<2x128xf32>
    %335 = arith.divf %333, %334 : vector<2x128xf32>
    %336 = vector.extract_strided_slice %302 {offsets = [0, 128], sizes = [2, 128], strides = [1, 1]} : vector<2x512xf32> to vector<2x128xf32>
    %337 = arith.negf %336 : vector<2x128xf32>
    %338 = math.exp %337 : vector<2x128xf32>
    %cst_78 = arith.constant 1.000000e+00 : f32
    %339 = vector.broadcast %cst_78 : f32 to vector<2x128xf32>
    %340 = arith.addf %339, %338 : vector<2x128xf32>
    %341 = arith.divf %339, %340 : vector<2x128xf32>
    %342 = vector.extract_strided_slice %302 {offsets = [0, 256], sizes = [2, 128], strides = [1, 1]} : vector<2x512xf32> to vector<2x128xf32>
    %343 = math.tanh %342 : vector<2x128xf32>
    %344 = vector.extract_strided_slice %302 {offsets = [0, 384], sizes = [2, 128], strides = [1, 1]} : vector<2x512xf32> to vector<2x128xf32>
    %345 = arith.negf %344 : vector<2x128xf32>
    %346 = math.exp %345 : vector<2x128xf32>
    %cst_79 = arith.constant 1.000000e+00 : f32
    %347 = vector.broadcast %cst_79 : f32 to vector<2x128xf32>
    %348 = arith.addf %347, %346 : vector<2x128xf32>
    %349 = arith.divf %347, %348 : vector<2x128xf32>
    %350 = arith.mulf %341, %329 : vector<2x128xf32>
    %351 = arith.mulf %335, %343 : vector<2x128xf32>
    %352 = arith.addf %350, %351 : vector<2x128xf32>
    %353 = math.tanh %352 : vector<2x128xf32>
    %354 = arith.mulf %349, %353 : vector<2x128xf32>
    %355 = tpu.concatenate %326, %352 in 1 : vector<2x128xf32>, vector<2x128xf32> -> vector<2x256xf32>
    %356 = tpu.concatenate %328, %354 in 1 : vector<2x128xf32>, vector<2x128xf32> -> vector<2x256xf32>
    %357 = arith.truncf %356 : vector<2x256xf32> to vector<2x256xbf16>
    %c0_80 = arith.constant 0 : index
    %c0_81 = arith.constant 0 : index
    %358 = vector.load %arg2[%c0_80, %c0_81] : memref<256x128xbf16, #tpu.memory_space<vmem>>, vector<256x128xbf16>
    %cst_82 = arith.constant dense<0.000000e+00> : vector<2x128xf32>
    %359 = tpu.matmul %357, %358, %cst_82 {dimension_numbers = #tpu.dot_dimension_numbers<[1], [0], [0], [1], [0, 0, 1, 1], [], []>} : vector<2x256xbf16>, vector<256x128xbf16>, vector<2x128xf32> -> vector<2x128xf32>
    %360 = vector.extract_strided_slice %359 {offsets = [0, 0], sizes = [2, 64], strides = [1, 1]} : vector<2x128xf32> to vector<2x64xf32>
    %361 = vector.extract_strided_slice %359 {offsets = [0, 64], sizes = [2, 64], strides = [1, 1]} : vector<2x128xf32> to vector<2x64xf32>
    %362 = arith.truncf %359 : vector<2x128xf32> to vector<2x128xbf16>
    %c0_83 = arith.constant 0 : index
    %c0_84 = arith.constant 0 : index
    %363 = vector.load %arg1[%c0_83, %c0_84] : memref<128x1024xbf16, #tpu.memory_space<vmem>>, vector<128x1024xbf16>
    %cst_85 = arith.constant dense<0.000000e+00> : vector<2x1024xf32>
    %364 = tpu.matmul %362, %363, %cst_85 {dimension_numbers = #tpu.dot_dimension_numbers<[1], [0], [0], [1], [0, 0, 1, 1], [], []>} : vector<2x128xbf16>, vector<128x1024xbf16>, vector<2x1024xf32> -> vector<2x1024xf32>
    %c5_86 = arith.constant 5 : index
    %c0_87 = arith.constant 0 : index
    %c0_88 = arith.constant 0 : index
    %365 = vector.load %arg0[%c5_86, %c0_87, %c0_88] : memref<8x2x1024xf32, #tpu.memory_space<vmem>>, vector<1x2x1024xf32>
    %366 = vector.shape_cast %365 : vector<1x2x1024xf32> to vector<2x1024xf32>
    %c2_89 = arith.constant 2 : index
    %c0_90 = arith.constant 0 : index
    %c0_91 = arith.constant 0 : index
    %367 = vector.load %arg0[%c2_89, %c0_90, %c0_91] : memref<8x2x1024xf32, #tpu.memory_space<vmem>>, vector<1x2x1024xf32>
    %368 = vector.shape_cast %367 : vector<1x2x1024xf32> to vector<2x1024xf32>
    %369 = vector.extract_strided_slice %366 {offsets = [0, 0], sizes = [2, 512], strides = [1, 1]} : vector<2x1024xf32> to vector<2x512xf32>
    %370 = vector.extract_strided_slice %364 {offsets = [0, 0], sizes = [2, 512], strides = [1, 1]} : vector<2x1024xf32> to vector<2x512xf32>
    %371 = arith.addf %369, %370 : vector<2x512xf32>
    %372 = vector.extract_strided_slice %368 {offsets = [0, 512], sizes = [2, 512], strides = [1, 1]} : vector<2x1024xf32> to vector<2x512xf32>
    %373 = vector.extract_strided_slice %364 {offsets = [0, 512], sizes = [2, 512], strides = [1, 1]} : vector<2x1024xf32> to vector<2x512xf32>
    %374 = arith.addf %372, %373 : vector<2x512xf32>
    %375 = vector.extract_strided_slice %355 {offsets = [0, 0], sizes = [2, 128], strides = [1, 1]} : vector<2x256xf32> to vector<2x128xf32>
    %376 = vector.extract_strided_slice %371 {offsets = [0, 0], sizes = [2, 128], strides = [1, 1]} : vector<2x512xf32> to vector<2x128xf32>
    %377 = arith.negf %376 : vector<2x128xf32>
    %378 = math.exp %377 : vector<2x128xf32>
    %cst_92 = arith.constant 1.000000e+00 : f32
    %379 = vector.broadcast %cst_92 : f32 to vector<2x128xf32>
    %380 = arith.addf %379, %378 : vector<2x128xf32>
    %381 = arith.divf %379, %380 : vector<2x128xf32>
    %382 = vector.extract_strided_slice %371 {offsets = [0, 128], sizes = [2, 128], strides = [1, 1]} : vector<2x512xf32> to vector<2x128xf32>
    %383 = arith.negf %382 : vector<2x128xf32>
    %384 = math.exp %383 : vector<2x128xf32>
    %cst_93 = arith.constant 1.000000e+00 : f32
    %385 = vector.broadcast %cst_93 : f32 to vector<2x128xf32>
    %386 = arith.addf %385, %384 : vector<2x128xf32>
    %387 = arith.divf %385, %386 : vector<2x128xf32>
    %388 = vector.extract_strided_slice %371 {offsets = [0, 256], sizes = [2, 128], strides = [1, 1]} : vector<2x512xf32> to vector<2x128xf32>
    %389 = math.tanh %388 : vector<2x128xf32>
    %390 = vector.extract_strided_slice %371 {offsets = [0, 384], sizes = [2, 128], strides = [1, 1]} : vector<2x512xf32> to vector<2x128xf32>
    %391 = arith.negf %390 : vector<2x128xf32>
    %392 = math.exp %391 : vector<2x128xf32>
    %cst_94 = arith.constant 1.000000e+00 : f32
    %393 = vector.broadcast %cst_94 : f32 to vector<2x128xf32>
    %394 = arith.addf %393, %392 : vector<2x128xf32>
    %395 = arith.divf %393, %394 : vector<2x128xf32>
    %396 = arith.mulf %387, %375 : vector<2x128xf32>
    %397 = arith.mulf %381, %389 : vector<2x128xf32>
    %398 = arith.addf %396, %397 : vector<2x128xf32>
    %399 = math.tanh %398 : vector<2x128xf32>
    %400 = arith.mulf %395, %399 : vector<2x128xf32>
    %401 = vector.extract_strided_slice %355 {offsets = [0, 128], sizes = [2, 128], strides = [1, 1]} : vector<2x256xf32> to vector<2x128xf32>
    %402 = vector.extract_strided_slice %374 {offsets = [0, 0], sizes = [2, 128], strides = [1, 1]} : vector<2x512xf32> to vector<2x128xf32>
    %403 = arith.negf %402 : vector<2x128xf32>
    %404 = math.exp %403 : vector<2x128xf32>
    %cst_95 = arith.constant 1.000000e+00 : f32
    %405 = vector.broadcast %cst_95 : f32 to vector<2x128xf32>
    %406 = arith.addf %405, %404 : vector<2x128xf32>
    %407 = arith.divf %405, %406 : vector<2x128xf32>
    %408 = vector.extract_strided_slice %374 {offsets = [0, 128], sizes = [2, 128], strides = [1, 1]} : vector<2x512xf32> to vector<2x128xf32>
    %409 = arith.negf %408 : vector<2x128xf32>
    %410 = math.exp %409 : vector<2x128xf32>
    %cst_96 = arith.constant 1.000000e+00 : f32
    %411 = vector.broadcast %cst_96 : f32 to vector<2x128xf32>
    %412 = arith.addf %411, %410 : vector<2x128xf32>
    %413 = arith.divf %411, %412 : vector<2x128xf32>
    %414 = vector.extract_strided_slice %374 {offsets = [0, 256], sizes = [2, 128], strides = [1, 1]} : vector<2x512xf32> to vector<2x128xf32>
    %415 = math.tanh %414 : vector<2x128xf32>
    %416 = vector.extract_strided_slice %374 {offsets = [0, 384], sizes = [2, 128], strides = [1, 1]} : vector<2x512xf32> to vector<2x128xf32>
    %417 = arith.negf %416 : vector<2x128xf32>
    %418 = math.exp %417 : vector<2x128xf32>
    %cst_97 = arith.constant 1.000000e+00 : f32
    %419 = vector.broadcast %cst_97 : f32 to vector<2x128xf32>
    %420 = arith.addf %419, %418 : vector<2x128xf32>
    %421 = arith.divf %419, %420 : vector<2x128xf32>
    %422 = arith.mulf %413, %401 : vector<2x128xf32>
    %423 = arith.mulf %407, %415 : vector<2x128xf32>
    %424 = arith.addf %422, %423 : vector<2x128xf32>
    %425 = math.tanh %424 : vector<2x128xf32>
    %426 = arith.mulf %421, %425 : vector<2x128xf32>
    %427 = tpu.concatenate %398, %424 in 1 : vector<2x128xf32>, vector<2x128xf32> -> vector<2x256xf32>
    %428 = tpu.concatenate %400, %426 in 1 : vector<2x128xf32>, vector<2x128xf32> -> vector<2x256xf32>
    %429 = arith.truncf %428 : vector<2x256xf32> to vector<2x256xbf16>
    %c0_98 = arith.constant 0 : index
    %c0_99 = arith.constant 0 : index
    %430 = vector.load %arg2[%c0_98, %c0_99] : memref<256x128xbf16, #tpu.memory_space<vmem>>, vector<256x128xbf16>
    %cst_100 = arith.constant dense<0.000000e+00> : vector<2x128xf32>
    %431 = tpu.matmul %429, %430, %cst_100 {dimension_numbers = #tpu.dot_dimension_numbers<[1], [0], [0], [1], [0, 0, 1, 1], [], []>} : vector<2x256xbf16>, vector<256x128xbf16>, vector<2x128xf32> -> vector<2x128xf32>
    %432 = vector.extract_strided_slice %431 {offsets = [0, 0], sizes = [2, 64], strides = [1, 1]} : vector<2x128xf32> to vector<2x64xf32>
    %433 = vector.extract_strided_slice %431 {offsets = [0, 64], sizes = [2, 64], strides = [1, 1]} : vector<2x128xf32> to vector<2x64xf32>
    %434 = arith.truncf %431 : vector<2x128xf32> to vector<2x128xbf16>
    %c0_101 = arith.constant 0 : index
    %c0_102 = arith.constant 0 : index
    %435 = vector.load %arg1[%c0_101, %c0_102] : memref<128x1024xbf16, #tpu.memory_space<vmem>>, vector<128x1024xbf16>
    %cst_103 = arith.constant dense<0.000000e+00> : vector<2x1024xf32>
    %436 = tpu.matmul %434, %435, %cst_103 {dimension_numbers = #tpu.dot_dimension_numbers<[1], [0], [0], [1], [0, 0, 1, 1], [], []>} : vector<2x128xbf16>, vector<128x1024xbf16>, vector<2x1024xf32> -> vector<2x1024xf32>
    %c6_104 = arith.constant 6 : index
    %c0_105 = arith.constant 0 : index
    %c0_106 = arith.constant 0 : index
    %437 = vector.load %arg0[%c6_104, %c0_105, %c0_106] : memref<8x2x1024xf32, #tpu.memory_space<vmem>>, vector<1x2x1024xf32>
    %438 = vector.shape_cast %437 : vector<1x2x1024xf32> to vector<2x1024xf32>
    %c1_107 = arith.constant 1 : index
    %c0_108 = arith.constant 0 : index
    %c0_109 = arith.constant 0 : index
    %439 = vector.load %arg0[%c1_107, %c0_108, %c0_109] : memref<8x2x1024xf32, #tpu.memory_space<vmem>>, vector<1x2x1024xf32>
    %440 = vector.shape_cast %439 : vector<1x2x1024xf32> to vector<2x1024xf32>
    %441 = vector.extract_strided_slice %438 {offsets = [0, 0], sizes = [2, 512], strides = [1, 1]} : vector<2x1024xf32> to vector<2x512xf32>
    %442 = vector.extract_strided_slice %436 {offsets = [0, 0], sizes = [2, 512], strides = [1, 1]} : vector<2x1024xf32> to vector<2x512xf32>
    %443 = arith.addf %441, %442 : vector<2x512xf32>
    %444 = vector.extract_strided_slice %440 {offsets = [0, 512], sizes = [2, 512], strides = [1, 1]} : vector<2x1024xf32> to vector<2x512xf32>
    %445 = vector.extract_strided_slice %436 {offsets = [0, 512], sizes = [2, 512], strides = [1, 1]} : vector<2x1024xf32> to vector<2x512xf32>
    %446 = arith.addf %444, %445 : vector<2x512xf32>
    %447 = vector.extract_strided_slice %427 {offsets = [0, 0], sizes = [2, 128], strides = [1, 1]} : vector<2x256xf32> to vector<2x128xf32>
    %448 = vector.extract_strided_slice %443 {offsets = [0, 0], sizes = [2, 128], strides = [1, 1]} : vector<2x512xf32> to vector<2x128xf32>
    %449 = arith.negf %448 : vector<2x128xf32>
    %450 = math.exp %449 : vector<2x128xf32>
    %cst_110 = arith.constant 1.000000e+00 : f32
    %451 = vector.broadcast %cst_110 : f32 to vector<2x128xf32>
    %452 = arith.addf %451, %450 : vector<2x128xf32>
    %453 = arith.divf %451, %452 : vector<2x128xf32>
    %454 = vector.extract_strided_slice %443 {offsets = [0, 128], sizes = [2, 128], strides = [1, 1]} : vector<2x512xf32> to vector<2x128xf32>
    %455 = arith.negf %454 : vector<2x128xf32>
    %456 = math.exp %455 : vector<2x128xf32>
    %cst_111 = arith.constant 1.000000e+00 : f32
    %457 = vector.broadcast %cst_111 : f32 to vector<2x128xf32>
    %458 = arith.addf %457, %456 : vector<2x128xf32>
    %459 = arith.divf %457, %458 : vector<2x128xf32>
    %460 = vector.extract_strided_slice %443 {offsets = [0, 256], sizes = [2, 128], strides = [1, 1]} : vector<2x512xf32> to vector<2x128xf32>
    %461 = math.tanh %460 : vector<2x128xf32>
    %462 = vector.extract_strided_slice %443 {offsets = [0, 384], sizes = [2, 128], strides = [1, 1]} : vector<2x512xf32> to vector<2x128xf32>
    %463 = arith.negf %462 : vector<2x128xf32>
    %464 = math.exp %463 : vector<2x128xf32>
    %cst_112 = arith.constant 1.000000e+00 : f32
    %465 = vector.broadcast %cst_112 : f32 to vector<2x128xf32>
    %466 = arith.addf %465, %464 : vector<2x128xf32>
    %467 = arith.divf %465, %466 : vector<2x128xf32>
    %468 = arith.mulf %459, %447 : vector<2x128xf32>
    %469 = arith.mulf %453, %461 : vector<2x128xf32>
    %470 = arith.addf %468, %469 : vector<2x128xf32>
    %471 = math.tanh %470 : vector<2x128xf32>
    %472 = arith.mulf %467, %471 : vector<2x128xf32>
    %473 = vector.extract_strided_slice %427 {offsets = [0, 128], sizes = [2, 128], strides = [1, 1]} : vector<2x256xf32> to vector<2x128xf32>
    %474 = vector.extract_strided_slice %446 {offsets = [0, 0], sizes = [2, 128], strides = [1, 1]} : vector<2x512xf32> to vector<2x128xf32>
    %475 = arith.negf %474 : vector<2x128xf32>
    %476 = math.exp %475 : vector<2x128xf32>
    %cst_113 = arith.constant 1.000000e+00 : f32
    %477 = vector.broadcast %cst_113 : f32 to vector<2x128xf32>
    %478 = arith.addf %477, %476 : vector<2x128xf32>
    %479 = arith.divf %477, %478 : vector<2x128xf32>
    %480 = vector.extract_strided_slice %446 {offsets = [0, 128], sizes = [2, 128], strides = [1, 1]} : vector<2x512xf32> to vector<2x128xf32>
    %481 = arith.negf %480 : vector<2x128xf32>
    %482 = math.exp %481 : vector<2x128xf32>
    %cst_114 = arith.constant 1.000000e+00 : f32
    %483 = vector.broadcast %cst_114 : f32 to vector<2x128xf32>
    %484 = arith.addf %483, %482 : vector<2x128xf32>
    %485 = arith.divf %483, %484 : vector<2x128xf32>
    %486 = vector.extract_strided_slice %446 {offsets = [0, 256], sizes = [2, 128], strides = [1, 1]} : vector<2x512xf32> to vector<2x128xf32>
    %487 = math.tanh %486 : vector<2x128xf32>
    %488 = vector.extract_strided_slice %446 {offsets = [0, 384], sizes = [2, 128], strides = [1, 1]} : vector<2x512xf32> to vector<2x128xf32>
    %489 = arith.negf %488 : vector<2x128xf32>
    %490 = math.exp %489 : vector<2x128xf32>
    %cst_115 = arith.constant 1.000000e+00 : f32
    %491 = vector.broadcast %cst_115 : f32 to vector<2x128xf32>
    %492 = arith.addf %491, %490 : vector<2x128xf32>
    %493 = arith.divf %491, %492 : vector<2x128xf32>
    %494 = arith.mulf %485, %473 : vector<2x128xf32>
    %495 = arith.mulf %479, %487 : vector<2x128xf32>
    %496 = arith.addf %494, %495 : vector<2x128xf32>
    %497 = math.tanh %496 : vector<2x128xf32>
    %498 = arith.mulf %493, %497 : vector<2x128xf32>
    %499 = tpu.concatenate %470, %496 in 1 : vector<2x128xf32>, vector<2x128xf32> -> vector<2x256xf32>
    %500 = tpu.concatenate %472, %498 in 1 : vector<2x128xf32>, vector<2x128xf32> -> vector<2x256xf32>
    %501 = arith.truncf %500 : vector<2x256xf32> to vector<2x256xbf16>
    %c0_116 = arith.constant 0 : index
    %c0_117 = arith.constant 0 : index
    %502 = vector.load %arg2[%c0_116, %c0_117] : memref<256x128xbf16, #tpu.memory_space<vmem>>, vector<256x128xbf16>
    %cst_118 = arith.constant dense<0.000000e+00> : vector<2x128xf32>
    %503 = tpu.matmul %501, %502, %cst_118 {dimension_numbers = #tpu.dot_dimension_numbers<[1], [0], [0], [1], [0, 0, 1, 1], [], []>} : vector<2x256xbf16>, vector<256x128xbf16>, vector<2x128xf32> -> vector<2x128xf32>
    %504 = vector.extract_strided_slice %503 {offsets = [0, 0], sizes = [2, 64], strides = [1, 1]} : vector<2x128xf32> to vector<2x64xf32>
    %505 = vector.extract_strided_slice %503 {offsets = [0, 64], sizes = [2, 64], strides = [1, 1]} : vector<2x128xf32> to vector<2x64xf32>
    %506 = arith.truncf %503 : vector<2x128xf32> to vector<2x128xbf16>
    %c0_119 = arith.constant 0 : index
    %c0_120 = arith.constant 0 : index
    %507 = vector.load %arg1[%c0_119, %c0_120] : memref<128x1024xbf16, #tpu.memory_space<vmem>>, vector<128x1024xbf16>
    %cst_121 = arith.constant dense<0.000000e+00> : vector<2x1024xf32>
    %508 = tpu.matmul %506, %507, %cst_121 {dimension_numbers = #tpu.dot_dimension_numbers<[1], [0], [0], [1], [0, 0, 1, 1], [], []>} : vector<2x128xbf16>, vector<128x1024xbf16>, vector<2x1024xf32> -> vector<2x1024xf32>
    %c7_122 = arith.constant 7 : index
    %c0_123 = arith.constant 0 : index
    %c0_124 = arith.constant 0 : index
    %509 = vector.load %arg0[%c7_122, %c0_123, %c0_124] : memref<8x2x1024xf32, #tpu.memory_space<vmem>>, vector<1x2x1024xf32>
    %510 = vector.shape_cast %509 : vector<1x2x1024xf32> to vector<2x1024xf32>
    %c0_125 = arith.constant 0 : index
    %c0_126 = arith.constant 0 : index
    %c0_127 = arith.constant 0 : index
    %511 = vector.load %arg0[%c0_125, %c0_126, %c0_127] : memref<8x2x1024xf32, #tpu.memory_space<vmem>>, vector<1x2x1024xf32>
    %512 = vector.shape_cast %511 : vector<1x2x1024xf32> to vector<2x1024xf32>
    %513 = vector.extract_strided_slice %510 {offsets = [0, 0], sizes = [2, 512], strides = [1, 1]} : vector<2x1024xf32> to vector<2x512xf32>
    %514 = vector.extract_strided_slice %508 {offsets = [0, 0], sizes = [2, 512], strides = [1, 1]} : vector<2x1024xf32> to vector<2x512xf32>
    %515 = arith.addf %513, %514 : vector<2x512xf32>
    %516 = vector.extract_strided_slice %512 {offsets = [0, 512], sizes = [2, 512], strides = [1, 1]} : vector<2x1024xf32> to vector<2x512xf32>
    %517 = vector.extract_strided_slice %508 {offsets = [0, 512], sizes = [2, 512], strides = [1, 1]} : vector<2x1024xf32> to vector<2x512xf32>
    %518 = arith.addf %516, %517 : vector<2x512xf32>
    %519 = vector.extract_strided_slice %499 {offsets = [0, 0], sizes = [2, 128], strides = [1, 1]} : vector<2x256xf32> to vector<2x128xf32>
    %520 = vector.extract_strided_slice %515 {offsets = [0, 0], sizes = [2, 128], strides = [1, 1]} : vector<2x512xf32> to vector<2x128xf32>
    %521 = arith.negf %520 : vector<2x128xf32>
    %522 = math.exp %521 : vector<2x128xf32>
    %cst_128 = arith.constant 1.000000e+00 : f32
    %523 = vector.broadcast %cst_128 : f32 to vector<2x128xf32>
    %524 = arith.addf %523, %522 : vector<2x128xf32>
    %525 = arith.divf %523, %524 : vector<2x128xf32>
    %526 = vector.extract_strided_slice %515 {offsets = [0, 128], sizes = [2, 128], strides = [1, 1]} : vector<2x512xf32> to vector<2x128xf32>
    %527 = arith.negf %526 : vector<2x128xf32>
    %528 = math.exp %527 : vector<2x128xf32>
    %cst_129 = arith.constant 1.000000e+00 : f32
    %529 = vector.broadcast %cst_129 : f32 to vector<2x128xf32>
    %530 = arith.addf %529, %528 : vector<2x128xf32>
    %531 = arith.divf %529, %530 : vector<2x128xf32>
    %532 = vector.extract_strided_slice %515 {offsets = [0, 256], sizes = [2, 128], strides = [1, 1]} : vector<2x512xf32> to vector<2x128xf32>
    %533 = math.tanh %532 : vector<2x128xf32>
    %534 = vector.extract_strided_slice %515 {offsets = [0, 384], sizes = [2, 128], strides = [1, 1]} : vector<2x512xf32> to vector<2x128xf32>
    %535 = arith.negf %534 : vector<2x128xf32>
    %536 = math.exp %535 : vector<2x128xf32>
    %cst_130 = arith.constant 1.000000e+00 : f32
    %537 = vector.broadcast %cst_130 : f32 to vector<2x128xf32>
    %538 = arith.addf %537, %536 : vector<2x128xf32>
    %539 = arith.divf %537, %538 : vector<2x128xf32>
    %540 = arith.mulf %531, %519 : vector<2x128xf32>
    %541 = arith.mulf %525, %533 : vector<2x128xf32>
    %542 = arith.addf %540, %541 : vector<2x128xf32>
    %543 = math.tanh %542 : vector<2x128xf32>
    %544 = arith.mulf %539, %543 : vector<2x128xf32>
    %545 = vector.extract_strided_slice %499 {offsets = [0, 128], sizes = [2, 128], strides = [1, 1]} : vector<2x256xf32> to vector<2x128xf32>
    %546 = vector.extract_strided_slice %518 {offsets = [0, 0], sizes = [2, 128], strides = [1, 1]} : vector<2x512xf32> to vector<2x128xf32>
    %547 = arith.negf %546 : vector<2x128xf32>
    %548 = math.exp %547 : vector<2x128xf32>
    %cst_131 = arith.constant 1.000000e+00 : f32
    %549 = vector.broadcast %cst_131 : f32 to vector<2x128xf32>
    %550 = arith.addf %549, %548 : vector<2x128xf32>
    %551 = arith.divf %549, %550 : vector<2x128xf32>
    %552 = vector.extract_strided_slice %518 {offsets = [0, 128], sizes = [2, 128], strides = [1, 1]} : vector<2x512xf32> to vector<2x128xf32>
    %553 = arith.negf %552 : vector<2x128xf32>
    %554 = math.exp %553 : vector<2x128xf32>
    %cst_132 = arith.constant 1.000000e+00 : f32
    %555 = vector.broadcast %cst_132 : f32 to vector<2x128xf32>
    %556 = arith.addf %555, %554 : vector<2x128xf32>
    %557 = arith.divf %555, %556 : vector<2x128xf32>
    %558 = vector.extract_strided_slice %518 {offsets = [0, 256], sizes = [2, 128], strides = [1, 1]} : vector<2x512xf32> to vector<2x128xf32>
    %559 = math.tanh %558 : vector<2x128xf32>
    %560 = vector.extract_strided_slice %518 {offsets = [0, 384], sizes = [2, 128], strides = [1, 1]} : vector<2x512xf32> to vector<2x128xf32>
    %561 = arith.negf %560 : vector<2x128xf32>
    %562 = math.exp %561 : vector<2x128xf32>
    %cst_133 = arith.constant 1.000000e+00 : f32
    %563 = vector.broadcast %cst_133 : f32 to vector<2x128xf32>
    %564 = arith.addf %563, %562 : vector<2x128xf32>
    %565 = arith.divf %563, %564 : vector<2x128xf32>
    %566 = arith.mulf %557, %545 : vector<2x128xf32>
    %567 = arith.mulf %551, %559 : vector<2x128xf32>
    %568 = arith.addf %566, %567 : vector<2x128xf32>
    %569 = math.tanh %568 : vector<2x128xf32>
    %570 = arith.mulf %565, %569 : vector<2x128xf32>
    %571 = tpu.concatenate %544, %570 in 1 : vector<2x128xf32>, vector<2x128xf32> -> vector<2x256xf32>
    %572 = arith.truncf %571 : vector<2x256xf32> to vector<2x256xbf16>
    %c0_134 = arith.constant 0 : index
    %c0_135 = arith.constant 0 : index
    %573 = vector.load %arg2[%c0_134, %c0_135] : memref<256x128xbf16, #tpu.memory_space<vmem>>, vector<256x128xbf16>
    %cst_136 = arith.constant dense<0.000000e+00> : vector<2x128xf32>
    %574 = tpu.matmul %572, %573, %cst_136 {dimension_numbers = #tpu.dot_dimension_numbers<[1], [0], [0], [1], [0, 0, 1, 1], [], []>} : vector<2x256xbf16>, vector<256x128xbf16>, vector<2x128xf32> -> vector<2x128xf32>
    %575 = vector.extract_strided_slice %574 {offsets = [0, 0], sizes = [2, 64], strides = [1, 1]} : vector<2x128xf32> to vector<2x64xf32>
    %576 = vector.extract_strided_slice %574 {offsets = [0, 64], sizes = [2, 64], strides = [1, 1]} : vector<2x128xf32> to vector<2x64xf32>
    %577 = tpu.concatenate %72, %576 in 1 : vector<2x64xf32>, vector<2x64xf32> -> vector<2x128xf32>
    %c0_137 = arith.constant 0 : index
    %c0_138 = arith.constant 0 : index
    %c0_139 = arith.constant 0 : index
    %578 = vector.load %arg3[%c0_137, %c0_138, %c0_139] : memref<8x2x128xf32, #tpu.memory_space<vmem>>, vector<1x2x128xf32>
    %579 = vector.shape_cast %578 : vector<1x2x128xf32> to vector<2x128xf32>
    %580 = vector.shape_cast %577 : vector<2x128xf32> to vector<1x2x128xf32>
    tpu.vector_store %arg3[%c0_137, %c0_138, %c0_139], %580 {strides = array<i32>} : memref<8x2x128xf32, #tpu.memory_space<vmem>>, vector<1x2x128xf32>,
    %581 = tpu.concatenate %144, %505 in 1 : vector<2x64xf32>, vector<2x64xf32> -> vector<2x128xf32>
    %c1_140 = arith.constant 1 : index
    %c0_141 = arith.constant 0 : index
    %c0_142 = arith.constant 0 : index
    %582 = vector.load %arg3[%c1_140, %c0_141, %c0_142] : memref<8x2x128xf32, #tpu.memory_space<vmem>>, vector<1x2x128xf32>
    %583 = vector.shape_cast %582 : vector<1x2x128xf32> to vector<2x128xf32>
    %584 = vector.shape_cast %581 : vector<2x128xf32> to vector<1x2x128xf32>
    tpu.vector_store %arg3[%c1_140, %c0_141, %c0_142], %584 {strides = array<i32>} : memref<8x2x128xf32, #tpu.memory_space<vmem>>, vector<1x2x128xf32>,
    %585 = tpu.concatenate %216, %433 in 1 : vector<2x64xf32>, vector<2x64xf32> -> vector<2x128xf32>
    %c2_143 = arith.constant 2 : index
    %c0_144 = arith.constant 0 : index
    %c0_145 = arith.constant 0 : index
    %586 = vector.load %arg3[%c2_143, %c0_144, %c0_145] : memref<8x2x128xf32, #tpu.memory_space<vmem>>, vector<1x2x128xf32>
    %587 = vector.shape_cast %586 : vector<1x2x128xf32> to vector<2x128xf32>
    %588 = vector.shape_cast %585 : vector<2x128xf32> to vector<1x2x128xf32>
    tpu.vector_store %arg3[%c2_143, %c0_144, %c0_145], %588 {strides = array<i32>} : memref<8x2x128xf32, #tpu.memory_space<vmem>>, vector<1x2x128xf32>,
    %589 = tpu.concatenate %288, %361 in 1 : vector<2x64xf32>, vector<2x64xf32> -> vector<2x128xf32>
    %c3_146 = arith.constant 3 : index
    %c0_147 = arith.constant 0 : index
    %c0_148 = arith.constant 0 : index
    %590 = vector.load %arg3[%c3_146, %c0_147, %c0_148] : memref<8x2x128xf32, #tpu.memory_space<vmem>>, vector<1x2x128xf32>
    %591 = vector.shape_cast %590 : vector<1x2x128xf32> to vector<2x128xf32>
    %592 = vector.shape_cast %589 : vector<2x128xf32> to vector<1x2x128xf32>
    tpu.vector_store %arg3[%c3_146, %c0_147, %c0_148], %592 {strides = array<i32>} : memref<8x2x128xf32, #tpu.memory_space<vmem>>, vector<1x2x128xf32>,
    %593 = tpu.concatenate %360, %289 in 1 : vector<2x64xf32>, vector<2x64xf32> -> vector<2x128xf32>
    %c4_149 = arith.constant 4 : index
    %c0_150 = arith.constant 0 : index
    %c0_151 = arith.constant 0 : index
    %594 = vector.load %arg3[%c4_149, %c0_150, %c0_151] : memref<8x2x128xf32, #tpu.memory_space<vmem>>, vector<1x2x128xf32>
    %595 = vector.shape_cast %594 : vector<1x2x128xf32> to vector<2x128xf32>
    %596 = vector.shape_cast %593 : vector<2x128xf32> to vector<1x2x128xf32>
    tpu.vector_store %arg3[%c4_149, %c0_150, %c0_151], %596 {strides = array<i32>} : memref<8x2x128xf32, #tpu.memory_space<vmem>>, vector<1x2x128xf32>,
    %597 = tpu.concatenate %432, %217 in 1 : vector<2x64xf32>, vector<2x64xf32> -> vector<2x128xf32>
    %c5_152 = arith.constant 5 : index
    %c0_153 = arith.constant 0 : index
    %c0_154 = arith.constant 0 : index
    %598 = vector.load %arg3[%c5_152, %c0_153, %c0_154] : memref<8x2x128xf32, #tpu.memory_space<vmem>>, vector<1x2x128xf32>
    %599 = vector.shape_cast %598 : vector<1x2x128xf32> to vector<2x128xf32>
    %600 = vector.shape_cast %597 : vector<2x128xf32> to vector<1x2x128xf32>
    tpu.vector_store %arg3[%c5_152, %c0_153, %c0_154], %600 {strides = array<i32>} : memref<8x2x128xf32, #tpu.memory_space<vmem>>, vector<1x2x128xf32>,
    %601 = tpu.concatenate %504, %145 in 1 : vector<2x64xf32>, vector<2x64xf32> -> vector<2x128xf32>
    %c6_155 = arith.constant 6 : index
    %c0_156 = arith.constant 0 : index
    %c0_157 = arith.constant 0 : index
    %602 = vector.load %arg3[%c6_155, %c0_156, %c0_157] : memref<8x2x128xf32, #tpu.memory_space<vmem>>, vector<1x2x128xf32>
    %603 = vector.shape_cast %602 : vector<1x2x128xf32> to vector<2x128xf32>
    %604 = vector.shape_cast %601 : vector<2x128xf32> to vector<1x2x128xf32>
    tpu.vector_store %arg3[%c6_155, %c0_156, %c0_157], %604 {strides = array<i32>} : memref<8x2x128xf32, #tpu.memory_space<vmem>>, vector<1x2x128xf32>,
    %605 = tpu.concatenate %575, %73 in 1 : vector<2x64xf32>, vector<2x64xf32> -> vector<2x128xf32>
    %c7_158 = arith.constant 7 : index
    %c0_159 = arith.constant 0 : index
    %c0_160 = arith.constant 0 : index
    %606 = vector.load %arg3[%c7_158, %c0_159, %c0_160] : memref<8x2x128xf32, #tpu.memory_space<vmem>>, vector<1x2x128xf32>
    %607 = vector.shape_cast %606 : vector<1x2x128xf32> to vector<2x128xf32>
    %608 = vector.shape_cast %605 : vector<2x128xf32> to vector<1x2x128xf32>
    tpu.vector_store %arg3[%c7_158, %c0_159, %c0_160], %608 {strides = array<i32>} : memref<8x2x128xf32, #tpu.memory_space<vmem>>, vector<1x2x128xf32>,
    return
  }
}

</mosaic_0001>

<llo_original>
// kernel: bilstm_encoder_forward.2
$region0: #{bilstm_encoder_forward.2}
  #allocation0 [shape = 'u32[]', space=smem, size = 0x4, offset = 0x4, fixed_abs, tag = 'smem constant byte address 0x4 - core index']
  #allocation1 [shape = 'u32[72,128]{1,0:T(1,128)}', space=vmem, size = 0x9000, scoped, tag = 'internal scratch']
  %s0 = inlined_call_operand.vmem [shape: f32[8,2,1024], index: 0, kind: input, shape index: {}]
  %s1 = inlined_call_operand.vmem [shape: bf16[128,1024], index: 1, kind: input, shape index: {}]
  %s2 = inlined_call_operand.vmem [shape: bf16[256,128], index: 2, kind: input, shape index: {}]
  %s3 = inlined_call_operand.vmem [shape: f32[8,2,128], index: 3, kind: output, shape index: {}]
  %s4 = sld [smem:[#allocation0]]
  $region22: #{bilstm_encoder_forward.2} parent=0
    _
  %s6 = ssub.s32 1, %s4
  %s7 = scalar_select 0, %s6, %s4
  // Predicated region
  $region2: #{bilstm_encoder_forward.2} parent=0 // pred_check
    _
  $region3: #{bilstm_encoder_forward.2} parent=0 // pred_check_branch
    %9 = sbr.rel (0) target = $region5
  $region4: #{bilstm_encoder_forward.2} parent=0 // pred_region
    _
  $region5: #{bilstm_encoder_forward.2} parent=0 // pred_fallthru
    _
  // Predicated region
  $region6: #{bilstm_encoder_forward.2} parent=0 // pred_check
    _
  $region7: #{bilstm_encoder_forward.2} parent=0 // pred_check_branch
    %11 = sbr.rel (0) target = $region9
  $region8: #{bilstm_encoder_forward.2} parent=0 // pred_region
    _
  $region9: #{bilstm_encoder_forward.2} parent=0 // pred_fallthru
    _
  // Predicated region
  $region10: #{bilstm_encoder_forward.2} parent=0 // pred_check
    _
  $region11: #{bilstm_encoder_forward.2} parent=0 // pred_check_branch
    %13 = sbr.rel (0) target = $region13
  $region12: #{bilstm_encoder_forward.2} parent=0 // pred_region
    _
  $region13: #{bilstm_encoder_forward.2} parent=0 // pred_fallthru
    _
  %v15 = vld [vmem:[%s1] sm:$0xff]
  %v16 = vld [vmem:[%s1 + $0x8] sm:$0xff]
  %v17 = vld [vmem:[%s1 + $0x10] sm:$0xff]
  %v18 = vld [vmem:[%s1 + $0x18] sm:$0xff]
  %v19 = vld [vmem:[%s1 + $0x20] sm:$0xff]
  %v20 = vld [vmem:[%s1 + $0x28] sm:$0xff]
  %v21 = vld [vmem:[%s1 + $0x30] sm:$0xff]
  %v22 = vld [vmem:[%s1 + $0x38] sm:$0xff]
  %v23 = vld [vmem:[%s1 + $0x40] sm:$0xff]
  %v24 = vld [vmem:[%s1 + $0x48] sm:$0xff]
  %v25 = vld [vmem:[%s1 + $0x50] sm:$0xff]
  %v26 = vld [vmem:[%s1 + $0x58] sm:$0xff]
  %v27 = vld [vmem:[%s1 + $0x60] sm:$0xff]
  %v28 = vld [vmem:[%s1 + $0x68] sm:$0xff]
  %v29 = vld [vmem:[%s1 + $0x70] sm:$0xff]
  %v30 = vld [vmem:[%s1 + $0x78] sm:$0xff]
  %v31 = vld [vmem:[%s1 + $0x80] sm:$0xff]
  %v32 = vld [vmem:[%s1 + $0x88] sm:$0xff]
  %v33 = vld [vmem:[%s1 + $0x90] sm:$0xff]
  %v34 = vld [vmem:[%s1 + $0x98] sm:$0xff]
  %v35 = vld [vmem:[%s1 + $0xa0] sm:$0xff]
  %v36 = vld [vmem:[%s1 + $0xa8] sm:$0xff]
  %v37 = vld [vmem:[%s1 + $0xb0] sm:$0xff]
  %v38 = vld [vmem:[%s1 + $0xb8] sm:$0xff]
  %v39 = vld [vmem:[%s1 + $0xc0] sm:$0xff]
  %v40 = vld [vmem:[%s1 + $0xc8] sm:$0xff]
  %v41 = vld [vmem:[%s1 + $0xd0] sm:$0xff]
  %v42 = vld [vmem:[%s1 + $0xd8] sm:$0xff]
  %v43 = vld [vmem:[%s1 + $0xe0] sm:$0xff]
  %v44 = vld [vmem:[%s1 + $0xe8] sm:$0xff]
  %v45 = vld [vmem:[%s1 + $0xf0] sm:$0xff]
  %v46 = vld [vmem:[%s1 + $0xf8] sm:$0xff]
  %v47 = vld [vmem:[%s1 + $0x100] sm:$0xff]
  %v48 = vld [vmem:[%s1 + $0x108] sm:$0xff]
  %v49 = vld [vmem:[%s1 + $0x110] sm:$0xff]
  %v50 = vld [vmem:[%s1 + $0x118] sm:$0xff]
  %v51 = vld [vmem:[%s1 + $0x120] sm:$0xff]
  %v52 = vld [vmem:[%s1 + $0x128] sm:$0xff]
  %v53 = vld [vmem:[%s1 + $0x130] sm:$0xff]
  %v54 = vld [vmem:[%s1 + $0x138] sm:$0xff]
  %v55 = vld [vmem:[%s1 + $0x140] sm:$0xff]
  %v56 = vld [vmem:[%s1 + $0x148] sm:$0xff]
  %v57 = vld [vmem:[%s1 + $0x150] sm:$0xff]
  %v58 = vld [vmem:[%s1 + $0x158] sm:$0xff]
  %v59 = vld [vmem:[%s1 + $0x160] sm:$0xff]
  %v60 = vld [vmem:[%s1 + $0x168] sm:$0xff]
  %v61 = vld [vmem:[%s1 + $0x170] sm:$0xff]
  %v62 = vld [vmem:[%s1 + $0x178] sm:$0xff]
  %v63 = vld [vmem:[%s1 + $0x180] sm:$0xff]
  %v64 = vld [vmem:[%s1 + $0x188] sm:$0xff]
  %v65 = vld [vmem:[%s1 + $0x190] sm:$0xff]
  %v66 = vld [vmem:[%s1 + $0x198] sm:$0xff]
  %v67 = vld [vmem:[%s1 + $0x1a0] sm:$0xff]
  %v68 = vld [vmem:[%s1 + $0x1a8] sm:$0xff]
  %v69 = vld [vmem:[%s1 + $0x1b0] sm:$0xff]
  %v70 = vld [vmem:[%s1 + $0x1b8] sm:$0xff]
  %v71 = vld [vmem:[%s1 + $0x1c0] sm:$0xff]
  %v72 = vld [vmem:[%s1 + $0x1c8] sm:$0xff]
  %v73 = vld [vmem:[%s1 + $0x1d0] sm:$0xff]
  %v74 = vld [vmem:[%s1 + $0x1d8] sm:$0xff]
  %v75 = vld [vmem:[%s1 + $0x1e0] sm:$0xff]
  %v76 = vld [vmem:[%s1 + $0x1e8] sm:$0xff]
  %v77 = vld [vmem:[%s1 + $0x1f0] sm:$0xff]
  %v78 = vld [vmem:[%s1 + $0x1f8] sm:$0xff]
  %v143 = vunpack.c.l.b16 %v15
  %v144 = vunpack.c.h.b16 %v15
  %v145 = vunpack.c.l.b16 %v16
  %v146 = vunpack.c.h.b16 %v16
  %v147 = vunpack.c.l.b16 %v17
  %v148 = vunpack.c.h.b16 %v17
  %v149 = vunpack.c.l.b16 %v18
  %v150 = vunpack.c.h.b16 %v18
  %v151 = vunpack.c.l.b16 %v19
  %v152 = vunpack.c.h.b16 %v19
  %v153 = vunpack.c.l.b16 %v20
  %v154 = vunpack.c.h.b16 %v20
  %v155 = vunpack.c.l.b16 %v21
  %v156 = vunpack.c.h.b16 %v21
  %v157 = vunpack.c.l.b16 %v22
  %v158 = vunpack.c.h.b16 %v22
  %v159 = vunpack.c.l.b16 %v23
  %v160 = vunpack.c.h.b16 %v23
  %v161 = vunpack.c.l.b16 %v24
  %v162 = vunpack.c.h.b16 %v24
  %v163 = vunpack.c.l.b16 %v25
  %v164 = vunpack.c.h.b16 %v25
  %v165 = vunpack.c.l.b16 %v26
  %v166 = vunpack.c.h.b16 %v26
  %v167 = vunpack.c.l.b16 %v27
  %v168 = vunpack.c.h.b16 %v27
  %v169 = vunpack.c.l.b16 %v28
  %v170 = vunpack.c.h.b16 %v28
  %v171 = vunpack.c.l.b16 %v29
  %v172 = vunpack.c.h.b16 %v29
  %v173 = vunpack.c.l.b16 %v30
  %v174 = vunpack.c.h.b16 %v30
  %v175 = vunpack.c.l.b16 %v31
  %v176 = vunpack.c.h.b16 %v31
  %v177 = vunpack.c.l.b16 %v32
  %v178 = vunpack.c.h.b16 %v32
  %v179 = vunpack.c.l.b16 %v33
  %v180 = vunpack.c.h.b16 %v33
  %v181 = vunpack.c.l.b16 %v34
  %v182 = vunpack.c.h.b16 %v34
  %v183 = vunpack.c.l.b16 %v35
  %v184 = vunpack.c.h.b16 %v35
  %v185 = vunpack.c.l.b16 %v36
  %v186 = vunpack.c.h.b16 %v36
  %v187 = vunpack.c.l.b16 %v37
  %v188 = vunpack.c.h.b16 %v37
  %v189 = vunpack.c.l.b16 %v38
  %v190 = vunpack.c.h.b16 %v38
  %v191 = vunpack.c.l.b16 %v39
  %v192 = vunpack.c.h.b16 %v39
  %v193 = vunpack.c.l.b16 %v40
  %v194 = vunpack.c.h.b16 %v40
  %v195 = vunpack.c.l.b16 %v41
  %v196 = vunpack.c.h.b16 %v41
  %v197 = vunpack.c.l.b16 %v42
  %v198 = vunpack.c.h.b16 %v42
  %v199 = vunpack.c.l.b16 %v43
  %v200 = vunpack.c.h.b16 %v43
  %v201 = vunpack.c.l.b16 %v44
  %v202 = vunpack.c.h.b16 %v44
  %v203 = vunpack.c.l.b16 %v45
  %v204 = vunpack.c.h.b16 %v45
  %v205 = vunpack.c.l.b16 %v46
  %v206 = vunpack.c.h.b16 %v46
  %v207 = vunpack.c.l.b16 %v47
  %v208 = vunpack.c.h.b16 %v47
  %v209 = vunpack.c.l.b16 %v48
  %v210 = vunpack.c.h.b16 %v48
  %v211 = vunpack.c.l.b16 %v49
  %v212 = vunpack.c.h.b16 %v49
  %v213 = vunpack.c.l.b16 %v50
  %v214 = vunpack.c.h.b16 %v50
  %v215 = vunpack.c.l.b16 %v51
  %v216 = vunpack.c.h.b16 %v51
  %v217 = vunpack.c.l.b16 %v52
  %v218 = vunpack.c.h.b16 %v52
  %v219 = vunpack.c.l.b16 %v53
  %v220 = vunpack.c.h.b16 %v53
  %v221 = vunpack.c.l.b16 %v54
  %v222 = vunpack.c.h.b16 %v54
  %v223 = vunpack.c.l.b16 %v55
  %v224 = vunpack.c.h.b16 %v55
  %v225 = vunpack.c.l.b16 %v56
  %v226 = vunpack.c.h.b16 %v56
  %v227 = vunpack.c.l.b16 %v57
  %v228 = vunpack.c.h.b16 %v57
  %v229 = vunpack.c.l.b16 %v58
  %v230 = vunpack.c.h.b16 %v58
  %v231 = vunpack.c.l.b16 %v59
  %v232 = vunpack.c.h.b16 %v59
  %v233 = vunpack.c.l.b16 %v60
  %v234 = vunpack.c.h.b16 %v60
  %v235 = vunpack.c.l.b16 %v61
  %v236 = vunpack.c.h.b16 %v61
  %v237 = vunpack.c.l.b16 %v62
  %v238 = vunpack.c.h.b16 %v62
  %v239 = vunpack.c.l.b16 %v63
  %v240 = vunpack.c.h.b16 %v63
  %v241 = vunpack.c.l.b16 %v64
  %v242 = vunpack.c.h.b16 %v64
  %v243 = vunpack.c.l.b16 %v65
  %v244 = vunpack.c.h.b16 %v65
  %v245 = vunpack.c.l.b16 %v66
  %v246 = vunpack.c.h.b16 %v66
  %v247 = vunpack.c.l.b16 %v67
  %v248 = vunpack.c.h.b16 %v67
  %v249 = vunpack.c.l.b16 %v68
  %v250 = vunpack.c.h.b16 %v68
  %v251 = vunpack.c.l.b16 %v69
  %v252 = vunpack.c.h.b16 %v69
  %v253 = vunpack.c.l.b16 %v70
  %v254 = vunpack.c.h.b16 %v70
  %v255 = vunpack.c.l.b16 %v71
  %v256 = vunpack.c.h.b16 %v71
  %v257 = vunpack.c.l.b16 %v72
  %v258 = vunpack.c.h.b16 %v72
  %v259 = vunpack.c.l.b16 %v73
  %v260 = vunpack.c.h.b16 %v73
  %v261 = vunpack.c.l.b16 %v74
  %v262 = vunpack.c.h.b16 %v74
  %v263 = vunpack.c.l.b16 %v75
  %v264 = vunpack.c.h.b16 %v75
  %v265 = vunpack.c.l.b16 %v76
  %v266 = vunpack.c.h.b16 %v76
  %v267 = vunpack.c.l.b16 %v77
  %v268 = vunpack.c.h.b16 %v77
  %v269 = vunpack.c.l.b16 %v78
  %v270 = vunpack.c.h.b16 %v78
  %v271 = vpack.c.b16 %v151, %v143
  %v272 = vpack.c.b16 %v152, %v144
  %v273 = vpack.c.b16 %v153, %v145
  %v274 = vpack.c.b16 %v154, %v146
  %v275 = vpack.c.b16 %v155, %v147
  %v276 = vpack.c.b16 %v156, %v148
  %v277 = vpack.c.b16 %v157, %v149
  %v278 = vpack.c.b16 %v158, %v150
  %v279 = vpack.c.b16 %v167, %v159
  %v280 = vpack.c.b16 %v168, %v160
  %v281 = vpack.c.b16 %v169, %v161
  %v282 = vpack.c.b16 %v170, %v162
  %v283 = vpack.c.b16 %v171, %v163
  %v284 = vpack.c.b16 %v172, %v164
  %v285 = vpack.c.b16 %v173, %v165
  %v286 = vpack.c.b16 %v174, %v166
  %v287 = vpack.c.b16 %v183, %v175
  %v288 = vpack.c.b16 %v184, %v176
  %v289 = vpack.c.b16 %v185, %v177
  %v290 = vpack.c.b16 %v186, %v178
  %v291 = vpack.c.b16 %v187, %v179
  %v292 = vpack.c.b16 %v188, %v180
  %v293 = vpack.c.b16 %v189, %v181
  %v294 = vpack.c.b16 %v190, %v182
  %v295 = vpack.c.b16 %v199, %v191
  %v296 = vpack.c.b16 %v200, %v192
  %v297 = vpack.c.b16 %v201, %v193
  %v298 = vpack.c.b16 %v202, %v194
  %v299 = vpack.c.b16 %v203, %v195
  %v300 = vpack.c.b16 %v204, %v196
  %v301 = vpack.c.b16 %v205, %v197
  %v302 = vpack.c.b16 %v206, %v198
  %v303 = vpack.c.b16 %v215, %v207
  %v304 = vpack.c.b16 %v216, %v208
  %v305 = vpack.c.b16 %v217, %v209
  %v306 = vpack.c.b16 %v218, %v210
  %v307 = vpack.c.b16 %v219, %v211
  %v308 = vpack.c.b16 %v220, %v212
  %v309 = vpack.c.b16 %v221, %v213
  %v310 = vpack.c.b16 %v222, %v214
  %v311 = vpack.c.b16 %v231, %v223
  %v312 = vpack.c.b16 %v232, %v224
  %v313 = vpack.c.b16 %v233, %v225
  %v314 = vpack.c.b16 %v234, %v226
  %v315 = vpack.c.b16 %v235, %v227
  %v316 = vpack.c.b16 %v236, %v228
  %v317 = vpack.c.b16 %v237, %v229
  %v318 = vpack.c.b16 %v238, %v230
  %v319 = vpack.c.b16 %v247, %v239
  %v320 = vpack.c.b16 %v248, %v240
  %v321 = vpack.c.b16 %v249, %v241
  %v322 = vpack.c.b16 %v250, %v242
  %v323 = vpack.c.b16 %v251, %v243
  %v324 = vpack.c.b16 %v252, %v244
  %v325 = vpack.c.b16 %v253, %v245
  %v326 = vpack.c.b16 %v254, %v246
  %v327 = vpack.c.b16 %v263, %v255
  %v328 = vpack.c.b16 %v264, %v256
  %v329 = vpack.c.b16 %v265, %v257
  %v330 = vpack.c.b16 %v266, %v258
  %v331 = vpack.c.b16 %v267, %v259
  %v332 = vpack.c.b16 %v268, %v260
  %v333 = vpack.c.b16 %v269, %v261
  %v334 = vpack.c.b16 %v270, %v262
  %399 = vmatpush.bf16.msra.mxu0 %v327
  %400 = vmatpush.bf16.msra.mxu0 %v319
  %401 = vmatpush.bf16.msra.mxu0 %v311
  %402 = vmatpush.bf16.msra.mxu0 %v303
  %403 = vmatpush.bf16.msra.mxu0 %v295
  %404 = vmatpush.bf16.msra.mxu0 %v287
  %405 = vmatpush.bf16.msra.mxu0 %v279
  %406 = vmatpush.bf16.msra.mxu0 %v271
  %407 = vmatmul.bf16.gmra.mxu0 0
  %v408 = vpop.f32.mrf.mxu0
  %v409 = vadd.f32 0.0, %v408
  %v410 = vpop.f32.mrf.mxu0
  %411 = vdwg.mxu0
  %412 = vmatpush.bf16.msra.mxu0 %v328
  %413 = vmatpush.bf16.msra.mxu0 %v320
  %414 = vmatpush.bf16.msra.mxu0 %v312
  %415 = vmatpush.bf16.msra.mxu0 %v304
  %416 = vmatpush.bf16.msra.mxu0 %v296
  %417 = vmatpush.bf16.msra.mxu0 %v288
  %418 = vmatpush.bf16.msra.mxu0 %v280
  %419 = vmatpush.bf16.msra.mxu0 %v272
  %420 = vmatmul.bf16.gmra.mxu0 0
  %v421 = vpop.f32.mrf.mxu0
  %v422 = vadd.f32 0.0, %v421
  %v423 = vpop.f32.mrf.mxu0
  %424 = vdwg.mxu0
  %425 = vmatpush.bf16.msra.mxu0 %v329
  %426 = vmatpush.bf16.msra.mxu0 %v321
  %427 = vmatpush.bf16.msra.mxu0 %v313
  %428 = vmatpush.bf16.msra.mxu0 %v305
  %429 = vmatpush.bf16.msra.mxu0 %v297
  %430 = vmatpush.bf16.msra.mxu0 %v289
  %431 = vmatpush.bf16.msra.mxu0 %v281
  %432 = vmatpush.bf16.msra.mxu0 %v273
  %433 = vmatmul.bf16.gmra.mxu0 0
  %v434 = vpop.f32.mrf.mxu0
  %v435 = vadd.f32 0.0, %v434
  %v436 = vpop.f32.mrf.mxu0
  %437 = vdwg.mxu0
  %438 = vmatpush.bf16.msra.mxu0 %v330
  %439 = vmatpush.bf16.msra.mxu0 %v322
  %440 = vmatpush.bf16.msra.mxu0 %v314
  %441 = vmatpush.bf16.msra.mxu0 %v306
  %442 = vmatpush.bf16.msra.mxu0 %v298
  %443 = vmatpush.bf16.msra.mxu0 %v290
  %444 = vmatpush.bf16.msra.mxu0 %v282
  %445 = vmatpush.bf16.msra.mxu0 %v274
  %446 = vmatmul.bf16.gmra.mxu0 0
  %v447 = vpop.f32.mrf.mxu0
  %v448 = vadd.f32 0.0, %v447
  %v449 = vpop.f32.mrf.mxu0
  %450 = vdwg.mxu0
  %451 = vmatpush.bf16.msra.mxu0 %v331
  %452 = vmatpush.bf16.msra.mxu0 %v323
  %453 = vmatpush.bf16.msra.mxu0 %v315
  %454 = vmatpush.bf16.msra.mxu0 %v307
  %455 = vmatpush.bf16.msra.mxu0 %v299
  %456 = vmatpush.bf16.msra.mxu0 %v291
  %457 = vmatpush.bf16.msra.mxu0 %v283
  %458 = vmatpush.bf16.msra.mxu0 %v275
  %459 = vmatmul.bf16.gmra.mxu0 0
  %v460 = vpop.f32.mrf.mxu0
  %v461 = vadd.f32 0.0, %v460
  %v462 = vpop.f32.mrf.mxu0
  %463 = vdwg.mxu0
  %464 = vmatpush.bf16.msra.mxu0 %v332
  %465 = vmatpush.bf16.msra.mxu0 %v324
  %466 = vmatpush.bf16.msra.mxu0 %v316
  %467 = vmatpush.bf16.msra.mxu0 %v308
  %468 = vmatpush.bf16.msra.mxu0 %v300
  %469 = vmatpush.bf16.msra.mxu0 %v292
  %470 = vmatpush.bf16.msra.mxu0 %v284
  %471 = vmatpush.bf16.msra.mxu0 %v276
  %472 = vmatmul.bf16.gmra.mxu0 0
  %v473 = vpop.f32.mrf.mxu0
  %v474 = vadd.f32 0.0, %v473
  %v475 = vpop.f32.mrf.mxu0
  %476 = vdwg.mxu0
  %477 = vmatpush.bf16.msra.mxu0 %v333
  %478 = vmatpush.bf16.msra.mxu0 %v325
  %479 = vmatpush.bf16.msra.mxu0 %v317
  %480 = vmatpush.bf16.msra.mxu0 %v309
  %481 = vmatpush.bf16.msra.mxu0 %v301
  %482 = vmatpush.bf16.msra.mxu0 %v293
  %483 = vmatpush.bf16.msra.mxu0 %v285
  %484 = vmatpush.bf16.msra.mxu0 %v277
  %485 = vmatmul.bf16.gmra.mxu0 0
  %v486 = vpop.f32.mrf.mxu0
  %v487 = vadd.f32 0.0, %v486
  %v488 = vpop.f32.mrf.mxu0
  %489 = vdwg.mxu0
  %490 = vmatpush.bf16.msra.mxu0 %v334
  %491 = vmatpush.bf16.msra.mxu0 %v326
  %492 = vmatpush.bf16.msra.mxu0 %v318
  %493 = vmatpush.bf16.msra.mxu0 %v310
  %494 = vmatpush.bf16.msra.mxu0 %v302
  %495 = vmatpush.bf16.msra.mxu0 %v294
  %496 = vmatpush.bf16.msra.mxu0 %v286
  %497 = vmatpush.bf16.msra.mxu0 %v278
  %498 = vmatmul.bf16.gmra.mxu0 0
  %v499 = vpop.f32.mrf.mxu0
  %v500 = vadd.f32 0.0, %v499
  %v501 = vpop.f32.mrf.mxu0
  %502 = vdwg.mxu0
  %v503 = vld [vmem:[%s0] sm:$0xff]
  %v504 = vld [vmem:[%s0 + $0x8] sm:$0xff]
  %s505 = scalar_lea.vmem %s0, 112
  %v506 = vld [vmem:[%s505] sm:$0xff]
  %v507 = vld [vmem:[%s505 + $0x8] sm:$0xff]
  %v512 = vrot.slane %v422, 6
  %v513 = vrot.slane %v435, 4
  %v514 = vrot.slane %v448, 2
  %vm515 = vcmask 1041408
  %v516 = vsel %vm515, %v409, %v512
  %vm517 = vcmask 1045508
  %v518 = vsel %vm517, %v513, %v514
  %vm519 = vcmask 1043456
  %v520 = vsel %vm519, %v516, %v518
  %v522 = vadd.f32 %v503, %v520
  %v527 = vrot.slane %v474, 6
  %v528 = vrot.slane %v487, 4
  %v529 = vrot.slane %v500, 2
  %v530 = vsel %vm515, %v461, %v527
  %v531 = vsel %vm517, %v528, %v529
  %v532 = vsel %vm519, %v530, %v531
  %v534 = vadd.f32 %v507, %v532
  %v535 = vxor.u32 %v522, 2147483648
  %v536 = vmul.f32 %v535, 1.442695
  %v537 = vpow.pop %v536
  %v538 = vadd.f32 %v537, 1.0
  %v539 = vrcp.pop %v538
  %v540 = vmul.f32 %v538, %v539
  %v541 = vsub.f32 1.0, %v540
  %v542 = vmul.f32 %v539, %v541
  %v543 = vadd.f32 %v539, %v542
  %vm544 = vweird.f32 %v538
  %vm545 = vweird.f32 %v539
  %vm546 = vmor %vm544, %vm545
  %v547 = vsel %vm546, %v539, %v543
  %v548 = vand.u32 2147483647, %v538
  %vm549 = vcmp.eq.f32.partialorder %v548, 8.507059e+37
  %v550 = vand.u32 %v538, 2147483648
  %v551 = vor.u32 1.1754944e-38, %v550
  %v552 = vsel %vm549, %v551, %v547
  %v553 = vmul.f32 1.0, %v552
  %v555 = vrot.slane %v522, 2
  %v557 = vxor.u32 %v555, 2147483648
  %v558 = vmul.f32 %v557, 1.442695
  %v559 = vpow.pop %v558
  %v560 = vadd.f32 %v559, 1.0
  %v561 = vrcp.pop %v560
  %v562 = vmul.f32 %v560, %v561
  %v563 = vsub.f32 1.0, %v562
  %v564 = vmul.f32 %v561, %v563
  %v565 = vadd.f32 %v561, %v564
  %vm566 = vweird.f32 %v560
  %vm567 = vweird.f32 %v561
  %vm568 = vmor %vm566, %vm567
  %v569 = vsel %vm568, %v561, %v565
  %v570 = vand.u32 2147483647, %v560
  %vm571 = vcmp.eq.f32.partialorder %v570, 8.507059e+37
  %v572 = vand.u32 %v560, 2147483648
  %v573 = vor.u32 1.1754944e-38, %v572
  %v574 = vsel %vm571, %v573, %v569
  %v575 = vmul.f32 1.0, %v574
  %v576 = vrot.slane %v522, 4
  %v578 = vtanh.pop %v576
  %v579 = vrot.slane %v522, 6
  %v581 = vxor.u32 %v579, 2147483648
  %v582 = vmul.f32 %v581, 1.442695
  %v583 = vpow.pop %v582
  %v584 = vadd.f32 %v583, 1.0
  %v585 = vrcp.pop %v584
  %v586 = vmul.f32 %v584, %v585
  %v587 = vsub.f32 1.0, %v586
  %v588 = vmul.f32 %v585, %v587
  %v589 = vadd.f32 %v585, %v588
  %vm590 = vweird.f32 %v584
  %vm591 = vweird.f32 %v585
  %vm592 = vmor %vm590, %vm591
  %v593 = vsel %vm592, %v585, %v589
  %v594 = vand.u32 2147483647, %v584
  %vm595 = vcmp.eq.f32.partialorder %v594, 8.507059e+37
  %v596 = vand.u32 %v584, 2147483648
  %v597 = vor.u32 1.1754944e-38, %v596
  %v598 = vsel %vm595, %v597, %v593
  %v599 = vmul.f32 1.0, %v598
  %v600 = vmul.f32 %v575, 0.0
  %v601 = vmul.f32 %v553, %v578
  %v602 = vadd.f32 %v600, %v601
  %v603 = vtanh.pop %v602
  %v604 = vmul.f32 %v599, %v603
  %v605 = vxor.u32 %v534, 2147483648
  %v606 = vmul.f32 %v605, 1.442695
  %v607 = vpow.pop %v606
  %v608 = vadd.f32 %v607, 1.0
  %v609 = vrcp.pop %v608
  %v610 = vmul.f32 %v608, %v609
  %v611 = vsub.f32 1.0, %v610
  %v612 = vmul.f32 %v609, %v611
  %v613 = vadd.f32 %v609, %v612
  %vm614 = vweird.f32 %v608
  %vm615 = vweird.f32 %v609
  %vm616 = vmor %vm614, %vm615
  %v617 = vsel %vm616, %v609, %v613
  %v618 = vand.u32 2147483647, %v608
  %vm619 = vcmp.eq.f32.partialorder %v618, 8.507059e+37
  %v620 = vand.u32 %v608, 2147483648
  %v621 = vor.u32 1.1754944e-38, %v620
  %v622 = vsel %vm619, %v621, %v617
  %v623 = vmul.f32 1.0, %v622
  %v625 = vrot.slane %v534, 2
  %v627 = vxor.u32 %v625, 2147483648
  %v628 = vmul.f32 %v627, 1.442695
  %v629 = vpow.pop %v628
  %v630 = vadd.f32 %v629, 1.0
  %v631 = vrcp.pop %v630
  %v632 = vmul.f32 %v630, %v631
  %v633 = vsub.f32 1.0, %v632
  %v634 = vmul.f32 %v631, %v633
  %v635 = vadd.f32 %v631, %v634
  %vm636 = vweird.f32 %v630
  %vm637 = vweird.f32 %v631
  %vm638 = vmor %vm636, %vm637
  %v639 = vsel %vm638, %v631, %v635
  %v640 = vand.u32 2147483647, %v630
  %vm641 = vcmp.eq.f32.partialorder %v640, 8.507059e+37
  %v642 = vand.u32 %v630, 2147483648
  %v643 = vor.u32 1.1754944e-38, %v642
  %v644 = vsel %vm641, %v643, %v639
  %v645 = vmul.f32 1.0, %v644
  %v646 = vrot.slane %v534, 4
  %v648 = vtanh.pop %v646
  %v649 = vrot.slane %v534, 6
  %v651 = vxor.u32 %v649, 2147483648
  %v652 = vmul.f32 %v651, 1.442695
  %v653 = vpow.pop %v652
  %v654 = vadd.f32 %v653, 1.0
  %v655 = vrcp.pop %v654
  %v656 = vmul.f32 %v654, %v655
  %v657 = vsub.f32 1.0, %v656
  %v658 = vmul.f32 %v655, %v657
  %v659 = vadd.f32 %v655, %v658
  %vm660 = vweird.f32 %v654
  %vm661 = vweird.f32 %v655
  %vm662 = vmor %vm660, %vm661
  %v663 = vsel %vm662, %v655, %v659
  %v664 = vand.u32 2147483647, %v654
  %vm665 = vcmp.eq.f32.partialorder %v664, 8.507059e+37
  %v666 = vand.u32 %v654, 2147483648
  %v667 = vor.u32 1.1754944e-38, %v666
  %v668 = vsel %vm665, %v667, %v663
  %v669 = vmul.f32 1.0, %v668
  %v670 = vmul.f32 %v645, 0.0
  %v671 = vmul.f32 %v623, %v648
  %v672 = vadd.f32 %v670, %v671
  %v673 = vtanh.pop %v672
  %v674 = vmul.f32 %v669, %v673
  %v675 = vpack.c.bf16 %v604, %v604
  %v676 = vpack.c.bf16 %v674, %v674
  %v677 = vld [vmem:[%s2] sm:$0xf]
  %v678 = vld [vmem:[%s2 + $0x4] sm:$0xf]
  %v679 = vld [vmem:[%s2 + $0x8] sm:$0xf]
  %v680 = vld [vmem:[%s2 + $0xc] sm:$0xf]
  %v681 = vld [vmem:[%s2 + $0x10] sm:$0xf]
  %v682 = vld [vmem:[%s2 + $0x14] sm:$0xf]
  %v683 = vld [vmem:[%s2 + $0x18] sm:$0xf]
  %v684 = vld [vmem:[%s2 + $0x1c] sm:$0xf]
  %v685 = vld [vmem:[%s2 + $0x20] sm:$0xf]
  %v686 = vld [vmem:[%s2 + $0x24] sm:$0xf]
  %v687 = vld [vmem:[%s2 + $0x28] sm:$0xf]
  %v688 = vld [vmem:[%s2 + $0x2c] sm:$0xf]
  %v689 = vld [vmem:[%s2 + $0x30] sm:$0xf]
  %v690 = vld [vmem:[%s2 + $0x34] sm:$0xf]
  %v691 = vld [vmem:[%s2 + $0x38] sm:$0xf]
  %v692 = vld [vmem:[%s2 + $0x3c] sm:$0xf]
  %v693 = vld [vmem:[%s2 + $0x40] sm:$0xf]
  %v694 = vld [vmem:[%s2 + $0x44] sm:$0xf]
  %v695 = vld [vmem:[%s2 + $0x48] sm:$0xf]
  %v696 = vld [vmem:[%s2 + $0x4c] sm:$0xf]
  %v697 = vld [vmem:[%s2 + $0x50] sm:$0xf]
  %v698 = vld [vmem:[%s2 + $0x54] sm:$0xf]
  %v699 = vld [vmem:[%s2 + $0x58] sm:$0xf]
  %v700 = vld [vmem:[%s2 + $0x5c] sm:$0xf]
  %v701 = vld [vmem:[%s2 + $0x60] sm:$0xf]
  %v702 = vld [vmem:[%s2 + $0x64] sm:$0xf]
  %v703 = vld [vmem:[%s2 + $0x68] sm:$0xf]
  %v704 = vld [vmem:[%s2 + $0x6c] sm:$0xf]
  %v705 = vld [vmem:[%s2 + $0x70] sm:$0xf]
  %v706 = vld [vmem:[%s2 + $0x74] sm:$0xf]
  %v707 = vld [vmem:[%s2 + $0x78] sm:$0xf]
  %v708 = vld [vmem:[%s2 + $0x7c] sm:$0xf]
  %v741 = vunpack.c.l.b16 %v677
  %v742 = vunpack.c.l.b16 %v678
  %v743 = vunpack.c.l.b16 %v679
  %v744 = vunpack.c.l.b16 %v680
  %v745 = vunpack.c.l.b16 %v681
  %v746 = vunpack.c.l.b16 %v682
  %v747 = vunpack.c.l.b16 %v683
  %v748 = vunpack.c.l.b16 %v684
  %v749 = vunpack.c.l.b16 %v685
  %v750 = vunpack.c.l.b16 %v686
  %v751 = vunpack.c.l.b16 %v687
  %v752 = vunpack.c.l.b16 %v688
  %v753 = vunpack.c.l.b16 %v689
  %v754 = vunpack.c.l.b16 %v690
  %v755 = vunpack.c.l.b16 %v691
  %v756 = vunpack.c.l.b16 %v692
  %v757 = vunpack.c.l.b16 %v693
  %v758 = vunpack.c.l.b16 %v694
  %v759 = vunpack.c.l.b16 %v695
  %v760 = vunpack.c.l.b16 %v696
  %v761 = vunpack.c.l.b16 %v697
  %v762 = vunpack.c.l.b16 %v698
  %v763 = vunpack.c.l.b16 %v699
  %v764 = vunpack.c.l.b16 %v700
  %v765 = vunpack.c.l.b16 %v701
  %v766 = vunpack.c.l.b16 %v702
  %v767 = vunpack.c.l.b16 %v703
  %v768 = vunpack.c.l.b16 %v704
  %v769 = vunpack.c.l.b16 %v705
  %v770 = vunpack.c.l.b16 %v706
  %v771 = vunpack.c.l.b16 %v707
  %v772 = vunpack.c.l.b16 %v708
  %v773 = vpack.c.b16 %v742, %v741
  %v774 = vpack.c.b16 %v744, %v743
  %v775 = vpack.c.b16 %v746, %v745
  %v776 = vpack.c.b16 %v748, %v747
  %v777 = vpack.c.b16 %v750, %v749
  %v778 = vpack.c.b16 %v752, %v751
  %v779 = vpack.c.b16 %v754, %v753
  %v780 = vpack.c.b16 %v756, %v755
  %v781 = vpack.c.b16 %v758, %v757
  %v782 = vpack.c.b16 %v760, %v759
  %v783 = vpack.c.b16 %v762, %v761
  %v784 = vpack.c.b16 %v764, %v763
  %v785 = vpack.c.b16 %v766, %v765
  %v786 = vpack.c.b16 %v768, %v767
  %v787 = vpack.c.b16 %v770, %v769
  %v788 = vpack.c.b16 %v772, %v771
  %805 = vmatpush.bf16.msra.mxu0 %v780
  %806 = vmatpush.bf16.msra.mxu0 %v779
  %807 = vmatpush.bf16.msra.mxu0 %v778
  %808 = vmatpush.bf16.msra.mxu0 %v777
  %809 = vmatpush.bf16.msra.mxu0 %v776
  %810 = vmatpush.bf16.msra.mxu0 %v775
  %811 = vmatpush.bf16.msra.mxu0 %v774
  %812 = vmatpush.bf16.msra.mxu0 %v773
  %813 = vmatmul.bf16.gmra.mxu0 %v675
  %v814 = vpop.f32.mrf.mxu0
  %v815 = vadd.f32 0.0, %v814
  %v816 = vpop.f32.mrf.mxu0
  %817 = vdwg.mxu0
  %818 = vmatpush.bf16.msra.mxu0 %v788
  %819 = vmatpush.bf16.msra.mxu0 %v787
  %820 = vmatpush.bf16.msra.mxu0 %v786
  %821 = vmatpush.bf16.msra.mxu0 %v785
  %822 = vmatpush.bf16.msra.mxu0 %v784
  %823 = vmatpush.bf16.msra.mxu0 %v783
  %824 = vmatpush.bf16.msra.mxu0 %v782
  %825 = vmatpush.bf16.msra.mxu0 %v781
  %826 = vmatmul.bf16.gmra.mxu0 %v676
  %v827 = vpop.f32.mrf.mxu0
  %v828 = vadd.f32 %v815, %v827
  %v829 = vpop.f32.mrf.mxu0
  %830 = vdwg.mxu0
  %v831 = vpack.c.bf16 %v828, %v828
  %832 = vmatpush.bf16.msra.mxu0 %v327
  %833 = vmatpush.bf16.msra.mxu0 %v319
  %834 = vmatpush.bf16.msra.mxu0 %v311
  %835 = vmatpush.bf16.msra.mxu0 %v303
  %836 = vmatpush.bf16.msra.mxu0 %v295
  %837 = vmatpush.bf16.msra.mxu0 %v287
  %838 = vmatpush.bf16.msra.mxu0 %v279
  %839 = vmatpush.bf16.msra.mxu0 %v271
  %840 = vmatmul.bf16.gmra.mxu0 %v831
  %v841 = vpop.f32.mrf.mxu0
  %v842 = vadd.f32 0.0, %v841
  %v843 = vpop.f32.mrf.mxu0
  %844 = vdwg.mxu0
  %845 = vmatpush.bf16.msra.mxu0 %v328
  %846 = vmatpush.bf16.msra.mxu0 %v320
  %847 = vmatpush.bf16.msra.mxu0 %v312
  %848 = vmatpush.bf16.msra.mxu0 %v304
  %849 = vmatpush.bf16.msra.mxu0 %v296
  %850 = vmatpush.bf16.msra.mxu0 %v288
  %851 = vmatpush.bf16.msra.mxu0 %v280
  %852 = vmatpush.bf16.msra.mxu0 %v272
  %853 = vmatmul.bf16.gmra.mxu0 %v831
  %v854 = vpop.f32.mrf.mxu0
  %v855 = vadd.f32 0.0, %v854
  %v856 = vpop.f32.mrf.mxu0
  %857 = vdwg.mxu0
  %858 = vmatpush.bf16.msra.mxu0 %v329
  %859 = vmatpush.bf16.msra.mxu0 %v321
  %860 = vmatpush.bf16.msra.mxu0 %v313
  %861 = vmatpush.bf16.msra.mxu0 %v305
  %862 = vmatpush.bf16.msra.mxu0 %v297
  %863 = vmatpush.bf16.msra.mxu0 %v289
  %864 = vmatpush.bf16.msra.mxu0 %v281
  %865 = vmatpush.bf16.msra.mxu0 %v273
  %866 = vmatmul.bf16.gmra.mxu0 %v831
  %v867 = vpop.f32.mrf.mxu0
  %v868 = vadd.f32 0.0, %v867
  %v869 = vpop.f32.mrf.mxu0
  %870 = vdwg.mxu0
  %871 = vmatpush.bf16.msra.mxu0 %v330
  %872 = vmatpush.bf16.msra.mxu0 %v322
  %873 = vmatpush.bf16.msra.mxu0 %v314
  %874 = vmatpush.bf16.msra.mxu0 %v306
  %875 = vmatpush.bf16.msra.mxu0 %v298
  %876 = vmatpush.bf16.msra.mxu0 %v290
  %877 = vmatpush.bf16.msra.mxu0 %v282
  %878 = vmatpush.bf16.msra.mxu0 %v274
  %879 = vmatmul.bf16.gmra.mxu0 %v831
  %v880 = vpop.f32.mrf.mxu0
  %v881 = vadd.f32 0.0, %v880
  %v882 = vpop.f32.mrf.mxu0
  %883 = vdwg.mxu0
  %884 = vmatpush.bf16.msra.mxu0 %v331
  %885 = vmatpush.bf16.msra.mxu0 %v323
  %886 = vmatpush.bf16.msra.mxu0 %v315
  %887 = vmatpush.bf16.msra.mxu0 %v307
  %888 = vmatpush.bf16.msra.mxu0 %v299
  %889 = vmatpush.bf16.msra.mxu0 %v291
  %890 = vmatpush.bf16.msra.mxu0 %v283
  %891 = vmatpush.bf16.msra.mxu0 %v275
  %892 = vmatmul.bf16.gmra.mxu0 %v831
  %v893 = vpop.f32.mrf.mxu0
  %v894 = vadd.f32 0.0, %v893
  %v895 = vpop.f32.mrf.mxu0
  %896 = vdwg.mxu0
  %897 = vmatpush.bf16.msra.mxu0 %v332
  %898 = vmatpush.bf16.msra.mxu0 %v324
  %899 = vmatpush.bf16.msra.mxu0 %v316
  %900 = vmatpush.bf16.msra.mxu0 %v308
  %901 = vmatpush.bf16.msra.mxu0 %v300
  %902 = vmatpush.bf16.msra.mxu0 %v292
  %903 = vmatpush.bf16.msra.mxu0 %v284
  %904 = vmatpush.bf16.msra.mxu0 %v276
  %905 = vmatmul.bf16.gmra.mxu0 %v831
  %v906 = vpop.f32.mrf.mxu0
  %v907 = vadd.f32 0.0, %v906
  %v908 = vpop.f32.mrf.mxu0
  %909 = vdwg.mxu0
  %910 = vmatpush.bf16.msra.mxu0 %v333
  %911 = vmatpush.bf16.msra.mxu0 %v325
  %912 = vmatpush.bf16.msra.mxu0 %v317
  %913 = vmatpush.bf16.msra.mxu0 %v309
  %914 = vmatpush.bf16.msra.mxu0 %v301
  %915 = vmatpush.bf16.msra.mxu0 %v293
  %916 = vmatpush.bf16.msra.mxu0 %v285
  %917 = vmatpush.bf16.msra.mxu0 %v277
  %918 = vmatmul.bf16.gmra.mxu0 %v831
  %v919 = vpop.f32.mrf.mxu0
  %v920 = vadd.f32 0.0, %v919
  %v921 = vpop.f32.mrf.mxu0
  %922 = vdwg.mxu0
  %923 = vmatpush.bf16.msra.mxu0 %v334
  %924 = vmatpush.bf16.msra.mxu0 %v326
  %925 = vmatpush.bf16.msra.mxu0 %v318
  %926 = vmatpush.bf16.msra.mxu0 %v310
  %927 = vmatpush.bf16.msra.mxu0 %v302
  %928 = vmatpush.bf16.msra.mxu0 %v294
  %929 = vmatpush.bf16.msra.mxu0 %v286
  %930 = vmatpush.bf16.msra.mxu0 %v278
  %931 = vmatmul.bf16.gmra.mxu0 %v831
  %v932 = vpop.f32.mrf.mxu0
  %v933 = vadd.f32 0.0, %v932
  %v934 = vpop.f32.mrf.mxu0
  %935 = vdwg.mxu0
  %s936 = scalar_lea.vmem %s0, 16
  %v937 = vld [vmem:[%s936] sm:$0xff]
  %v938 = vld [vmem:[%s936 + $0x8] sm:$0xff]
  %s939 = scalar_lea.vmem %s0, 96
  %v940 = vld [vmem:[%s939] sm:$0xff]
  %v941 = vld [vmem:[%s939 + $0x8] sm:$0xff]
  %v946 = vrot.slane %v855, 6
  %v947 = vrot.slane %v868, 4
  %v948 = vrot.slane %v881, 2
  %v949 = vsel %vm515, %v842, %v946
  %v950 = vsel %vm517, %v947, %v948
  %v951 = vsel %vm519, %v949, %v950
  %v953 = vadd.f32 %v937, %v951
  %v958 = vrot.slane %v907, 6
  %v959 = vrot.slane %v920, 4
  %v960 = vrot.slane %v933, 2
  %v961 = vsel %vm515, %v894, %v958
  %v962 = vsel %vm517, %v959, %v960
  %v963 = vsel %vm519, %v961, %v962
  %v965 = vadd.f32 %v941, %v963
  %v966 = vxor.u32 %v953, 2147483648
  %v967 = vmul.f32 %v966, 1.442695
  %v968 = vpow.pop %v967
  %v969 = vadd.f32 %v968, 1.0
  %v970 = vrcp.pop %v969
  %v971 = vmul.f32 %v969, %v970
  %v972 = vsub.f32 1.0, %v971
  %v973 = vmul.f32 %v970, %v972
  %v974 = vadd.f32 %v970, %v973
  %vm975 = vweird.f32 %v969
  %vm976 = vweird.f32 %v970
  %vm977 = vmor %vm975, %vm976
  %v978 = vsel %vm977, %v970, %v974
  %v979 = vand.u32 2147483647, %v969
  %vm980 = vcmp.eq.f32.partialorder %v979, 8.507059e+37
  %v981 = vand.u32 %v969, 2147483648
  %v982 = vor.u32 1.1754944e-38, %v981
  %v983 = vsel %vm980, %v982, %v978
  %v984 = vmul.f32 1.0, %v983
  %v986 = vrot.slane %v953, 2
  %v988 = vxor.u32 %v986, 2147483648
  %v989 = vmul.f32 %v988, 1.442695
  %v990 = vpow.pop %v989
  %v991 = vadd.f32 %v990, 1.0
  %v992 = vrcp.pop %v991
  %v993 = vmul.f32 %v991, %v992
  %v994 = vsub.f32 1.0, %v993
  %v995 = vmul.f32 %v992, %v994
  %v996 = vadd.f32 %v992, %v995
  %vm997 = vweird.f32 %v991
  %vm998 = vweird.f32 %v992
  %vm999 = vmor %vm997, %vm998
  %v1000 = vsel %vm999, %v992, %v996
  %v1001 = vand.u32 2147483647, %v991
  %vm1002 = vcmp.eq.f32.partialorder %v1001, 8.507059e+37
  %v1003 = vand.u32 %v991, 2147483648
  %v1004 = vor.u32 1.1754944e-38, %v1003
  %v1005 = vsel %vm1002, %v1004, %v1000
  %v1006 = vmul.f32 1.0, %v1005
  %v1007 = vrot.slane %v953, 4
  %v1009 = vtanh.pop %v1007
  %v1010 = vrot.slane %v953, 6
  %v1012 = vxor.u32 %v1010, 2147483648
  %v1013 = vmul.f32 %v1012, 1.442695
  %v1014 = vpow.pop %v1013
  %v1015 = vadd.f32 %v1014, 1.0
  %v1016 = vrcp.pop %v1015
  %v1017 = vmul.f32 %v1015, %v1016
  %v1018 = vsub.f32 1.0, %v1017
  %v1019 = vmul.f32 %v1016, %v1018
  %v1020 = vadd.f32 %v1016, %v1019
  %vm1021 = vweird.f32 %v1015
  %vm1022 = vweird.f32 %v1016
  %vm1023 = vmor %vm1021, %vm1022
  %v1024 = vsel %vm1023, %v1016, %v1020
  %v1025 = vand.u32 2147483647, %v1015
  %vm1026 = vcmp.eq.f32.partialorder %v1025, 8.507059e+37
  %v1027 = vand.u32 %v1015, 2147483648
  %v1028 = vor.u32 1.1754944e-38, %v1027
  %v1029 = vsel %vm1026, %v1028, %v1024
  %v1030 = vmul.f32 1.0, %v1029
  %v1031 = vmul.f32 %v1006, %v602
  %v1032 = vmul.f32 %v984, %v1009
  %v1033 = vadd.f32 %v1031, %v1032
  %v1034 = vtanh.pop %v1033
  %v1035 = vmul.f32 %v1030, %v1034
  %v1036 = vxor.u32 %v965, 2147483648
  %v1037 = vmul.f32 %v1036, 1.442695
  %v1038 = vpow.pop %v1037
  %v1039 = vadd.f32 %v1038, 1.0
  %v1040 = vrcp.pop %v1039
  %v1041 = vmul.f32 %v1039, %v1040
  %v1042 = vsub.f32 1.0, %v1041
  %v1043 = vmul.f32 %v1040, %v1042
  %v1044 = vadd.f32 %v1040, %v1043
  %vm1045 = vweird.f32 %v1039
  %vm1046 = vweird.f32 %v1040
  %vm1047 = vmor %vm1045, %vm1046
  %v1048 = vsel %vm1047, %v1040, %v1044
  %v1049 = vand.u32 2147483647, %v1039
  %vm1050 = vcmp.eq.f32.partialorder %v1049, 8.507059e+37
  %v1051 = vand.u32 %v1039, 2147483648
  %v1052 = vor.u32 1.1754944e-38, %v1051
  %v1053 = vsel %vm1050, %v1052, %v1048
  %v1054 = vmul.f32 1.0, %v1053
  %v1056 = vrot.slane %v965, 2
  %v1058 = vxor.u32 %v1056, 2147483648
  %v1059 = vmul.f32 %v1058, 1.442695
  %v1060 = vpow.pop %v1059
  %v1061 = vadd.f32 %v1060, 1.0
  %v1062 = vrcp.pop %v1061
  %v1063 = vmul.f32 %v1061, %v1062
  %v1064 = vsub.f32 1.0, %v1063
  %v1065 = vmul.f32 %v1062, %v1064
  %v1066 = vadd.f32 %v1062, %v1065
  %vm1067 = vweird.f32 %v1061
  %vm1068 = vweird.f32 %v1062
  %vm1069 = vmor %vm1067, %vm1068
  %v1070 = vsel %vm1069, %v1062, %v1066
  %v1071 = vand.u32 2147483647, %v1061
  %vm1072 = vcmp.eq.f32.partialorder %v1071, 8.507059e+37
  %v1073 = vand.u32 %v1061, 2147483648
  %v1074 = vor.u32 1.1754944e-38, %v1073
  %v1075 = vsel %vm1072, %v1074, %v1070
  %v1076 = vmul.f32 1.0, %v1075
  %v1077 = vrot.slane %v965, 4
  %v1079 = vtanh.pop %v1077
  %v1080 = vrot.slane %v965, 6
  %v1082 = vxor.u32 %v1080, 2147483648
  %v1083 = vmul.f32 %v1082, 1.442695
  %v1084 = vpow.pop %v1083
  %v1085 = vadd.f32 %v1084, 1.0
  %v1086 = vrcp.pop %v1085
  %v1087 = vmul.f32 %v1085, %v1086
  %v1088 = vsub.f32 1.0, %v1087
  %v1089 = vmul.f32 %v1086, %v1088
  %v1090 = vadd.f32 %v1086, %v1089
  %vm1091 = vweird.f32 %v1085
  %vm1092 = vweird.f32 %v1086
  %vm1093 = vmor %vm1091, %vm1092
  %v1094 = vsel %vm1093, %v1086, %v1090
  %v1095 = vand.u32 2147483647, %v1085
  %vm1096 = vcmp.eq.f32.partialorder %v1095, 8.507059e+37
  %v1097 = vand.u32 %v1085, 2147483648
  %v1098 = vor.u32 1.1754944e-38, %v1097
  %v1099 = vsel %vm1096, %v1098, %v1094
  %v1100 = vmul.f32 1.0, %v1099
  %v1101 = vmul.f32 %v1076, %v672
  %v1102 = vmul.f32 %v1054, %v1079
  %v1103 = vadd.f32 %v1101, %v1102
  %v1104 = vtanh.pop %v1103
  %v1105 = vmul.f32 %v1100, %v1104
  %v1106 = vpack.c.bf16 %v1035, %v1035
  %v1107 = vpack.c.bf16 %v1105, %v1105
  %1108 = vmatpush.bf16.msra.mxu0 %v780
  %1109 = vmatpush.bf16.msra.mxu0 %v779
  %1110 = vmatpush.bf16.msra.mxu0 %v778
  %1111 = vmatpush.bf16.msra.mxu0 %v777
  %1112 = vmatpush.bf16.msra.mxu0 %v776
  %1113 = vmatpush.bf16.msra.mxu0 %v775
  %1114 = vmatpush.bf16.msra.mxu0 %v774
  %1115 = vmatpush.bf16.msra.mxu0 %v773
  %1116 = vmatmul.bf16.gmra.mxu0 %v1106
  %v1117 = vpop.f32.mrf.mxu0
  %v1118 = vadd.f32 0.0, %v1117
  %v1119 = vpop.f32.mrf.mxu0
  %1120 = vdwg.mxu0
  %1121 = vmatpush.bf16.msra.mxu0 %v788
  %1122 = vmatpush.bf16.msra.mxu0 %v787
  %1123 = vmatpush.bf16.msra.mxu0 %v786
  %1124 = vmatpush.bf16.msra.mxu0 %v785
  %1125 = vmatpush.bf16.msra.mxu0 %v784
  %1126 = vmatpush.bf16.msra.mxu0 %v783
  %1127 = vmatpush.bf16.msra.mxu0 %v782
  %1128 = vmatpush.bf16.msra.mxu0 %v781
  %1129 = vmatmul.bf16.gmra.mxu0 %v1107
  %v1130 = vpop.f32.mrf.mxu0
  %v1131 = vadd.f32 %v1118, %v1130
  %v1132 = vpop.f32.mrf.mxu0
  %1133 = vdwg.mxu0
  %v1134 = vpack.c.bf16 %v1131, %v1131
  %1135 = vmatpush.bf16.msra.mxu0 %v327
  %1136 = vmatpush.bf16.msra.mxu0 %v319
  %1137 = vmatpush.bf16.msra.mxu0 %v311
  %1138 = vmatpush.bf16.msra.mxu0 %v303
  %1139 = vmatpush.bf16.msra.mxu0 %v295
  %1140 = vmatpush.bf16.msra.mxu0 %v287
  %1141 = vmatpush.bf16.msra.mxu0 %v279
  %1142 = vmatpush.bf16.msra.mxu0 %v271
  %1143 = vmatmul.bf16.gmra.mxu0 %v1134
  %v1144 = vpop.f32.mrf.mxu0
  %v1145 = vadd.f32 0.0, %v1144
  %v1146 = vpop.f32.mrf.mxu0
  %1147 = vdwg.mxu0
  %1148 = vmatpush.bf16.msra.mxu0 %v328
  %1149 = vmatpush.bf16.msra.mxu0 %v320
  %1150 = vmatpush.bf16.msra.mxu0 %v312
  %1151 = vmatpush.bf16.msra.mxu0 %v304
  %1152 = vmatpush.bf16.msra.mxu0 %v296
  %1153 = vmatpush.bf16.msra.mxu0 %v288
  %1154 = vmatpush.bf16.msra.mxu0 %v280
  %1155 = vmatpush.bf16.msra.mxu0 %v272
  %1156 = vmatmul.bf16.gmra.mxu0 %v1134
  %v1157 = vpop.f32.mrf.mxu0
  %v1158 = vadd.f32 0.0, %v1157
  %v1159 = vpop.f32.mrf.mxu0
  %1160 = vdwg.mxu0
  %1161 = vmatpush.bf16.msra.mxu0 %v329
  %1162 = vmatpush.bf16.msra.mxu0 %v321
  %1163 = vmatpush.bf16.msra.mxu0 %v313
  %1164 = vmatpush.bf16.msra.mxu0 %v305
  %1165 = vmatpush.bf16.msra.mxu0 %v297
  %1166 = vmatpush.bf16.msra.mxu0 %v289
  %1167 = vmatpush.bf16.msra.mxu0 %v281
  %1168 = vmatpush.bf16.msra.mxu0 %v273
  %1169 = vmatmul.bf16.gmra.mxu0 %v1134
  %v1170 = vpop.f32.mrf.mxu0
  %v1171 = vadd.f32 0.0, %v1170
  %v1172 = vpop.f32.mrf.mxu0
  %1173 = vdwg.mxu0
  %1174 = vmatpush.bf16.msra.mxu0 %v330
  %1175 = vmatpush.bf16.msra.mxu0 %v322
  %1176 = vmatpush.bf16.msra.mxu0 %v314
  %1177 = vmatpush.bf16.msra.mxu0 %v306
  %1178 = vmatpush.bf16.msra.mxu0 %v298
  %1179 = vmatpush.bf16.msra.mxu0 %v290
  %1180 = vmatpush.bf16.msra.mxu0 %v282
  %1181 = vmatpush.bf16.msra.mxu0 %v274
  %1182 = vmatmul.bf16.gmra.mxu0 %v1134
  %v1183 = vpop.f32.mrf.mxu0
  %v1184 = vadd.f32 0.0, %v1183
  %v1185 = vpop.f32.mrf.mxu0
  %1186 = vdwg.mxu0
  %1187 = vmatpush.bf16.msra.mxu0 %v331
  %1188 = vmatpush.bf16.msra.mxu0 %v323
  %1189 = vmatpush.bf16.msra.mxu0 %v315
  %1190 = vmatpush.bf16.msra.mxu0 %v307
  %1191 = vmatpush.bf16.msra.mxu0 %v299
  %1192 = vmatpush.bf16.msra.mxu0 %v291
  %1193 = vmatpush.bf16.msra.mxu0 %v283
  %1194 = vmatpush.bf16.msra.mxu0 %v275
  %1195 = vmatmul.bf16.gmra.mxu0 %v1134
  %v1196 = vpop.f32.mrf.mxu0
  %v1197 = vadd.f32 0.0, %v1196
  %v1198 = vpop.f32.mrf.mxu0
  %1199 = vdwg.mxu0
  %1200 = vmatpush.bf16.msra.mxu0 %v332
  %1201 = vmatpush.bf16.msra.mxu0 %v324
  %1202 = vmatpush.bf16.msra.mxu0 %v316
  %1203 = vmatpush.bf16.msra.mxu0 %v308
  %1204 = vmatpush.bf16.msra.mxu0 %v300
  %1205 = vmatpush.bf16.msra.mxu0 %v292
  %1206 = vmatpush.bf16.msra.mxu0 %v284
  %1207 = vmatpush.bf16.msra.mxu0 %v276
  %1208 = vmatmul.bf16.gmra.mxu0 %v1134
  %v1209 = vpop.f32.mrf.mxu0
  %v1210 = vadd.f32 0.0, %v1209
  %v1211 = vpop.f32.mrf.mxu0
  %1212 = vdwg.mxu0
  %1213 = vmatpush.bf16.msra.mxu0 %v333
  %1214 = vmatpush.bf16.msra.mxu0 %v325
  %1215 = vmatpush.bf16.msra.mxu0 %v317
  %1216 = vmatpush.bf16.msra.mxu0 %v309
  %1217 = vmatpush.bf16.msra.mxu0 %v301
  %1218 = vmatpush.bf16.msra.mxu0 %v293
  %1219 = vmatpush.bf16.msra.mxu0 %v285
  %1220 = vmatpush.bf16.msra.mxu0 %v277
  %1221 = vmatmul.bf16.gmra.mxu0 %v1134
  %v1222 = vpop.f32.mrf.mxu0
  %v1223 = vadd.f32 0.0, %v1222
  %v1224 = vpop.f32.mrf.mxu0
  %1225 = vdwg.mxu0
  %1226 = vmatpush.bf16.msra.mxu0 %v334
  %1227 = vmatpush.bf16.msra.mxu0 %v326
  %1228 = vmatpush.bf16.msra.mxu0 %v318
  %1229 = vmatpush.bf16.msra.mxu0 %v310
  %1230 = vmatpush.bf16.msra.mxu0 %v302
  %1231 = vmatpush.bf16.msra.mxu0 %v294
  %1232 = vmatpush.bf16.msra.mxu0 %v286
  %1233 = vmatpush.bf16.msra.mxu0 %v278
  %1234 = vmatmul.bf16.gmra.mxu0 %v1134
  %v1235 = vpop.f32.mrf.mxu0
  %v1236 = vadd.f32 0.0, %v1235
  %v1237 = vpop.f32.mrf.mxu0
  %1238 = vdwg.mxu0
  %s1239 = scalar_lea.vmem %s0, 32
  %v1240 = vld [vmem:[%s1239] sm:$0xff]
  %v1241 = vld [vmem:[%s1239 + $0x8] sm:$0xff]
  %s1242 = scalar_lea.vmem %s0, 80
  %v1243 = vld [vmem:[%s1242] sm:$0xff]
  %v1244 = vld [vmem:[%s1242 + $0x8] sm:$0xff]
  %v1249 = vrot.slane %v1158, 6
  %v1250 = vrot.slane %v1171, 4
  %v1251 = vrot.slane %v1184, 2
  %v1252 = vsel %vm515, %v1145, %v1249
  %v1253 = vsel %vm517, %v1250, %v1251
  %v1254 = vsel %vm519, %v1252, %v1253
  %v1256 = vadd.f32 %v1240, %v1254
  %v1261 = vrot.slane %v1210, 6
  %v1262 = vrot.slane %v1223, 4
  %v1263 = vrot.slane %v1236, 2
  %v1264 = vsel %vm515, %v1197, %v1261
  %v1265 = vsel %vm517, %v1262, %v1263
  %v1266 = vsel %vm519, %v1264, %v1265
  %v1268 = vadd.f32 %v1244, %v1266
  %v1269 = vxor.u32 %v1256, 2147483648
  %v1270 = vmul.f32 %v1269, 1.442695
  %v1271 = vpow.pop %v1270
  %v1272 = vadd.f32 %v1271, 1.0
  %v1273 = vrcp.pop %v1272
  %v1274 = vmul.f32 %v1272, %v1273
  %v1275 = vsub.f32 1.0, %v1274
  %v1276 = vmul.f32 %v1273, %v1275
  %v1277 = vadd.f32 %v1273, %v1276
  %vm1278 = vweird.f32 %v1272
  %vm1279 = vweird.f32 %v1273
  %vm1280 = vmor %vm1278, %vm1279
  %v1281 = vsel %vm1280, %v1273, %v1277
  %v1282 = vand.u32 2147483647, %v1272
  %vm1283 = vcmp.eq.f32.partialorder %v1282, 8.507059e+37
  %v1284 = vand.u32 %v1272, 2147483648
  %v1285 = vor.u32 1.1754944e-38, %v1284
  %v1286 = vsel %vm1283, %v1285, %v1281
  %v1287 = vmul.f32 1.0, %v1286
  %v1289 = vrot.slane %v1256, 2
  %v1291 = vxor.u32 %v1289, 2147483648
  %v1292 = vmul.f32 %v1291, 1.442695
  %v1293 = vpow.pop %v1292
  %v1294 = vadd.f32 %v1293, 1.0
  %v1295 = vrcp.pop %v1294
  %v1296 = vmul.f32 %v1294, %v1295
  %v1297 = vsub.f32 1.0, %v1296
  %v1298 = vmul.f32 %v1295, %v1297
  %v1299 = vadd.f32 %v1295, %v1298
  %vm1300 = vweird.f32 %v1294
  %vm1301 = vweird.f32 %v1295
  %vm1302 = vmor %vm1300, %vm1301
  %v1303 = vsel %vm1302, %v1295, %v1299
  %v1304 = vand.u32 2147483647, %v1294
  %vm1305 = vcmp.eq.f32.partialorder %v1304, 8.507059e+37
  %v1306 = vand.u32 %v1294, 2147483648
  %v1307 = vor.u32 1.1754944e-38, %v1306
  %v1308 = vsel %vm1305, %v1307, %v1303
  %v1309 = vmul.f32 1.0, %v1308
  %v1310 = vrot.slane %v1256, 4
  %v1312 = vtanh.pop %v1310
  %v1313 = vrot.slane %v1256, 6
  %v1315 = vxor.u32 %v1313, 2147483648
  %v1316 = vmul.f32 %v1315, 1.442695
  %v1317 = vpow.pop %v1316
  %v1318 = vadd.f32 %v1317, 1.0
  %v1319 = vrcp.pop %v1318
  %v1320 = vmul.f32 %v1318, %v1319
  %v1321 = vsub.f32 1.0, %v1320
  %v1322 = vmul.f32 %v1319, %v1321
  %v1323 = vadd.f32 %v1319, %v1322
  %vm1324 = vweird.f32 %v1318
  %vm1325 = vweird.f32 %v1319
  %vm1326 = vmor %vm1324, %vm1325
  %v1327 = vsel %vm1326, %v1319, %v1323
  %v1328 = vand.u32 2147483647, %v1318
  %vm1329 = vcmp.eq.f32.partialorder %v1328, 8.507059e+37
  %v1330 = vand.u32 %v1318, 2147483648
  %v1331 = vor.u32 1.1754944e-38, %v1330
  %v1332 = vsel %vm1329, %v1331, %v1327
  %v1333 = vmul.f32 1.0, %v1332
  %v1334 = vmul.f32 %v1309, %v1033
  %v1335 = vmul.f32 %v1287, %v1312
  %v1336 = vadd.f32 %v1334, %v1335
  %v1337 = vtanh.pop %v1336
  %v1338 = vmul.f32 %v1333, %v1337
  %v1339 = vxor.u32 %v1268, 2147483648
  %v1340 = vmul.f32 %v1339, 1.442695
  %v1341 = vpow.pop %v1340
  %v1342 = vadd.f32 %v1341, 1.0
  %v1343 = vrcp.pop %v1342
  %v1344 = vmul.f32 %v1342, %v1343
  %v1345 = vsub.f32 1.0, %v1344
  %v1346 = vmul.f32 %v1343, %v1345
  %v1347 = vadd.f32 %v1343, %v1346
  %vm1348 = vweird.f32 %v1342
  %vm1349 = vweird.f32 %v1343
  %vm1350 = vmor %vm1348, %vm1349
  %v1351 = vsel %vm1350, %v1343, %v1347
  %v1352 = vand.u32 2147483647, %v1342
  %vm1353 = vcmp.eq.f32.partialorder %v1352, 8.507059e+37
  %v1354 = vand.u32 %v1342, 2147483648
  %v1355 = vor.u32 1.1754944e-38, %v1354
  %v1356 = vsel %vm1353, %v1355, %v1351
  %v1357 = vmul.f32 1.0, %v1356
  %v1359 = vrot.slane %v1268, 2
  %v1361 = vxor.u32 %v1359, 2147483648
  %v1362 = vmul.f32 %v1361, 1.442695
  %v1363 = vpow.pop %v1362
  %v1364 = vadd.f32 %v1363, 1.0
  %v1365 = vrcp.pop %v1364
  %v1366 = vmul.f32 %v1364, %v1365
  %v1367 = vsub.f32 1.0, %v1366
  %v1368 = vmul.f32 %v1365, %v1367
  %v1369 = vadd.f32 %v1365, %v1368
  %vm1370 = vweird.f32 %v1364
  %vm1371 = vweird.f32 %v1365
  %vm1372 = vmor %vm1370, %vm1371
  %v1373 = vsel %vm1372, %v1365, %v1369
  %v1374 = vand.u32 2147483647, %v1364
  %vm1375 = vcmp.eq.f32.partialorder %v1374, 8.507059e+37
  %v1376 = vand.u32 %v1364, 2147483648
  %v1377 = vor.u32 1.1754944e-38, %v1376
  %v1378 = vsel %vm1375, %v1377, %v1373
  %v1379 = vmul.f32 1.0, %v1378
  %v1380 = vrot.slane %v1268, 4
  %v1382 = vtanh.pop %v1380
  %v1383 = vrot.slane %v1268, 6
  %v1385 = vxor.u32 %v1383, 2147483648
  %v1386 = vmul.f32 %v1385, 1.442695
  %v1387 = vpow.pop %v1386
  %v1388 = vadd.f32 %v1387, 1.0
  %v1389 = vrcp.pop %v1388
  %v1390 = vmul.f32 %v1388, %v1389
  %v1391 = vsub.f32 1.0, %v1390
  %v1392 = vmul.f32 %v1389, %v1391
  %v1393 = vadd.f32 %v1389, %v1392
  %vm1394 = vweird.f32 %v1388
  %vm1395 = vweird.f32 %v1389
  %vm1396 = vmor %vm1394, %vm1395
  %v1397 = vsel %vm1396, %v1389, %v1393
  %v1398 = vand.u32 2147483647, %v1388
  %vm1399 = vcmp.eq.f32.partialorder %v1398, 8.507059e+37
  %v1400 = vand.u32 %v1388, 2147483648
  %v1401 = vor.u32 1.1754944e-38, %v1400
  %v1402 = vsel %vm1399, %v1401, %v1397
  %v1403 = vmul.f32 1.0, %v1402
  %v1404 = vmul.f32 %v1379, %v1103
  %v1405 = vmul.f32 %v1357, %v1382
  %v1406 = vadd.f32 %v1404, %v1405
  %v1407 = vtanh.pop %v1406
  %v1408 = vmul.f32 %v1403, %v1407
  %v1409 = vpack.c.bf16 %v1338, %v1338
  %v1410 = vpack.c.bf16 %v1408, %v1408
  %1411 = vmatpush.bf16.msra.mxu0 %v780
  %1412 = vmatpush.bf16.msra.mxu0 %v779
  %1413 = vmatpush.bf16.msra.mxu0 %v778
  %1414 = vmatpush.bf16.msra.mxu0 %v777
  %1415 = vmatpush.bf16.msra.mxu0 %v776
  %1416 = vmatpush.bf16.msra.mxu0 %v775
  %1417 = vmatpush.bf16.msra.mxu0 %v774
  %1418 = vmatpush.bf16.msra.mxu0 %v773
  %1419 = vmatmul.bf16.gmra.mxu0 %v1409
  %v1420 = vpop.f32.mrf.mxu0
  %v1421 = vadd.f32 0.0, %v1420
  %v1422 = vpop.f32.mrf.mxu0
  %1423 = vdwg.mxu0
  %1424 = vmatpush.bf16.msra.mxu0 %v788
  %1425 = vmatpush.bf16.msra.mxu0 %v787
  %1426 = vmatpush.bf16.msra.mxu0 %v786
  %1427 = vmatpush.bf16.msra.mxu0 %v785
  %1428 = vmatpush.bf16.msra.mxu0 %v784
  %1429 = vmatpush.bf16.msra.mxu0 %v783
  %1430 = vmatpush.bf16.msra.mxu0 %v782
  %1431 = vmatpush.bf16.msra.mxu0 %v781
  %1432 = vmatmul.bf16.gmra.mxu0 %v1410
  %v1433 = vpop.f32.mrf.mxu0
  %v1434 = vadd.f32 %v1421, %v1433
  %v1435 = vpop.f32.mrf.mxu0
  %1436 = vdwg.mxu0
  %v1437 = vpack.c.bf16 %v1434, %v1434
  %1438 = vmatpush.bf16.msra.mxu0 %v327
  %1439 = vmatpush.bf16.msra.mxu0 %v319
  %1440 = vmatpush.bf16.msra.mxu0 %v311
  %1441 = vmatpush.bf16.msra.mxu0 %v303
  %1442 = vmatpush.bf16.msra.mxu0 %v295
  %1443 = vmatpush.bf16.msra.mxu0 %v287
  %1444 = vmatpush.bf16.msra.mxu0 %v279
  %1445 = vmatpush.bf16.msra.mxu0 %v271
  %1446 = vmatmul.bf16.gmra.mxu0 %v1437
  %v1447 = vpop.f32.mrf.mxu0
  %v1448 = vadd.f32 0.0, %v1447
  %v1449 = vpop.f32.mrf.mxu0
  %1450 = vdwg.mxu0
  %1451 = vmatpush.bf16.msra.mxu0 %v328
  %1452 = vmatpush.bf16.msra.mxu0 %v320
  %1453 = vmatpush.bf16.msra.mxu0 %v312
  %1454 = vmatpush.bf16.msra.mxu0 %v304
  %1455 = vmatpush.bf16.msra.mxu0 %v296
  %1456 = vmatpush.bf16.msra.mxu0 %v288
  %1457 = vmatpush.bf16.msra.mxu0 %v280
  %1458 = vmatpush.bf16.msra.mxu0 %v272
  %1459 = vmatmul.bf16.gmra.mxu0 %v1437
  %v1460 = vpop.f32.mrf.mxu0
  %v1461 = vadd.f32 0.0, %v1460
  %v1462 = vpop.f32.mrf.mxu0
  %1463 = vdwg.mxu0
  %1464 = vmatpush.bf16.msra.mxu0 %v329
  %1465 = vmatpush.bf16.msra.mxu0 %v321
  %1466 = vmatpush.bf16.msra.mxu0 %v313
  %1467 = vmatpush.bf16.msra.mxu0 %v305
  %1468 = vmatpush.bf16.msra.mxu0 %v297
  %1469 = vmatpush.bf16.msra.mxu0 %v289
  %1470 = vmatpush.bf16.msra.mxu0 %v281
  %1471 = vmatpush.bf16.msra.mxu0 %v273
  %1472 = vmatmul.bf16.gmra.mxu0 %v1437
  %v1473 = vpop.f32.mrf.mxu0
  %v1474 = vadd.f32 0.0, %v1473
  %v1475 = vpop.f32.mrf.mxu0
  %1476 = vdwg.mxu0
  %1477 = vmatpush.bf16.msra.mxu0 %v330
  %1478 = vmatpush.bf16.msra.mxu0 %v322
  %1479 = vmatpush.bf16.msra.mxu0 %v314
  %1480 = vmatpush.bf16.msra.mxu0 %v306
  %1481 = vmatpush.bf16.msra.mxu0 %v298
  %1482 = vmatpush.bf16.msra.mxu0 %v290
  %1483 = vmatpush.bf16.msra.mxu0 %v282
  %1484 = vmatpush.bf16.msra.mxu0 %v274
  %1485 = vmatmul.bf16.gmra.mxu0 %v1437
  %v1486 = vpop.f32.mrf.mxu0
  %v1487 = vadd.f32 0.0, %v1486
  %v1488 = vpop.f32.mrf.mxu0
  %1489 = vdwg.mxu0
  %1490 = vmatpush.bf16.msra.mxu0 %v331
  %1491 = vmatpush.bf16.msra.mxu0 %v323
  %1492 = vmatpush.bf16.msra.mxu0 %v315
  %1493 = vmatpush.bf16.msra.mxu0 %v307
  %1494 = vmatpush.bf16.msra.mxu0 %v299
  %1495 = vmatpush.bf16.msra.mxu0 %v291
  %1496 = vmatpush.bf16.msra.mxu0 %v283
  %1497 = vmatpush.bf16.msra.mxu0 %v275
  %1498 = vmatmul.bf16.gmra.mxu0 %v1437
  %v1499 = vpop.f32.mrf.mxu0
  %v1500 = vadd.f32 0.0, %v1499
  %v1501 = vpop.f32.mrf.mxu0
  %1502 = vdwg.mxu0
  %1503 = vmatpush.bf16.msra.mxu0 %v332
  %1504 = vmatpush.bf16.msra.mxu0 %v324
  %1505 = vmatpush.bf16.msra.mxu0 %v316
  %1506 = vmatpush.bf16.msra.mxu0 %v308
  %1507 = vmatpush.bf16.msra.mxu0 %v300
  %1508 = vmatpush.bf16.msra.mxu0 %v292
  %1509 = vmatpush.bf16.msra.mxu0 %v284
  %1510 = vmatpush.bf16.msra.mxu0 %v276
  %1511 = vmatmul.bf16.gmra.mxu0 %v1437
  %v1512 = vpop.f32.mrf.mxu0
  %v1513 = vadd.f32 0.0, %v1512
  %v1514 = vpop.f32.mrf.mxu0
  %1515 = vdwg.mxu0
  %1516 = vmatpush.bf16.msra.mxu0 %v333
  %1517 = vmatpush.bf16.msra.mxu0 %v325
  %1518 = vmatpush.bf16.msra.mxu0 %v317
  %1519 = vmatpush.bf16.msra.mxu0 %v309
  %1520 = vmatpush.bf16.msra.mxu0 %v301
  %1521 = vmatpush.bf16.msra.mxu0 %v293
  %1522 = vmatpush.bf16.msra.mxu0 %v285
  %1523 = vmatpush.bf16.msra.mxu0 %v277
  %1524 = vmatmul.bf16.gmra.mxu0 %v1437
  %v1525 = vpop.f32.mrf.mxu0
  %v1526 = vadd.f32 0.0, %v1525
  %v1527 = vpop.f32.mrf.mxu0
  %1528 = vdwg.mxu0
  %1529 = vmatpush.bf16.msra.mxu0 %v334
  %1530 = vmatpush.bf16.msra.mxu0 %v326
  %1531 = vmatpush.bf16.msra.mxu0 %v318
  %1532 = vmatpush.bf16.msra.mxu0 %v310
  %1533 = vmatpush.bf16.msra.mxu0 %v302
  %1534 = vmatpush.bf16.msra.mxu0 %v294
  %1535 = vmatpush.bf16.msra.mxu0 %v286
  %1536 = vmatpush.bf16.msra.mxu0 %v278
  %1537 = vmatmul.bf16.gmra.mxu0 %v1437
  %v1538 = vpop.f32.mrf.mxu0
  %v1539 = vadd.f32 0.0, %v1538
  %v1540 = vpop.f32.mrf.mxu0
  %1541 = vdwg.mxu0
  %s1542 = scalar_lea.vmem %s0, 48
  %v1543 = vld [vmem:[%s1542] sm:$0xff]
  %v1544 = vld [vmem:[%s1542 + $0x8] sm:$0xff]
  %s1545 = scalar_lea.vmem %s0, 64
  %v1546 = vld [vmem:[%s1545] sm:$0xff]
  %v1547 = vld [vmem:[%s1545 + $0x8] sm:$0xff]
  %v1552 = vrot.slane %v1461, 6
  %v1553 = vrot.slane %v1474, 4
  %v1554 = vrot.slane %v1487, 2
  %v1555 = vsel %vm515, %v1448, %v1552
  %v1556 = vsel %vm517, %v1553, %v1554
  %v1557 = vsel %vm519, %v1555, %v1556
  %v1559 = vadd.f32 %v1543, %v1557
  %v1564 = vrot.slane %v1513, 6
  %v1565 = vrot.slane %v1526, 4
  %v1566 = vrot.slane %v1539, 2
  %v1567 = vsel %vm515, %v1500, %v1564
  %v1568 = vsel %vm517, %v1565, %v1566
  %v1569 = vsel %vm519, %v1567, %v1568
  %v1571 = vadd.f32 %v1547, %v1569
  %v1572 = vxor.u32 %v1559, 2147483648
  %v1573 = vmul.f32 %v1572, 1.442695
  %v1574 = vpow.pop %v1573
  %v1575 = vadd.f32 %v1574, 1.0
  %v1576 = vrcp.pop %v1575
  %v1577 = vmul.f32 %v1575, %v1576
  %v1578 = vsub.f32 1.0, %v1577
  %v1579 = vmul.f32 %v1576, %v1578
  %v1580 = vadd.f32 %v1576, %v1579
  %vm1581 = vweird.f32 %v1575
  %vm1582 = vweird.f32 %v1576
  %vm1583 = vmor %vm1581, %vm1582
  %v1584 = vsel %vm1583, %v1576, %v1580
  %v1585 = vand.u32 2147483647, %v1575
  %vm1586 = vcmp.eq.f32.partialorder %v1585, 8.507059e+37
  %v1587 = vand.u32 %v1575, 2147483648
  %v1588 = vor.u32 1.1754944e-38, %v1587
  %v1589 = vsel %vm1586, %v1588, %v1584
  %v1590 = vmul.f32 1.0, %v1589
  %v1592 = vrot.slane %v1559, 2
  %v1594 = vxor.u32 %v1592, 2147483648
  %v1595 = vmul.f32 %v1594, 1.442695
  %v1596 = vpow.pop %v1595
  %v1597 = vadd.f32 %v1596, 1.0
  %v1598 = vrcp.pop %v1597
  %v1599 = vmul.f32 %v1597, %v1598
  %v1600 = vsub.f32 1.0, %v1599
  %v1601 = vmul.f32 %v1598, %v1600
  %v1602 = vadd.f32 %v1598, %v1601
  %vm1603 = vweird.f32 %v1597
  %vm1604 = vweird.f32 %v1598
  %vm1605 = vmor %vm1603, %vm1604
  %v1606 = vsel %vm1605, %v1598, %v1602
  %v1607 = vand.u32 2147483647, %v1597
  %vm1608 = vcmp.eq.f32.partialorder %v1607, 8.507059e+37
  %v1609 = vand.u32 %v1597, 2147483648
  %v1610 = vor.u32 1.1754944e-38, %v1609
  %v1611 = vsel %vm1608, %v1610, %v1606
  %v1612 = vmul.f32 1.0, %v1611
  %v1613 = vrot.slane %v1559, 4
  %v1615 = vtanh.pop %v1613
  %v1616 = vrot.slane %v1559, 6
  %v1618 = vxor.u32 %v1616, 2147483648
  %v1619 = vmul.f32 %v1618, 1.442695
  %v1620 = vpow.pop %v1619
  %v1621 = vadd.f32 %v1620, 1.0
  %v1622 = vrcp.pop %v1621
  %v1623 = vmul.f32 %v1621, %v1622
  %v1624 = vsub.f32 1.0, %v1623
  %v1625 = vmul.f32 %v1622, %v1624
  %v1626 = vadd.f32 %v1622, %v1625
  %vm1627 = vweird.f32 %v1621
  %vm1628 = vweird.f32 %v1622
  %vm1629 = vmor %vm1627, %vm1628
  %v1630 = vsel %vm1629, %v1622, %v1626
  %v1631 = vand.u32 2147483647, %v1621
  %vm1632 = vcmp.eq.f32.partialorder %v1631, 8.507059e+37
  %v1633 = vand.u32 %v1621, 2147483648
  %v1634 = vor.u32 1.1754944e-38, %v1633
  %v1635 = vsel %vm1632, %v1634, %v1630
  %v1636 = vmul.f32 1.0, %v1635
  %v1637 = vmul.f32 %v1612, %v1336
  %v1638 = vmul.f32 %v1590, %v1615
  %v1639 = vadd.f32 %v1637, %v1638
  %v1640 = vtanh.pop %v1639
  %v1641 = vmul.f32 %v1636, %v1640
  %v1642 = vxor.u32 %v1571, 2147483648
  %v1643 = vmul.f32 %v1642, 1.442695
  %v1644 = vpow.pop %v1643
  %v1645 = vadd.f32 %v1644, 1.0
  %v1646 = vrcp.pop %v1645
  %v1647 = vmul.f32 %v1645, %v1646
  %v1648 = vsub.f32 1.0, %v1647
  %v1649 = vmul.f32 %v1646, %v1648
  %v1650 = vadd.f32 %v1646, %v1649
  %vm1651 = vweird.f32 %v1645
  %vm1652 = vweird.f32 %v1646
  %vm1653 = vmor %vm1651, %vm1652
  %v1654 = vsel %vm1653, %v1646, %v1650
  %v1655 = vand.u32 2147483647, %v1645
  %vm1656 = vcmp.eq.f32.partialorder %v1655, 8.507059e+37
  %v1657 = vand.u32 %v1645, 2147483648
  %v1658 = vor.u32 1.1754944e-38, %v1657
  %v1659 = vsel %vm1656, %v1658, %v1654
  %v1660 = vmul.f32 1.0, %v1659
  %v1662 = vrot.slane %v1571, 2
  %v1664 = vxor.u32 %v1662, 2147483648
  %v1665 = vmul.f32 %v1664, 1.442695
  %v1666 = vpow.pop %v1665
  %v1667 = vadd.f32 %v1666, 1.0
  %v1668 = vrcp.pop %v1667
  %v1669 = vmul.f32 %v1667, %v1668
  %v1670 = vsub.f32 1.0, %v1669
  %v1671 = vmul.f32 %v1668, %v1670
  %v1672 = vadd.f32 %v1668, %v1671
  %vm1673 = vweird.f32 %v1667
  %vm1674 = vweird.f32 %v1668
  %vm1675 = vmor %vm1673, %vm1674
  %v1676 = vsel %vm1675, %v1668, %v1672
  %v1677 = vand.u32 2147483647, %v1667
  %vm1678 = vcmp.eq.f32.partialorder %v1677, 8.507059e+37
  %v1679 = vand.u32 %v1667, 2147483648
  %v1680 = vor.u32 1.1754944e-38, %v1679
  %v1681 = vsel %vm1678, %v1680, %v1676
  %v1682 = vmul.f32 1.0, %v1681
  %v1683 = vrot.slane %v1571, 4
  %v1685 = vtanh.pop %v1683
  %v1686 = vrot.slane %v1571, 6
  %v1688 = vxor.u32 %v1686, 2147483648
  %v1689 = vmul.f32 %v1688, 1.442695
  %v1690 = vpow.pop %v1689
  %v1691 = vadd.f32 %v1690, 1.0
  %v1692 = vrcp.pop %v1691
  %v1693 = vmul.f32 %v1691, %v1692
  %v1694 = vsub.f32 1.0, %v1693
  %v1695 = vmul.f32 %v1692, %v1694
  %v1696 = vadd.f32 %v1692, %v1695
  %vm1697 = vweird.f32 %v1691
  %vm1698 = vweird.f32 %v1692
  %vm1699 = vmor %vm1697, %vm1698
  %v1700 = vsel %vm1699, %v1692, %v1696
  %v1701 = vand.u32 2147483647, %v1691
  %vm1702 = vcmp.eq.f32.partialorder %v1701, 8.507059e+37
  %v1703 = vand.u32 %v1691, 2147483648
  %v1704 = vor.u32 1.1754944e-38, %v1703
  %v1705 = vsel %vm1702, %v1704, %v1700
  %v1706 = vmul.f32 1.0, %v1705
  %v1707 = vmul.f32 %v1682, %v1406
  %v1708 = vmul.f32 %v1660, %v1685
  %v1709 = vadd.f32 %v1707, %v1708
  %v1710 = vtanh.pop %v1709
  %v1711 = vmul.f32 %v1706, %v1710
  %v1712 = vpack.c.bf16 %v1641, %v1641
  %v1713 = vpack.c.bf16 %v1711, %v1711
  %1714 = vmatpush.bf16.msra.mxu0 %v780
  %1715 = vmatpush.bf16.msra.mxu0 %v779
  %1716 = vmatpush.bf16.msra.mxu0 %v778
  %1717 = vmatpush.bf16.msra.mxu0 %v777
  %1718 = vmatpush.bf16.msra.mxu0 %v776
  %1719 = vmatpush.bf16.msra.mxu0 %v775
  %1720 = vmatpush.bf16.msra.mxu0 %v774
  %1721 = vmatpush.bf16.msra.mxu0 %v773
  %1722 = vmatmul.bf16.gmra.mxu0 %v1712
  %v1723 = vpop.f32.mrf.mxu0
  %v1724 = vadd.f32 0.0, %v1723
  %v1725 = vpop.f32.mrf.mxu0
  %1726 = vdwg.mxu0
  %1727 = vmatpush.bf16.msra.mxu0 %v788
  %1728 = vmatpush.bf16.msra.mxu0 %v787
  %1729 = vmatpush.bf16.msra.mxu0 %v786
  %1730 = vmatpush.bf16.msra.mxu0 %v785
  %1731 = vmatpush.bf16.msra.mxu0 %v784
  %1732 = vmatpush.bf16.msra.mxu0 %v783
  %1733 = vmatpush.bf16.msra.mxu0 %v782
  %1734 = vmatpush.bf16.msra.mxu0 %v781
  %1735 = vmatmul.bf16.gmra.mxu0 %v1713
  %v1736 = vpop.f32.mrf.mxu0
  %v1737 = vadd.f32 %v1724, %v1736
  %v1738 = vpop.f32.mrf.mxu0
  %1739 = vdwg.mxu0
  %v1740 = vpack.c.bf16 %v1737, %v1737
  %1741 = vmatpush.bf16.msra.mxu0 %v327
  %1742 = vmatpush.bf16.msra.mxu0 %v319
  %1743 = vmatpush.bf16.msra.mxu0 %v311
  %1744 = vmatpush.bf16.msra.mxu0 %v303
  %1745 = vmatpush.bf16.msra.mxu0 %v295
  %1746 = vmatpush.bf16.msra.mxu0 %v287
  %1747 = vmatpush.bf16.msra.mxu0 %v279
  %1748 = vmatpush.bf16.msra.mxu0 %v271
  %1749 = vmatmul.bf16.gmra.mxu0 %v1740
  %v1750 = vpop.f32.mrf.mxu0
  %v1751 = vadd.f32 0.0, %v1750
  %v1752 = vpop.f32.mrf.mxu0
  %1753 = vdwg.mxu0
  %1754 = vmatpush.bf16.msra.mxu0 %v328
  %1755 = vmatpush.bf16.msra.mxu0 %v320
  %1756 = vmatpush.bf16.msra.mxu0 %v312
  %1757 = vmatpush.bf16.msra.mxu0 %v304
  %1758 = vmatpush.bf16.msra.mxu0 %v296
  %1759 = vmatpush.bf16.msra.mxu0 %v288
  %1760 = vmatpush.bf16.msra.mxu0 %v280
  %1761 = vmatpush.bf16.msra.mxu0 %v272
  %1762 = vmatmul.bf16.gmra.mxu0 %v1740
  %v1763 = vpop.f32.mrf.mxu0
  %v1764 = vadd.f32 0.0, %v1763
  %v1765 = vpop.f32.mrf.mxu0
  %1766 = vdwg.mxu0
  %1767 = vmatpush.bf16.msra.mxu0 %v329
  %1768 = vmatpush.bf16.msra.mxu0 %v321
  %1769 = vmatpush.bf16.msra.mxu0 %v313
  %1770 = vmatpush.bf16.msra.mxu0 %v305
  %1771 = vmatpush.bf16.msra.mxu0 %v297
  %1772 = vmatpush.bf16.msra.mxu0 %v289
  %1773 = vmatpush.bf16.msra.mxu0 %v281
  %1774 = vmatpush.bf16.msra.mxu0 %v273
  %1775 = vmatmul.bf16.gmra.mxu0 %v1740
  %v1776 = vpop.f32.mrf.mxu0
  %v1777 = vadd.f32 0.0, %v1776
  %v1778 = vpop.f32.mrf.mxu0
  %1779 = vdwg.mxu0
  %1780 = vmatpush.bf16.msra.mxu0 %v330
  %1781 = vmatpush.bf16.msra.mxu0 %v322
  %1782 = vmatpush.bf16.msra.mxu0 %v314
  %1783 = vmatpush.bf16.msra.mxu0 %v306
  %1784 = vmatpush.bf16.msra.mxu0 %v298
  %1785 = vmatpush.bf16.msra.mxu0 %v290
  %1786 = vmatpush.bf16.msra.mxu0 %v282
  %1787 = vmatpush.bf16.msra.mxu0 %v274
  %1788 = vmatmul.bf16.gmra.mxu0 %v1740
  %v1789 = vpop.f32.mrf.mxu0
  %v1790 = vadd.f32 0.0, %v1789
  %v1791 = vpop.f32.mrf.mxu0
  %1792 = vdwg.mxu0
  %1793 = vmatpush.bf16.msra.mxu0 %v331
  %1794 = vmatpush.bf16.msra.mxu0 %v323
  %1795 = vmatpush.bf16.msra.mxu0 %v315
  %1796 = vmatpush.bf16.msra.mxu0 %v307
  %1797 = vmatpush.bf16.msra.mxu0 %v299
  %1798 = vmatpush.bf16.msra.mxu0 %v291
  %1799 = vmatpush.bf16.msra.mxu0 %v283
  %1800 = vmatpush.bf16.msra.mxu0 %v275
  %1801 = vmatmul.bf16.gmra.mxu0 %v1740
  %v1802 = vpop.f32.mrf.mxu0
  %v1803 = vadd.f32 0.0, %v1802
  %v1804 = vpop.f32.mrf.mxu0
  %1805 = vdwg.mxu0
  %1806 = vmatpush.bf16.msra.mxu0 %v332
  %1807 = vmatpush.bf16.msra.mxu0 %v324
  %1808 = vmatpush.bf16.msra.mxu0 %v316
  %1809 = vmatpush.bf16.msra.mxu0 %v308
  %1810 = vmatpush.bf16.msra.mxu0 %v300
  %1811 = vmatpush.bf16.msra.mxu0 %v292
  %1812 = vmatpush.bf16.msra.mxu0 %v284
  %1813 = vmatpush.bf16.msra.mxu0 %v276
  %1814 = vmatmul.bf16.gmra.mxu0 %v1740
  %v1815 = vpop.f32.mrf.mxu0
  %v1816 = vadd.f32 0.0, %v1815
  %v1817 = vpop.f32.mrf.mxu0
  %1818 = vdwg.mxu0
  %1819 = vmatpush.bf16.msra.mxu0 %v333
  %1820 = vmatpush.bf16.msra.mxu0 %v325
  %1821 = vmatpush.bf16.msra.mxu0 %v317
  %1822 = vmatpush.bf16.msra.mxu0 %v309
  %1823 = vmatpush.bf16.msra.mxu0 %v301
  %1824 = vmatpush.bf16.msra.mxu0 %v293
  %1825 = vmatpush.bf16.msra.mxu0 %v285
  %1826 = vmatpush.bf16.msra.mxu0 %v277
  %1827 = vmatmul.bf16.gmra.mxu0 %v1740
  %v1828 = vpop.f32.mrf.mxu0
  %v1829 = vadd.f32 0.0, %v1828
  %v1830 = vpop.f32.mrf.mxu0
  %1831 = vdwg.mxu0
  %1832 = vmatpush.bf16.msra.mxu0 %v334
  %1833 = vmatpush.bf16.msra.mxu0 %v326
  %1834 = vmatpush.bf16.msra.mxu0 %v318
  %1835 = vmatpush.bf16.msra.mxu0 %v310
  %1836 = vmatpush.bf16.msra.mxu0 %v302
  %1837 = vmatpush.bf16.msra.mxu0 %v294
  %1838 = vmatpush.bf16.msra.mxu0 %v286
  %1839 = vmatpush.bf16.msra.mxu0 %v278
  %1840 = vmatmul.bf16.gmra.mxu0 %v1740
  %v1841 = vpop.f32.mrf.mxu0
  %v1842 = vadd.f32 0.0, %v1841
  %v1843 = vpop.f32.mrf.mxu0
  %1844 = vdwg.mxu0
  %v1849 = vrot.slane %v1764, 6
  %v1850 = vrot.slane %v1777, 4
  %v1851 = vrot.slane %v1790, 2
  %v1852 = vsel %vm515, %v1751, %v1849
  %v1853 = vsel %vm517, %v1850, %v1851
  %v1854 = vsel %vm519, %v1852, %v1853
  %v1856 = vadd.f32 %v1546, %v1854
  %v1861 = vrot.slane %v1816, 6
  %v1862 = vrot.slane %v1829, 4
  %v1863 = vrot.slane %v1842, 2
  %v1864 = vsel %vm515, %v1803, %v1861
  %v1865 = vsel %vm517, %v1862, %v1863
  %v1866 = vsel %vm519, %v1864, %v1865
  %v1868 = vadd.f32 %v1544, %v1866
  %v1869 = vxor.u32 %v1856, 2147483648
  %v1870 = vmul.f32 %v1869, 1.442695
  %v1871 = vpow.pop %v1870
  %v1872 = vadd.f32 %v1871, 1.0
  %v1873 = vrcp.pop %v1872
  %v1874 = vmul.f32 %v1872, %v1873
  %v1875 = vsub.f32 1.0, %v1874
  %v1876 = vmul.f32 %v1873, %v1875
  %v1877 = vadd.f32 %v1873, %v1876
  %vm1878 = vweird.f32 %v1872
  %vm1879 = vweird.f32 %v1873
  %vm1880 = vmor %vm1878, %vm1879
  %v1881 = vsel %vm1880, %v1873, %v1877
  %v1882 = vand.u32 2147483647, %v1872
  %vm1883 = vcmp.eq.f32.partialorder %v1882, 8.507059e+37
  %v1884 = vand.u32 %v1872, 2147483648
  %v1885 = vor.u32 1.1754944e-38, %v1884
  %v1886 = vsel %vm1883, %v1885, %v1881
  %v1887 = vmul.f32 1.0, %v1886
  %v1889 = vrot.slane %v1856, 2
  %v1891 = vxor.u32 %v1889, 2147483648
  %v1892 = vmul.f32 %v1891, 1.442695
  %v1893 = vpow.pop %v1892
  %v1894 = vadd.f32 %v1893, 1.0
  %v1895 = vrcp.pop %v1894
  %v1896 = vmul.f32 %v1894, %v1895
  %v1897 = vsub.f32 1.0, %v1896
  %v1898 = vmul.f32 %v1895, %v1897
  %v1899 = vadd.f32 %v1895, %v1898
  %vm1900 = vweird.f32 %v1894
  %vm1901 = vweird.f32 %v1895
  %vm1902 = vmor %vm1900, %vm1901
  %v1903 = vsel %vm1902, %v1895, %v1899
  %v1904 = vand.u32 2147483647, %v1894
  %vm1905 = vcmp.eq.f32.partialorder %v1904, 8.507059e+37
  %v1906 = vand.u32 %v1894, 2147483648
  %v1907 = vor.u32 1.1754944e-38, %v1906
  %v1908 = vsel %vm1905, %v1907, %v1903
  %v1909 = vmul.f32 1.0, %v1908
  %v1910 = vrot.slane %v1856, 4
  %v1912 = vtanh.pop %v1910
  %v1913 = vrot.slane %v1856, 6
  %v1915 = vxor.u32 %v1913, 2147483648
  %v1916 = vmul.f32 %v1915, 1.442695
  %v1917 = vpow.pop %v1916
  %v1918 = vadd.f32 %v1917, 1.0
  %v1919 = vrcp.pop %v1918
  %v1920 = vmul.f32 %v1918, %v1919
  %v1921 = vsub.f32 1.0, %v1920
  %v1922 = vmul.f32 %v1919, %v1921
  %v1923 = vadd.f32 %v1919, %v1922
  %vm1924 = vweird.f32 %v1918
  %vm1925 = vweird.f32 %v1919
  %vm1926 = vmor %vm1924, %vm1925
  %v1927 = vsel %vm1926, %v1919, %v1923
  %v1928 = vand.u32 2147483647, %v1918
  %vm1929 = vcmp.eq.f32.partialorder %v1928, 8.507059e+37
  %v1930 = vand.u32 %v1918, 2147483648
  %v1931 = vor.u32 1.1754944e-38, %v1930
  %v1932 = vsel %vm1929, %v1931, %v1927
  %v1933 = vmul.f32 1.0, %v1932
  %v1934 = vmul.f32 %v1909, %v1639
  %v1935 = vmul.f32 %v1887, %v1912
  %v1936 = vadd.f32 %v1934, %v1935
  %v1937 = vtanh.pop %v1936
  %v1938 = vmul.f32 %v1933, %v1937
  %v1939 = vxor.u32 %v1868, 2147483648
  %v1940 = vmul.f32 %v1939, 1.442695
  %v1941 = vpow.pop %v1940
  %v1942 = vadd.f32 %v1941, 1.0
  %v1943 = vrcp.pop %v1942
  %v1944 = vmul.f32 %v1942, %v1943
  %v1945 = vsub.f32 1.0, %v1944
  %v1946 = vmul.f32 %v1943, %v1945
  %v1947 = vadd.f32 %v1943, %v1946
  %vm1948 = vweird.f32 %v1942
  %vm1949 = vweird.f32 %v1943
  %vm1950 = vmor %vm1948, %vm1949
  %v1951 = vsel %vm1950, %v1943, %v1947
  %v1952 = vand.u32 2147483647, %v1942
  %vm1953 = vcmp.eq.f32.partialorder %v1952, 8.507059e+37
  %v1954 = vand.u32 %v1942, 2147483648
  %v1955 = vor.u32 1.1754944e-38, %v1954
  %v1956 = vsel %vm1953, %v1955, %v1951
  %v1957 = vmul.f32 1.0, %v1956
  %v1959 = vrot.slane %v1868, 2
  %v1961 = vxor.u32 %v1959, 2147483648
  %v1962 = vmul.f32 %v1961, 1.442695
  %v1963 = vpow.pop %v1962
  %v1964 = vadd.f32 %v1963, 1.0
  %v1965 = vrcp.pop %v1964
  %v1966 = vmul.f32 %v1964, %v1965
  %v1967 = vsub.f32 1.0, %v1966
  %v1968 = vmul.f32 %v1965, %v1967
  %v1969 = vadd.f32 %v1965, %v1968
  %vm1970 = vweird.f32 %v1964
  %vm1971 = vweird.f32 %v1965
  %vm1972 = vmor %vm1970, %vm1971
  %v1973 = vsel %vm1972, %v1965, %v1969
  %v1974 = vand.u32 2147483647, %v1964
  %vm1975 = vcmp.eq.f32.partialorder %v1974, 8.507059e+37
  %v1976 = vand.u32 %v1964, 2147483648
  %v1977 = vor.u32 1.1754944e-38, %v1976
  %v1978 = vsel %vm1975, %v1977, %v1973
  %v1979 = vmul.f32 1.0, %v1978
  %v1980 = vrot.slane %v1868, 4
  %v1982 = vtanh.pop %v1980
  %v1983 = vrot.slane %v1868, 6
  %v1985 = vxor.u32 %v1983, 2147483648
  %v1986 = vmul.f32 %v1985, 1.442695
  %v1987 = vpow.pop %v1986
  %v1988 = vadd.f32 %v1987, 1.0
  %v1989 = vrcp.pop %v1988
  %v1990 = vmul.f32 %v1988, %v1989
  %v1991 = vsub.f32 1.0, %v1990
  %v1992 = vmul.f32 %v1989, %v1991
  %v1993 = vadd.f32 %v1989, %v1992
  %vm1994 = vweird.f32 %v1988
  %vm1995 = vweird.f32 %v1989
  %vm1996 = vmor %vm1994, %vm1995
  %v1997 = vsel %vm1996, %v1989, %v1993
  %v1998 = vand.u32 2147483647, %v1988
  %vm1999 = vcmp.eq.f32.partialorder %v1998, 8.507059e+37
  %v2000 = vand.u32 %v1988, 2147483648
  %v2001 = vor.u32 1.1754944e-38, %v2000
  %v2002 = vsel %vm1999, %v2001, %v1997
  %v2003 = vmul.f32 1.0, %v2002
  %v2004 = vmul.f32 %v1979, %v1709
  %v2005 = vmul.f32 %v1957, %v1982
  %v2006 = vadd.f32 %v2004, %v2005
  %v2007 = vtanh.pop %v2006
  %v2008 = vmul.f32 %v2003, %v2007
  %v2009 = vpack.c.bf16 %v1938, %v1938
  %v2010 = vpack.c.bf16 %v2008, %v2008
  %2011 = vmatpush.bf16.msra.mxu0 %v780
  %2012 = vmatpush.bf16.msra.mxu0 %v779
  %2013 = vmatpush.bf16.msra.mxu0 %v778
  %2014 = vmatpush.bf16.msra.mxu0 %v777
  %2015 = vmatpush.bf16.msra.mxu0 %v776
  %2016 = vmatpush.bf16.msra.mxu0 %v775
  %2017 = vmatpush.bf16.msra.mxu0 %v774
  %2018 = vmatpush.bf16.msra.mxu0 %v773
  %2019 = vmatmul.bf16.gmra.mxu0 %v2009
  %v2020 = vpop.f32.mrf.mxu0
  %v2021 = vadd.f32 0.0, %v2020
  %v2022 = vpop.f32.mrf.mxu0
  %2023 = vdwg.mxu0
  %2024 = vmatpush.bf16.msra.mxu0 %v788
  %2025 = vmatpush.bf16.msra.mxu0 %v787
  %2026 = vmatpush.bf16.msra.mxu0 %v786
  %2027 = vmatpush.bf16.msra.mxu0 %v785
  %2028 = vmatpush.bf16.msra.mxu0 %v784
  %2029 = vmatpush.bf16.msra.mxu0 %v783
  %2030 = vmatpush.bf16.msra.mxu0 %v782
  %2031 = vmatpush.bf16.msra.mxu0 %v781
  %2032 = vmatmul.bf16.gmra.mxu0 %v2010
  %v2033 = vpop.f32.mrf.mxu0
  %v2034 = vadd.f32 %v2021, %v2033
  %v2035 = vpop.f32.mrf.mxu0
  %2036 = vdwg.mxu0
  %v2037 = vpack.c.bf16 %v2034, %v2034
  %2038 = vmatpush.bf16.msra.mxu0 %v327
  %2039 = vmatpush.bf16.msra.mxu0 %v319
  %2040 = vmatpush.bf16.msra.mxu0 %v311
  %2041 = vmatpush.bf16.msra.mxu0 %v303
  %2042 = vmatpush.bf16.msra.mxu0 %v295
  %2043 = vmatpush.bf16.msra.mxu0 %v287
  %2044 = vmatpush.bf16.msra.mxu0 %v279
  %2045 = vmatpush.bf16.msra.mxu0 %v271
  %2046 = vmatmul.bf16.gmra.mxu0 %v2037
  %v2047 = vpop.f32.mrf.mxu0
  %v2048 = vadd.f32 0.0, %v2047
  %v2049 = vpop.f32.mrf.mxu0
  %2050 = vdwg.mxu0
  %2051 = vmatpush.bf16.msra.mxu0 %v328
  %2052 = vmatpush.bf16.msra.mxu0 %v320
  %2053 = vmatpush.bf16.msra.mxu0 %v312
  %2054 = vmatpush.bf16.msra.mxu0 %v304
  %2055 = vmatpush.bf16.msra.mxu0 %v296
  %2056 = vmatpush.bf16.msra.mxu0 %v288
  %2057 = vmatpush.bf16.msra.mxu0 %v280
  %2058 = vmatpush.bf16.msra.mxu0 %v272
  %2059 = vmatmul.bf16.gmra.mxu0 %v2037
  %v2060 = vpop.f32.mrf.mxu0
  %v2061 = vadd.f32 0.0, %v2060
  %v2062 = vpop.f32.mrf.mxu0
  %2063 = vdwg.mxu0
  %2064 = vmatpush.bf16.msra.mxu0 %v329
  %2065 = vmatpush.bf16.msra.mxu0 %v321
  %2066 = vmatpush.bf16.msra.mxu0 %v313
  %2067 = vmatpush.bf16.msra.mxu0 %v305
  %2068 = vmatpush.bf16.msra.mxu0 %v297
  %2069 = vmatpush.bf16.msra.mxu0 %v289
  %2070 = vmatpush.bf16.msra.mxu0 %v281
  %2071 = vmatpush.bf16.msra.mxu0 %v273
  %2072 = vmatmul.bf16.gmra.mxu0 %v2037
  %v2073 = vpop.f32.mrf.mxu0
  %v2074 = vadd.f32 0.0, %v2073
  %v2075 = vpop.f32.mrf.mxu0
  %2076 = vdwg.mxu0
  %2077 = vmatpush.bf16.msra.mxu0 %v330
  %2078 = vmatpush.bf16.msra.mxu0 %v322
  %2079 = vmatpush.bf16.msra.mxu0 %v314
  %2080 = vmatpush.bf16.msra.mxu0 %v306
  %2081 = vmatpush.bf16.msra.mxu0 %v298
  %2082 = vmatpush.bf16.msra.mxu0 %v290
  %2083 = vmatpush.bf16.msra.mxu0 %v282
  %2084 = vmatpush.bf16.msra.mxu0 %v274
  %2085 = vmatmul.bf16.gmra.mxu0 %v2037
  %v2086 = vpop.f32.mrf.mxu0
  %v2087 = vadd.f32 0.0, %v2086
  %v2088 = vpop.f32.mrf.mxu0
  %2089 = vdwg.mxu0
  %2090 = vmatpush.bf16.msra.mxu0 %v331
  %2091 = vmatpush.bf16.msra.mxu0 %v323
  %2092 = vmatpush.bf16.msra.mxu0 %v315
  %2093 = vmatpush.bf16.msra.mxu0 %v307
  %2094 = vmatpush.bf16.msra.mxu0 %v299
  %2095 = vmatpush.bf16.msra.mxu0 %v291
  %2096 = vmatpush.bf16.msra.mxu0 %v283
  %2097 = vmatpush.bf16.msra.mxu0 %v275
  %2098 = vmatmul.bf16.gmra.mxu0 %v2037
  %v2099 = vpop.f32.mrf.mxu0
  %v2100 = vadd.f32 0.0, %v2099
  %v2101 = vpop.f32.mrf.mxu0
  %2102 = vdwg.mxu0
  %2103 = vmatpush.bf16.msra.mxu0 %v332
  %2104 = vmatpush.bf16.msra.mxu0 %v324
  %2105 = vmatpush.bf16.msra.mxu0 %v316
  %2106 = vmatpush.bf16.msra.mxu0 %v308
  %2107 = vmatpush.bf16.msra.mxu0 %v300
  %2108 = vmatpush.bf16.msra.mxu0 %v292
  %2109 = vmatpush.bf16.msra.mxu0 %v284
  %2110 = vmatpush.bf16.msra.mxu0 %v276
  %2111 = vmatmul.bf16.gmra.mxu0 %v2037
  %v2112 = vpop.f32.mrf.mxu0
  %v2113 = vadd.f32 0.0, %v2112
  %v2114 = vpop.f32.mrf.mxu0
  %2115 = vdwg.mxu0
  %2116 = vmatpush.bf16.msra.mxu0 %v333
  %2117 = vmatpush.bf16.msra.mxu0 %v325
  %2118 = vmatpush.bf16.msra.mxu0 %v317
  %2119 = vmatpush.bf16.msra.mxu0 %v309
  %2120 = vmatpush.bf16.msra.mxu0 %v301
  %2121 = vmatpush.bf16.msra.mxu0 %v293
  %2122 = vmatpush.bf16.msra.mxu0 %v285
  %2123 = vmatpush.bf16.msra.mxu0 %v277
  %2124 = vmatmul.bf16.gmra.mxu0 %v2037
  %v2125 = vpop.f32.mrf.mxu0
  %v2126 = vadd.f32 0.0, %v2125
  %v2127 = vpop.f32.mrf.mxu0
  %2128 = vdwg.mxu0
  %2129 = vmatpush.bf16.msra.mxu0 %v334
  %2130 = vmatpush.bf16.msra.mxu0 %v326
  %2131 = vmatpush.bf16.msra.mxu0 %v318
  %2132 = vmatpush.bf16.msra.mxu0 %v310
  %2133 = vmatpush.bf16.msra.mxu0 %v302
  %2134 = vmatpush.bf16.msra.mxu0 %v294
  %2135 = vmatpush.bf16.msra.mxu0 %v286
  %2136 = vmatpush.bf16.msra.mxu0 %v278
  %2137 = vmatmul.bf16.gmra.mxu0 %v2037
  %v2138 = vpop.f32.mrf.mxu0
  %v2139 = vadd.f32 0.0, %v2138
  %v2140 = vpop.f32.mrf.mxu0
  %2141 = vdwg.mxu0
  %v2146 = vrot.slane %v2061, 6
  %v2147 = vrot.slane %v2074, 4
  %v2148 = vrot.slane %v2087, 2
  %v2149 = vsel %vm515, %v2048, %v2146
  %v2150 = vsel %vm517, %v2147, %v2148
  %v2151 = vsel %vm519, %v2149, %v2150
  %v2153 = vadd.f32 %v1243, %v2151
  %v2158 = vrot.slane %v2113, 6
  %v2159 = vrot.slane %v2126, 4
  %v2160 = vrot.slane %v2139, 2
  %v2161 = vsel %vm515, %v2100, %v2158
  %v2162 = vsel %vm517, %v2159, %v2160
  %v2163 = vsel %vm519, %v2161, %v2162
  %v2165 = vadd.f32 %v1241, %v2163
  %v2166 = vxor.u32 %v2153, 2147483648
  %v2167 = vmul.f32 %v2166, 1.442695
  %v2168 = vpow.pop %v2167
  %v2169 = vadd.f32 %v2168, 1.0
  %v2170 = vrcp.pop %v2169
  %v2171 = vmul.f32 %v2169, %v2170
  %v2172 = vsub.f32 1.0, %v2171
  %v2173 = vmul.f32 %v2170, %v2172
  %v2174 = vadd.f32 %v2170, %v2173
  %vm2175 = vweird.f32 %v2169
  %vm2176 = vweird.f32 %v2170
  %vm2177 = vmor %vm2175, %vm2176
  %v2178 = vsel %vm2177, %v2170, %v2174
  %v2179 = vand.u32 2147483647, %v2169
  %vm2180 = vcmp.eq.f32.partialorder %v2179, 8.507059e+37
  %v2181 = vand.u32 %v2169, 2147483648
  %v2182 = vor.u32 1.1754944e-38, %v2181
  %v2183 = vsel %vm2180, %v2182, %v2178
  %v2184 = vmul.f32 1.0, %v2183
  %v2186 = vrot.slane %v2153, 2
  %v2188 = vxor.u32 %v2186, 2147483648
  %v2189 = vmul.f32 %v2188, 1.442695
  %v2190 = vpow.pop %v2189
  %v2191 = vadd.f32 %v2190, 1.0
  %v2192 = vrcp.pop %v2191
  %v2193 = vmul.f32 %v2191, %v2192
  %v2194 = vsub.f32 1.0, %v2193
  %v2195 = vmul.f32 %v2192, %v2194
  %v2196 = vadd.f32 %v2192, %v2195
  %vm2197 = vweird.f32 %v2191
  %vm2198 = vweird.f32 %v2192
  %vm2199 = vmor %vm2197, %vm2198
  %v2200 = vsel %vm2199, %v2192, %v2196
  %v2201 = vand.u32 2147483647, %v2191
  %vm2202 = vcmp.eq.f32.partialorder %v2201, 8.507059e+37
  %v2203 = vand.u32 %v2191, 2147483648
  %v2204 = vor.u32 1.1754944e-38, %v2203
  %v2205 = vsel %vm2202, %v2204, %v2200
  %v2206 = vmul.f32 1.0, %v2205
  %v2207 = vrot.slane %v2153, 4
  %v2209 = vtanh.pop %v2207
  %v2210 = vrot.slane %v2153, 6
  %v2212 = vxor.u32 %v2210, 2147483648
  %v2213 = vmul.f32 %v2212, 1.442695
  %v2214 = vpow.pop %v2213
  %v2215 = vadd.f32 %v2214, 1.0
  %v2216 = vrcp.pop %v2215
  %v2217 = vmul.f32 %v2215, %v2216
  %v2218 = vsub.f32 1.0, %v2217
  %v2219 = vmul.f32 %v2216, %v2218
  %v2220 = vadd.f32 %v2216, %v2219
  %vm2221 = vweird.f32 %v2215
  %vm2222 = vweird.f32 %v2216
  %vm2223 = vmor %vm2221, %vm2222
  %v2224 = vsel %vm2223, %v2216, %v2220
  %v2225 = vand.u32 2147483647, %v2215
  %vm2226 = vcmp.eq.f32.partialorder %v2225, 8.507059e+37
  %v2227 = vand.u32 %v2215, 2147483648
  %v2228 = vor.u32 1.1754944e-38, %v2227
  %v2229 = vsel %vm2226, %v2228, %v2224
  %v2230 = vmul.f32 1.0, %v2229
  %v2231 = vmul.f32 %v2206, %v1936
  %v2232 = vmul.f32 %v2184, %v2209
  %v2233 = vadd.f32 %v2231, %v2232
  %v2234 = vtanh.pop %v2233
  %v2235 = vmul.f32 %v2230, %v2234
  %v2236 = vxor.u32 %v2165, 2147483648
  %v2237 = vmul.f32 %v2236, 1.442695
  %v2238 = vpow.pop %v2237
  %v2239 = vadd.f32 %v2238, 1.0
  %v2240 = vrcp.pop %v2239
  %v2241 = vmul.f32 %v2239, %v2240
  %v2242 = vsub.f32 1.0, %v2241
  %v2243 = vmul.f32 %v2240, %v2242
  %v2244 = vadd.f32 %v2240, %v2243
  %vm2245 = vweird.f32 %v2239
  %vm2246 = vweird.f32 %v2240
  %vm2247 = vmor %vm2245, %vm2246
  %v2248 = vsel %vm2247, %v2240, %v2244
  %v2249 = vand.u32 2147483647, %v2239
  %vm2250 = vcmp.eq.f32.partialorder %v2249, 8.507059e+37
  %v2251 = vand.u32 %v2239, 2147483648
  %v2252 = vor.u32 1.1754944e-38, %v2251
  %v2253 = vsel %vm2250, %v2252, %v2248
  %v2254 = vmul.f32 1.0, %v2253
  %v2256 = vrot.slane %v2165, 2
  %v2258 = vxor.u32 %v2256, 2147483648
  %v2259 = vmul.f32 %v2258, 1.442695
  %v2260 = vpow.pop %v2259
  %v2261 = vadd.f32 %v2260, 1.0
  %v2262 = vrcp.pop %v2261
  %v2263 = vmul.f32 %v2261, %v2262
  %v2264 = vsub.f32 1.0, %v2263
  %v2265 = vmul.f32 %v2262, %v2264
  %v2266 = vadd.f32 %v2262, %v2265
  %vm2267 = vweird.f32 %v2261
  %vm2268 = vweird.f32 %v2262
  %vm2269 = vmor %vm2267, %vm2268
  %v2270 = vsel %vm2269, %v2262, %v2266
  %v2271 = vand.u32 2147483647, %v2261
  %vm2272 = vcmp.eq.f32.partialorder %v2271, 8.507059e+37
  %v2273 = vand.u32 %v2261, 2147483648
  %v2274 = vor.u32 1.1754944e-38, %v2273
  %v2275 = vsel %vm2272, %v2274, %v2270
  %v2276 = vmul.f32 1.0, %v2275
  %v2277 = vrot.slane %v2165, 4
  %v2279 = vtanh.pop %v2277
  %v2280 = vrot.slane %v2165, 6
  %v2282 = vxor.u32 %v2280, 2147483648
  %v2283 = vmul.f32 %v2282, 1.442695
  %v2284 = vpow.pop %v2283
  %v2285 = vadd.f32 %v2284, 1.0
  %v2286 = vrcp.pop %v2285
  %v2287 = vmul.f32 %v2285, %v2286
  %v2288 = vsub.f32 1.0, %v2287
  %v2289 = vmul.f32 %v2286, %v2288
  %v2290 = vadd.f32 %v2286, %v2289
  %vm2291 = vweird.f32 %v2285
  %vm2292 = vweird.f32 %v2286
  %vm2293 = vmor %vm2291, %vm2292
  %v2294 = vsel %vm2293, %v2286, %v2290
  %v2295 = vand.u32 2147483647, %v2285
  %vm2296 = vcmp.eq.f32.partialorder %v2295, 8.507059e+37
  %v2297 = vand.u32 %v2285, 2147483648
  %v2298 = vor.u32 1.1754944e-38, %v2297
  %v2299 = vsel %vm2296, %v2298, %v2294
  %v2300 = vmul.f32 1.0, %v2299
  %v2301 = vmul.f32 %v2276, %v2006
  %v2302 = vmul.f32 %v2254, %v2279
  %v2303 = vadd.f32 %v2301, %v2302
  %v2304 = vtanh.pop %v2303
  %v2305 = vmul.f32 %v2300, %v2304
  %v2306 = vpack.c.bf16 %v2235, %v2235
  %v2307 = vpack.c.bf16 %v2305, %v2305
  %2308 = vmatpush.bf16.msra.mxu0 %v780
  %2309 = vmatpush.bf16.msra.mxu0 %v779
  %2310 = vmatpush.bf16.msra.mxu0 %v778
  %2311 = vmatpush.bf16.msra.mxu0 %v777
  %2312 = vmatpush.bf16.msra.mxu0 %v776
  %2313 = vmatpush.bf16.msra.mxu0 %v775
  %2314 = vmatpush.bf16.msra.mxu0 %v774
  %2315 = vmatpush.bf16.msra.mxu0 %v773
  %2316 = vmatmul.bf16.gmra.mxu0 %v2306
  %v2317 = vpop.f32.mrf.mxu0
  %v2318 = vadd.f32 0.0, %v2317
  %v2319 = vpop.f32.mrf.mxu0
  %2320 = vdwg.mxu0
  %2321 = vmatpush.bf16.msra.mxu0 %v788
  %2322 = vmatpush.bf16.msra.mxu0 %v787
  %2323 = vmatpush.bf16.msra.mxu0 %v786
  %2324 = vmatpush.bf16.msra.mxu0 %v785
  %2325 = vmatpush.bf16.msra.mxu0 %v784
  %2326 = vmatpush.bf16.msra.mxu0 %v783
  %2327 = vmatpush.bf16.msra.mxu0 %v782
  %2328 = vmatpush.bf16.msra.mxu0 %v781
  %2329 = vmatmul.bf16.gmra.mxu0 %v2307
  %v2330 = vpop.f32.mrf.mxu0
  %v2331 = vadd.f32 %v2318, %v2330
  %v2332 = vpop.f32.mrf.mxu0
  %2333 = vdwg.mxu0
  %v2334 = vpack.c.bf16 %v2331, %v2331
  %2335 = vmatpush.bf16.msra.mxu0 %v327
  %2336 = vmatpush.bf16.msra.mxu0 %v319
  %2337 = vmatpush.bf16.msra.mxu0 %v311
  %2338 = vmatpush.bf16.msra.mxu0 %v303
  %2339 = vmatpush.bf16.msra.mxu0 %v295
  %2340 = vmatpush.bf16.msra.mxu0 %v287
  %2341 = vmatpush.bf16.msra.mxu0 %v279
  %2342 = vmatpush.bf16.msra.mxu0 %v271
  %2343 = vmatmul.bf16.gmra.mxu0 %v2334
  %v2344 = vpop.f32.mrf.mxu0
  %v2345 = vadd.f32 0.0, %v2344
  %v2346 = vpop.f32.mrf.mxu0
  %2347 = vdwg.mxu0
  %2348 = vmatpush.bf16.msra.mxu0 %v328
  %2349 = vmatpush.bf16.msra.mxu0 %v320
  %2350 = vmatpush.bf16.msra.mxu0 %v312
  %2351 = vmatpush.bf16.msra.mxu0 %v304
  %2352 = vmatpush.bf16.msra.mxu0 %v296
  %2353 = vmatpush.bf16.msra.mxu0 %v288
  %2354 = vmatpush.bf16.msra.mxu0 %v280
  %2355 = vmatpush.bf16.msra.mxu0 %v272
  %2356 = vmatmul.bf16.gmra.mxu0 %v2334
  %v2357 = vpop.f32.mrf.mxu0
  %v2358 = vadd.f32 0.0, %v2357
  %v2359 = vpop.f32.mrf.mxu0
  %2360 = vdwg.mxu0
  %2361 = vmatpush.bf16.msra.mxu0 %v329
  %2362 = vmatpush.bf16.msra.mxu0 %v321
  %2363 = vmatpush.bf16.msra.mxu0 %v313
  %2364 = vmatpush.bf16.msra.mxu0 %v305
  %2365 = vmatpush.bf16.msra.mxu0 %v297
  %2366 = vmatpush.bf16.msra.mxu0 %v289
  %2367 = vmatpush.bf16.msra.mxu0 %v281
  %2368 = vmatpush.bf16.msra.mxu0 %v273
  %2369 = vmatmul.bf16.gmra.mxu0 %v2334
  %v2370 = vpop.f32.mrf.mxu0
  %v2371 = vadd.f32 0.0, %v2370
  %v2372 = vpop.f32.mrf.mxu0
  %2373 = vdwg.mxu0
  %2374 = vmatpush.bf16.msra.mxu0 %v330
  %2375 = vmatpush.bf16.msra.mxu0 %v322
  %2376 = vmatpush.bf16.msra.mxu0 %v314
  %2377 = vmatpush.bf16.msra.mxu0 %v306
  %2378 = vmatpush.bf16.msra.mxu0 %v298
  %2379 = vmatpush.bf16.msra.mxu0 %v290
  %2380 = vmatpush.bf16.msra.mxu0 %v282
  %2381 = vmatpush.bf16.msra.mxu0 %v274
  %2382 = vmatmul.bf16.gmra.mxu0 %v2334
  %v2383 = vpop.f32.mrf.mxu0
  %v2384 = vadd.f32 0.0, %v2383
  %v2385 = vpop.f32.mrf.mxu0
  %2386 = vdwg.mxu0
  %2387 = vmatpush.bf16.msra.mxu0 %v331
  %2388 = vmatpush.bf16.msra.mxu0 %v323
  %2389 = vmatpush.bf16.msra.mxu0 %v315
  %2390 = vmatpush.bf16.msra.mxu0 %v307
  %2391 = vmatpush.bf16.msra.mxu0 %v299
  %2392 = vmatpush.bf16.msra.mxu0 %v291
  %2393 = vmatpush.bf16.msra.mxu0 %v283
  %2394 = vmatpush.bf16.msra.mxu0 %v275
  %2395 = vmatmul.bf16.gmra.mxu0 %v2334
  %v2396 = vpop.f32.mrf.mxu0
  %v2397 = vadd.f32 0.0, %v2396
  %v2398 = vpop.f32.mrf.mxu0
  %2399 = vdwg.mxu0
  %2400 = vmatpush.bf16.msra.mxu0 %v332
  %2401 = vmatpush.bf16.msra.mxu0 %v324
  %2402 = vmatpush.bf16.msra.mxu0 %v316
  %2403 = vmatpush.bf16.msra.mxu0 %v308
  %2404 = vmatpush.bf16.msra.mxu0 %v300
  %2405 = vmatpush.bf16.msra.mxu0 %v292
  %2406 = vmatpush.bf16.msra.mxu0 %v284
  %2407 = vmatpush.bf16.msra.mxu0 %v276
  %2408 = vmatmul.bf16.gmra.mxu0 %v2334
  %v2409 = vpop.f32.mrf.mxu0
  %v2410 = vadd.f32 0.0, %v2409
  %v2411 = vpop.f32.mrf.mxu0
  %2412 = vdwg.mxu0
  %2413 = vmatpush.bf16.msra.mxu0 %v333
  %2414 = vmatpush.bf16.msra.mxu0 %v325
  %2415 = vmatpush.bf16.msra.mxu0 %v317
  %2416 = vmatpush.bf16.msra.mxu0 %v309
  %2417 = vmatpush.bf16.msra.mxu0 %v301
  %2418 = vmatpush.bf16.msra.mxu0 %v293
  %2419 = vmatpush.bf16.msra.mxu0 %v285
  %2420 = vmatpush.bf16.msra.mxu0 %v277
  %2421 = vmatmul.bf16.gmra.mxu0 %v2334
  %v2422 = vpop.f32.mrf.mxu0
  %v2423 = vadd.f32 0.0, %v2422
  %v2424 = vpop.f32.mrf.mxu0
  %2425 = vdwg.mxu0
  %2426 = vmatpush.bf16.msra.mxu0 %v334
  %2427 = vmatpush.bf16.msra.mxu0 %v326
  %2428 = vmatpush.bf16.msra.mxu0 %v318
  %2429 = vmatpush.bf16.msra.mxu0 %v310
  %2430 = vmatpush.bf16.msra.mxu0 %v302
  %2431 = vmatpush.bf16.msra.mxu0 %v294
  %2432 = vmatpush.bf16.msra.mxu0 %v286
  %2433 = vmatpush.bf16.msra.mxu0 %v278
  %2434 = vmatmul.bf16.gmra.mxu0 %v2334
  %v2435 = vpop.f32.mrf.mxu0
  %v2436 = vadd.f32 0.0, %v2435
  %v2437 = vpop.f32.mrf.mxu0
  %2438 = vdwg.mxu0
  %v2443 = vrot.slane %v2358, 6
  %v2444 = vrot.slane %v2371, 4
  %v2445 = vrot.slane %v2384, 2
  %v2446 = vsel %vm515, %v2345, %v2443
  %v2447 = vsel %vm517, %v2444, %v2445
  %v2448 = vsel %vm519, %v2446, %v2447
  %v2450 = vadd.f32 %v940, %v2448
  %v2455 = vrot.slane %v2410, 6
  %v2456 = vrot.slane %v2423, 4
  %v2457 = vrot.slane %v2436, 2
  %v2458 = vsel %vm515, %v2397, %v2455
  %v2459 = vsel %vm517, %v2456, %v2457
  %v2460 = vsel %vm519, %v2458, %v2459
  %v2462 = vadd.f32 %v938, %v2460
  %v2463 = vxor.u32 %v2450, 2147483648
  %v2464 = vmul.f32 %v2463, 1.442695
  %v2465 = vpow.pop %v2464
  %v2466 = vadd.f32 %v2465, 1.0
  %v2467 = vrcp.pop %v2466
  %v2468 = vmul.f32 %v2466, %v2467
  %v2469 = vsub.f32 1.0, %v2468
  %v2470 = vmul.f32 %v2467, %v2469
  %v2471 = vadd.f32 %v2467, %v2470
  %vm2472 = vweird.f32 %v2466
  %vm2473 = vweird.f32 %v2467
  %vm2474 = vmor %vm2472, %vm2473
  %v2475 = vsel %vm2474, %v2467, %v2471
  %v2476 = vand.u32 2147483647, %v2466
  %vm2477 = vcmp.eq.f32.partialorder %v2476, 8.507059e+37
  %v2478 = vand.u32 %v2466, 2147483648
  %v2479 = vor.u32 1.1754944e-38, %v2478
  %v2480 = vsel %vm2477, %v2479, %v2475
  %v2481 = vmul.f32 1.0, %v2480
  %v2483 = vrot.slane %v2450, 2
  %v2485 = vxor.u32 %v2483, 2147483648
  %v2486 = vmul.f32 %v2485, 1.442695
  %v2487 = vpow.pop %v2486
  %v2488 = vadd.f32 %v2487, 1.0
  %v2489 = vrcp.pop %v2488
  %v2490 = vmul.f32 %v2488, %v2489
  %v2491 = vsub.f32 1.0, %v2490
  %v2492 = vmul.f32 %v2489, %v2491
  %v2493 = vadd.f32 %v2489, %v2492
  %vm2494 = vweird.f32 %v2488
  %vm2495 = vweird.f32 %v2489
  %vm2496 = vmor %vm2494, %vm2495
  %v2497 = vsel %vm2496, %v2489, %v2493
  %v2498 = vand.u32 2147483647, %v2488
  %vm2499 = vcmp.eq.f32.partialorder %v2498, 8.507059e+37
  %v2500 = vand.u32 %v2488, 2147483648
  %v2501 = vor.u32 1.1754944e-38, %v2500
  %v2502 = vsel %vm2499, %v2501, %v2497
  %v2503 = vmul.f32 1.0, %v2502
  %v2504 = vrot.slane %v2450, 4
  %v2506 = vtanh.pop %v2504
  %v2507 = vrot.slane %v2450, 6
  %v2509 = vxor.u32 %v2507, 2147483648
  %v2510 = vmul.f32 %v2509, 1.442695
  %v2511 = vpow.pop %v2510
  %v2512 = vadd.f32 %v2511, 1.0
  %v2513 = vrcp.pop %v2512
  %v2514 = vmul.f32 %v2512, %v2513
  %v2515 = vsub.f32 1.0, %v2514
  %v2516 = vmul.f32 %v2513, %v2515
  %v2517 = vadd.f32 %v2513, %v2516
  %vm2518 = vweird.f32 %v2512
  %vm2519 = vweird.f32 %v2513
  %vm2520 = vmor %vm2518, %vm2519
  %v2521 = vsel %vm2520, %v2513, %v2517
  %v2522 = vand.u32 2147483647, %v2512
  %vm2523 = vcmp.eq.f32.partialorder %v2522, 8.507059e+37
  %v2524 = vand.u32 %v2512, 2147483648
  %v2525 = vor.u32 1.1754944e-38, %v2524
  %v2526 = vsel %vm2523, %v2525, %v2521
  %v2527 = vmul.f32 1.0, %v2526
  %v2528 = vmul.f32 %v2503, %v2233
  %v2529 = vmul.f32 %v2481, %v2506
  %v2530 = vadd.f32 %v2528, %v2529
  %v2531 = vtanh.pop %v2530
  %v2532 = vmul.f32 %v2527, %v2531
  %v2533 = vxor.u32 %v2462, 2147483648
  %v2534 = vmul.f32 %v2533, 1.442695
  %v2535 = vpow.pop %v2534
  %v2536 = vadd.f32 %v2535, 1.0
  %v2537 = vrcp.pop %v2536
  %v2538 = vmul.f32 %v2536, %v2537
  %v2539 = vsub.f32 1.0, %v2538
  %v2540 = vmul.f32 %v2537, %v2539
  %v2541 = vadd.f32 %v2537, %v2540
  %vm2542 = vweird.f32 %v2536
  %vm2543 = vweird.f32 %v2537
  %vm2544 = vmor %vm2542, %vm2543
  %v2545 = vsel %vm2544, %v2537, %v2541
  %v2546 = vand.u32 2147483647, %v2536
  %vm2547 = vcmp.eq.f32.partialorder %v2546, 8.507059e+37
  %v2548 = vand.u32 %v2536, 2147483648
  %v2549 = vor.u32 1.1754944e-38, %v2548
  %v2550 = vsel %vm2547, %v2549, %v2545
  %v2551 = vmul.f32 1.0, %v2550
  %v2553 = vrot.slane %v2462, 2
  %v2555 = vxor.u32 %v2553, 2147483648
  %v2556 = vmul.f32 %v2555, 1.442695
  %v2557 = vpow.pop %v2556
  %v2558 = vadd.f32 %v2557, 1.0
  %v2559 = vrcp.pop %v2558
  %v2560 = vmul.f32 %v2558, %v2559
  %v2561 = vsub.f32 1.0, %v2560
  %v2562 = vmul.f32 %v2559, %v2561
  %v2563 = vadd.f32 %v2559, %v2562
  %vm2564 = vweird.f32 %v2558
  %vm2565 = vweird.f32 %v2559
  %vm2566 = vmor %vm2564, %vm2565
  %v2567 = vsel %vm2566, %v2559, %v2563
  %v2568 = vand.u32 2147483647, %v2558
  %vm2569 = vcmp.eq.f32.partialorder %v2568, 8.507059e+37
  %v2570 = vand.u32 %v2558, 2147483648
  %v2571 = vor.u32 1.1754944e-38, %v2570
  %v2572 = vsel %vm2569, %v2571, %v2567
  %v2573 = vmul.f32 1.0, %v2572
  %v2574 = vrot.slane %v2462, 4
  %v2576 = vtanh.pop %v2574
  %v2577 = vrot.slane %v2462, 6
  %v2579 = vxor.u32 %v2577, 2147483648
  %v2580 = vmul.f32 %v2579, 1.442695
  %v2581 = vpow.pop %v2580
  %v2582 = vadd.f32 %v2581, 1.0
  %v2583 = vrcp.pop %v2582
  %v2584 = vmul.f32 %v2582, %v2583
  %v2585 = vsub.f32 1.0, %v2584
  %v2586 = vmul.f32 %v2583, %v2585
  %v2587 = vadd.f32 %v2583, %v2586
  %vm2588 = vweird.f32 %v2582
  %vm2589 = vweird.f32 %v2583
  %vm2590 = vmor %vm2588, %vm2589
  %v2591 = vsel %vm2590, %v2583, %v2587
  %v2592 = vand.u32 2147483647, %v2582
  %vm2593 = vcmp.eq.f32.partialorder %v2592, 8.507059e+37
  %v2594 = vand.u32 %v2582, 2147483648
  %v2595 = vor.u32 1.1754944e-38, %v2594
  %v2596 = vsel %vm2593, %v2595, %v2591
  %v2597 = vmul.f32 1.0, %v2596
  %v2598 = vmul.f32 %v2573, %v2303
  %v2599 = vmul.f32 %v2551, %v2576
  %v2600 = vadd.f32 %v2598, %v2599
  %v2601 = vtanh.pop %v2600
  %v2602 = vmul.f32 %v2597, %v2601
  %v2603 = vpack.c.bf16 %v2532, %v2532
  %v2604 = vpack.c.bf16 %v2602, %v2602
  %2605 = vmatpush.bf16.msra.mxu0 %v780
  %2606 = vmatpush.bf16.msra.mxu0 %v779
  %2607 = vmatpush.bf16.msra.mxu0 %v778
  %2608 = vmatpush.bf16.msra.mxu0 %v777
  %2609 = vmatpush.bf16.msra.mxu0 %v776
  %2610 = vmatpush.bf16.msra.mxu0 %v775
  %2611 = vmatpush.bf16.msra.mxu0 %v774
  %2612 = vmatpush.bf16.msra.mxu0 %v773
  %2613 = vmatmul.bf16.gmra.mxu0 %v2603
  %v2614 = vpop.f32.mrf.mxu0
  %v2615 = vadd.f32 0.0, %v2614
  %v2616 = vpop.f32.mrf.mxu0
  %2617 = vdwg.mxu0
  %2618 = vmatpush.bf16.msra.mxu0 %v788
  %2619 = vmatpush.bf16.msra.mxu0 %v787
  %2620 = vmatpush.bf16.msra.mxu0 %v786
  %2621 = vmatpush.bf16.msra.mxu0 %v785
  %2622 = vmatpush.bf16.msra.mxu0 %v784
  %2623 = vmatpush.bf16.msra.mxu0 %v783
  %2624 = vmatpush.bf16.msra.mxu0 %v782
  %2625 = vmatpush.bf16.msra.mxu0 %v781
  %2626 = vmatmul.bf16.gmra.mxu0 %v2604
  %v2627 = vpop.f32.mrf.mxu0
  %v2628 = vadd.f32 %v2615, %v2627
  %v2629 = vpop.f32.mrf.mxu0
  %2630 = vdwg.mxu0
  %v2631 = vpack.c.bf16 %v2628, %v2628
  %2632 = vmatpush.bf16.msra.mxu0 %v327
  %2633 = vmatpush.bf16.msra.mxu0 %v319
  %2634 = vmatpush.bf16.msra.mxu0 %v311
  %2635 = vmatpush.bf16.msra.mxu0 %v303
  %2636 = vmatpush.bf16.msra.mxu0 %v295
  %2637 = vmatpush.bf16.msra.mxu0 %v287
  %2638 = vmatpush.bf16.msra.mxu0 %v279
  %2639 = vmatpush.bf16.msra.mxu0 %v271
  %2640 = vmatmul.bf16.gmra.mxu0 %v2631
  %v2641 = vpop.f32.mrf.mxu0
  %v2642 = vadd.f32 0.0, %v2641
  %v2643 = vpop.f32.mrf.mxu0
  %2644 = vdwg.mxu0
  %2645 = vmatpush.bf16.msra.mxu0 %v328
  %2646 = vmatpush.bf16.msra.mxu0 %v320
  %2647 = vmatpush.bf16.msra.mxu0 %v312
  %2648 = vmatpush.bf16.msra.mxu0 %v304
  %2649 = vmatpush.bf16.msra.mxu0 %v296
  %2650 = vmatpush.bf16.msra.mxu0 %v288
  %2651 = vmatpush.bf16.msra.mxu0 %v280
  %2652 = vmatpush.bf16.msra.mxu0 %v272
  %2653 = vmatmul.bf16.gmra.mxu0 %v2631
  %v2654 = vpop.f32.mrf.mxu0
  %v2655 = vadd.f32 0.0, %v2654
  %v2656 = vpop.f32.mrf.mxu0
  %2657 = vdwg.mxu0
  %2658 = vmatpush.bf16.msra.mxu0 %v329
  %2659 = vmatpush.bf16.msra.mxu0 %v321
  %2660 = vmatpush.bf16.msra.mxu0 %v313
  %2661 = vmatpush.bf16.msra.mxu0 %v305
  %2662 = vmatpush.bf16.msra.mxu0 %v297
  %2663 = vmatpush.bf16.msra.mxu0 %v289
  %2664 = vmatpush.bf16.msra.mxu0 %v281
  %2665 = vmatpush.bf16.msra.mxu0 %v273
  %2666 = vmatmul.bf16.gmra.mxu0 %v2631
  %v2667 = vpop.f32.mrf.mxu0
  %v2668 = vadd.f32 0.0, %v2667
  %v2669 = vpop.f32.mrf.mxu0
  %2670 = vdwg.mxu0
  %2671 = vmatpush.bf16.msra.mxu0 %v330
  %2672 = vmatpush.bf16.msra.mxu0 %v322
  %2673 = vmatpush.bf16.msra.mxu0 %v314
  %2674 = vmatpush.bf16.msra.mxu0 %v306
  %2675 = vmatpush.bf16.msra.mxu0 %v298
  %2676 = vmatpush.bf16.msra.mxu0 %v290
  %2677 = vmatpush.bf16.msra.mxu0 %v282
  %2678 = vmatpush.bf16.msra.mxu0 %v274
  %2679 = vmatmul.bf16.gmra.mxu0 %v2631
  %v2680 = vpop.f32.mrf.mxu0
  %v2681 = vadd.f32 0.0, %v2680
  %v2682 = vpop.f32.mrf.mxu0
  %2683 = vdwg.mxu0
  %2684 = vmatpush.bf16.msra.mxu0 %v331
  %2685 = vmatpush.bf16.msra.mxu0 %v323
  %2686 = vmatpush.bf16.msra.mxu0 %v315
  %2687 = vmatpush.bf16.msra.mxu0 %v307
  %2688 = vmatpush.bf16.msra.mxu0 %v299
  %2689 = vmatpush.bf16.msra.mxu0 %v291
  %2690 = vmatpush.bf16.msra.mxu0 %v283
  %2691 = vmatpush.bf16.msra.mxu0 %v275
  %2692 = vmatmul.bf16.gmra.mxu0 %v2631
  %v2693 = vpop.f32.mrf.mxu0
  %v2694 = vadd.f32 0.0, %v2693
  %v2695 = vpop.f32.mrf.mxu0
  %2696 = vdwg.mxu0
  %2697 = vmatpush.bf16.msra.mxu0 %v332
  %2698 = vmatpush.bf16.msra.mxu0 %v324
  %2699 = vmatpush.bf16.msra.mxu0 %v316
  %2700 = vmatpush.bf16.msra.mxu0 %v308
  %2701 = vmatpush.bf16.msra.mxu0 %v300
  %2702 = vmatpush.bf16.msra.mxu0 %v292
  %2703 = vmatpush.bf16.msra.mxu0 %v284
  %2704 = vmatpush.bf16.msra.mxu0 %v276
  %2705 = vmatmul.bf16.gmra.mxu0 %v2631
  %v2706 = vpop.f32.mrf.mxu0
  %v2707 = vadd.f32 0.0, %v2706
  %v2708 = vpop.f32.mrf.mxu0
  %2709 = vdwg.mxu0
  %2710 = vmatpush.bf16.msra.mxu0 %v333
  %2711 = vmatpush.bf16.msra.mxu0 %v325
  %2712 = vmatpush.bf16.msra.mxu0 %v317
  %2713 = vmatpush.bf16.msra.mxu0 %v309
  %2714 = vmatpush.bf16.msra.mxu0 %v301
  %2715 = vmatpush.bf16.msra.mxu0 %v293
  %2716 = vmatpush.bf16.msra.mxu0 %v285
  %2717 = vmatpush.bf16.msra.mxu0 %v277
  %2718 = vmatmul.bf16.gmra.mxu0 %v2631
  %v2719 = vpop.f32.mrf.mxu0
  %v2720 = vadd.f32 0.0, %v2719
  %v2721 = vpop.f32.mrf.mxu0
  %2722 = vdwg.mxu0
  %2723 = vmatpush.bf16.msra.mxu0 %v334
  %2724 = vmatpush.bf16.msra.mxu0 %v326
  %2725 = vmatpush.bf16.msra.mxu0 %v318
  %2726 = vmatpush.bf16.msra.mxu0 %v310
  %2727 = vmatpush.bf16.msra.mxu0 %v302
  %2728 = vmatpush.bf16.msra.mxu0 %v294
  %2729 = vmatpush.bf16.msra.mxu0 %v286
  %2730 = vmatpush.bf16.msra.mxu0 %v278
  %2731 = vmatmul.bf16.gmra.mxu0 %v2631
  %v2732 = vpop.f32.mrf.mxu0
  %v2733 = vadd.f32 0.0, %v2732
  %v2734 = vpop.f32.mrf.mxu0
  %2735 = vdwg.mxu0
  %v2740 = vrot.slane %v2655, 6
  %v2741 = vrot.slane %v2668, 4
  %v2742 = vrot.slane %v2681, 2
  %v2743 = vsel %vm515, %v2642, %v2740
  %v2744 = vsel %vm517, %v2741, %v2742
  %v2745 = vsel %vm519, %v2743, %v2744
  %v2747 = vadd.f32 %v506, %v2745
  %v2752 = vrot.slane %v2707, 6
  %v2753 = vrot.slane %v2720, 4
  %v2754 = vrot.slane %v2733, 2
  %v2755 = vsel %vm515, %v2694, %v2752
  %v2756 = vsel %vm517, %v2753, %v2754
  %v2757 = vsel %vm519, %v2755, %v2756
  %v2759 = vadd.f32 %v504, %v2757
  %v2760 = vxor.u32 %v2747, 2147483648
  %v2761 = vmul.f32 %v2760, 1.442695
  %v2762 = vpow.pop %v2761
  %v2763 = vadd.f32 %v2762, 1.0
  %v2764 = vrcp.pop %v2763
  %v2765 = vmul.f32 %v2763, %v2764
  %v2766 = vsub.f32 1.0, %v2765
  %v2767 = vmul.f32 %v2764, %v2766
  %v2768 = vadd.f32 %v2764, %v2767
  %vm2769 = vweird.f32 %v2763
  %vm2770 = vweird.f32 %v2764
  %vm2771 = vmor %vm2769, %vm2770
  %v2772 = vsel %vm2771, %v2764, %v2768
  %v2773 = vand.u32 2147483647, %v2763
  %vm2774 = vcmp.eq.f32.partialorder %v2773, 8.507059e+37
  %v2775 = vand.u32 %v2763, 2147483648
  %v2776 = vor.u32 1.1754944e-38, %v2775
  %v2777 = vsel %vm2774, %v2776, %v2772
  %v2778 = vmul.f32 1.0, %v2777
  %v2780 = vrot.slane %v2747, 2
  %v2782 = vxor.u32 %v2780, 2147483648
  %v2783 = vmul.f32 %v2782, 1.442695
  %v2784 = vpow.pop %v2783
  %v2785 = vadd.f32 %v2784, 1.0
  %v2786 = vrcp.pop %v2785
  %v2787 = vmul.f32 %v2785, %v2786
  %v2788 = vsub.f32 1.0, %v2787
  %v2789 = vmul.f32 %v2786, %v2788
  %v2790 = vadd.f32 %v2786, %v2789
  %vm2791 = vweird.f32 %v2785
  %vm2792 = vweird.f32 %v2786
  %vm2793 = vmor %vm2791, %vm2792
  %v2794 = vsel %vm2793, %v2786, %v2790
  %v2795 = vand.u32 2147483647, %v2785
  %vm2796 = vcmp.eq.f32.partialorder %v2795, 8.507059e+37
  %v2797 = vand.u32 %v2785, 2147483648
  %v2798 = vor.u32 1.1754944e-38, %v2797
  %v2799 = vsel %vm2796, %v2798, %v2794
  %v2800 = vmul.f32 1.0, %v2799
  %v2801 = vrot.slane %v2747, 4
  %v2803 = vtanh.pop %v2801
  %v2804 = vrot.slane %v2747, 6
  %v2806 = vxor.u32 %v2804, 2147483648
  %v2807 = vmul.f32 %v2806, 1.442695
  %v2808 = vpow.pop %v2807
  %v2809 = vadd.f32 %v2808, 1.0
  %v2810 = vrcp.pop %v2809
  %v2811 = vmul.f32 %v2809, %v2810
  %v2812 = vsub.f32 1.0, %v2811
  %v2813 = vmul.f32 %v2810, %v2812
  %v2814 = vadd.f32 %v2810, %v2813
  %vm2815 = vweird.f32 %v2809
  %vm2816 = vweird.f32 %v2810
  %vm2817 = vmor %vm2815, %vm2816
  %v2818 = vsel %vm2817, %v2810, %v2814
  %v2819 = vand.u32 2147483647, %v2809
  %vm2820 = vcmp.eq.f32.partialorder %v2819, 8.507059e+37
  %v2821 = vand.u32 %v2809, 2147483648
  %v2822 = vor.u32 1.1754944e-38, %v2821
  %v2823 = vsel %vm2820, %v2822, %v2818
  %v2824 = vmul.f32 1.0, %v2823
  %v2825 = vmul.f32 %v2800, %v2530
  %v2826 = vmul.f32 %v2778, %v2803
  %v2827 = vadd.f32 %v2825, %v2826
  %v2828 = vtanh.pop %v2827
  %v2829 = vmul.f32 %v2824, %v2828
  %v2830 = vxor.u32 %v2759, 2147483648
  %v2831 = vmul.f32 %v2830, 1.442695
  %v2832 = vpow.pop %v2831
  %v2833 = vadd.f32 %v2832, 1.0
  %v2834 = vrcp.pop %v2833
  %v2835 = vmul.f32 %v2833, %v2834
  %v2836 = vsub.f32 1.0, %v2835
  %v2837 = vmul.f32 %v2834, %v2836
  %v2838 = vadd.f32 %v2834, %v2837
  %vm2839 = vweird.f32 %v2833
  %vm2840 = vweird.f32 %v2834
  %vm2841 = vmor %vm2839, %vm2840
  %v2842 = vsel %vm2841, %v2834, %v2838
  %v2843 = vand.u32 2147483647, %v2833
  %vm2844 = vcmp.eq.f32.partialorder %v2843, 8.507059e+37
  %v2845 = vand.u32 %v2833, 2147483648
  %v2846 = vor.u32 1.1754944e-38, %v2845
  %v2847 = vsel %vm2844, %v2846, %v2842
  %v2848 = vmul.f32 1.0, %v2847
  %v2850 = vrot.slane %v2759, 2
  %v2852 = vxor.u32 %v2850, 2147483648
  %v2853 = vmul.f32 %v2852, 1.442695
  %v2854 = vpow.pop %v2853
  %v2855 = vadd.f32 %v2854, 1.0
  %v2856 = vrcp.pop %v2855
  %v2857 = vmul.f32 %v2855, %v2856
  %v2858 = vsub.f32 1.0, %v2857
  %v2859 = vmul.f32 %v2856, %v2858
  %v2860 = vadd.f32 %v2856, %v2859
  %vm2861 = vweird.f32 %v2855
  %vm2862 = vweird.f32 %v2856
  %vm2863 = vmor %vm2861, %vm2862
  %v2864 = vsel %vm2863, %v2856, %v2860
  %v2865 = vand.u32 2147483647, %v2855
  %vm2866 = vcmp.eq.f32.partialorder %v2865, 8.507059e+37
  %v2867 = vand.u32 %v2855, 2147483648
  %v2868 = vor.u32 1.1754944e-38, %v2867
  %v2869 = vsel %vm2866, %v2868, %v2864
  %v2870 = vmul.f32 1.0, %v2869
  %v2871 = vrot.slane %v2759, 4
  %v2873 = vtanh.pop %v2871
  %v2874 = vrot.slane %v2759, 6
  %v2876 = vxor.u32 %v2874, 2147483648
  %v2877 = vmul.f32 %v2876, 1.442695
  %v2878 = vpow.pop %v2877
  %v2879 = vadd.f32 %v2878, 1.0
  %v2880 = vrcp.pop %v2879
  %v2881 = vmul.f32 %v2879, %v2880
  %v2882 = vsub.f32 1.0, %v2881
  %v2883 = vmul.f32 %v2880, %v2882
  %v2884 = vadd.f32 %v2880, %v2883
  %vm2885 = vweird.f32 %v2879
  %vm2886 = vweird.f32 %v2880
  %vm2887 = vmor %vm2885, %vm2886
  %v2888 = vsel %vm2887, %v2880, %v2884
  %v2889 = vand.u32 2147483647, %v2879
  %vm2890 = vcmp.eq.f32.partialorder %v2889, 8.507059e+37
  %v2891 = vand.u32 %v2879, 2147483648
  %v2892 = vor.u32 1.1754944e-38, %v2891
  %v2893 = vsel %vm2890, %v2892, %v2888
  %v2894 = vmul.f32 1.0, %v2893
  %v2895 = vmul.f32 %v2870, %v2600
  %v2896 = vmul.f32 %v2848, %v2873
  %v2897 = vadd.f32 %v2895, %v2896
  %v2898 = vtanh.pop %v2897
  %v2899 = vmul.f32 %v2894, %v2898
  %v2900 = vpack.c.bf16 %v2829, %v2829
  %v2901 = vpack.c.bf16 %v2899, %v2899
  %2902 = vmatpush.bf16.msra.mxu0 %v780
  %2903 = vmatpush.bf16.msra.mxu0 %v779
  %2904 = vmatpush.bf16.msra.mxu0 %v778
  %2905 = vmatpush.bf16.msra.mxu0 %v777
  %2906 = vmatpush.bf16.msra.mxu0 %v776
  %2907 = vmatpush.bf16.msra.mxu0 %v775
  %2908 = vmatpush.bf16.msra.mxu0 %v774
  %2909 = vmatpush.bf16.msra.mxu0 %v773
  %2910 = vmatmul.bf16.gmra.mxu0 %v2900
  %v2911 = vpop.f32.mrf.mxu0
  %v2912 = vadd.f32 0.0, %v2911
  %v2913 = vpop.f32.mrf.mxu0
  %2914 = vdwg.mxu0
  %2915 = vmatpush.bf16.msra.mxu0 %v788
  %2916 = vmatpush.bf16.msra.mxu0 %v787
  %2917 = vmatpush.bf16.msra.mxu0 %v786
  %2918 = vmatpush.bf16.msra.mxu0 %v785
  %2919 = vmatpush.bf16.msra.mxu0 %v784
  %2920 = vmatpush.bf16.msra.mxu0 %v783
  %2921 = vmatpush.bf16.msra.mxu0 %v782
  %2922 = vmatpush.bf16.msra.mxu0 %v781
  %2923 = vmatmul.bf16.gmra.mxu0 %v2901
  %v2924 = vpop.f32.mrf.mxu0
  %v2925 = vadd.f32 %v2912, %v2924
  %v2926 = vpop.f32.mrf.mxu0
  %2927 = vdwg.mxu0
  %vm2928 = vcmask 523264
  %v2929 = vsel %vm2928, %v828, %v2925
  %2930 = vst [vmem:[%s3] sm:$0x3] %v2929
  %v2931 = vsel %vm2928, %v1131, %v2628
  %s2932 = scalar_lea.vmem %s3, 2
  %2933 = vst [vmem:[%s2932] sm:$0x3] %v2931
  %v2934 = vsel %vm2928, %v1434, %v2331
  %s2935 = scalar_lea.vmem %s3, 4
  %2936 = vst [vmem:[%s2935] sm:$0x3] %v2934
  %v2937 = vsel %vm2928, %v1737, %v2034
  %s2938 = scalar_lea.vmem %s3, 6
  %2939 = vst [vmem:[%s2938] sm:$0x3] %v2937
  %v2940 = vsel %vm2928, %v2034, %v1737
  %s2941 = scalar_lea.vmem %s3, 8
  %2942 = vst [vmem:[%s2941] sm:$0x3] %v2940
  %v2943 = vsel %vm2928, %v2331, %v1434
  %s2944 = scalar_lea.vmem %s3, 10
  %2945 = vst [vmem:[%s2944] sm:$0x3] %v2943
  %v2946 = vsel %vm2928, %v2628, %v1131
  %s2947 = scalar_lea.vmem %s3, 12
  %2948 = vst [vmem:[%s2947] sm:$0x3] %v2946
  %v2949 = vsel %vm2928, %v2925, %v828
  %s2950 = scalar_lea.vmem %s3, 14
  %2951 = vst [vmem:[%s2950] sm:$0x3] %v2949
  // Predicated region
  $region14: #{bilstm_encoder_forward.2} parent=0 // pred_check
    _
  $region15: #{bilstm_encoder_forward.2} parent=0 // pred_check_branch
    %2953 = sbr.rel (0) target = $region17
  $region16: #{bilstm_encoder_forward.2} parent=0 // pred_region
    _
  $region17: #{bilstm_encoder_forward.2} parent=0 // pred_fallthru
    _
  // Predicated region
  $region18: #{bilstm_encoder_forward.2} parent=0 // pred_check
    _
  $region19: #{bilstm_encoder_forward.2} parent=0 // pred_check_branch
    %2955 = sbr.rel (0) target = $region21
  $region20: #{bilstm_encoder_forward.2} parent=0 // pred_region
    _
  $region21: #{bilstm_encoder_forward.2} parent=0 // pred_fallthru
    _

// kernel: bilstm_encoder_forward.3
$region0: #{bilstm_encoder_forward.3}
  #allocation0 [shape = 'u32[]', space=smem, size = 0x4, offset = 0x4, fixed_abs, tag = 'smem constant byte address 0x4 - core index']
  #allocation1 [shape = 'u32[72,128]{1,0:T(1,128)}', space=vmem, size = 0x9000, scoped, tag = 'internal scratch']
  %s0 = inlined_call_operand.vmem [shape: f32[8,2,1024], index: 0, kind: input, shape index: {}]
  %s1 = inlined_call_operand.vmem [shape: bf16[128,1024], index: 1, kind: input, shape index: {}]
  %s2 = inlined_call_operand.vmem [shape: bf16[256,128], index: 2, kind: input, shape index: {}]
  %s3 = inlined_call_operand.hbm [shape: f32[8,2,128], index: 3, kind: output, shape index: {}]
  %s4 = sld [smem:[#allocation0]]
  $region22: #{bilstm_encoder_forward.3} parent=0
    _
  %s6 = ssub.s32 1, %s4
  %s7 = scalar_select 0, %s6, %s4
  $region1: #{bilstm_encoder_forward.3} parent=0
    #allocation2 [shape = 'u8[8192]{0}', space=vmem, size = 0x2000, scoped, tag = 'output window, operand 0, single buffered']
    #allocation3 [shape = 's32[1]{0}', space=sflag, size = 0x4, scoped, tag = 'scoped memory for bilstm_encoder_forward.3']
    %8 = vsyncpa [#allocation3], 0
    // Predicated region
    $region2: #{bilstm_encoder_forward.3} parent=1 // pred_check
      _
    $region3: #{bilstm_encoder_forward.3} parent=1 // pred_check_branch
      %10 = sbr.rel (0) target = $region5
    $region4: #{bilstm_encoder_forward.3} parent=1 // pred_region
      _
    $region5: #{bilstm_encoder_forward.3} parent=1 // pred_fallthru
      _
    // Predicated region
    $region6: #{bilstm_encoder_forward.3} parent=1 // pred_check
      _
    $region7: #{bilstm_encoder_forward.3} parent=1 // pred_check_branch
      %12 = sbr.rel (0) target = $region9
    $region8: #{bilstm_encoder_forward.3} parent=1 // pred_region
      _
    $region9: #{bilstm_encoder_forward.3} parent=1 // pred_fallthru
      _
    // Predicated region
    $region10: #{bilstm_encoder_forward.3} parent=1 // pred_check
      _
    $region11: #{bilstm_encoder_forward.3} parent=1 // pred_check_branch
      %14 = sbr.rel (0) target = $region13
    $region12: #{bilstm_encoder_forward.3} parent=1 // pred_region
      _
    $region13: #{bilstm_encoder_forward.3} parent=1 // pred_fallthru
      _
    %v16 = vld [vmem:[%s1] sm:$0xff]
    %v17 = vld [vmem:[%s1 + $0x8] sm:$0xff]
    %v18 = vld [vmem:[%s1 + $0x10] sm:$0xff]
    %v19 = vld [vmem:[%s1 + $0x18] sm:$0xff]
    %v20 = vld [vmem:[%s1 + $0x20] sm:$0xff]
    %v21 = vld [vmem:[%s1 + $0x28] sm:$0xff]
    %v22 = vld [vmem:[%s1 + $0x30] sm:$0xff]
    %v23 = vld [vmem:[%s1 + $0x38] sm:$0xff]
    %v24 = vld [vmem:[%s1 + $0x40] sm:$0xff]
    %v25 = vld [vmem:[%s1 + $0x48] sm:$0xff]
    %v26 = vld [vmem:[%s1 + $0x50] sm:$0xff]
    %v27 = vld [vmem:[%s1 + $0x58] sm:$0xff]
    %v28 = vld [vmem:[%s1 + $0x60] sm:$0xff]
    %v29 = vld [vmem:[%s1 + $0x68] sm:$0xff]
    %v30 = vld [vmem:[%s1 + $0x70] sm:$0xff]
    %v31 = vld [vmem:[%s1 + $0x78] sm:$0xff]
    %v32 = vld [vmem:[%s1 + $0x80] sm:$0xff]
    %v33 = vld [vmem:[%s1 + $0x88] sm:$0xff]
    %v34 = vld [vmem:[%s1 + $0x90] sm:$0xff]
    %v35 = vld [vmem:[%s1 + $0x98] sm:$0xff]
    %v36 = vld [vmem:[%s1 + $0xa0] sm:$0xff]
    %v37 = vld [vmem:[%s1 + $0xa8] sm:$0xff]
    %v38 = vld [vmem:[%s1 + $0xb0] sm:$0xff]
    %v39 = vld [vmem:[%s1 + $0xb8] sm:$0xff]
    %v40 = vld [vmem:[%s1 + $0xc0] sm:$0xff]
    %v41 = vld [vmem:[%s1 + $0xc8] sm:$0xff]
    %v42 = vld [vmem:[%s1 + $0xd0] sm:$0xff]
    %v43 = vld [vmem:[%s1 + $0xd8] sm:$0xff]
    %v44 = vld [vmem:[%s1 + $0xe0] sm:$0xff]
    %v45 = vld [vmem:[%s1 + $0xe8] sm:$0xff]
    %v46 = vld [vmem:[%s1 + $0xf0] sm:$0xff]
    %v47 = vld [vmem:[%s1 + $0xf8] sm:$0xff]
    %v48 = vld [vmem:[%s1 + $0x100] sm:$0xff]
    %v49 = vld [vmem:[%s1 + $0x108] sm:$0xff]
    %v50 = vld [vmem:[%s1 + $0x110] sm:$0xff]
    %v51 = vld [vmem:[%s1 + $0x118] sm:$0xff]
    %v52 = vld [vmem:[%s1 + $0x120] sm:$0xff]
    %v53 = vld [vmem:[%s1 + $0x128] sm:$0xff]
    %v54 = vld [vmem:[%s1 + $0x130] sm:$0xff]
    %v55 = vld [vmem:[%s1 + $0x138] sm:$0xff]
    %v56 = vld [vmem:[%s1 + $0x140] sm:$0xff]
    %v57 = vld [vmem:[%s1 + $0x148] sm:$0xff]
    %v58 = vld [vmem:[%s1 + $0x150] sm:$0xff]
    %v59 = vld [vmem:[%s1 + $0x158] sm:$0xff]
    %v60 = vld [vmem:[%s1 + $0x160] sm:$0xff]
    %v61 = vld [vmem:[%s1 + $0x168] sm:$0xff]
    %v62 = vld [vmem:[%s1 + $0x170] sm:$0xff]
    %v63 = vld [vmem:[%s1 + $0x178] sm:$0xff]
    %v64 = vld [vmem:[%s1 + $0x180] sm:$0xff]
    %v65 = vld [vmem:[%s1 + $0x188] sm:$0xff]
    %v66 = vld [vmem:[%s1 + $0x190] sm:$0xff]
    %v67 = vld [vmem:[%s1 + $0x198] sm:$0xff]
    %v68 = vld [vmem:[%s1 + $0x1a0] sm:$0xff]
    %v69 = vld [vmem:[%s1 + $0x1a8] sm:$0xff]
    %v70 = vld [vmem:[%s1 + $0x1b0] sm:$0xff]
    %v71 = vld [vmem:[%s1 + $0x1b8] sm:$0xff]
    %v72 = vld [vmem:[%s1 + $0x1c0] sm:$0xff]
    %v73 = vld [vmem:[%s1 + $0x1c8] sm:$0xff]
    %v74 = vld [vmem:[%s1 + $0x1d0] sm:$0xff]
    %v75 = vld [vmem:[%s1 + $0x1d8] sm:$0xff]
    %v76 = vld [vmem:[%s1 + $0x1e0] sm:$0xff]
    %v77 = vld [vmem:[%s1 + $0x1e8] sm:$0xff]
    %v78 = vld [vmem:[%s1 + $0x1f0] sm:$0xff]
    %v79 = vld [vmem:[%s1 + $0x1f8] sm:$0xff]
    %v144 = vunpack.c.l.b16 %v16
    %v145 = vunpack.c.h.b16 %v16
    %v146 = vunpack.c.l.b16 %v17
    %v147 = vunpack.c.h.b16 %v17
    %v148 = vunpack.c.l.b16 %v18
    %v149 = vunpack.c.h.b16 %v18
    %v150 = vunpack.c.l.b16 %v19
    %v151 = vunpack.c.h.b16 %v19
    %v152 = vunpack.c.l.b16 %v20
    %v153 = vunpack.c.h.b16 %v20
    %v154 = vunpack.c.l.b16 %v21
    %v155 = vunpack.c.h.b16 %v21
    %v156 = vunpack.c.l.b16 %v22
    %v157 = vunpack.c.h.b16 %v22
    %v158 = vunpack.c.l.b16 %v23
    %v159 = vunpack.c.h.b16 %v23
    %v160 = vunpack.c.l.b16 %v24
    %v161 = vunpack.c.h.b16 %v24
    %v162 = vunpack.c.l.b16 %v25
    %v163 = vunpack.c.h.b16 %v25
    %v164 = vunpack.c.l.b16 %v26
    %v165 = vunpack.c.h.b16 %v26
    %v166 = vunpack.c.l.b16 %v27
    %v167 = vunpack.c.h.b16 %v27
    %v168 = vunpack.c.l.b16 %v28
    %v169 = vunpack.c.h.b16 %v28
    %v170 = vunpack.c.l.b16 %v29
    %v171 = vunpack.c.h.b16 %v29
    %v172 = vunpack.c.l.b16 %v30
    %v173 = vunpack.c.h.b16 %v30
    %v174 = vunpack.c.l.b16 %v31
    %v175 = vunpack.c.h.b16 %v31
    %v176 = vunpack.c.l.b16 %v32
    %v177 = vunpack.c.h.b16 %v32
    %v178 = vunpack.c.l.b16 %v33
    %v179 = vunpack.c.h.b16 %v33
    %v180 = vunpack.c.l.b16 %v34
    %v181 = vunpack.c.h.b16 %v34
    %v182 = vunpack.c.l.b16 %v35
    %v183 = vunpack.c.h.b16 %v35
    %v184 = vunpack.c.l.b16 %v36
    %v185 = vunpack.c.h.b16 %v36
    %v186 = vunpack.c.l.b16 %v37
    %v187 = vunpack.c.h.b16 %v37
    %v188 = vunpack.c.l.b16 %v38
    %v189 = vunpack.c.h.b16 %v38
    %v190 = vunpack.c.l.b16 %v39
    %v191 = vunpack.c.h.b16 %v39
    %v192 = vunpack.c.l.b16 %v40
    %v193 = vunpack.c.h.b16 %v40
    %v194 = vunpack.c.l.b16 %v41
    %v195 = vunpack.c.h.b16 %v41
    %v196 = vunpack.c.l.b16 %v42
    %v197 = vunpack.c.h.b16 %v42
    %v198 = vunpack.c.l.b16 %v43
    %v199 = vunpack.c.h.b16 %v43
    %v200 = vunpack.c.l.b16 %v44
    %v201 = vunpack.c.h.b16 %v44
    %v202 = vunpack.c.l.b16 %v45
    %v203 = vunpack.c.h.b16 %v45
    %v204 = vunpack.c.l.b16 %v46
    %v205 = vunpack.c.h.b16 %v46
    %v206 = vunpack.c.l.b16 %v47
    %v207 = vunpack.c.h.b16 %v47
    %v208 = vunpack.c.l.b16 %v48
    %v209 = vunpack.c.h.b16 %v48
    %v210 = vunpack.c.l.b16 %v49
    %v211 = vunpack.c.h.b16 %v49
    %v212 = vunpack.c.l.b16 %v50
    %v213 = vunpack.c.h.b16 %v50
    %v214 = vunpack.c.l.b16 %v51
    %v215 = vunpack.c.h.b16 %v51
    %v216 = vunpack.c.l.b16 %v52
    %v217 = vunpack.c.h.b16 %v52
    %v218 = vunpack.c.l.b16 %v53
    %v219 = vunpack.c.h.b16 %v53
    %v220 = vunpack.c.l.b16 %v54
    %v221 = vunpack.c.h.b16 %v54
    %v222 = vunpack.c.l.b16 %v55
    %v223 = vunpack.c.h.b16 %v55
    %v224 = vunpack.c.l.b16 %v56
    %v225 = vunpack.c.h.b16 %v56
    %v226 = vunpack.c.l.b16 %v57
    %v227 = vunpack.c.h.b16 %v57
    %v228 = vunpack.c.l.b16 %v58
    %v229 = vunpack.c.h.b16 %v58
    %v230 = vunpack.c.l.b16 %v59
    %v231 = vunpack.c.h.b16 %v59
    %v232 = vunpack.c.l.b16 %v60
    %v233 = vunpack.c.h.b16 %v60
    %v234 = vunpack.c.l.b16 %v61
    %v235 = vunpack.c.h.b16 %v61
    %v236 = vunpack.c.l.b16 %v62
    %v237 = vunpack.c.h.b16 %v62
    %v238 = vunpack.c.l.b16 %v63
    %v239 = vunpack.c.h.b16 %v63
    %v240 = vunpack.c.l.b16 %v64
    %v241 = vunpack.c.h.b16 %v64
    %v242 = vunpack.c.l.b16 %v65
    %v243 = vunpack.c.h.b16 %v65
    %v244 = vunpack.c.l.b16 %v66
    %v245 = vunpack.c.h.b16 %v66
    %v246 = vunpack.c.l.b16 %v67
    %v247 = vunpack.c.h.b16 %v67
    %v248 = vunpack.c.l.b16 %v68
    %v249 = vunpack.c.h.b16 %v68
    %v250 = vunpack.c.l.b16 %v69
    %v251 = vunpack.c.h.b16 %v69
    %v252 = vunpack.c.l.b16 %v70
    %v253 = vunpack.c.h.b16 %v70
    %v254 = vunpack.c.l.b16 %v71
    %v255 = vunpack.c.h.b16 %v71
    %v256 = vunpack.c.l.b16 %v72
    %v257 = vunpack.c.h.b16 %v72
    %v258 = vunpack.c.l.b16 %v73
    %v259 = vunpack.c.h.b16 %v73
    %v260 = vunpack.c.l.b16 %v74
    %v261 = vunpack.c.h.b16 %v74
    %v262 = vunpack.c.l.b16 %v75
    %v263 = vunpack.c.h.b16 %v75
    %v264 = vunpack.c.l.b16 %v76
    %v265 = vunpack.c.h.b16 %v76
    %v266 = vunpack.c.l.b16 %v77
    %v267 = vunpack.c.h.b16 %v77
    %v268 = vunpack.c.l.b16 %v78
    %v269 = vunpack.c.h.b16 %v78
    %v270 = vunpack.c.l.b16 %v79
    %v271 = vunpack.c.h.b16 %v79
    %v272 = vpack.c.b16 %v152, %v144
    %v273 = vpack.c.b16 %v153, %v145
    %v274 = vpack.c.b16 %v154, %v146
    %v275 = vpack.c.b16 %v155, %v147
    %v276 = vpack.c.b16 %v156, %v148
    %v277 = vpack.c.b16 %v157, %v149
    %v278 = vpack.c.b16 %v158, %v150
    %v279 = vpack.c.b16 %v159, %v151
    %v280 = vpack.c.b16 %v168, %v160
    %v281 = vpack.c.b16 %v169, %v161
    %v282 = vpack.c.b16 %v170, %v162
    %v283 = vpack.c.b16 %v171, %v163
    %v284 = vpack.c.b16 %v172, %v164
    %v285 = vpack.c.b16 %v173, %v165
    %v286 = vpack.c.b16 %v174, %v166
    %v287 = vpack.c.b16 %v175, %v167
    %v288 = vpack.c.b16 %v184, %v176
    %v289 = vpack.c.b16 %v185, %v177
    %v290 = vpack.c.b16 %v186, %v178
    %v291 = vpack.c.b16 %v187, %v179
    %v292 = vpack.c.b16 %v188, %v180
    %v293 = vpack.c.b16 %v189, %v181
    %v294 = vpack.c.b16 %v190, %v182
    %v295 = vpack.c.b16 %v191, %v183
    %v296 = vpack.c.b16 %v200, %v192
    %v297 = vpack.c.b16 %v201, %v193
    %v298 = vpack.c.b16 %v202, %v194
    %v299 = vpack.c.b16 %v203, %v195
    %v300 = vpack.c.b16 %v204, %v196
    %v301 = vpack.c.b16 %v205, %v197
    %v302 = vpack.c.b16 %v206, %v198
    %v303 = vpack.c.b16 %v207, %v199
    %v304 = vpack.c.b16 %v216, %v208
    %v305 = vpack.c.b16 %v217, %v209
    %v306 = vpack.c.b16 %v218, %v210
    %v307 = vpack.c.b16 %v219, %v211
    %v308 = vpack.c.b16 %v220, %v212
    %v309 = vpack.c.b16 %v221, %v213
    %v310 = vpack.c.b16 %v222, %v214
    %v311 = vpack.c.b16 %v223, %v215
    %v312 = vpack.c.b16 %v232, %v224
    %v313 = vpack.c.b16 %v233, %v225
    %v314 = vpack.c.b16 %v234, %v226
    %v315 = vpack.c.b16 %v235, %v227
    %v316 = vpack.c.b16 %v236, %v228
    %v317 = vpack.c.b16 %v237, %v229
    %v318 = vpack.c.b16 %v238, %v230
    %v319 = vpack.c.b16 %v239, %v231
    %v320 = vpack.c.b16 %v248, %v240
    %v321 = vpack.c.b16 %v249, %v241
    %v322 = vpack.c.b16 %v250, %v242
    %v323 = vpack.c.b16 %v251, %v243
    %v324 = vpack.c.b16 %v252, %v244
    %v325 = vpack.c.b16 %v253, %v245
    %v326 = vpack.c.b16 %v254, %v246
    %v327 = vpack.c.b16 %v255, %v247
    %v328 = vpack.c.b16 %v264, %v256
    %v329 = vpack.c.b16 %v265, %v257
    %v330 = vpack.c.b16 %v266, %v258
    %v331 = vpack.c.b16 %v267, %v259
    %v332 = vpack.c.b16 %v268, %v260
    %v333 = vpack.c.b16 %v269, %v261
    %v334 = vpack.c.b16 %v270, %v262
    %v335 = vpack.c.b16 %v271, %v263
    %400 = vmatpush.bf16.msra.mxu0 %v328
    %401 = vmatpush.bf16.msra.mxu0 %v320
    %402 = vmatpush.bf16.msra.mxu0 %v312
    %403 = vmatpush.bf16.msra.mxu0 %v304
    %404 = vmatpush.bf16.msra.mxu0 %v296
    %405 = vmatpush.bf16.msra.mxu0 %v288
    %406 = vmatpush.bf16.msra.mxu0 %v280
    %407 = vmatpush.bf16.msra.mxu0 %v272
    %408 = vmatmul.bf16.gmra.mxu0 0
    %v409 = vpop.f32.mrf.mxu0
    %v410 = vadd.f32 0.0, %v409
    %v411 = vpop.f32.mrf.mxu0
    %412 = vdwg.mxu0
    %413 = vmatpush.bf16.msra.mxu0 %v329
    %414 = vmatpush.bf16.msra.mxu0 %v321
    %415 = vmatpush.bf16.msra.mxu0 %v313
    %416 = vmatpush.bf16.msra.mxu0 %v305
    %417 = vmatpush.bf16.msra.mxu0 %v297
    %418 = vmatpush.bf16.msra.mxu0 %v289
    %419 = vmatpush.bf16.msra.mxu0 %v281
    %420 = vmatpush.bf16.msra.mxu0 %v273
    %421 = vmatmul.bf16.gmra.mxu0 0
    %v422 = vpop.f32.mrf.mxu0
    %v423 = vadd.f32 0.0, %v422
    %v424 = vpop.f32.mrf.mxu0
    %425 = vdwg.mxu0
    %426 = vmatpush.bf16.msra.mxu0 %v330
    %427 = vmatpush.bf16.msra.mxu0 %v322
    %428 = vmatpush.bf16.msra.mxu0 %v314
    %429 = vmatpush.bf16.msra.mxu0 %v306
    %430 = vmatpush.bf16.msra.mxu0 %v298
    %431 = vmatpush.bf16.msra.mxu0 %v290
    %432 = vmatpush.bf16.msra.mxu0 %v282
    %433 = vmatpush.bf16.msra.mxu0 %v274
    %434 = vmatmul.bf16.gmra.mxu0 0
    %v435 = vpop.f32.mrf.mxu0
    %v436 = vadd.f32 0.0, %v435
    %v437 = vpop.f32.mrf.mxu0
    %438 = vdwg.mxu0
    %439 = vmatpush.bf16.msra.mxu0 %v331
    %440 = vmatpush.bf16.msra.mxu0 %v323
    %441 = vmatpush.bf16.msra.mxu0 %v315
    %442 = vmatpush.bf16.msra.mxu0 %v307
    %443 = vmatpush.bf16.msra.mxu0 %v299
    %444 = vmatpush.bf16.msra.mxu0 %v291
    %445 = vmatpush.bf16.msra.mxu0 %v283
    %446 = vmatpush.bf16.msra.mxu0 %v275
    %447 = vmatmul.bf16.gmra.mxu0 0
    %v448 = vpop.f32.mrf.mxu0
    %v449 = vadd.f32 0.0, %v448
    %v450 = vpop.f32.mrf.mxu0
    %451 = vdwg.mxu0
    %452 = vmatpush.bf16.msra.mxu0 %v332
    %453 = vmatpush.bf16.msra.mxu0 %v324
    %454 = vmatpush.bf16.msra.mxu0 %v316
    %455 = vmatpush.bf16.msra.mxu0 %v308
    %456 = vmatpush.bf16.msra.mxu0 %v300
    %457 = vmatpush.bf16.msra.mxu0 %v292
    %458 = vmatpush.bf16.msra.mxu0 %v284
    %459 = vmatpush.bf16.msra.mxu0 %v276
    %460 = vmatmul.bf16.gmra.mxu0 0
    %v461 = vpop.f32.mrf.mxu0
    %v462 = vadd.f32 0.0, %v461
    %v463 = vpop.f32.mrf.mxu0
    %464 = vdwg.mxu0
    %465 = vmatpush.bf16.msra.mxu0 %v333
    %466 = vmatpush.bf16.msra.mxu0 %v325
    %467 = vmatpush.bf16.msra.mxu0 %v317
    %468 = vmatpush.bf16.msra.mxu0 %v309
    %469 = vmatpush.bf16.msra.mxu0 %v301
    %470 = vmatpush.bf16.msra.mxu0 %v293
    %471 = vmatpush.bf16.msra.mxu0 %v285
    %472 = vmatpush.bf16.msra.mxu0 %v277
    %473 = vmatmul.bf16.gmra.mxu0 0
    %v474 = vpop.f32.mrf.mxu0
    %v475 = vadd.f32 0.0, %v474
    %v476 = vpop.f32.mrf.mxu0
    %477 = vdwg.mxu0
    %478 = vmatpush.bf16.msra.mxu0 %v334
    %479 = vmatpush.bf16.msra.mxu0 %v326
    %480 = vmatpush.bf16.msra.mxu0 %v318
    %481 = vmatpush.bf16.msra.mxu0 %v310
    %482 = vmatpush.bf16.msra.mxu0 %v302
    %483 = vmatpush.bf16.msra.mxu0 %v294
    %484 = vmatpush.bf16.msra.mxu0 %v286
    %485 = vmatpush.bf16.msra.mxu0 %v278
    %486 = vmatmul.bf16.gmra.mxu0 0
    %v487 = vpop.f32.mrf.mxu0
    %v488 = vadd.f32 0.0, %v487
    %v489 = vpop.f32.mrf.mxu0
    %490 = vdwg.mxu0
    %491 = vmatpush.bf16.msra.mxu0 %v335
    %492 = vmatpush.bf16.msra.mxu0 %v327
    %493 = vmatpush.bf16.msra.mxu0 %v319
    %494 = vmatpush.bf16.msra.mxu0 %v311
    %495 = vmatpush.bf16.msra.mxu0 %v303
    %496 = vmatpush.bf16.msra.mxu0 %v295
    %497 = vmatpush.bf16.msra.mxu0 %v287
    %498 = vmatpush.bf16.msra.mxu0 %v279
    %499 = vmatmul.bf16.gmra.mxu0 0
    %v500 = vpop.f32.mrf.mxu0
    %v501 = vadd.f32 0.0, %v500
    %v502 = vpop.f32.mrf.mxu0
    %503 = vdwg.mxu0
    %v504 = vld [vmem:[%s0] sm:$0xff]
    %v505 = vld [vmem:[%s0 + $0x8] sm:$0xff]
    %s506 = scalar_lea.vmem %s0, 112
    %v507 = vld [vmem:[%s506] sm:$0xff]
    %v508 = vld [vmem:[%s506 + $0x8] sm:$0xff]
    %v513 = vrot.slane %v423, 6
    %v514 = vrot.slane %v436, 4
    %v515 = vrot.slane %v449, 2
    %vm516 = vcmask 1041408
    %v517 = vsel %vm516, %v410, %v513
    %vm518 = vcmask 1045508
    %v519 = vsel %vm518, %v514, %v515
    %vm520 = vcmask 1043456
    %v521 = vsel %vm520, %v517, %v519
    %v523 = vadd.f32 %v504, %v521
    %v528 = vrot.slane %v475, 6
    %v529 = vrot.slane %v488, 4
    %v530 = vrot.slane %v501, 2
    %v531 = vsel %vm516, %v462, %v528
    %v532 = vsel %vm518, %v529, %v530
    %v533 = vsel %vm520, %v531, %v532
    %v535 = vadd.f32 %v508, %v533
    %v536 = vxor.u32 %v523, 2147483648
    %v537 = vmul.f32 %v536, 1.442695
    %v538 = vpow.pop %v537
    %v539 = vadd.f32 %v538, 1.0
    %v540 = vrcp.pop %v539
    %v541 = vmul.f32 %v539, %v540
    %v542 = vsub.f32 1.0, %v541
    %v543 = vmul.f32 %v540, %v542
    %v544 = vadd.f32 %v540, %v543
    %vm545 = vweird.f32 %v539
    %vm546 = vweird.f32 %v540
    %vm547 = vmor %vm545, %vm546
    %v548 = vsel %vm547, %v540, %v544
    %v549 = vand.u32 2147483647, %v539
    %vm550 = vcmp.eq.f32.partialorder %v549, 8.507059e+37
    %v551 = vand.u32 %v539, 2147483648
    %v552 = vor.u32 1.1754944e-38, %v551
    %v553 = vsel %vm550, %v552, %v548
    %v554 = vmul.f32 1.0, %v553
    %v556 = vrot.slane %v523, 2
    %v558 = vxor.u32 %v556, 2147483648
    %v559 = vmul.f32 %v558, 1.442695
    %v560 = vpow.pop %v559
    %v561 = vadd.f32 %v560, 1.0
    %v562 = vrcp.pop %v561
    %v563 = vmul.f32 %v561, %v562
    %v564 = vsub.f32 1.0, %v563
    %v565 = vmul.f32 %v562, %v564
    %v566 = vadd.f32 %v562, %v565
    %vm567 = vweird.f32 %v561
    %vm568 = vweird.f32 %v562
    %vm569 = vmor %vm567, %vm568
    %v570 = vsel %vm569, %v562, %v566
    %v571 = vand.u32 2147483647, %v561
    %vm572 = vcmp.eq.f32.partialorder %v571, 8.507059e+37
    %v573 = vand.u32 %v561, 2147483648
    %v574 = vor.u32 1.1754944e-38, %v573
    %v575 = vsel %vm572, %v574, %v570
    %v576 = vmul.f32 1.0, %v575
    %v577 = vrot.slane %v523, 4
    %v579 = vtanh.pop %v577
    %v580 = vrot.slane %v523, 6
    %v582 = vxor.u32 %v580, 2147483648
    %v583 = vmul.f32 %v582, 1.442695
    %v584 = vpow.pop %v583
    %v585 = vadd.f32 %v584, 1.0
    %v586 = vrcp.pop %v585
    %v587 = vmul.f32 %v585, %v586
    %v588 = vsub.f32 1.0, %v587
    %v589 = vmul.f32 %v586, %v588
    %v590 = vadd.f32 %v586, %v589
    %vm591 = vweird.f32 %v585
    %vm592 = vweird.f32 %v586
    %vm593 = vmor %vm591, %vm592
    %v594 = vsel %vm593, %v586, %v590
    %v595 = vand.u32 2147483647, %v585
    %vm596 = vcmp.eq.f32.partialorder %v595, 8.507059e+37
    %v597 = vand.u32 %v585, 2147483648
    %v598 = vor.u32 1.1754944e-38, %v597
    %v599 = vsel %vm596, %v598, %v594
    %v600 = vmul.f32 1.0, %v599
    %v601 = vmul.f32 %v576, 0.0
    %v602 = vmul.f32 %v554, %v579
    %v603 = vadd.f32 %v601, %v602
    %v604 = vtanh.pop %v603
    %v605 = vmul.f32 %v600, %v604
    %v606 = vxor.u32 %v535, 2147483648
    %v607 = vmul.f32 %v606, 1.442695
    %v608 = vpow.pop %v607
    %v609 = vadd.f32 %v608, 1.0
    %v610 = vrcp.pop %v609
    %v611 = vmul.f32 %v609, %v610
    %v612 = vsub.f32 1.0, %v611
    %v613 = vmul.f32 %v610, %v612
    %v614 = vadd.f32 %v610, %v613
    %vm615 = vweird.f32 %v609
    %vm616 = vweird.f32 %v610
    %vm617 = vmor %vm615, %vm616
    %v618 = vsel %vm617, %v610, %v614
    %v619 = vand.u32 2147483647, %v609
    %vm620 = vcmp.eq.f32.partialorder %v619, 8.507059e+37
    %v621 = vand.u32 %v609, 2147483648
    %v622 = vor.u32 1.1754944e-38, %v621
    %v623 = vsel %vm620, %v622, %v618
    %v624 = vmul.f32 1.0, %v623
    %v626 = vrot.slane %v535, 2
    %v628 = vxor.u32 %v626, 2147483648
    %v629 = vmul.f32 %v628, 1.442695
    %v630 = vpow.pop %v629
    %v631 = vadd.f32 %v630, 1.0
    %v632 = vrcp.pop %v631
    %v633 = vmul.f32 %v631, %v632
    %v634 = vsub.f32 1.0, %v633
    %v635 = vmul.f32 %v632, %v634
    %v636 = vadd.f32 %v632, %v635
    %vm637 = vweird.f32 %v631
    %vm638 = vweird.f32 %v632
    %vm639 = vmor %vm637, %vm638
    %v640 = vsel %vm639, %v632, %v636
    %v641 = vand.u32 2147483647, %v631
    %vm642 = vcmp.eq.f32.partialorder %v641, 8.507059e+37
    %v643 = vand.u32 %v631, 2147483648
    %v644 = vor.u32 1.1754944e-38, %v643
    %v645 = vsel %vm642, %v644, %v640
    %v646 = vmul.f32 1.0, %v645
    %v647 = vrot.slane %v535, 4
    %v649 = vtanh.pop %v647
    %v650 = vrot.slane %v535, 6
    %v652 = vxor.u32 %v650, 2147483648
    %v653 = vmul.f32 %v652, 1.442695
    %v654 = vpow.pop %v653
    %v655 = vadd.f32 %v654, 1.0
    %v656 = vrcp.pop %v655
    %v657 = vmul.f32 %v655, %v656
    %v658 = vsub.f32 1.0, %v657
    %v659 = vmul.f32 %v656, %v658
    %v660 = vadd.f32 %v656, %v659
    %vm661 = vweird.f32 %v655
    %vm662 = vweird.f32 %v656
    %vm663 = vmor %vm661, %vm662
    %v664 = vsel %vm663, %v656, %v660
    %v665 = vand.u32 2147483647, %v655
    %vm666 = vcmp.eq.f32.partialorder %v665, 8.507059e+37
    %v667 = vand.u32 %v655, 2147483648
    %v668 = vor.u32 1.1754944e-38, %v667
    %v669 = vsel %vm666, %v668, %v664
    %v670 = vmul.f32 1.0, %v669
    %v671 = vmul.f32 %v646, 0.0
    %v672 = vmul.f32 %v624, %v649
    %v673 = vadd.f32 %v671, %v672
    %v674 = vtanh.pop %v673
    %v675 = vmul.f32 %v670, %v674
    %v676 = vpack.c.bf16 %v605, %v605
    %v677 = vpack.c.bf16 %v675, %v675
    %v678 = vld [vmem:[%s2] sm:$0xf]
    %v679 = vld [vmem:[%s2 + $0x4] sm:$0xf]
    %v680 = vld [vmem:[%s2 + $0x8] sm:$0xf]
    %v681 = vld [vmem:[%s2 + $0xc] sm:$0xf]
    %v682 = vld [vmem:[%s2 + $0x10] sm:$0xf]
    %v683 = vld [vmem:[%s2 + $0x14] sm:$0xf]
    %v684 = vld [vmem:[%s2 + $0x18] sm:$0xf]
    %v685 = vld [vmem:[%s2 + $0x1c] sm:$0xf]
    %v686 = vld [vmem:[%s2 + $0x20] sm:$0xf]
    %v687 = vld [vmem:[%s2 + $0x24] sm:$0xf]
    %v688 = vld [vmem:[%s2 + $0x28] sm:$0xf]
    %v689 = vld [vmem:[%s2 + $0x2c] sm:$0xf]
    %v690 = vld [vmem:[%s2 + $0x30] sm:$0xf]
    %v691 = vld [vmem:[%s2 + $0x34] sm:$0xf]
    %v692 = vld [vmem:[%s2 + $0x38] sm:$0xf]
    %v693 = vld [vmem:[%s2 + $0x3c] sm:$0xf]
    %v694 = vld [vmem:[%s2 + $0x40] sm:$0xf]
    %v695 = vld [vmem:[%s2 + $0x44] sm:$0xf]
    %v696 = vld [vmem:[%s2 + $0x48] sm:$0xf]
    %v697 = vld [vmem:[%s2 + $0x4c] sm:$0xf]
    %v698 = vld [vmem:[%s2 + $0x50] sm:$0xf]
    %v699 = vld [vmem:[%s2 + $0x54] sm:$0xf]
    %v700 = vld [vmem:[%s2 + $0x58] sm:$0xf]
    %v701 = vld [vmem:[%s2 + $0x5c] sm:$0xf]
    %v702 = vld [vmem:[%s2 + $0x60] sm:$0xf]
    %v703 = vld [vmem:[%s2 + $0x64] sm:$0xf]
    %v704 = vld [vmem:[%s2 + $0x68] sm:$0xf]
    %v705 = vld [vmem:[%s2 + $0x6c] sm:$0xf]
    %v706 = vld [vmem:[%s2 + $0x70] sm:$0xf]
    %v707 = vld [vmem:[%s2 + $0x74] sm:$0xf]
    %v708 = vld [vmem:[%s2 + $0x78] sm:$0xf]
    %v709 = vld [vmem:[%s2 + $0x7c] sm:$0xf]
    %v742 = vunpack.c.l.b16 %v678
    %v743 = vunpack.c.l.b16 %v679
    %v744 = vunpack.c.l.b16 %v680
    %v745 = vunpack.c.l.b16 %v681
    %v746 = vunpack.c.l.b16 %v682
    %v747 = vunpack.c.l.b16 %v683
    %v748 = vunpack.c.l.b16 %v684
    %v749 = vunpack.c.l.b16 %v685
    %v750 = vunpack.c.l.b16 %v686
    %v751 = vunpack.c.l.b16 %v687
    %v752 = vunpack.c.l.b16 %v688
    %v753 = vunpack.c.l.b16 %v689
    %v754 = vunpack.c.l.b16 %v690
    %v755 = vunpack.c.l.b16 %v691
    %v756 = vunpack.c.l.b16 %v692
    %v757 = vunpack.c.l.b16 %v693
    %v758 = vunpack.c.l.b16 %v694
    %v759 = vunpack.c.l.b16 %v695
    %v760 = vunpack.c.l.b16 %v696
    %v761 = vunpack.c.l.b16 %v697
    %v762 = vunpack.c.l.b16 %v698
    %v763 = vunpack.c.l.b16 %v699
    %v764 = vunpack.c.l.b16 %v700
    %v765 = vunpack.c.l.b16 %v701
    %v766 = vunpack.c.l.b16 %v702
    %v767 = vunpack.c.l.b16 %v703
    %v768 = vunpack.c.l.b16 %v704
    %v769 = vunpack.c.l.b16 %v705
    %v770 = vunpack.c.l.b16 %v706
    %v771 = vunpack.c.l.b16 %v707
    %v772 = vunpack.c.l.b16 %v708
    %v773 = vunpack.c.l.b16 %v709
    %v774 = vpack.c.b16 %v743, %v742
    %v775 = vpack.c.b16 %v745, %v744
    %v776 = vpack.c.b16 %v747, %v746
    %v777 = vpack.c.b16 %v749, %v748
    %v778 = vpack.c.b16 %v751, %v750
    %v779 = vpack.c.b16 %v753, %v752
    %v780 = vpack.c.b16 %v755, %v754
    %v781 = vpack.c.b16 %v757, %v756
    %v782 = vpack.c.b16 %v759, %v758
    %v783 = vpack.c.b16 %v761, %v760
    %v784 = vpack.c.b16 %v763, %v762
    %v785 = vpack.c.b16 %v765, %v764
    %v786 = vpack.c.b16 %v767, %v766
    %v787 = vpack.c.b16 %v769, %v768
    %v788 = vpack.c.b16 %v771, %v770
    %v789 = vpack.c.b16 %v773, %v772
    %806 = vmatpush.bf16.msra.mxu0 %v781
    %807 = vmatpush.bf16.msra.mxu0 %v780
    %808 = vmatpush.bf16.msra.mxu0 %v779
    %809 = vmatpush.bf16.msra.mxu0 %v778
    %810 = vmatpush.bf16.msra.mxu0 %v777
    %811 = vmatpush.bf16.msra.mxu0 %v776
    %812 = vmatpush.bf16.msra.mxu0 %v775
    %813 = vmatpush.bf16.msra.mxu0 %v774
    %814 = vmatmul.bf16.gmra.mxu0 %v676
    %v815 = vpop.f32.mrf.mxu0
    %v816 = vadd.f32 0.0, %v815
    %v817 = vpop.f32.mrf.mxu0
    %818 = vdwg.mxu0
    %819 = vmatpush.bf16.msra.mxu0 %v789
    %820 = vmatpush.bf16.msra.mxu0 %v788
    %821 = vmatpush.bf16.msra.mxu0 %v787
    %822 = vmatpush.bf16.msra.mxu0 %v786
    %823 = vmatpush.bf16.msra.mxu0 %v785
    %824 = vmatpush.bf16.msra.mxu0 %v784
    %825 = vmatpush.bf16.msra.mxu0 %v783
    %826 = vmatpush.bf16.msra.mxu0 %v782
    %827 = vmatmul.bf16.gmra.mxu0 %v677
    %v828 = vpop.f32.mrf.mxu0
    %v829 = vadd.f32 %v816, %v828
    %v830 = vpop.f32.mrf.mxu0
    %831 = vdwg.mxu0
    %v832 = vpack.c.bf16 %v829, %v829
    %833 = vmatpush.bf16.msra.mxu0 %v328
    %834 = vmatpush.bf16.msra.mxu0 %v320
    %835 = vmatpush.bf16.msra.mxu0 %v312
    %836 = vmatpush.bf16.msra.mxu0 %v304
    %837 = vmatpush.bf16.msra.mxu0 %v296
    %838 = vmatpush.bf16.msra.mxu0 %v288
    %839 = vmatpush.bf16.msra.mxu0 %v280
    %840 = vmatpush.bf16.msra.mxu0 %v272
    %841 = vmatmul.bf16.gmra.mxu0 %v832
    %v842 = vpop.f32.mrf.mxu0
    %v843 = vadd.f32 0.0, %v842
    %v844 = vpop.f32.mrf.mxu0
    %845 = vdwg.mxu0
    %846 = vmatpush.bf16.msra.mxu0 %v329
    %847 = vmatpush.bf16.msra.mxu0 %v321
    %848 = vmatpush.bf16.msra.mxu0 %v313
    %849 = vmatpush.bf16.msra.mxu0 %v305
    %850 = vmatpush.bf16.msra.mxu0 %v297
    %851 = vmatpush.bf16.msra.mxu0 %v289
    %852 = vmatpush.bf16.msra.mxu0 %v281
    %853 = vmatpush.bf16.msra.mxu0 %v273
    %854 = vmatmul.bf16.gmra.mxu0 %v832
    %v855 = vpop.f32.mrf.mxu0
    %v856 = vadd.f32 0.0, %v855
    %v857 = vpop.f32.mrf.mxu0
    %858 = vdwg.mxu0
    %859 = vmatpush.bf16.msra.mxu0 %v330
    %860 = vmatpush.bf16.msra.mxu0 %v322
    %861 = vmatpush.bf16.msra.mxu0 %v314
    %862 = vmatpush.bf16.msra.mxu0 %v306
    %863 = vmatpush.bf16.msra.mxu0 %v298
    %864 = vmatpush.bf16.msra.mxu0 %v290
    %865 = vmatpush.bf16.msra.mxu0 %v282
    %866 = vmatpush.bf16.msra.mxu0 %v274
    %867 = vmatmul.bf16.gmra.mxu0 %v832
    %v868 = vpop.f32.mrf.mxu0
    %v869 = vadd.f32 0.0, %v868
    %v870 = vpop.f32.mrf.mxu0
    %871 = vdwg.mxu0
    %872 = vmatpush.bf16.msra.mxu0 %v331
    %873 = vmatpush.bf16.msra.mxu0 %v323
    %874 = vmatpush.bf16.msra.mxu0 %v315
    %875 = vmatpush.bf16.msra.mxu0 %v307
    %876 = vmatpush.bf16.msra.mxu0 %v299
    %877 = vmatpush.bf16.msra.mxu0 %v291
    %878 = vmatpush.bf16.msra.mxu0 %v283
    %879 = vmatpush.bf16.msra.mxu0 %v275
    %880 = vmatmul.bf16.gmra.mxu0 %v832
    %v881 = vpop.f32.mrf.mxu0
    %v882 = vadd.f32 0.0, %v881
    %v883 = vpop.f32.mrf.mxu0
    %884 = vdwg.mxu0
    %885 = vmatpush.bf16.msra.mxu0 %v332
    %886 = vmatpush.bf16.msra.mxu0 %v324
    %887 = vmatpush.bf16.msra.mxu0 %v316
    %888 = vmatpush.bf16.msra.mxu0 %v308
    %889 = vmatpush.bf16.msra.mxu0 %v300
    %890 = vmatpush.bf16.msra.mxu0 %v292
    %891 = vmatpush.bf16.msra.mxu0 %v284
    %892 = vmatpush.bf16.msra.mxu0 %v276
    %893 = vmatmul.bf16.gmra.mxu0 %v832
    %v894 = vpop.f32.mrf.mxu0
    %v895 = vadd.f32 0.0, %v894
    %v896 = vpop.f32.mrf.mxu0
    %897 = vdwg.mxu0
    %898 = vmatpush.bf16.msra.mxu0 %v333
    %899 = vmatpush.bf16.msra.mxu0 %v325
    %900 = vmatpush.bf16.msra.mxu0 %v317
    %901 = vmatpush.bf16.msra.mxu0 %v309
    %902 = vmatpush.bf16.msra.mxu0 %v301
    %903 = vmatpush.bf16.msra.mxu0 %v293
    %904 = vmatpush.bf16.msra.mxu0 %v285
    %905 = vmatpush.bf16.msra.mxu0 %v277
    %906 = vmatmul.bf16.gmra.mxu0 %v832
    %v907 = vpop.f32.mrf.mxu0
    %v908 = vadd.f32 0.0, %v907
    %v909 = vpop.f32.mrf.mxu0
    %910 = vdwg.mxu0
    %911 = vmatpush.bf16.msra.mxu0 %v334
    %912 = vmatpush.bf16.msra.mxu0 %v326
    %913 = vmatpush.bf16.msra.mxu0 %v318
    %914 = vmatpush.bf16.msra.mxu0 %v310
    %915 = vmatpush.bf16.msra.mxu0 %v302
    %916 = vmatpush.bf16.msra.mxu0 %v294
    %917 = vmatpush.bf16.msra.mxu0 %v286
    %918 = vmatpush.bf16.msra.mxu0 %v278
    %919 = vmatmul.bf16.gmra.mxu0 %v832
    %v920 = vpop.f32.mrf.mxu0
    %v921 = vadd.f32 0.0, %v920
    %v922 = vpop.f32.mrf.mxu0
    %923 = vdwg.mxu0
    %924 = vmatpush.bf16.msra.mxu0 %v335
    %925 = vmatpush.bf16.msra.mxu0 %v327
    %926 = vmatpush.bf16.msra.mxu0 %v319
    %927 = vmatpush.bf16.msra.mxu0 %v311
    %928 = vmatpush.bf16.msra.mxu0 %v303
    %929 = vmatpush.bf16.msra.mxu0 %v295
    %930 = vmatpush.bf16.msra.mxu0 %v287
    %931 = vmatpush.bf16.msra.mxu0 %v279
    %932 = vmatmul.bf16.gmra.mxu0 %v832
    %v933 = vpop.f32.mrf.mxu0
    %v934 = vadd.f32 0.0, %v933
    %v935 = vpop.f32.mrf.mxu0
    %936 = vdwg.mxu0
    %s937 = scalar_lea.vmem %s0, 16
    %v938 = vld [vmem:[%s937] sm:$0xff]
    %v939 = vld [vmem:[%s937 + $0x8] sm:$0xff]
    %s940 = scalar_lea.vmem %s0, 96
    %v941 = vld [vmem:[%s940] sm:$0xff]
    %v942 = vld [vmem:[%s940 + $0x8] sm:$0xff]
    %v947 = vrot.slane %v856, 6
    %v948 = vrot.slane %v869, 4
    %v949 = vrot.slane %v882, 2
    %v950 = vsel %vm516, %v843, %v947
    %v951 = vsel %vm518, %v948, %v949
    %v952 = vsel %vm520, %v950, %v951
    %v954 = vadd.f32 %v938, %v952
    %v959 = vrot.slane %v908, 6
    %v960 = vrot.slane %v921, 4
    %v961 = vrot.slane %v934, 2
    %v962 = vsel %vm516, %v895, %v959
    %v963 = vsel %vm518, %v960, %v961
    %v964 = vsel %vm520, %v962, %v963
    %v966 = vadd.f32 %v942, %v964
    %v967 = vxor.u32 %v954, 2147483648
    %v968 = vmul.f32 %v967, 1.442695
    %v969 = vpow.pop %v968
    %v970 = vadd.f32 %v969, 1.0
    %v971 = vrcp.pop %v970
    %v972 = vmul.f32 %v970, %v971
    %v973 = vsub.f32 1.0, %v972
    %v974 = vmul.f32 %v971, %v973
    %v975 = vadd.f32 %v971, %v974
    %vm976 = vweird.f32 %v970
    %vm977 = vweird.f32 %v971
    %vm978 = vmor %vm976, %vm977
    %v979 = vsel %vm978, %v971, %v975
    %v980 = vand.u32 2147483647, %v970
    %vm981 = vcmp.eq.f32.partialorder %v980, 8.507059e+37
    %v982 = vand.u32 %v970, 2147483648
    %v983 = vor.u32 1.1754944e-38, %v982
    %v984 = vsel %vm981, %v983, %v979
    %v985 = vmul.f32 1.0, %v984
    %v987 = vrot.slane %v954, 2
    %v989 = vxor.u32 %v987, 2147483648
    %v990 = vmul.f32 %v989, 1.442695
    %v991 = vpow.pop %v990
    %v992 = vadd.f32 %v991, 1.0
    %v993 = vrcp.pop %v992
    %v994 = vmul.f32 %v992, %v993
    %v995 = vsub.f32 1.0, %v994
    %v996 = vmul.f32 %v993, %v995
    %v997 = vadd.f32 %v993, %v996
    %vm998 = vweird.f32 %v992
    %vm999 = vweird.f32 %v993
    %vm1000 = vmor %vm998, %vm999
    %v1001 = vsel %vm1000, %v993, %v997
    %v1002 = vand.u32 2147483647, %v992
    %vm1003 = vcmp.eq.f32.partialorder %v1002, 8.507059e+37
    %v1004 = vand.u32 %v992, 2147483648
    %v1005 = vor.u32 1.1754944e-38, %v1004
    %v1006 = vsel %vm1003, %v1005, %v1001
    %v1007 = vmul.f32 1.0, %v1006
    %v1008 = vrot.slane %v954, 4
    %v1010 = vtanh.pop %v1008
    %v1011 = vrot.slane %v954, 6
    %v1013 = vxor.u32 %v1011, 2147483648
    %v1014 = vmul.f32 %v1013, 1.442695
    %v1015 = vpow.pop %v1014
    %v1016 = vadd.f32 %v1015, 1.0
    %v1017 = vrcp.pop %v1016
    %v1018 = vmul.f32 %v1016, %v1017
    %v1019 = vsub.f32 1.0, %v1018
    %v1020 = vmul.f32 %v1017, %v1019
    %v1021 = vadd.f32 %v1017, %v1020
    %vm1022 = vweird.f32 %v1016
    %vm1023 = vweird.f32 %v1017
    %vm1024 = vmor %vm1022, %vm1023
    %v1025 = vsel %vm1024, %v1017, %v1021
    %v1026 = vand.u32 2147483647, %v1016
    %vm1027 = vcmp.eq.f32.partialorder %v1026, 8.507059e+37
    %v1028 = vand.u32 %v1016, 2147483648
    %v1029 = vor.u32 1.1754944e-38, %v1028
    %v1030 = vsel %vm1027, %v1029, %v1025
    %v1031 = vmul.f32 1.0, %v1030
    %v1032 = vmul.f32 %v1007, %v603
    %v1033 = vmul.f32 %v985, %v1010
    %v1034 = vadd.f32 %v1032, %v1033
    %v1035 = vtanh.pop %v1034
    %v1036 = vmul.f32 %v1031, %v1035
    %v1037 = vxor.u32 %v966, 2147483648
    %v1038 = vmul.f32 %v1037, 1.442695
    %v1039 = vpow.pop %v1038
    %v1040 = vadd.f32 %v1039, 1.0
    %v1041 = vrcp.pop %v1040
    %v1042 = vmul.f32 %v1040, %v1041
    %v1043 = vsub.f32 1.0, %v1042
    %v1044 = vmul.f32 %v1041, %v1043
    %v1045 = vadd.f32 %v1041, %v1044
    %vm1046 = vweird.f32 %v1040
    %vm1047 = vweird.f32 %v1041
    %vm1048 = vmor %vm1046, %vm1047
    %v1049 = vsel %vm1048, %v1041, %v1045
    %v1050 = vand.u32 2147483647, %v1040
    %vm1051 = vcmp.eq.f32.partialorder %v1050, 8.507059e+37
    %v1052 = vand.u32 %v1040, 2147483648
    %v1053 = vor.u32 1.1754944e-38, %v1052
    %v1054 = vsel %vm1051, %v1053, %v1049
    %v1055 = vmul.f32 1.0, %v1054
    %v1057 = vrot.slane %v966, 2
    %v1059 = vxor.u32 %v1057, 2147483648
    %v1060 = vmul.f32 %v1059, 1.442695
    %v1061 = vpow.pop %v1060
    %v1062 = vadd.f32 %v1061, 1.0
    %v1063 = vrcp.pop %v1062
    %v1064 = vmul.f32 %v1062, %v1063
    %v1065 = vsub.f32 1.0, %v1064
    %v1066 = vmul.f32 %v1063, %v1065
    %v1067 = vadd.f32 %v1063, %v1066
    %vm1068 = vweird.f32 %v1062
    %vm1069 = vweird.f32 %v1063
    %vm1070 = vmor %vm1068, %vm1069
    %v1071 = vsel %vm1070, %v1063, %v1067
    %v1072 = vand.u32 2147483647, %v1062
    %vm1073 = vcmp.eq.f32.partialorder %v1072, 8.507059e+37
    %v1074 = vand.u32 %v1062, 2147483648
    %v1075 = vor.u32 1.1754944e-38, %v1074
    %v1076 = vsel %vm1073, %v1075, %v1071
    %v1077 = vmul.f32 1.0, %v1076
    %v1078 = vrot.slane %v966, 4
    %v1080 = vtanh.pop %v1078
    %v1081 = vrot.slane %v966, 6
    %v1083 = vxor.u32 %v1081, 2147483648
    %v1084 = vmul.f32 %v1083, 1.442695
    %v1085 = vpow.pop %v1084
    %v1086 = vadd.f32 %v1085, 1.0
    %v1087 = vrcp.pop %v1086
    %v1088 = vmul.f32 %v1086, %v1087
    %v1089 = vsub.f32 1.0, %v1088
    %v1090 = vmul.f32 %v1087, %v1089
    %v1091 = vadd.f32 %v1087, %v1090
    %vm1092 = vweird.f32 %v1086
    %vm1093 = vweird.f32 %v1087
    %vm1094 = vmor %vm1092, %vm1093
    %v1095 = vsel %vm1094, %v1087, %v1091
    %v1096 = vand.u32 2147483647, %v1086
    %vm1097 = vcmp.eq.f32.partialorder %v1096, 8.507059e+37
    %v1098 = vand.u32 %v1086, 2147483648
    %v1099 = vor.u32 1.1754944e-38, %v1098
    %v1100 = vsel %vm1097, %v1099, %v1095
    %v1101 = vmul.f32 1.0, %v1100
    %v1102 = vmul.f32 %v1077, %v673
    %v1103 = vmul.f32 %v1055, %v1080
    %v1104 = vadd.f32 %v1102, %v1103
    %v1105 = vtanh.pop %v1104
    %v1106 = vmul.f32 %v1101, %v1105
    %v1107 = vpack.c.bf16 %v1036, %v1036
    %v1108 = vpack.c.bf16 %v1106, %v1106
    %1109 = vmatpush.bf16.msra.mxu0 %v781
    %1110 = vmatpush.bf16.msra.mxu0 %v780
    %1111 = vmatpush.bf16.msra.mxu0 %v779
    %1112 = vmatpush.bf16.msra.mxu0 %v778
    %1113 = vmatpush.bf16.msra.mxu0 %v777
    %1114 = vmatpush.bf16.msra.mxu0 %v776
    %1115 = vmatpush.bf16.msra.mxu0 %v775
    %1116 = vmatpush.bf16.msra.mxu0 %v774
    %1117 = vmatmul.bf16.gmra.mxu0 %v1107
    %v1118 = vpop.f32.mrf.mxu0
    %v1119 = vadd.f32 0.0, %v1118
    %v1120 = vpop.f32.mrf.mxu0
    %1121 = vdwg.mxu0
    %1122 = vmatpush.bf16.msra.mxu0 %v789
    %1123 = vmatpush.bf16.msra.mxu0 %v788
    %1124 = vmatpush.bf16.msra.mxu0 %v787
    %1125 = vmatpush.bf16.msra.mxu0 %v786
    %1126 = vmatpush.bf16.msra.mxu0 %v785
    %1127 = vmatpush.bf16.msra.mxu0 %v784
    %1128 = vmatpush.bf16.msra.mxu0 %v783
    %1129 = vmatpush.bf16.msra.mxu0 %v782
    %1130 = vmatmul.bf16.gmra.mxu0 %v1108
    %v1131 = vpop.f32.mrf.mxu0
    %v1132 = vadd.f32 %v1119, %v1131
    %v1133 = vpop.f32.mrf.mxu0
    %1134 = vdwg.mxu0
    %v1135 = vpack.c.bf16 %v1132, %v1132
    %1136 = vmatpush.bf16.msra.mxu0 %v328
    %1137 = vmatpush.bf16.msra.mxu0 %v320
    %1138 = vmatpush.bf16.msra.mxu0 %v312
    %1139 = vmatpush.bf16.msra.mxu0 %v304
    %1140 = vmatpush.bf16.msra.mxu0 %v296
    %1141 = vmatpush.bf16.msra.mxu0 %v288
    %1142 = vmatpush.bf16.msra.mxu0 %v280
    %1143 = vmatpush.bf16.msra.mxu0 %v272
    %1144 = vmatmul.bf16.gmra.mxu0 %v1135
    %v1145 = vpop.f32.mrf.mxu0
    %v1146 = vadd.f32 0.0, %v1145
    %v1147 = vpop.f32.mrf.mxu0
    %1148 = vdwg.mxu0
    %1149 = vmatpush.bf16.msra.mxu0 %v329
    %1150 = vmatpush.bf16.msra.mxu0 %v321
    %1151 = vmatpush.bf16.msra.mxu0 %v313
    %1152 = vmatpush.bf16.msra.mxu0 %v305
    %1153 = vmatpush.bf16.msra.mxu0 %v297
    %1154 = vmatpush.bf16.msra.mxu0 %v289
    %1155 = vmatpush.bf16.msra.mxu0 %v281
    %1156 = vmatpush.bf16.msra.mxu0 %v273
    %1157 = vmatmul.bf16.gmra.mxu0 %v1135
    %v1158 = vpop.f32.mrf.mxu0
    %v1159 = vadd.f32 0.0, %v1158
    %v1160 = vpop.f32.mrf.mxu0
    %1161 = vdwg.mxu0
    %1162 = vmatpush.bf16.msra.mxu0 %v330
    %1163 = vmatpush.bf16.msra.mxu0 %v322
    %1164 = vmatpush.bf16.msra.mxu0 %v314
    %1165 = vmatpush.bf16.msra.mxu0 %v306
    %1166 = vmatpush.bf16.msra.mxu0 %v298
    %1167 = vmatpush.bf16.msra.mxu0 %v290
    %1168 = vmatpush.bf16.msra.mxu0 %v282
    %1169 = vmatpush.bf16.msra.mxu0 %v274
    %1170 = vmatmul.bf16.gmra.mxu0 %v1135
    %v1171 = vpop.f32.mrf.mxu0
    %v1172 = vadd.f32 0.0, %v1171
    %v1173 = vpop.f32.mrf.mxu0
    %1174 = vdwg.mxu0
    %1175 = vmatpush.bf16.msra.mxu0 %v331
    %1176 = vmatpush.bf16.msra.mxu0 %v323
    %1177 = vmatpush.bf16.msra.mxu0 %v315
    %1178 = vmatpush.bf16.msra.mxu0 %v307
    %1179 = vmatpush.bf16.msra.mxu0 %v299
    %1180 = vmatpush.bf16.msra.mxu0 %v291
    %1181 = vmatpush.bf16.msra.mxu0 %v283
    %1182 = vmatpush.bf16.msra.mxu0 %v275
    %1183 = vmatmul.bf16.gmra.mxu0 %v1135
    %v1184 = vpop.f32.mrf.mxu0
    %v1185 = vadd.f32 0.0, %v1184
    %v1186 = vpop.f32.mrf.mxu0
    %1187 = vdwg.mxu0
    %1188 = vmatpush.bf16.msra.mxu0 %v332
    %1189 = vmatpush.bf16.msra.mxu0 %v324
    %1190 = vmatpush.bf16.msra.mxu0 %v316
    %1191 = vmatpush.bf16.msra.mxu0 %v308
    %1192 = vmatpush.bf16.msra.mxu0 %v300
    %1193 = vmatpush.bf16.msra.mxu0 %v292
    %1194 = vmatpush.bf16.msra.mxu0 %v284
    %1195 = vmatpush.bf16.msra.mxu0 %v276
    %1196 = vmatmul.bf16.gmra.mxu0 %v1135
    %v1197 = vpop.f32.mrf.mxu0
    %v1198 = vadd.f32 0.0, %v1197
    %v1199 = vpop.f32.mrf.mxu0
    %1200 = vdwg.mxu0
    %1201 = vmatpush.bf16.msra.mxu0 %v333
    %1202 = vmatpush.bf16.msra.mxu0 %v325
    %1203 = vmatpush.bf16.msra.mxu0 %v317
    %1204 = vmatpush.bf16.msra.mxu0 %v309
    %1205 = vmatpush.bf16.msra.mxu0 %v301
    %1206 = vmatpush.bf16.msra.mxu0 %v293
    %1207 = vmatpush.bf16.msra.mxu0 %v285
    %1208 = vmatpush.bf16.msra.mxu0 %v277
    %1209 = vmatmul.bf16.gmra.mxu0 %v1135
    %v1210 = vpop.f32.mrf.mxu0
    %v1211 = vadd.f32 0.0, %v1210
    %v1212 = vpop.f32.mrf.mxu0
    %1213 = vdwg.mxu0
    %1214 = vmatpush.bf16.msra.mxu0 %v334
    %1215 = vmatpush.bf16.msra.mxu0 %v326
    %1216 = vmatpush.bf16.msra.mxu0 %v318
    %1217 = vmatpush.bf16.msra.mxu0 %v310
    %1218 = vmatpush.bf16.msra.mxu0 %v302
    %1219 = vmatpush.bf16.msra.mxu0 %v294
    %1220 = vmatpush.bf16.msra.mxu0 %v286
    %1221 = vmatpush.bf16.msra.mxu0 %v278
    %1222 = vmatmul.bf16.gmra.mxu0 %v1135
    %v1223 = vpop.f32.mrf.mxu0
    %v1224 = vadd.f32 0.0, %v1223
    %v1225 = vpop.f32.mrf.mxu0
    %1226 = vdwg.mxu0
    %1227 = vmatpush.bf16.msra.mxu0 %v335
    %1228 = vmatpush.bf16.msra.mxu0 %v327
    %1229 = vmatpush.bf16.msra.mxu0 %v319
    %1230 = vmatpush.bf16.msra.mxu0 %v311
    %1231 = vmatpush.bf16.msra.mxu0 %v303
    %1232 = vmatpush.bf16.msra.mxu0 %v295
    %1233 = vmatpush.bf16.msra.mxu0 %v287
    %1234 = vmatpush.bf16.msra.mxu0 %v279
    %1235 = vmatmul.bf16.gmra.mxu0 %v1135
    %v1236 = vpop.f32.mrf.mxu0
    %v1237 = vadd.f32 0.0, %v1236
    %v1238 = vpop.f32.mrf.mxu0
    %1239 = vdwg.mxu0
    %s1240 = scalar_lea.vmem %s0, 32
    %v1241 = vld [vmem:[%s1240] sm:$0xff]
    %v1242 = vld [vmem:[%s1240 + $0x8] sm:$0xff]
    %s1243 = scalar_lea.vmem %s0, 80
    %v1244 = vld [vmem:[%s1243] sm:$0xff]
    %v1245 = vld [vmem:[%s1243 + $0x8] sm:$0xff]
    %v1250 = vrot.slane %v1159, 6
    %v1251 = vrot.slane %v1172, 4
    %v1252 = vrot.slane %v1185, 2
    %v1253 = vsel %vm516, %v1146, %v1250
    %v1254 = vsel %vm518, %v1251, %v1252
    %v1255 = vsel %vm520, %v1253, %v1254
    %v1257 = vadd.f32 %v1241, %v1255
    %v1262 = vrot.slane %v1211, 6
    %v1263 = vrot.slane %v1224, 4
    %v1264 = vrot.slane %v1237, 2
    %v1265 = vsel %vm516, %v1198, %v1262
    %v1266 = vsel %vm518, %v1263, %v1264
    %v1267 = vsel %vm520, %v1265, %v1266
    %v1269 = vadd.f32 %v1245, %v1267
    %v1270 = vxor.u32 %v1257, 2147483648
    %v1271 = vmul.f32 %v1270, 1.442695
    %v1272 = vpow.pop %v1271
    %v1273 = vadd.f32 %v1272, 1.0
    %v1274 = vrcp.pop %v1273
    %v1275 = vmul.f32 %v1273, %v1274
    %v1276 = vsub.f32 1.0, %v1275
    %v1277 = vmul.f32 %v1274, %v1276
    %v1278 = vadd.f32 %v1274, %v1277
    %vm1279 = vweird.f32 %v1273
    %vm1280 = vweird.f32 %v1274
    %vm1281 = vmor %vm1279, %vm1280
    %v1282 = vsel %vm1281, %v1274, %v1278
    %v1283 = vand.u32 2147483647, %v1273
    %vm1284 = vcmp.eq.f32.partialorder %v1283, 8.507059e+37
    %v1285 = vand.u32 %v1273, 2147483648
    %v1286 = vor.u32 1.1754944e-38, %v1285
    %v1287 = vsel %vm1284, %v1286, %v1282
    %v1288 = vmul.f32 1.0, %v1287
    %v1290 = vrot.slane %v1257, 2
    %v1292 = vxor.u32 %v1290, 2147483648
    %v1293 = vmul.f32 %v1292, 1.442695
    %v1294 = vpow.pop %v1293
    %v1295 = vadd.f32 %v1294, 1.0
    %v1296 = vrcp.pop %v1295
    %v1297 = vmul.f32 %v1295, %v1296
    %v1298 = vsub.f32 1.0, %v1297
    %v1299 = vmul.f32 %v1296, %v1298
    %v1300 = vadd.f32 %v1296, %v1299
    %vm1301 = vweird.f32 %v1295
    %vm1302 = vweird.f32 %v1296
    %vm1303 = vmor %vm1301, %vm1302
    %v1304 = vsel %vm1303, %v1296, %v1300
    %v1305 = vand.u32 2147483647, %v1295
    %vm1306 = vcmp.eq.f32.partialorder %v1305, 8.507059e+37
    %v1307 = vand.u32 %v1295, 2147483648
    %v1308 = vor.u32 1.1754944e-38, %v1307
    %v1309 = vsel %vm1306, %v1308, %v1304
    %v1310 = vmul.f32 1.0, %v1309
    %v1311 = vrot.slane %v1257, 4
    %v1313 = vtanh.pop %v1311
    %v1314 = vrot.slane %v1257, 6
    %v1316 = vxor.u32 %v1314, 2147483648
    %v1317 = vmul.f32 %v1316, 1.442695
    %v1318 = vpow.pop %v1317
    %v1319 = vadd.f32 %v1318, 1.0
    %v1320 = vrcp.pop %v1319
    %v1321 = vmul.f32 %v1319, %v1320
    %v1322 = vsub.f32 1.0, %v1321
    %v1323 = vmul.f32 %v1320, %v1322
    %v1324 = vadd.f32 %v1320, %v1323
    %vm1325 = vweird.f32 %v1319
    %vm1326 = vweird.f32 %v1320
    %vm1327 = vmor %vm1325, %vm1326
    %v1328 = vsel %vm1327, %v1320, %v1324
    %v1329 = vand.u32 2147483647, %v1319
    %vm1330 = vcmp.eq.f32.partialorder %v1329, 8.507059e+37
    %v1331 = vand.u32 %v1319, 2147483648
    %v1332 = vor.u32 1.1754944e-38, %v1331
    %v1333 = vsel %vm1330, %v1332, %v1328
    %v1334 = vmul.f32 1.0, %v1333
    %v1335 = vmul.f32 %v1310, %v1034
    %v1336 = vmul.f32 %v1288, %v1313
    %v1337 = vadd.f32 %v1335, %v1336
    %v1338 = vtanh.pop %v1337
    %v1339 = vmul.f32 %v1334, %v1338
    %v1340 = vxor.u32 %v1269, 2147483648
    %v1341 = vmul.f32 %v1340, 1.442695
    %v1342 = vpow.pop %v1341
    %v1343 = vadd.f32 %v1342, 1.0
    %v1344 = vrcp.pop %v1343
    %v1345 = vmul.f32 %v1343, %v1344
    %v1346 = vsub.f32 1.0, %v1345
    %v1347 = vmul.f32 %v1344, %v1346
    %v1348 = vadd.f32 %v1344, %v1347
    %vm1349 = vweird.f32 %v1343
    %vm1350 = vweird.f32 %v1344
    %vm1351 = vmor %vm1349, %vm1350
    %v1352 = vsel %vm1351, %v1344, %v1348
    %v1353 = vand.u32 2147483647, %v1343
    %vm1354 = vcmp.eq.f32.partialorder %v1353, 8.507059e+37
    %v1355 = vand.u32 %v1343, 2147483648
    %v1356 = vor.u32 1.1754944e-38, %v1355
    %v1357 = vsel %vm1354, %v1356, %v1352
    %v1358 = vmul.f32 1.0, %v1357
    %v1360 = vrot.slane %v1269, 2
    %v1362 = vxor.u32 %v1360, 2147483648
    %v1363 = vmul.f32 %v1362, 1.442695
    %v1364 = vpow.pop %v1363
    %v1365 = vadd.f32 %v1364, 1.0
    %v1366 = vrcp.pop %v1365
    %v1367 = vmul.f32 %v1365, %v1366
    %v1368 = vsub.f32 1.0, %v1367
    %v1369 = vmul.f32 %v1366, %v1368
    %v1370 = vadd.f32 %v1366, %v1369
    %vm1371 = vweird.f32 %v1365
    %vm1372 = vweird.f32 %v1366
    %vm1373 = vmor %vm1371, %vm1372
    %v1374 = vsel %vm1373, %v1366, %v1370
    %v1375 = vand.u32 2147483647, %v1365
    %vm1376 = vcmp.eq.f32.partialorder %v1375, 8.507059e+37
    %v1377 = vand.u32 %v1365, 2147483648
    %v1378 = vor.u32 1.1754944e-38, %v1377
    %v1379 = vsel %vm1376, %v1378, %v1374
    %v1380 = vmul.f32 1.0, %v1379
    %v1381 = vrot.slane %v1269, 4
    %v1383 = vtanh.pop %v1381
    %v1384 = vrot.slane %v1269, 6
    %v1386 = vxor.u32 %v1384, 2147483648
    %v1387 = vmul.f32 %v1386, 1.442695
    %v1388 = vpow.pop %v1387
    %v1389 = vadd.f32 %v1388, 1.0
    %v1390 = vrcp.pop %v1389
    %v1391 = vmul.f32 %v1389, %v1390
    %v1392 = vsub.f32 1.0, %v1391
    %v1393 = vmul.f32 %v1390, %v1392
    %v1394 = vadd.f32 %v1390, %v1393
    %vm1395 = vweird.f32 %v1389
    %vm1396 = vweird.f32 %v1390
    %vm1397 = vmor %vm1395, %vm1396
    %v1398 = vsel %vm1397, %v1390, %v1394
    %v1399 = vand.u32 2147483647, %v1389
    %vm1400 = vcmp.eq.f32.partialorder %v1399, 8.507059e+37
    %v1401 = vand.u32 %v1389, 2147483648
    %v1402 = vor.u32 1.1754944e-38, %v1401
    %v1403 = vsel %vm1400, %v1402, %v1398
    %v1404 = vmul.f32 1.0, %v1403
    %v1405 = vmul.f32 %v1380, %v1104
    %v1406 = vmul.f32 %v1358, %v1383
    %v1407 = vadd.f32 %v1405, %v1406
    %v1408 = vtanh.pop %v1407
    %v1409 = vmul.f32 %v1404, %v1408
    %v1410 = vpack.c.bf16 %v1339, %v1339
    %v1411 = vpack.c.bf16 %v1409, %v1409
    %1412 = vmatpush.bf16.msra.mxu0 %v781
    %1413 = vmatpush.bf16.msra.mxu0 %v780
    %1414 = vmatpush.bf16.msra.mxu0 %v779
    %1415 = vmatpush.bf16.msra.mxu0 %v778
    %1416 = vmatpush.bf16.msra.mxu0 %v777
    %1417 = vmatpush.bf16.msra.mxu0 %v776
    %1418 = vmatpush.bf16.msra.mxu0 %v775
    %1419 = vmatpush.bf16.msra.mxu0 %v774
    %1420 = vmatmul.bf16.gmra.mxu0 %v1410
    %v1421 = vpop.f32.mrf.mxu0
    %v1422 = vadd.f32 0.0, %v1421
    %v1423 = vpop.f32.mrf.mxu0
    %1424 = vdwg.mxu0
    %1425 = vmatpush.bf16.msra.mxu0 %v789
    %1426 = vmatpush.bf16.msra.mxu0 %v788
    %1427 = vmatpush.bf16.msra.mxu0 %v787
    %1428 = vmatpush.bf16.msra.mxu0 %v786
    %1429 = vmatpush.bf16.msra.mxu0 %v785
    %1430 = vmatpush.bf16.msra.mxu0 %v784
    %1431 = vmatpush.bf16.msra.mxu0 %v783
    %1432 = vmatpush.bf16.msra.mxu0 %v782
    %1433 = vmatmul.bf16.gmra.mxu0 %v1411
    %v1434 = vpop.f32.mrf.mxu0
    %v1435 = vadd.f32 %v1422, %v1434
    %v1436 = vpop.f32.mrf.mxu0
    %1437 = vdwg.mxu0
    %v1438 = vpack.c.bf16 %v1435, %v1435
    %1439 = vmatpush.bf16.msra.mxu0 %v328
    %1440 = vmatpush.bf16.msra.mxu0 %v320
    %1441 = vmatpush.bf16.msra.mxu0 %v312
    %1442 = vmatpush.bf16.msra.mxu0 %v304
    %1443 = vmatpush.bf16.msra.mxu0 %v296
    %1444 = vmatpush.bf16.msra.mxu0 %v288
    %1445 = vmatpush.bf16.msra.mxu0 %v280
    %1446 = vmatpush.bf16.msra.mxu0 %v272
    %1447 = vmatmul.bf16.gmra.mxu0 %v1438
    %v1448 = vpop.f32.mrf.mxu0
    %v1449 = vadd.f32 0.0, %v1448
    %v1450 = vpop.f32.mrf.mxu0
    %1451 = vdwg.mxu0
    %1452 = vmatpush.bf16.msra.mxu0 %v329
    %1453 = vmatpush.bf16.msra.mxu0 %v321
    %1454 = vmatpush.bf16.msra.mxu0 %v313
    %1455 = vmatpush.bf16.msra.mxu0 %v305
    %1456 = vmatpush.bf16.msra.mxu0 %v297
    %1457 = vmatpush.bf16.msra.mxu0 %v289
    %1458 = vmatpush.bf16.msra.mxu0 %v281
    %1459 = vmatpush.bf16.msra.mxu0 %v273
    %1460 = vmatmul.bf16.gmra.mxu0 %v1438
    %v1461 = vpop.f32.mrf.mxu0
    %v1462 = vadd.f32 0.0, %v1461
    %v1463 = vpop.f32.mrf.mxu0
    %1464 = vdwg.mxu0
    %1465 = vmatpush.bf16.msra.mxu0 %v330
    %1466 = vmatpush.bf16.msra.mxu0 %v322
    %1467 = vmatpush.bf16.msra.mxu0 %v314
    %1468 = vmatpush.bf16.msra.mxu0 %v306
    %1469 = vmatpush.bf16.msra.mxu0 %v298
    %1470 = vmatpush.bf16.msra.mxu0 %v290
    %1471 = vmatpush.bf16.msra.mxu0 %v282
    %1472 = vmatpush.bf16.msra.mxu0 %v274
    %1473 = vmatmul.bf16.gmra.mxu0 %v1438
    %v1474 = vpop.f32.mrf.mxu0
    %v1475 = vadd.f32 0.0, %v1474
    %v1476 = vpop.f32.mrf.mxu0
    %1477 = vdwg.mxu0
    %1478 = vmatpush.bf16.msra.mxu0 %v331
    %1479 = vmatpush.bf16.msra.mxu0 %v323
    %1480 = vmatpush.bf16.msra.mxu0 %v315
    %1481 = vmatpush.bf16.msra.mxu0 %v307
    %1482 = vmatpush.bf16.msra.mxu0 %v299
    %1483 = vmatpush.bf16.msra.mxu0 %v291
    %1484 = vmatpush.bf16.msra.mxu0 %v283
    %1485 = vmatpush.bf16.msra.mxu0 %v275
    %1486 = vmatmul.bf16.gmra.mxu0 %v1438
    %v1487 = vpop.f32.mrf.mxu0
    %v1488 = vadd.f32 0.0, %v1487
    %v1489 = vpop.f32.mrf.mxu0
    %1490 = vdwg.mxu0
    %1491 = vmatpush.bf16.msra.mxu0 %v332
    %1492 = vmatpush.bf16.msra.mxu0 %v324
    %1493 = vmatpush.bf16.msra.mxu0 %v316
    %1494 = vmatpush.bf16.msra.mxu0 %v308
    %1495 = vmatpush.bf16.msra.mxu0 %v300
    %1496 = vmatpush.bf16.msra.mxu0 %v292
    %1497 = vmatpush.bf16.msra.mxu0 %v284
    %1498 = vmatpush.bf16.msra.mxu0 %v276
    %1499 = vmatmul.bf16.gmra.mxu0 %v1438
    %v1500 = vpop.f32.mrf.mxu0
    %v1501 = vadd.f32 0.0, %v1500
    %v1502 = vpop.f32.mrf.mxu0
    %1503 = vdwg.mxu0
    %1504 = vmatpush.bf16.msra.mxu0 %v333
    %1505 = vmatpush.bf16.msra.mxu0 %v325
    %1506 = vmatpush.bf16.msra.mxu0 %v317
    %1507 = vmatpush.bf16.msra.mxu0 %v309
    %1508 = vmatpush.bf16.msra.mxu0 %v301
    %1509 = vmatpush.bf16.msra.mxu0 %v293
    %1510 = vmatpush.bf16.msra.mxu0 %v285
    %1511 = vmatpush.bf16.msra.mxu0 %v277
    %1512 = vmatmul.bf16.gmra.mxu0 %v1438
    %v1513 = vpop.f32.mrf.mxu0
    %v1514 = vadd.f32 0.0, %v1513
    %v1515 = vpop.f32.mrf.mxu0
    %1516 = vdwg.mxu0
    %1517 = vmatpush.bf16.msra.mxu0 %v334
    %1518 = vmatpush.bf16.msra.mxu0 %v326
    %1519 = vmatpush.bf16.msra.mxu0 %v318
    %1520 = vmatpush.bf16.msra.mxu0 %v310
    %1521 = vmatpush.bf16.msra.mxu0 %v302
    %1522 = vmatpush.bf16.msra.mxu0 %v294
    %1523 = vmatpush.bf16.msra.mxu0 %v286
    %1524 = vmatpush.bf16.msra.mxu0 %v278
    %1525 = vmatmul.bf16.gmra.mxu0 %v1438
    %v1526 = vpop.f32.mrf.mxu0
    %v1527 = vadd.f32 0.0, %v1526
    %v1528 = vpop.f32.mrf.mxu0
    %1529 = vdwg.mxu0
    %1530 = vmatpush.bf16.msra.mxu0 %v335
    %1531 = vmatpush.bf16.msra.mxu0 %v327
    %1532 = vmatpush.bf16.msra.mxu0 %v319
    %1533 = vmatpush.bf16.msra.mxu0 %v311
    %1534 = vmatpush.bf16.msra.mxu0 %v303
    %1535 = vmatpush.bf16.msra.mxu0 %v295
    %1536 = vmatpush.bf16.msra.mxu0 %v287
    %1537 = vmatpush.bf16.msra.mxu0 %v279
    %1538 = vmatmul.bf16.gmra.mxu0 %v1438
    %v1539 = vpop.f32.mrf.mxu0
    %v1540 = vadd.f32 0.0, %v1539
    %v1541 = vpop.f32.mrf.mxu0
    %1542 = vdwg.mxu0
    %s1543 = scalar_lea.vmem %s0, 48
    %v1544 = vld [vmem:[%s1543] sm:$0xff]
    %v1545 = vld [vmem:[%s1543 + $0x8] sm:$0xff]
    %s1546 = scalar_lea.vmem %s0, 64
    %v1547 = vld [vmem:[%s1546] sm:$0xff]
    %v1548 = vld [vmem:[%s1546 + $0x8] sm:$0xff]
    %v1553 = vrot.slane %v1462, 6
    %v1554 = vrot.slane %v1475, 4
    %v1555 = vrot.slane %v1488, 2
    %v1556 = vsel %vm516, %v1449, %v1553
    %v1557 = vsel %vm518, %v1554, %v1555
    %v1558 = vsel %vm520, %v1556, %v1557
    %v1560 = vadd.f32 %v1544, %v1558
    %v1565 = vrot.slane %v1514, 6
    %v1566 = vrot.slane %v1527, 4
    %v1567 = vrot.slane %v1540, 2
    %v1568 = vsel %vm516, %v1501, %v1565
    %v1569 = vsel %vm518, %v1566, %v1567
    %v1570 = vsel %vm520, %v1568, %v1569
    %v1572 = vadd.f32 %v1548, %v1570
    %v1573 = vxor.u32 %v1560, 2147483648
    %v1574 = vmul.f32 %v1573, 1.442695
    %v1575 = vpow.pop %v1574
    %v1576 = vadd.f32 %v1575, 1.0
    %v1577 = vrcp.pop %v1576
    %v1578 = vmul.f32 %v1576, %v1577
    %v1579 = vsub.f32 1.0, %v1578
    %v1580 = vmul.f32 %v1577, %v1579
    %v1581 = vadd.f32 %v1577, %v1580
    %vm1582 = vweird.f32 %v1576
    %vm1583 = vweird.f32 %v1577
    %vm1584 = vmor %vm1582, %vm1583
    %v1585 = vsel %vm1584, %v1577, %v1581
    %v1586 = vand.u32 2147483647, %v1576
    %vm1587 = vcmp.eq.f32.partialorder %v1586, 8.507059e+37
    %v1588 = vand.u32 %v1576, 2147483648
    %v1589 = vor.u32 1.1754944e-38, %v1588
    %v1590 = vsel %vm1587, %v1589, %v1585
    %v1591 = vmul.f32 1.0, %v1590
    %v1593 = vrot.slane %v1560, 2
    %v1595 = vxor.u32 %v1593, 2147483648
    %v1596 = vmul.f32 %v1595, 1.442695
    %v1597 = vpow.pop %v1596
    %v1598 = vadd.f32 %v1597, 1.0
    %v1599 = vrcp.pop %v1598
    %v1600 = vmul.f32 %v1598, %v1599
    %v1601 = vsub.f32 1.0, %v1600
    %v1602 = vmul.f32 %v1599, %v1601
    %v1603 = vadd.f32 %v1599, %v1602
    %vm1604 = vweird.f32 %v1598
    %vm1605 = vweird.f32 %v1599
    %vm1606 = vmor %vm1604, %vm1605
    %v1607 = vsel %vm1606, %v1599, %v1603
    %v1608 = vand.u32 2147483647, %v1598
    %vm1609 = vcmp.eq.f32.partialorder %v1608, 8.507059e+37
    %v1610 = vand.u32 %v1598, 2147483648
    %v1611 = vor.u32 1.1754944e-38, %v1610
    %v1612 = vsel %vm1609, %v1611, %v1607
    %v1613 = vmul.f32 1.0, %v1612
    %v1614 = vrot.slane %v1560, 4
    %v1616 = vtanh.pop %v1614
    %v1617 = vrot.slane %v1560, 6
    %v1619 = vxor.u32 %v1617, 2147483648
    %v1620 = vmul.f32 %v1619, 1.442695
    %v1621 = vpow.pop %v1620
    %v1622 = vadd.f32 %v1621, 1.0
    %v1623 = vrcp.pop %v1622
    %v1624 = vmul.f32 %v1622, %v1623
    %v1625 = vsub.f32 1.0, %v1624
    %v1626 = vmul.f32 %v1623, %v1625
    %v1627 = vadd.f32 %v1623, %v1626
    %vm1628 = vweird.f32 %v1622
    %vm1629 = vweird.f32 %v1623
    %vm1630 = vmor %vm1628, %vm1629
    %v1631 = vsel %vm1630, %v1623, %v1627
    %v1632 = vand.u32 2147483647, %v1622
    %vm1633 = vcmp.eq.f32.partialorder %v1632, 8.507059e+37
    %v1634 = vand.u32 %v1622, 2147483648
    %v1635 = vor.u32 1.1754944e-38, %v1634
    %v1636 = vsel %vm1633, %v1635, %v1631
    %v1637 = vmul.f32 1.0, %v1636
    %v1638 = vmul.f32 %v1613, %v1337
    %v1639 = vmul.f32 %v1591, %v1616
    %v1640 = vadd.f32 %v1638, %v1639
    %v1641 = vtanh.pop %v1640
    %v1642 = vmul.f32 %v1637, %v1641
    %v1643 = vxor.u32 %v1572, 2147483648
    %v1644 = vmul.f32 %v1643, 1.442695
    %v1645 = vpow.pop %v1644
    %v1646 = vadd.f32 %v1645, 1.0
    %v1647 = vrcp.pop %v1646
    %v1648 = vmul.f32 %v1646, %v1647
    %v1649 = vsub.f32 1.0, %v1648
    %v1650 = vmul.f32 %v1647, %v1649
    %v1651 = vadd.f32 %v1647, %v1650
    %vm1652 = vweird.f32 %v1646
    %vm1653 = vweird.f32 %v1647
    %vm1654 = vmor %vm1652, %vm1653
    %v1655 = vsel %vm1654, %v1647, %v1651
    %v1656 = vand.u32 2147483647, %v1646
    %vm1657 = vcmp.eq.f32.partialorder %v1656, 8.507059e+37
    %v1658 = vand.u32 %v1646, 2147483648
    %v1659 = vor.u32 1.1754944e-38, %v1658
    %v1660 = vsel %vm1657, %v1659, %v1655
    %v1661 = vmul.f32 1.0, %v1660
    %v1663 = vrot.slane %v1572, 2
    %v1665 = vxor.u32 %v1663, 2147483648
    %v1666 = vmul.f32 %v1665, 1.442695
    %v1667 = vpow.pop %v1666
    %v1668 = vadd.f32 %v1667, 1.0
    %v1669 = vrcp.pop %v1668
    %v1670 = vmul.f32 %v1668, %v1669
    %v1671 = vsub.f32 1.0, %v1670
    %v1672 = vmul.f32 %v1669, %v1671
    %v1673 = vadd.f32 %v1669, %v1672
    %vm1674 = vweird.f32 %v1668
    %vm1675 = vweird.f32 %v1669
    %vm1676 = vmor %vm1674, %vm1675
    %v1677 = vsel %vm1676, %v1669, %v1673
    %v1678 = vand.u32 2147483647, %v1668
    %vm1679 = vcmp.eq.f32.partialorder %v1678, 8.507059e+37
    %v1680 = vand.u32 %v1668, 2147483648
    %v1681 = vor.u32 1.1754944e-38, %v1680
    %v1682 = vsel %vm1679, %v1681, %v1677
    %v1683 = vmul.f32 1.0, %v1682
    %v1684 = vrot.slane %v1572, 4
    %v1686 = vtanh.pop %v1684
    %v1687 = vrot.slane %v1572, 6
    %v1689 = vxor.u32 %v1687, 2147483648
    %v1690 = vmul.f32 %v1689, 1.442695
    %v1691 = vpow.pop %v1690
    %v1692 = vadd.f32 %v1691, 1.0
    %v1693 = vrcp.pop %v1692
    %v1694 = vmul.f32 %v1692, %v1693
    %v1695 = vsub.f32 1.0, %v1694
    %v1696 = vmul.f32 %v1693, %v1695
    %v1697 = vadd.f32 %v1693, %v1696
    %vm1698 = vweird.f32 %v1692
    %vm1699 = vweird.f32 %v1693
    %vm1700 = vmor %vm1698, %vm1699
    %v1701 = vsel %vm1700, %v1693, %v1697
    %v1702 = vand.u32 2147483647, %v1692
    %vm1703 = vcmp.eq.f32.partialorder %v1702, 8.507059e+37
    %v1704 = vand.u32 %v1692, 2147483648
    %v1705 = vor.u32 1.1754944e-38, %v1704
    %v1706 = vsel %vm1703, %v1705, %v1701
    %v1707 = vmul.f32 1.0, %v1706
    %v1708 = vmul.f32 %v1683, %v1407
    %v1709 = vmul.f32 %v1661, %v1686
    %v1710 = vadd.f32 %v1708, %v1709
    %v1711 = vtanh.pop %v1710
    %v1712 = vmul.f32 %v1707, %v1711
    %v1713 = vpack.c.bf16 %v1642, %v1642
    %v1714 = vpack.c.bf16 %v1712, %v1712
    %1715 = vmatpush.bf16.msra.mxu0 %v781
    %1716 = vmatpush.bf16.msra.mxu0 %v780
    %1717 = vmatpush.bf16.msra.mxu0 %v779
    %1718 = vmatpush.bf16.msra.mxu0 %v778
    %1719 = vmatpush.bf16.msra.mxu0 %v777
    %1720 = vmatpush.bf16.msra.mxu0 %v776
    %1721 = vmatpush.bf16.msra.mxu0 %v775
    %1722 = vmatpush.bf16.msra.mxu0 %v774
    %1723 = vmatmul.bf16.gmra.mxu0 %v1713
    %v1724 = vpop.f32.mrf.mxu0
    %v1725 = vadd.f32 0.0, %v1724
    %v1726 = vpop.f32.mrf.mxu0
    %1727 = vdwg.mxu0
    %1728 = vmatpush.bf16.msra.mxu0 %v789
    %1729 = vmatpush.bf16.msra.mxu0 %v788
    %1730 = vmatpush.bf16.msra.mxu0 %v787
    %1731 = vmatpush.bf16.msra.mxu0 %v786
    %1732 = vmatpush.bf16.msra.mxu0 %v785
    %1733 = vmatpush.bf16.msra.mxu0 %v784
    %1734 = vmatpush.bf16.msra.mxu0 %v783
    %1735 = vmatpush.bf16.msra.mxu0 %v782
    %1736 = vmatmul.bf16.gmra.mxu0 %v1714
    %v1737 = vpop.f32.mrf.mxu0
    %v1738 = vadd.f32 %v1725, %v1737
    %v1739 = vpop.f32.mrf.mxu0
    %1740 = vdwg.mxu0
    %v1741 = vpack.c.bf16 %v1738, %v1738
    %1742 = vmatpush.bf16.msra.mxu0 %v328
    %1743 = vmatpush.bf16.msra.mxu0 %v320
    %1744 = vmatpush.bf16.msra.mxu0 %v312
    %1745 = vmatpush.bf16.msra.mxu0 %v304
    %1746 = vmatpush.bf16.msra.mxu0 %v296
    %1747 = vmatpush.bf16.msra.mxu0 %v288
    %1748 = vmatpush.bf16.msra.mxu0 %v280
    %1749 = vmatpush.bf16.msra.mxu0 %v272
    %1750 = vmatmul.bf16.gmra.mxu0 %v1741
    %v1751 = vpop.f32.mrf.mxu0
    %v1752 = vadd.f32 0.0, %v1751
    %v1753 = vpop.f32.mrf.mxu0
    %1754 = vdwg.mxu0
    %1755 = vmatpush.bf16.msra.mxu0 %v329
    %1756 = vmatpush.bf16.msra.mxu0 %v321
    %1757 = vmatpush.bf16.msra.mxu0 %v313
    %1758 = vmatpush.bf16.msra.mxu0 %v305
    %1759 = vmatpush.bf16.msra.mxu0 %v297
    %1760 = vmatpush.bf16.msra.mxu0 %v289
    %1761 = vmatpush.bf16.msra.mxu0 %v281
    %1762 = vmatpush.bf16.msra.mxu0 %v273
    %1763 = vmatmul.bf16.gmra.mxu0 %v1741
    %v1764 = vpop.f32.mrf.mxu0
    %v1765 = vadd.f32 0.0, %v1764
    %v1766 = vpop.f32.mrf.mxu0
    %1767 = vdwg.mxu0
    %1768 = vmatpush.bf16.msra.mxu0 %v330
    %1769 = vmatpush.bf16.msra.mxu0 %v322
    %1770 = vmatpush.bf16.msra.mxu0 %v314
    %1771 = vmatpush.bf16.msra.mxu0 %v306
    %1772 = vmatpush.bf16.msra.mxu0 %v298
    %1773 = vmatpush.bf16.msra.mxu0 %v290
    %1774 = vmatpush.bf16.msra.mxu0 %v282
    %1775 = vmatpush.bf16.msra.mxu0 %v274
    %1776 = vmatmul.bf16.gmra.mxu0 %v1741
    %v1777 = vpop.f32.mrf.mxu0
    %v1778 = vadd.f32 0.0, %v1777
    %v1779 = vpop.f32.mrf.mxu0
    %1780 = vdwg.mxu0
    %1781 = vmatpush.bf16.msra.mxu0 %v331
    %1782 = vmatpush.bf16.msra.mxu0 %v323
    %1783 = vmatpush.bf16.msra.mxu0 %v315
    %1784 = vmatpush.bf16.msra.mxu0 %v307
    %1785 = vmatpush.bf16.msra.mxu0 %v299
    %1786 = vmatpush.bf16.msra.mxu0 %v291
    %1787 = vmatpush.bf16.msra.mxu0 %v283
    %1788 = vmatpush.bf16.msra.mxu0 %v275
    %1789 = vmatmul.bf16.gmra.mxu0 %v1741
    %v1790 = vpop.f32.mrf.mxu0
    %v1791 = vadd.f32 0.0, %v1790
    %v1792 = vpop.f32.mrf.mxu0
    %1793 = vdwg.mxu0
    %1794 = vmatpush.bf16.msra.mxu0 %v332
    %1795 = vmatpush.bf16.msra.mxu0 %v324
    %1796 = vmatpush.bf16.msra.mxu0 %v316
    %1797 = vmatpush.bf16.msra.mxu0 %v308
    %1798 = vmatpush.bf16.msra.mxu0 %v300
    %1799 = vmatpush.bf16.msra.mxu0 %v292
    %1800 = vmatpush.bf16.msra.mxu0 %v284
    %1801 = vmatpush.bf16.msra.mxu0 %v276
    %1802 = vmatmul.bf16.gmra.mxu0 %v1741
    %v1803 = vpop.f32.mrf.mxu0
    %v1804 = vadd.f32 0.0, %v1803
    %v1805 = vpop.f32.mrf.mxu0
    %1806 = vdwg.mxu0
    %1807 = vmatpush.bf16.msra.mxu0 %v333
    %1808 = vmatpush.bf16.msra.mxu0 %v325
    %1809 = vmatpush.bf16.msra.mxu0 %v317
    %1810 = vmatpush.bf16.msra.mxu0 %v309
    %1811 = vmatpush.bf16.msra.mxu0 %v301
    %1812 = vmatpush.bf16.msra.mxu0 %v293
    %1813 = vmatpush.bf16.msra.mxu0 %v285
    %1814 = vmatpush.bf16.msra.mxu0 %v277
    %1815 = vmatmul.bf16.gmra.mxu0 %v1741
    %v1816 = vpop.f32.mrf.mxu0
    %v1817 = vadd.f32 0.0, %v1816
    %v1818 = vpop.f32.mrf.mxu0
    %1819 = vdwg.mxu0
    %1820 = vmatpush.bf16.msra.mxu0 %v334
    %1821 = vmatpush.bf16.msra.mxu0 %v326
    %1822 = vmatpush.bf16.msra.mxu0 %v318
    %1823 = vmatpush.bf16.msra.mxu0 %v310
    %1824 = vmatpush.bf16.msra.mxu0 %v302
    %1825 = vmatpush.bf16.msra.mxu0 %v294
    %1826 = vmatpush.bf16.msra.mxu0 %v286
    %1827 = vmatpush.bf16.msra.mxu0 %v278
    %1828 = vmatmul.bf16.gmra.mxu0 %v1741
    %v1829 = vpop.f32.mrf.mxu0
    %v1830 = vadd.f32 0.0, %v1829
    %v1831 = vpop.f32.mrf.mxu0
    %1832 = vdwg.mxu0
    %1833 = vmatpush.bf16.msra.mxu0 %v335
    %1834 = vmatpush.bf16.msra.mxu0 %v327
    %1835 = vmatpush.bf16.msra.mxu0 %v319
    %1836 = vmatpush.bf16.msra.mxu0 %v311
    %1837 = vmatpush.bf16.msra.mxu0 %v303
    %1838 = vmatpush.bf16.msra.mxu0 %v295
    %1839 = vmatpush.bf16.msra.mxu0 %v287
    %1840 = vmatpush.bf16.msra.mxu0 %v279
    %1841 = vmatmul.bf16.gmra.mxu0 %v1741
    %v1842 = vpop.f32.mrf.mxu0
    %v1843 = vadd.f32 0.0, %v1842
    %v1844 = vpop.f32.mrf.mxu0
    %1845 = vdwg.mxu0
    %v1850 = vrot.slane %v1765, 6
    %v1851 = vrot.slane %v1778, 4
    %v1852 = vrot.slane %v1791, 2
    %v1853 = vsel %vm516, %v1752, %v1850
    %v1854 = vsel %vm518, %v1851, %v1852
    %v1855 = vsel %vm520, %v1853, %v1854
    %v1857 = vadd.f32 %v1547, %v1855
    %v1862 = vrot.slane %v1817, 6
    %v1863 = vrot.slane %v1830, 4
    %v1864 = vrot.slane %v1843, 2
    %v1865 = vsel %vm516, %v1804, %v1862
    %v1866 = vsel %vm518, %v1863, %v1864
    %v1867 = vsel %vm520, %v1865, %v1866
    %v1869 = vadd.f32 %v1545, %v1867
    %v1870 = vxor.u32 %v1857, 2147483648
    %v1871 = vmul.f32 %v1870, 1.442695
    %v1872 = vpow.pop %v1871
    %v1873 = vadd.f32 %v1872, 1.0
    %v1874 = vrcp.pop %v1873
    %v1875 = vmul.f32 %v1873, %v1874
    %v1876 = vsub.f32 1.0, %v1875
    %v1877 = vmul.f32 %v1874, %v1876
    %v1878 = vadd.f32 %v1874, %v1877
    %vm1879 = vweird.f32 %v1873
    %vm1880 = vweird.f32 %v1874
    %vm1881 = vmor %vm1879, %vm1880
    %v1882 = vsel %vm1881, %v1874, %v1878
    %v1883 = vand.u32 2147483647, %v1873
    %vm1884 = vcmp.eq.f32.partialorder %v1883, 8.507059e+37
    %v1885 = vand.u32 %v1873, 2147483648
    %v1886 = vor.u32 1.1754944e-38, %v1885
    %v1887 = vsel %vm1884, %v1886, %v1882
    %v1888 = vmul.f32 1.0, %v1887
    %v1890 = vrot.slane %v1857, 2
    %v1892 = vxor.u32 %v1890, 2147483648
    %v1893 = vmul.f32 %v1892, 1.442695
    %v1894 = vpow.pop %v1893
    %v1895 = vadd.f32 %v1894, 1.0
    %v1896 = vrcp.pop %v1895
    %v1897 = vmul.f32 %v1895, %v1896
    %v1898 = vsub.f32 1.0, %v1897
    %v1899 = vmul.f32 %v1896, %v1898
    %v1900 = vadd.f32 %v1896, %v1899
    %vm1901 = vweird.f32 %v1895
    %vm1902 = vweird.f32 %v1896
    %vm1903 = vmor %vm1901, %vm1902
    %v1904 = vsel %vm1903, %v1896, %v1900
    %v1905 = vand.u32 2147483647, %v1895
    %vm1906 = vcmp.eq.f32.partialorder %v1905, 8.507059e+37
    %v1907 = vand.u32 %v1895, 2147483648
    %v1908 = vor.u32 1.1754944e-38, %v1907
    %v1909 = vsel %vm1906, %v1908, %v1904
    %v1910 = vmul.f32 1.0, %v1909
    %v1911 = vrot.slane %v1857, 4
    %v1913 = vtanh.pop %v1911
    %v1914 = vrot.slane %v1857, 6
    %v1916 = vxor.u32 %v1914, 2147483648
    %v1917 = vmul.f32 %v1916, 1.442695
    %v1918 = vpow.pop %v1917
    %v1919 = vadd.f32 %v1918, 1.0
    %v1920 = vrcp.pop %v1919
    %v1921 = vmul.f32 %v1919, %v1920
    %v1922 = vsub.f32 1.0, %v1921
    %v1923 = vmul.f32 %v1920, %v1922
    %v1924 = vadd.f32 %v1920, %v1923
    %vm1925 = vweird.f32 %v1919
    %vm1926 = vweird.f32 %v1920
    %vm1927 = vmor %vm1925, %vm1926
    %v1928 = vsel %vm1927, %v1920, %v1924
    %v1929 = vand.u32 2147483647, %v1919
    %vm1930 = vcmp.eq.f32.partialorder %v1929, 8.507059e+37
    %v1931 = vand.u32 %v1919, 2147483648
    %v1932 = vor.u32 1.1754944e-38, %v1931
    %v1933 = vsel %vm1930, %v1932, %v1928
    %v1934 = vmul.f32 1.0, %v1933
    %v1935 = vmul.f32 %v1910, %v1640
    %v1936 = vmul.f32 %v1888, %v1913
    %v1937 = vadd.f32 %v1935, %v1936
    %v1938 = vtanh.pop %v1937
    %v1939 = vmul.f32 %v1934, %v1938
    %v1940 = vxor.u32 %v1869, 2147483648
    %v1941 = vmul.f32 %v1940, 1.442695
    %v1942 = vpow.pop %v1941
    %v1943 = vadd.f32 %v1942, 1.0
    %v1944 = vrcp.pop %v1943
    %v1945 = vmul.f32 %v1943, %v1944
    %v1946 = vsub.f32 1.0, %v1945
    %v1947 = vmul.f32 %v1944, %v1946
    %v1948 = vadd.f32 %v1944, %v1947
    %vm1949 = vweird.f32 %v1943
    %vm1950 = vweird.f32 %v1944
    %vm1951 = vmor %vm1949, %vm1950
    %v1952 = vsel %vm1951, %v1944, %v1948
    %v1953 = vand.u32 2147483647, %v1943
    %vm1954 = vcmp.eq.f32.partialorder %v1953, 8.507059e+37
    %v1955 = vand.u32 %v1943, 2147483648
    %v1956 = vor.u32 1.1754944e-38, %v1955
    %v1957 = vsel %vm1954, %v1956, %v1952
    %v1958 = vmul.f32 1.0, %v1957
    %v1960 = vrot.slane %v1869, 2
    %v1962 = vxor.u32 %v1960, 2147483648
    %v1963 = vmul.f32 %v1962, 1.442695
    %v1964 = vpow.pop %v1963
    %v1965 = vadd.f32 %v1964, 1.0
    %v1966 = vrcp.pop %v1965
    %v1967 = vmul.f32 %v1965, %v1966
    %v1968 = vsub.f32 1.0, %v1967
    %v1969 = vmul.f32 %v1966, %v1968
    %v1970 = vadd.f32 %v1966, %v1969
    %vm1971 = vweird.f32 %v1965
    %vm1972 = vweird.f32 %v1966
    %vm1973 = vmor %vm1971, %vm1972
    %v1974 = vsel %vm1973, %v1966, %v1970
    %v1975 = vand.u32 2147483647, %v1965
    %vm1976 = vcmp.eq.f32.partialorder %v1975, 8.507059e+37
    %v1977 = vand.u32 %v1965, 2147483648
    %v1978 = vor.u32 1.1754944e-38, %v1977
    %v1979 = vsel %vm1976, %v1978, %v1974
    %v1980 = vmul.f32 1.0, %v1979
    %v1981 = vrot.slane %v1869, 4
    %v1983 = vtanh.pop %v1981
    %v1984 = vrot.slane %v1869, 6
    %v1986 = vxor.u32 %v1984, 2147483648
    %v1987 = vmul.f32 %v1986, 1.442695
    %v1988 = vpow.pop %v1987
    %v1989 = vadd.f32 %v1988, 1.0
    %v1990 = vrcp.pop %v1989
    %v1991 = vmul.f32 %v1989, %v1990
    %v1992 = vsub.f32 1.0, %v1991
    %v1993 = vmul.f32 %v1990, %v1992
    %v1994 = vadd.f32 %v1990, %v1993
    %vm1995 = vweird.f32 %v1989
    %vm1996 = vweird.f32 %v1990
    %vm1997 = vmor %vm1995, %vm1996
    %v1998 = vsel %vm1997, %v1990, %v1994
    %v1999 = vand.u32 2147483647, %v1989
    %vm2000 = vcmp.eq.f32.partialorder %v1999, 8.507059e+37
    %v2001 = vand.u32 %v1989, 2147483648
    %v2002 = vor.u32 1.1754944e-38, %v2001
    %v2003 = vsel %vm2000, %v2002, %v1998
    %v2004 = vmul.f32 1.0, %v2003
    %v2005 = vmul.f32 %v1980, %v1710
    %v2006 = vmul.f32 %v1958, %v1983
    %v2007 = vadd.f32 %v2005, %v2006
    %v2008 = vtanh.pop %v2007
    %v2009 = vmul.f32 %v2004, %v2008
    %v2010 = vpack.c.bf16 %v1939, %v1939
    %v2011 = vpack.c.bf16 %v2009, %v2009
    %2012 = vmatpush.bf16.msra.mxu0 %v781
    %2013 = vmatpush.bf16.msra.mxu0 %v780
    %2014 = vmatpush.bf16.msra.mxu0 %v779
    %2015 = vmatpush.bf16.msra.mxu0 %v778
    %2016 = vmatpush.bf16.msra.mxu0 %v777
    %2017 = vmatpush.bf16.msra.mxu0 %v776
    %2018 = vmatpush.bf16.msra.mxu0 %v775
    %2019 = vmatpush.bf16.msra.mxu0 %v774
    %2020 = vmatmul.bf16.gmra.mxu0 %v2010
    %v2021 = vpop.f32.mrf.mxu0
    %v2022 = vadd.f32 0.0, %v2021
    %v2023 = vpop.f32.mrf.mxu0
    %2024 = vdwg.mxu0
    %2025 = vmatpush.bf16.msra.mxu0 %v789
    %2026 = vmatpush.bf16.msra.mxu0 %v788
    %2027 = vmatpush.bf16.msra.mxu0 %v787
    %2028 = vmatpush.bf16.msra.mxu0 %v786
    %2029 = vmatpush.bf16.msra.mxu0 %v785
    %2030 = vmatpush.bf16.msra.mxu0 %v784
    %2031 = vmatpush.bf16.msra.mxu0 %v783
    %2032 = vmatpush.bf16.msra.mxu0 %v782
    %2033 = vmatmul.bf16.gmra.mxu0 %v2011
    %v2034 = vpop.f32.mrf.mxu0
    %v2035 = vadd.f32 %v2022, %v2034
    %v2036 = vpop.f32.mrf.mxu0
    %2037 = vdwg.mxu0
    %v2038 = vpack.c.bf16 %v2035, %v2035
    %2039 = vmatpush.bf16.msra.mxu0 %v328
    %2040 = vmatpush.bf16.msra.mxu0 %v320
    %2041 = vmatpush.bf16.msra.mxu0 %v312
    %2042 = vmatpush.bf16.msra.mxu0 %v304
    %2043 = vmatpush.bf16.msra.mxu0 %v296
    %2044 = vmatpush.bf16.msra.mxu0 %v288
    %2045 = vmatpush.bf16.msra.mxu0 %v280
    %2046 = vmatpush.bf16.msra.mxu0 %v272
    %2047 = vmatmul.bf16.gmra.mxu0 %v2038
    %v2048 = vpop.f32.mrf.mxu0
    %v2049 = vadd.f32 0.0, %v2048
    %v2050 = vpop.f32.mrf.mxu0
    %2051 = vdwg.mxu0
    %2052 = vmatpush.bf16.msra.mxu0 %v329
    %2053 = vmatpush.bf16.msra.mxu0 %v321
    %2054 = vmatpush.bf16.msra.mxu0 %v313
    %2055 = vmatpush.bf16.msra.mxu0 %v305
    %2056 = vmatpush.bf16.msra.mxu0 %v297
    %2057 = vmatpush.bf16.msra.mxu0 %v289
    %2058 = vmatpush.bf16.msra.mxu0 %v281
    %2059 = vmatpush.bf16.msra.mxu0 %v273
    %2060 = vmatmul.bf16.gmra.mxu0 %v2038
    %v2061 = vpop.f32.mrf.mxu0
    %v2062 = vadd.f32 0.0, %v2061
    %v2063 = vpop.f32.mrf.mxu0
    %2064 = vdwg.mxu0
    %2065 = vmatpush.bf16.msra.mxu0 %v330
    %2066 = vmatpush.bf16.msra.mxu0 %v322
    %2067 = vmatpush.bf16.msra.mxu0 %v314
    %2068 = vmatpush.bf16.msra.mxu0 %v306
    %2069 = vmatpush.bf16.msra.mxu0 %v298
    %2070 = vmatpush.bf16.msra.mxu0 %v290
    %2071 = vmatpush.bf16.msra.mxu0 %v282
    %2072 = vmatpush.bf16.msra.mxu0 %v274
    %2073 = vmatmul.bf16.gmra.mxu0 %v2038
    %v2074 = vpop.f32.mrf.mxu0
    %v2075 = vadd.f32 0.0, %v2074
    %v2076 = vpop.f32.mrf.mxu0
    %2077 = vdwg.mxu0
    %2078 = vmatpush.bf16.msra.mxu0 %v331
    %2079 = vmatpush.bf16.msra.mxu0 %v323
    %2080 = vmatpush.bf16.msra.mxu0 %v315
    %2081 = vmatpush.bf16.msra.mxu0 %v307
    %2082 = vmatpush.bf16.msra.mxu0 %v299
    %2083 = vmatpush.bf16.msra.mxu0 %v291
    %2084 = vmatpush.bf16.msra.mxu0 %v283
    %2085 = vmatpush.bf16.msra.mxu0 %v275
    %2086 = vmatmul.bf16.gmra.mxu0 %v2038
    %v2087 = vpop.f32.mrf.mxu0
    %v2088 = vadd.f32 0.0, %v2087
    %v2089 = vpop.f32.mrf.mxu0
    %2090 = vdwg.mxu0
    %2091 = vmatpush.bf16.msra.mxu0 %v332
    %2092 = vmatpush.bf16.msra.mxu0 %v324
    %2093 = vmatpush.bf16.msra.mxu0 %v316
    %2094 = vmatpush.bf16.msra.mxu0 %v308
    %2095 = vmatpush.bf16.msra.mxu0 %v300
    %2096 = vmatpush.bf16.msra.mxu0 %v292
    %2097 = vmatpush.bf16.msra.mxu0 %v284
    %2098 = vmatpush.bf16.msra.mxu0 %v276
    %2099 = vmatmul.bf16.gmra.mxu0 %v2038
    %v2100 = vpop.f32.mrf.mxu0
    %v2101 = vadd.f32 0.0, %v2100
    %v2102 = vpop.f32.mrf.mxu0
    %2103 = vdwg.mxu0
    %2104 = vmatpush.bf16.msra.mxu0 %v333
    %2105 = vmatpush.bf16.msra.mxu0 %v325
    %2106 = vmatpush.bf16.msra.mxu0 %v317
    %2107 = vmatpush.bf16.msra.mxu0 %v309
    %2108 = vmatpush.bf16.msra.mxu0 %v301
    %2109 = vmatpush.bf16.msra.mxu0 %v293
    %2110 = vmatpush.bf16.msra.mxu0 %v285
    %2111 = vmatpush.bf16.msra.mxu0 %v277
    %2112 = vmatmul.bf16.gmra.mxu0 %v2038
    %v2113 = vpop.f32.mrf.mxu0
    %v2114 = vadd.f32 0.0, %v2113
    %v2115 = vpop.f32.mrf.mxu0
    %2116 = vdwg.mxu0
    %2117 = vmatpush.bf16.msra.mxu0 %v334
    %2118 = vmatpush.bf16.msra.mxu0 %v326
    %2119 = vmatpush.bf16.msra.mxu0 %v318
    %2120 = vmatpush.bf16.msra.mxu0 %v310
    %2121 = vmatpush.bf16.msra.mxu0 %v302
    %2122 = vmatpush.bf16.msra.mxu0 %v294
    %2123 = vmatpush.bf16.msra.mxu0 %v286
    %2124 = vmatpush.bf16.msra.mxu0 %v278
    %2125 = vmatmul.bf16.gmra.mxu0 %v2038
    %v2126 = vpop.f32.mrf.mxu0
    %v2127 = vadd.f32 0.0, %v2126
    %v2128 = vpop.f32.mrf.mxu0
    %2129 = vdwg.mxu0
    %2130 = vmatpush.bf16.msra.mxu0 %v335
    %2131 = vmatpush.bf16.msra.mxu0 %v327
    %2132 = vmatpush.bf16.msra.mxu0 %v319
    %2133 = vmatpush.bf16.msra.mxu0 %v311
    %2134 = vmatpush.bf16.msra.mxu0 %v303
    %2135 = vmatpush.bf16.msra.mxu0 %v295
    %2136 = vmatpush.bf16.msra.mxu0 %v287
    %2137 = vmatpush.bf16.msra.mxu0 %v279
    %2138 = vmatmul.bf16.gmra.mxu0 %v2038
    %v2139 = vpop.f32.mrf.mxu0
    %v2140 = vadd.f32 0.0, %v2139
    %v2141 = vpop.f32.mrf.mxu0
    %2142 = vdwg.mxu0
    %v2147 = vrot.slane %v2062, 6
    %v2148 = vrot.slane %v2075, 4
    %v2149 = vrot.slane %v2088, 2
    %v2150 = vsel %vm516, %v2049, %v2147
    %v2151 = vsel %vm518, %v2148, %v2149
    %v2152 = vsel %vm520, %v2150, %v2151
    %v2154 = vadd.f32 %v1244, %v2152
    %v2159 = vrot.slane %v2114, 6
    %v2160 = vrot.slane %v2127, 4
    %v2161 = vrot.slane %v2140, 2
    %v2162 = vsel %vm516, %v2101, %v2159
    %v2163 = vsel %vm518, %v2160, %v2161
    %v2164 = vsel %vm520, %v2162, %v2163
    %v2166 = vadd.f32 %v1242, %v2164
    %v2167 = vxor.u32 %v2154, 2147483648
    %v2168 = vmul.f32 %v2167, 1.442695
    %v2169 = vpow.pop %v2168
    %v2170 = vadd.f32 %v2169, 1.0
    %v2171 = vrcp.pop %v2170
    %v2172 = vmul.f32 %v2170, %v2171
    %v2173 = vsub.f32 1.0, %v2172
    %v2174 = vmul.f32 %v2171, %v2173
    %v2175 = vadd.f32 %v2171, %v2174
    %vm2176 = vweird.f32 %v2170
    %vm2177 = vweird.f32 %v2171
    %vm2178 = vmor %vm2176, %vm2177
    %v2179 = vsel %vm2178, %v2171, %v2175
    %v2180 = vand.u32 2147483647, %v2170
    %vm2181 = vcmp.eq.f32.partialorder %v2180, 8.507059e+37
    %v2182 = vand.u32 %v2170, 2147483648
    %v2183 = vor.u32 1.1754944e-38, %v2182
    %v2184 = vsel %vm2181, %v2183, %v2179
    %v2185 = vmul.f32 1.0, %v2184
    %v2187 = vrot.slane %v2154, 2
    %v2189 = vxor.u32 %v2187, 2147483648
    %v2190 = vmul.f32 %v2189, 1.442695
    %v2191 = vpow.pop %v2190
    %v2192 = vadd.f32 %v2191, 1.0
    %v2193 = vrcp.pop %v2192
    %v2194 = vmul.f32 %v2192, %v2193
    %v2195 = vsub.f32 1.0, %v2194
    %v2196 = vmul.f32 %v2193, %v2195
    %v2197 = vadd.f32 %v2193, %v2196
    %vm2198 = vweird.f32 %v2192
    %vm2199 = vweird.f32 %v2193
    %vm2200 = vmor %vm2198, %vm2199
    %v2201 = vsel %vm2200, %v2193, %v2197
    %v2202 = vand.u32 2147483647, %v2192
    %vm2203 = vcmp.eq.f32.partialorder %v2202, 8.507059e+37
    %v2204 = vand.u32 %v2192, 2147483648
    %v2205 = vor.u32 1.1754944e-38, %v2204
    %v2206 = vsel %vm2203, %v2205, %v2201
    %v2207 = vmul.f32 1.0, %v2206
    %v2208 = vrot.slane %v2154, 4
    %v2210 = vtanh.pop %v2208
    %v2211 = vrot.slane %v2154, 6
    %v2213 = vxor.u32 %v2211, 2147483648
    %v2214 = vmul.f32 %v2213, 1.442695
    %v2215 = vpow.pop %v2214
    %v2216 = vadd.f32 %v2215, 1.0
    %v2217 = vrcp.pop %v2216
    %v2218 = vmul.f32 %v2216, %v2217
    %v2219 = vsub.f32 1.0, %v2218
    %v2220 = vmul.f32 %v2217, %v2219
    %v2221 = vadd.f32 %v2217, %v2220
    %vm2222 = vweird.f32 %v2216
    %vm2223 = vweird.f32 %v2217
    %vm2224 = vmor %vm2222, %vm2223
    %v2225 = vsel %vm2224, %v2217, %v2221
    %v2226 = vand.u32 2147483647, %v2216
    %vm2227 = vcmp.eq.f32.partialorder %v2226, 8.507059e+37
    %v2228 = vand.u32 %v2216, 2147483648
    %v2229 = vor.u32 1.1754944e-38, %v2228
    %v2230 = vsel %vm2227, %v2229, %v2225
    %v2231 = vmul.f32 1.0, %v2230
    %v2232 = vmul.f32 %v2207, %v1937
    %v2233 = vmul.f32 %v2185, %v2210
    %v2234 = vadd.f32 %v2232, %v2233
    %v2235 = vtanh.pop %v2234
    %v2236 = vmul.f32 %v2231, %v2235
    %v2237 = vxor.u32 %v2166, 2147483648
    %v2238 = vmul.f32 %v2237, 1.442695
    %v2239 = vpow.pop %v2238
    %v2240 = vadd.f32 %v2239, 1.0
    %v2241 = vrcp.pop %v2240
    %v2242 = vmul.f32 %v2240, %v2241
    %v2243 = vsub.f32 1.0, %v2242
    %v2244 = vmul.f32 %v2241, %v2243
    %v2245 = vadd.f32 %v2241, %v2244
    %vm2246 = vweird.f32 %v2240
    %vm2247 = vweird.f32 %v2241
    %vm2248 = vmor %vm2246, %vm2247
    %v2249 = vsel %vm2248, %v2241, %v2245
    %v2250 = vand.u32 2147483647, %v2240
    %vm2251 = vcmp.eq.f32.partialorder %v2250, 8.507059e+37
    %v2252 = vand.u32 %v2240, 2147483648
    %v2253 = vor.u32 1.1754944e-38, %v2252
    %v2254 = vsel %vm2251, %v2253, %v2249
    %v2255 = vmul.f32 1.0, %v2254
    %v2257 = vrot.slane %v2166, 2
    %v2259 = vxor.u32 %v2257, 2147483648
    %v2260 = vmul.f32 %v2259, 1.442695
    %v2261 = vpow.pop %v2260
    %v2262 = vadd.f32 %v2261, 1.0
    %v2263 = vrcp.pop %v2262
    %v2264 = vmul.f32 %v2262, %v2263
    %v2265 = vsub.f32 1.0, %v2264
    %v2266 = vmul.f32 %v2263, %v2265
    %v2267 = vadd.f32 %v2263, %v2266
    %vm2268 = vweird.f32 %v2262
    %vm2269 = vweird.f32 %v2263
    %vm2270 = vmor %vm2268, %vm2269
    %v2271 = vsel %vm2270, %v2263, %v2267
    %v2272 = vand.u32 2147483647, %v2262
    %vm2273 = vcmp.eq.f32.partialorder %v2272, 8.507059e+37
    %v2274 = vand.u32 %v2262, 2147483648
    %v2275 = vor.u32 1.1754944e-38, %v2274
    %v2276 = vsel %vm2273, %v2275, %v2271
    %v2277 = vmul.f32 1.0, %v2276
    %v2278 = vrot.slane %v2166, 4
    %v2280 = vtanh.pop %v2278
    %v2281 = vrot.slane %v2166, 6
    %v2283 = vxor.u32 %v2281, 2147483648
    %v2284 = vmul.f32 %v2283, 1.442695
    %v2285 = vpow.pop %v2284
    %v2286 = vadd.f32 %v2285, 1.0
    %v2287 = vrcp.pop %v2286
    %v2288 = vmul.f32 %v2286, %v2287
    %v2289 = vsub.f32 1.0, %v2288
    %v2290 = vmul.f32 %v2287, %v2289
    %v2291 = vadd.f32 %v2287, %v2290
    %vm2292 = vweird.f32 %v2286
    %vm2293 = vweird.f32 %v2287
    %vm2294 = vmor %vm2292, %vm2293
    %v2295 = vsel %vm2294, %v2287, %v2291
    %v2296 = vand.u32 2147483647, %v2286
    %vm2297 = vcmp.eq.f32.partialorder %v2296, 8.507059e+37
    %v2298 = vand.u32 %v2286, 2147483648
    %v2299 = vor.u32 1.1754944e-38, %v2298
    %v2300 = vsel %vm2297, %v2299, %v2295
    %v2301 = vmul.f32 1.0, %v2300
    %v2302 = vmul.f32 %v2277, %v2007
    %v2303 = vmul.f32 %v2255, %v2280
    %v2304 = vadd.f32 %v2302, %v2303
    %v2305 = vtanh.pop %v2304
    %v2306 = vmul.f32 %v2301, %v2305
    %v2307 = vpack.c.bf16 %v2236, %v2236
    %v2308 = vpack.c.bf16 %v2306, %v2306
    %2309 = vmatpush.bf16.msra.mxu0 %v781
    %2310 = vmatpush.bf16.msra.mxu0 %v780
    %2311 = vmatpush.bf16.msra.mxu0 %v779
    %2312 = vmatpush.bf16.msra.mxu0 %v778
    %2313 = vmatpush.bf16.msra.mxu0 %v777
    %2314 = vmatpush.bf16.msra.mxu0 %v776
    %2315 = vmatpush.bf16.msra.mxu0 %v775
    %2316 = vmatpush.bf16.msra.mxu0 %v774
    %2317 = vmatmul.bf16.gmra.mxu0 %v2307
    %v2318 = vpop.f32.mrf.mxu0
    %v2319 = vadd.f32 0.0, %v2318
    %v2320 = vpop.f32.mrf.mxu0
    %2321 = vdwg.mxu0
    %2322 = vmatpush.bf16.msra.mxu0 %v789
    %2323 = vmatpush.bf16.msra.mxu0 %v788
    %2324 = vmatpush.bf16.msra.mxu0 %v787
    %2325 = vmatpush.bf16.msra.mxu0 %v786
    %2326 = vmatpush.bf16.msra.mxu0 %v785
    %2327 = vmatpush.bf16.msra.mxu0 %v784
    %2328 = vmatpush.bf16.msra.mxu0 %v783
    %2329 = vmatpush.bf16.msra.mxu0 %v782
    %2330 = vmatmul.bf16.gmra.mxu0 %v2308
    %v2331 = vpop.f32.mrf.mxu0
    %v2332 = vadd.f32 %v2319, %v2331
    %v2333 = vpop.f32.mrf.mxu0
    %2334 = vdwg.mxu0
    %v2335 = vpack.c.bf16 %v2332, %v2332
    %2336 = vmatpush.bf16.msra.mxu0 %v328
    %2337 = vmatpush.bf16.msra.mxu0 %v320
    %2338 = vmatpush.bf16.msra.mxu0 %v312
    %2339 = vmatpush.bf16.msra.mxu0 %v304
    %2340 = vmatpush.bf16.msra.mxu0 %v296
    %2341 = vmatpush.bf16.msra.mxu0 %v288
    %2342 = vmatpush.bf16.msra.mxu0 %v280
    %2343 = vmatpush.bf16.msra.mxu0 %v272
    %2344 = vmatmul.bf16.gmra.mxu0 %v2335
    %v2345 = vpop.f32.mrf.mxu0
    %v2346 = vadd.f32 0.0, %v2345
    %v2347 = vpop.f32.mrf.mxu0
    %2348 = vdwg.mxu0
    %2349 = vmatpush.bf16.msra.mxu0 %v329
    %2350 = vmatpush.bf16.msra.mxu0 %v321
    %2351 = vmatpush.bf16.msra.mxu0 %v313
    %2352 = vmatpush.bf16.msra.mxu0 %v305
    %2353 = vmatpush.bf16.msra.mxu0 %v297
    %2354 = vmatpush.bf16.msra.mxu0 %v289
    %2355 = vmatpush.bf16.msra.mxu0 %v281
    %2356 = vmatpush.bf16.msra.mxu0 %v273
    %2357 = vmatmul.bf16.gmra.mxu0 %v2335
    %v2358 = vpop.f32.mrf.mxu0
    %v2359 = vadd.f32 0.0, %v2358
    %v2360 = vpop.f32.mrf.mxu0
    %2361 = vdwg.mxu0
    %2362 = vmatpush.bf16.msra.mxu0 %v330
    %2363 = vmatpush.bf16.msra.mxu0 %v322
    %2364 = vmatpush.bf16.msra.mxu0 %v314
    %2365 = vmatpush.bf16.msra.mxu0 %v306
    %2366 = vmatpush.bf16.msra.mxu0 %v298
    %2367 = vmatpush.bf16.msra.mxu0 %v290
    %2368 = vmatpush.bf16.msra.mxu0 %v282
    %2369 = vmatpush.bf16.msra.mxu0 %v274
    %2370 = vmatmul.bf16.gmra.mxu0 %v2335
    %v2371 = vpop.f32.mrf.mxu0
    %v2372 = vadd.f32 0.0, %v2371
    %v2373 = vpop.f32.mrf.mxu0
    %2374 = vdwg.mxu0
    %2375 = vmatpush.bf16.msra.mxu0 %v331
    %2376 = vmatpush.bf16.msra.mxu0 %v323
    %2377 = vmatpush.bf16.msra.mxu0 %v315
    %2378 = vmatpush.bf16.msra.mxu0 %v307
    %2379 = vmatpush.bf16.msra.mxu0 %v299
    %2380 = vmatpush.bf16.msra.mxu0 %v291
    %2381 = vmatpush.bf16.msra.mxu0 %v283
    %2382 = vmatpush.bf16.msra.mxu0 %v275
    %2383 = vmatmul.bf16.gmra.mxu0 %v2335
    %v2384 = vpop.f32.mrf.mxu0
    %v2385 = vadd.f32 0.0, %v2384
    %v2386 = vpop.f32.mrf.mxu0
    %2387 = vdwg.mxu0
    %2388 = vmatpush.bf16.msra.mxu0 %v332
    %2389 = vmatpush.bf16.msra.mxu0 %v324
    %2390 = vmatpush.bf16.msra.mxu0 %v316
    %2391 = vmatpush.bf16.msra.mxu0 %v308
    %2392 = vmatpush.bf16.msra.mxu0 %v300
    %2393 = vmatpush.bf16.msra.mxu0 %v292
    %2394 = vmatpush.bf16.msra.mxu0 %v284
    %2395 = vmatpush.bf16.msra.mxu0 %v276
    %2396 = vmatmul.bf16.gmra.mxu0 %v2335
    %v2397 = vpop.f32.mrf.mxu0
    %v2398 = vadd.f32 0.0, %v2397
    %v2399 = vpop.f32.mrf.mxu0
    %2400 = vdwg.mxu0
    %2401 = vmatpush.bf16.msra.mxu0 %v333
    %2402 = vmatpush.bf16.msra.mxu0 %v325
    %2403 = vmatpush.bf16.msra.mxu0 %v317
    %2404 = vmatpush.bf16.msra.mxu0 %v309
    %2405 = vmatpush.bf16.msra.mxu0 %v301
    %2406 = vmatpush.bf16.msra.mxu0 %v293
    %2407 = vmatpush.bf16.msra.mxu0 %v285
    %2408 = vmatpush.bf16.msra.mxu0 %v277
    %2409 = vmatmul.bf16.gmra.mxu0 %v2335
    %v2410 = vpop.f32.mrf.mxu0
    %v2411 = vadd.f32 0.0, %v2410
    %v2412 = vpop.f32.mrf.mxu0
    %2413 = vdwg.mxu0
    %2414 = vmatpush.bf16.msra.mxu0 %v334
    %2415 = vmatpush.bf16.msra.mxu0 %v326
    %2416 = vmatpush.bf16.msra.mxu0 %v318
    %2417 = vmatpush.bf16.msra.mxu0 %v310
    %2418 = vmatpush.bf16.msra.mxu0 %v302
    %2419 = vmatpush.bf16.msra.mxu0 %v294
    %2420 = vmatpush.bf16.msra.mxu0 %v286
    %2421 = vmatpush.bf16.msra.mxu0 %v278
    %2422 = vmatmul.bf16.gmra.mxu0 %v2335
    %v2423 = vpop.f32.mrf.mxu0
    %v2424 = vadd.f32 0.0, %v2423
    %v2425 = vpop.f32.mrf.mxu0
    %2426 = vdwg.mxu0
    %2427 = vmatpush.bf16.msra.mxu0 %v335
    %2428 = vmatpush.bf16.msra.mxu0 %v327
    %2429 = vmatpush.bf16.msra.mxu0 %v319
    %2430 = vmatpush.bf16.msra.mxu0 %v311
    %2431 = vmatpush.bf16.msra.mxu0 %v303
    %2432 = vmatpush.bf16.msra.mxu0 %v295
    %2433 = vmatpush.bf16.msra.mxu0 %v287
    %2434 = vmatpush.bf16.msra.mxu0 %v279
    %2435 = vmatmul.bf16.gmra.mxu0 %v2335
    %v2436 = vpop.f32.mrf.mxu0
    %v2437 = vadd.f32 0.0, %v2436
    %v2438 = vpop.f32.mrf.mxu0
    %2439 = vdwg.mxu0
    %v2444 = vrot.slane %v2359, 6
    %v2445 = vrot.slane %v2372, 4
    %v2446 = vrot.slane %v2385, 2
    %v2447 = vsel %vm516, %v2346, %v2444
    %v2448 = vsel %vm518, %v2445, %v2446
    %v2449 = vsel %vm520, %v2447, %v2448
    %v2451 = vadd.f32 %v941, %v2449
    %v2456 = vrot.slane %v2411, 6
    %v2457 = vrot.slane %v2424, 4
    %v2458 = vrot.slane %v2437, 2
    %v2459 = vsel %vm516, %v2398, %v2456
    %v2460 = vsel %vm518, %v2457, %v2458
    %v2461 = vsel %vm520, %v2459, %v2460
    %v2463 = vadd.f32 %v939, %v2461
    %v2464 = vxor.u32 %v2451, 2147483648
    %v2465 = vmul.f32 %v2464, 1.442695
    %v2466 = vpow.pop %v2465
    %v2467 = vadd.f32 %v2466, 1.0
    %v2468 = vrcp.pop %v2467
    %v2469 = vmul.f32 %v2467, %v2468
    %v2470 = vsub.f32 1.0, %v2469
    %v2471 = vmul.f32 %v2468, %v2470
    %v2472 = vadd.f32 %v2468, %v2471
    %vm2473 = vweird.f32 %v2467
    %vm2474 = vweird.f32 %v2468
    %vm2475 = vmor %vm2473, %vm2474
    %v2476 = vsel %vm2475, %v2468, %v2472
    %v2477 = vand.u32 2147483647, %v2467
    %vm2478 = vcmp.eq.f32.partialorder %v2477, 8.507059e+37
    %v2479 = vand.u32 %v2467, 2147483648
    %v2480 = vor.u32 1.1754944e-38, %v2479
    %v2481 = vsel %vm2478, %v2480, %v2476
    %v2482 = vmul.f32 1.0, %v2481
    %v2484 = vrot.slane %v2451, 2
    %v2486 = vxor.u32 %v2484, 2147483648
    %v2487 = vmul.f32 %v2486, 1.442695
    %v2488 = vpow.pop %v2487
    %v2489 = vadd.f32 %v2488, 1.0
    %v2490 = vrcp.pop %v2489
    %v2491 = vmul.f32 %v2489, %v2490
    %v2492 = vsub.f32 1.0, %v2491
    %v2493 = vmul.f32 %v2490, %v2492
    %v2494 = vadd.f32 %v2490, %v2493
    %vm2495 = vweird.f32 %v2489
    %vm2496 = vweird.f32 %v2490
    %vm2497 = vmor %vm2495, %vm2496
    %v2498 = vsel %vm2497, %v2490, %v2494
    %v2499 = vand.u32 2147483647, %v2489
    %vm2500 = vcmp.eq.f32.partialorder %v2499, 8.507059e+37
    %v2501 = vand.u32 %v2489, 2147483648
    %v2502 = vor.u32 1.1754944e-38, %v2501
    %v2503 = vsel %vm2500, %v2502, %v2498
    %v2504 = vmul.f32 1.0, %v2503
    %v2505 = vrot.slane %v2451, 4
    %v2507 = vtanh.pop %v2505
    %v2508 = vrot.slane %v2451, 6
    %v2510 = vxor.u32 %v2508, 2147483648
    %v2511 = vmul.f32 %v2510, 1.442695
    %v2512 = vpow.pop %v2511
    %v2513 = vadd.f32 %v2512, 1.0
    %v2514 = vrcp.pop %v2513
    %v2515 = vmul.f32 %v2513, %v2514
    %v2516 = vsub.f32 1.0, %v2515
    %v2517 = vmul.f32 %v2514, %v2516
    %v2518 = vadd.f32 %v2514, %v2517
    %vm2519 = vweird.f32 %v2513
    %vm2520 = vweird.f32 %v2514
    %vm2521 = vmor %vm2519, %vm2520
    %v2522 = vsel %vm2521, %v2514, %v2518
    %v2523 = vand.u32 2147483647, %v2513
    %vm2524 = vcmp.eq.f32.partialorder %v2523, 8.507059e+37
    %v2525 = vand.u32 %v2513, 2147483648
    %v2526 = vor.u32 1.1754944e-38, %v2525
    %v2527 = vsel %vm2524, %v2526, %v2522
    %v2528 = vmul.f32 1.0, %v2527
    %v2529 = vmul.f32 %v2504, %v2234
    %v2530 = vmul.f32 %v2482, %v2507
    %v2531 = vadd.f32 %v2529, %v2530
    %v2532 = vtanh.pop %v2531
    %v2533 = vmul.f32 %v2528, %v2532
    %v2534 = vxor.u32 %v2463, 2147483648
    %v2535 = vmul.f32 %v2534, 1.442695
    %v2536 = vpow.pop %v2535
    %v2537 = vadd.f32 %v2536, 1.0
    %v2538 = vrcp.pop %v2537
    %v2539 = vmul.f32 %v2537, %v2538
    %v2540 = vsub.f32 1.0, %v2539
    %v2541 = vmul.f32 %v2538, %v2540
    %v2542 = vadd.f32 %v2538, %v2541
    %vm2543 = vweird.f32 %v2537
    %vm2544 = vweird.f32 %v2538
    %vm2545 = vmor %vm2543, %vm2544
    %v2546 = vsel %vm2545, %v2538, %v2542
    %v2547 = vand.u32 2147483647, %v2537
    %vm2548 = vcmp.eq.f32.partialorder %v2547, 8.507059e+37
    %v2549 = vand.u32 %v2537, 2147483648
    %v2550 = vor.u32 1.1754944e-38, %v2549
    %v2551 = vsel %vm2548, %v2550, %v2546
    %v2552 = vmul.f32 1.0, %v2551
    %v2554 = vrot.slane %v2463, 2
    %v2556 = vxor.u32 %v2554, 2147483648
    %v2557 = vmul.f32 %v2556, 1.442695
    %v2558 = vpow.pop %v2557
    %v2559 = vadd.f32 %v2558, 1.0
    %v2560 = vrcp.pop %v2559
    %v2561 = vmul.f32 %v2559, %v2560
    %v2562 = vsub.f32 1.0, %v2561
    %v2563 = vmul.f32 %v2560, %v2562
    %v2564 = vadd.f32 %v2560, %v2563
    %vm2565 = vweird.f32 %v2559
    %vm2566 = vweird.f32 %v2560
    %vm2567 = vmor %vm2565, %vm2566
    %v2568 = vsel %vm2567, %v2560, %v2564
    %v2569 = vand.u32 2147483647, %v2559
    %vm2570 = vcmp.eq.f32.partialorder %v2569, 8.507059e+37
    %v2571 = vand.u32 %v2559, 2147483648
    %v2572 = vor.u32 1.1754944e-38, %v2571
    %v2573 = vsel %vm2570, %v2572, %v2568
    %v2574 = vmul.f32 1.0, %v2573
    %v2575 = vrot.slane %v2463, 4
    %v2577 = vtanh.pop %v2575
    %v2578 = vrot.slane %v2463, 6
    %v2580 = vxor.u32 %v2578, 2147483648
    %v2581 = vmul.f32 %v2580, 1.442695
    %v2582 = vpow.pop %v2581
    %v2583 = vadd.f32 %v2582, 1.0
    %v2584 = vrcp.pop %v2583
    %v2585 = vmul.f32 %v2583, %v2584
    %v2586 = vsub.f32 1.0, %v2585
    %v2587 = vmul.f32 %v2584, %v2586
    %v2588 = vadd.f32 %v2584, %v2587
    %vm2589 = vweird.f32 %v2583
    %vm2590 = vweird.f32 %v2584
    %vm2591 = vmor %vm2589, %vm2590
    %v2592 = vsel %vm2591, %v2584, %v2588
    %v2593 = vand.u32 2147483647, %v2583
    %vm2594 = vcmp.eq.f32.partialorder %v2593, 8.507059e+37
    %v2595 = vand.u32 %v2583, 2147483648
    %v2596 = vor.u32 1.1754944e-38, %v2595
    %v2597 = vsel %vm2594, %v2596, %v2592
    %v2598 = vmul.f32 1.0, %v2597
    %v2599 = vmul.f32 %v2574, %v2304
    %v2600 = vmul.f32 %v2552, %v2577
    %v2601 = vadd.f32 %v2599, %v2600
    %v2602 = vtanh.pop %v2601
    %v2603 = vmul.f32 %v2598, %v2602
    %v2604 = vpack.c.bf16 %v2533, %v2533
    %v2605 = vpack.c.bf16 %v2603, %v2603
    %2606 = vmatpush.bf16.msra.mxu0 %v781
    %2607 = vmatpush.bf16.msra.mxu0 %v780
    %2608 = vmatpush.bf16.msra.mxu0 %v779
    %2609 = vmatpush.bf16.msra.mxu0 %v778
    %2610 = vmatpush.bf16.msra.mxu0 %v777
    %2611 = vmatpush.bf16.msra.mxu0 %v776
    %2612 = vmatpush.bf16.msra.mxu0 %v775
    %2613 = vmatpush.bf16.msra.mxu0 %v774
    %2614 = vmatmul.bf16.gmra.mxu0 %v2604
    %v2615 = vpop.f32.mrf.mxu0
    %v2616 = vadd.f32 0.0, %v2615
    %v2617 = vpop.f32.mrf.mxu0
    %2618 = vdwg.mxu0
    %2619 = vmatpush.bf16.msra.mxu0 %v789
    %2620 = vmatpush.bf16.msra.mxu0 %v788
    %2621 = vmatpush.bf16.msra.mxu0 %v787
    %2622 = vmatpush.bf16.msra.mxu0 %v786
    %2623 = vmatpush.bf16.msra.mxu0 %v785
    %2624 = vmatpush.bf16.msra.mxu0 %v784
    %2625 = vmatpush.bf16.msra.mxu0 %v783
    %2626 = vmatpush.bf16.msra.mxu0 %v782
    %2627 = vmatmul.bf16.gmra.mxu0 %v2605
    %v2628 = vpop.f32.mrf.mxu0
    %v2629 = vadd.f32 %v2616, %v2628
    %v2630 = vpop.f32.mrf.mxu0
    %2631 = vdwg.mxu0
    %v2632 = vpack.c.bf16 %v2629, %v2629
    %2633 = vmatpush.bf16.msra.mxu0 %v328
    %2634 = vmatpush.bf16.msra.mxu0 %v320
    %2635 = vmatpush.bf16.msra.mxu0 %v312
    %2636 = vmatpush.bf16.msra.mxu0 %v304
    %2637 = vmatpush.bf16.msra.mxu0 %v296
    %2638 = vmatpush.bf16.msra.mxu0 %v288
    %2639 = vmatpush.bf16.msra.mxu0 %v280
    %2640 = vmatpush.bf16.msra.mxu0 %v272
    %2641 = vmatmul.bf16.gmra.mxu0 %v2632
    %v2642 = vpop.f32.mrf.mxu0
    %v2643 = vadd.f32 0.0, %v2642
    %v2644 = vpop.f32.mrf.mxu0
    %2645 = vdwg.mxu0
    %2646 = vmatpush.bf16.msra.mxu0 %v329
    %2647 = vmatpush.bf16.msra.mxu0 %v321
    %2648 = vmatpush.bf16.msra.mxu0 %v313
    %2649 = vmatpush.bf16.msra.mxu0 %v305
    %2650 = vmatpush.bf16.msra.mxu0 %v297
    %2651 = vmatpush.bf16.msra.mxu0 %v289
    %2652 = vmatpush.bf16.msra.mxu0 %v281
    %2653 = vmatpush.bf16.msra.mxu0 %v273
    %2654 = vmatmul.bf16.gmra.mxu0 %v2632
    %v2655 = vpop.f32.mrf.mxu0
    %v2656 = vadd.f32 0.0, %v2655
    %v2657 = vpop.f32.mrf.mxu0
    %2658 = vdwg.mxu0
    %2659 = vmatpush.bf16.msra.mxu0 %v330
    %2660 = vmatpush.bf16.msra.mxu0 %v322
    %2661 = vmatpush.bf16.msra.mxu0 %v314
    %2662 = vmatpush.bf16.msra.mxu0 %v306
    %2663 = vmatpush.bf16.msra.mxu0 %v298
    %2664 = vmatpush.bf16.msra.mxu0 %v290
    %2665 = vmatpush.bf16.msra.mxu0 %v282
    %2666 = vmatpush.bf16.msra.mxu0 %v274
    %2667 = vmatmul.bf16.gmra.mxu0 %v2632
    %v2668 = vpop.f32.mrf.mxu0
    %v2669 = vadd.f32 0.0, %v2668
    %v2670 = vpop.f32.mrf.mxu0
    %2671 = vdwg.mxu0
    %2672 = vmatpush.bf16.msra.mxu0 %v331
    %2673 = vmatpush.bf16.msra.mxu0 %v323
    %2674 = vmatpush.bf16.msra.mxu0 %v315
    %2675 = vmatpush.bf16.msra.mxu0 %v307
    %2676 = vmatpush.bf16.msra.mxu0 %v299
    %2677 = vmatpush.bf16.msra.mxu0 %v291
    %2678 = vmatpush.bf16.msra.mxu0 %v283
    %2679 = vmatpush.bf16.msra.mxu0 %v275
    %2680 = vmatmul.bf16.gmra.mxu0 %v2632
    %v2681 = vpop.f32.mrf.mxu0
    %v2682 = vadd.f32 0.0, %v2681
    %v2683 = vpop.f32.mrf.mxu0
    %2684 = vdwg.mxu0
    %2685 = vmatpush.bf16.msra.mxu0 %v332
    %2686 = vmatpush.bf16.msra.mxu0 %v324
    %2687 = vmatpush.bf16.msra.mxu0 %v316
    %2688 = vmatpush.bf16.msra.mxu0 %v308
    %2689 = vmatpush.bf16.msra.mxu0 %v300
    %2690 = vmatpush.bf16.msra.mxu0 %v292
    %2691 = vmatpush.bf16.msra.mxu0 %v284
    %2692 = vmatpush.bf16.msra.mxu0 %v276
    %2693 = vmatmul.bf16.gmra.mxu0 %v2632
    %v2694 = vpop.f32.mrf.mxu0
    %v2695 = vadd.f32 0.0, %v2694
    %v2696 = vpop.f32.mrf.mxu0
    %2697 = vdwg.mxu0
    %2698 = vmatpush.bf16.msra.mxu0 %v333
    %2699 = vmatpush.bf16.msra.mxu0 %v325
    %2700 = vmatpush.bf16.msra.mxu0 %v317
    %2701 = vmatpush.bf16.msra.mxu0 %v309
    %2702 = vmatpush.bf16.msra.mxu0 %v301
    %2703 = vmatpush.bf16.msra.mxu0 %v293
    %2704 = vmatpush.bf16.msra.mxu0 %v285
    %2705 = vmatpush.bf16.msra.mxu0 %v277
    %2706 = vmatmul.bf16.gmra.mxu0 %v2632
    %v2707 = vpop.f32.mrf.mxu0
    %v2708 = vadd.f32 0.0, %v2707
    %v2709 = vpop.f32.mrf.mxu0
    %2710 = vdwg.mxu0
    %2711 = vmatpush.bf16.msra.mxu0 %v334
    %2712 = vmatpush.bf16.msra.mxu0 %v326
    %2713 = vmatpush.bf16.msra.mxu0 %v318
    %2714 = vmatpush.bf16.msra.mxu0 %v310
    %2715 = vmatpush.bf16.msra.mxu0 %v302
    %2716 = vmatpush.bf16.msra.mxu0 %v294
    %2717 = vmatpush.bf16.msra.mxu0 %v286
    %2718 = vmatpush.bf16.msra.mxu0 %v278
    %2719 = vmatmul.bf16.gmra.mxu0 %v2632
    %v2720 = vpop.f32.mrf.mxu0
    %v2721 = vadd.f32 0.0, %v2720
    %v2722 = vpop.f32.mrf.mxu0
    %2723 = vdwg.mxu0
    %2724 = vmatpush.bf16.msra.mxu0 %v335
    %2725 = vmatpush.bf16.msra.mxu0 %v327
    %2726 = vmatpush.bf16.msra.mxu0 %v319
    %2727 = vmatpush.bf16.msra.mxu0 %v311
    %2728 = vmatpush.bf16.msra.mxu0 %v303
    %2729 = vmatpush.bf16.msra.mxu0 %v295
    %2730 = vmatpush.bf16.msra.mxu0 %v287
    %2731 = vmatpush.bf16.msra.mxu0 %v279
    %2732 = vmatmul.bf16.gmra.mxu0 %v2632
    %v2733 = vpop.f32.mrf.mxu0
    %v2734 = vadd.f32 0.0, %v2733
    %v2735 = vpop.f32.mrf.mxu0
    %2736 = vdwg.mxu0
    %v2741 = vrot.slane %v2656, 6
    %v2742 = vrot.slane %v2669, 4
    %v2743 = vrot.slane %v2682, 2
    %v2744 = vsel %vm516, %v2643, %v2741
    %v2745 = vsel %vm518, %v2742, %v2743
    %v2746 = vsel %vm520, %v2744, %v2745
    %v2748 = vadd.f32 %v507, %v2746
    %v2753 = vrot.slane %v2708, 6
    %v2754 = vrot.slane %v2721, 4
    %v2755 = vrot.slane %v2734, 2
    %v2756 = vsel %vm516, %v2695, %v2753
    %v2757 = vsel %vm518, %v2754, %v2755
    %v2758 = vsel %vm520, %v2756, %v2757
    %v2760 = vadd.f32 %v505, %v2758
    %v2761 = vxor.u32 %v2748, 2147483648
    %v2762 = vmul.f32 %v2761, 1.442695
    %v2763 = vpow.pop %v2762
    %v2764 = vadd.f32 %v2763, 1.0
    %v2765 = vrcp.pop %v2764
    %v2766 = vmul.f32 %v2764, %v2765
    %v2767 = vsub.f32 1.0, %v2766
    %v2768 = vmul.f32 %v2765, %v2767
    %v2769 = vadd.f32 %v2765, %v2768
    %vm2770 = vweird.f32 %v2764
    %vm2771 = vweird.f32 %v2765
    %vm2772 = vmor %vm2770, %vm2771
    %v2773 = vsel %vm2772, %v2765, %v2769
    %v2774 = vand.u32 2147483647, %v2764
    %vm2775 = vcmp.eq.f32.partialorder %v2774, 8.507059e+37
    %v2776 = vand.u32 %v2764, 2147483648
    %v2777 = vor.u32 1.1754944e-38, %v2776
    %v2778 = vsel %vm2775, %v2777, %v2773
    %v2779 = vmul.f32 1.0, %v2778
    %v2781 = vrot.slane %v2748, 2
    %v2783 = vxor.u32 %v2781, 2147483648
    %v2784 = vmul.f32 %v2783, 1.442695
    %v2785 = vpow.pop %v2784
    %v2786 = vadd.f32 %v2785, 1.0
    %v2787 = vrcp.pop %v2786
    %v2788 = vmul.f32 %v2786, %v2787
    %v2789 = vsub.f32 1.0, %v2788
    %v2790 = vmul.f32 %v2787, %v2789
    %v2791 = vadd.f32 %v2787, %v2790
    %vm2792 = vweird.f32 %v2786
    %vm2793 = vweird.f32 %v2787
    %vm2794 = vmor %vm2792, %vm2793
    %v2795 = vsel %vm2794, %v2787, %v2791
    %v2796 = vand.u32 2147483647, %v2786
    %vm2797 = vcmp.eq.f32.partialorder %v2796, 8.507059e+37
    %v2798 = vand.u32 %v2786, 2147483648
    %v2799 = vor.u32 1.1754944e-38, %v2798
    %v2800 = vsel %vm2797, %v2799, %v2795
    %v2801 = vmul.f32 1.0, %v2800
    %v2802 = vrot.slane %v2748, 4
    %v2804 = vtanh.pop %v2802
    %v2805 = vrot.slane %v2748, 6
    %v2807 = vxor.u32 %v2805, 2147483648
    %v2808 = vmul.f32 %v2807, 1.442695
    %v2809 = vpow.pop %v2808
    %v2810 = vadd.f32 %v2809, 1.0
    %v2811 = vrcp.pop %v2810
    %v2812 = vmul.f32 %v2810, %v2811
    %v2813 = vsub.f32 1.0, %v2812
    %v2814 = vmul.f32 %v2811, %v2813
    %v2815 = vadd.f32 %v2811, %v2814
    %vm2816 = vweird.f32 %v2810
    %vm2817 = vweird.f32 %v2811
    %vm2818 = vmor %vm2816, %vm2817
    %v2819 = vsel %vm2818, %v2811, %v2815
    %v2820 = vand.u32 2147483647, %v2810
    %vm2821 = vcmp.eq.f32.partialorder %v2820, 8.507059e+37
    %v2822 = vand.u32 %v2810, 2147483648
    %v2823 = vor.u32 1.1754944e-38, %v2822
    %v2824 = vsel %vm2821, %v2823, %v2819
    %v2825 = vmul.f32 1.0, %v2824
    %v2826 = vmul.f32 %v2801, %v2531
    %v2827 = vmul.f32 %v2779, %v2804
    %v2828 = vadd.f32 %v2826, %v2827
    %v2829 = vtanh.pop %v2828
    %v2830 = vmul.f32 %v2825, %v2829
    %v2831 = vxor.u32 %v2760, 2147483648
    %v2832 = vmul.f32 %v2831, 1.442695
    %v2833 = vpow.pop %v2832
    %v2834 = vadd.f32 %v2833, 1.0
    %v2835 = vrcp.pop %v2834
    %v2836 = vmul.f32 %v2834, %v2835
    %v2837 = vsub.f32 1.0, %v2836
    %v2838 = vmul.f32 %v2835, %v2837
    %v2839 = vadd.f32 %v2835, %v2838
    %vm2840 = vweird.f32 %v2834
    %vm2841 = vweird.f32 %v2835
    %vm2842 = vmor %vm2840, %vm2841
    %v2843 = vsel %vm2842, %v2835, %v2839
    %v2844 = vand.u32 2147483647, %v2834
    %vm2845 = vcmp.eq.f32.partialorder %v2844, 8.507059e+37
    %v2846 = vand.u32 %v2834, 2147483648
    %v2847 = vor.u32 1.1754944e-38, %v2846
    %v2848 = vsel %vm2845, %v2847, %v2843
    %v2849 = vmul.f32 1.0, %v2848
    %v2851 = vrot.slane %v2760, 2
    %v2853 = vxor.u32 %v2851, 2147483648
    %v2854 = vmul.f32 %v2853, 1.442695
    %v2855 = vpow.pop %v2854
    %v2856 = vadd.f32 %v2855, 1.0
    %v2857 = vrcp.pop %v2856
    %v2858 = vmul.f32 %v2856, %v2857
    %v2859 = vsub.f32 1.0, %v2858
    %v2860 = vmul.f32 %v2857, %v2859
    %v2861 = vadd.f32 %v2857, %v2860
    %vm2862 = vweird.f32 %v2856
    %vm2863 = vweird.f32 %v2857
    %vm2864 = vmor %vm2862, %vm2863
    %v2865 = vsel %vm2864, %v2857, %v2861
    %v2866 = vand.u32 2147483647, %v2856
    %vm2867 = vcmp.eq.f32.partialorder %v2866, 8.507059e+37
    %v2868 = vand.u32 %v2856, 2147483648
    %v2869 = vor.u32 1.1754944e-38, %v2868
    %v2870 = vsel %vm2867, %v2869, %v2865
    %v2871 = vmul.f32 1.0, %v2870
    %v2872 = vrot.slane %v2760, 4
    %v2874 = vtanh.pop %v2872
    %v2875 = vrot.slane %v2760, 6
    %v2877 = vxor.u32 %v2875, 2147483648
    %v2878 = vmul.f32 %v2877, 1.442695
    %v2879 = vpow.pop %v2878
    %v2880 = vadd.f32 %v2879, 1.0
    %v2881 = vrcp.pop %v2880
    %v2882 = vmul.f32 %v2880, %v2881
    %v2883 = vsub.f32 1.0, %v2882
    %v2884 = vmul.f32 %v2881, %v2883
    %v2885 = vadd.f32 %v2881, %v2884
    %vm2886 = vweird.f32 %v2880
    %vm2887 = vweird.f32 %v2881
    %vm2888 = vmor %vm2886, %vm2887
    %v2889 = vsel %vm2888, %v2881, %v2885
    %v2890 = vand.u32 2147483647, %v2880
    %vm2891 = vcmp.eq.f32.partialorder %v2890, 8.507059e+37
    %v2892 = vand.u32 %v2880, 2147483648
    %v2893 = vor.u32 1.1754944e-38, %v2892
    %v2894 = vsel %vm2891, %v2893, %v2889
    %v2895 = vmul.f32 1.0, %v2894
    %v2896 = vmul.f32 %v2871, %v2601
    %v2897 = vmul.f32 %v2849, %v2874
    %v2898 = vadd.f32 %v2896, %v2897
    %v2899 = vtanh.pop %v2898
    %v2900 = vmul.f32 %v2895, %v2899
    %v2901 = vpack.c.bf16 %v2830, %v2830
    %v2902 = vpack.c.bf16 %v2900, %v2900
    %2903 = vmatpush.bf16.msra.mxu0 %v781
    %2904 = vmatpush.bf16.msra.mxu0 %v780
    %2905 = vmatpush.bf16.msra.mxu0 %v779
    %2906 = vmatpush.bf16.msra.mxu0 %v778
    %2907 = vmatpush.bf16.msra.mxu0 %v777
    %2908 = vmatpush.bf16.msra.mxu0 %v776
    %2909 = vmatpush.bf16.msra.mxu0 %v775
    %2910 = vmatpush.bf16.msra.mxu0 %v774
    %2911 = vmatmul.bf16.gmra.mxu0 %v2901
    %v2912 = vpop.f32.mrf.mxu0
    %v2913 = vadd.f32 0.0, %v2912
    %v2914 = vpop.f32.mrf.mxu0
    %2915 = vdwg.mxu0
    %2916 = vmatpush.bf16.msra.mxu0 %v789
    %2917 = vmatpush.bf16.msra.mxu0 %v788
    %2918 = vmatpush.bf16.msra.mxu0 %v787
    %2919 = vmatpush.bf16.msra.mxu0 %v786
    %2920 = vmatpush.bf16.msra.mxu0 %v785
    %2921 = vmatpush.bf16.msra.mxu0 %v784
    %2922 = vmatpush.bf16.msra.mxu0 %v783
    %2923 = vmatpush.bf16.msra.mxu0 %v782
    %2924 = vmatmul.bf16.gmra.mxu0 %v2902
    %v2925 = vpop.f32.mrf.mxu0
    %v2926 = vadd.f32 %v2913, %v2925
    %v2927 = vpop.f32.mrf.mxu0
    %2928 = vdwg.mxu0
    %vm2929 = vcmask 523264
    %v2930 = vsel %vm2929, %v829, %v2926
    %2931 = vst [vmem:[#allocation2] sm:$0x3] %v2930
    %v2932 = vsel %vm2929, %v1132, %v2629
    %s2933 = scalar_lea.vmem [#allocation2], 2
    %2934 = vst [vmem:[%s2933] sm:$0x3] %v2932
    %v2935 = vsel %vm2929, %v1435, %v2332
    %s2936 = scalar_lea.vmem [#allocation2], 4
    %2937 = vst [vmem:[%s2936] sm:$0x3] %v2935
    %v2938 = vsel %vm2929, %v1738, %v2035
    %s2939 = scalar_lea.vmem [#allocation2], 6
    %2940 = vst [vmem:[%s2939] sm:$0x3] %v2938
    %v2941 = vsel %vm2929, %v2035, %v1738
    %s2942 = scalar_lea.vmem [#allocation2], 8
    %2943 = vst [vmem:[%s2942] sm:$0x3] %v2941
    %v2944 = vsel %vm2929, %v2332, %v1435
    %s2945 = scalar_lea.vmem [#allocation2], 10
    %2946 = vst [vmem:[%s2945] sm:$0x3] %v2944
    %v2947 = vsel %vm2929, %v2629, %v1132
    %s2948 = scalar_lea.vmem [#allocation2], 12
    %2949 = vst [vmem:[%s2948] sm:$0x3] %v2947
    %v2950 = vsel %vm2929, %v2926, %v829
    %s2951 = scalar_lea.vmem [#allocation2], 14
    %2952 = vst [vmem:[%s2951] sm:$0x3] %v2950
    // Predicated region
    $region14: #{bilstm_encoder_forward.3} parent=1 // pred_check
      _
    $region15: #{bilstm_encoder_forward.3} parent=1 // pred_check_branch
      %2954 = sbr.rel (0) target = $region17
    $region16: #{bilstm_encoder_forward.3} parent=1 // pred_region
      %2956 = vsyncadd [#allocation3], 0
      %s2957 = sshll.u32 [#allocation2], 4
      %s2958 = int_to_ptr.vmem [resolvable:$true] %s2957
      %s2959 = sshll.u32 %s3, 4
      %s2960 = int_to_ptr.hbm [resolvable:$true] %s2959
      %2965 = dma.vmem_to_hbm [thread:$0]  %s2958, 256, %s2960, [#allocation3], 32, 32, 2
    $region17: #{bilstm_encoder_forward.3} parent=1 // pred_fallthru
      _
    // Predicated region
    $region18: #{bilstm_encoder_forward.3} parent=1 // pred_check
      _
    $region19: #{bilstm_encoder_forward.3} parent=1 // pred_check_branch
      %2967 = sbr.rel (0) target = $region21
    $region20: #{bilstm_encoder_forward.3} parent=1 // pred_region
      %2969 = dma.done [#allocation3], 256
    $region21: #{bilstm_encoder_forward.3} parent=1 // pred_fallthru
      _
    %2970 = vsyncpa [#allocation3], 1

</llo_original>
